<compile_context>
chip_gen: v7x
topology: tpu7x:2x2x1
jax: 0.10.0
libtpu: 0.0.40
codegen_flags: <defaults>
</compile_context>

<pallas_src>
import jax
import jax.numpy as jnp
from jax import lax
from jax.experimental import pallas as pl
from jax.experimental.pallas import tpu as pltpu

SUBLANE = 8    # vreg sublane width
LANE = 128     # vreg lane width


def _round_up(x, m):
    return ((x + m - 1) // m) * m


# ----------------------------------------------------------------------------
# Fused kernel: all LSTM layers + FC in one invocation, no grid.
# ----------------------------------------------------------------------------
def make_fused_lstm_kernel(num_layers, seq, batch_pad, hidden):
    H = hidden
    # Full unroll only for short recurrences; partial unroll keeps LLO
    # scheduling visibility without blowing the 64-vreg budget at long seq.
    unroll = True if seq <= 32 else 8

    def kernel(*refs):
        # refs layout:
        #   [0]                      x_flat           (seq*batch_pad, in_pad0)
        #   [1 + 3l .. 3 + 3l]       (w_ih, w_hh, b)  for layer l  (g-cols pre-scaled x2)
        #   [1 + 3L]                 w_fc             (H, c_pad)
        #   [2 + 3L]                 b_fc             (1, c_pad)
        #   [3 + 3L]                 out              (num_layers*batch_pad, c_pad)
        #   [4 + 3L], [5 + 3L]       ping-pong seq scratch  (seq, batch_pad, H)
        #   [6 + 3L]                 xproj scratch          (seq, batch_pad, 4H)
        x_ref = refs[0]
        layer_refs = [tuple(refs[1 + 3 * l: 4 + 3 * l]) for l in range(num_layers)]
        w_fc_ref = refs[1 + 3 * num_layers]
        b_fc_ref = refs[2 + 3 * num_layers]
        out_ref = refs[3 + 3 * num_layers]
        seq_bufs = (refs[4 + 3 * num_layers], refs[5 + 3 * num_layers])
        xproj_buf = refs[6 + 3 * num_layers]

        h_finals = []
        for layer, (w_ih_ref, w_hh_ref, b_ref) in enumerate(layer_refs):
            if layer == 0:
                inp2d = x_ref[...]                                     # (seq*bp, in_pad)
            else:
                # Ping-pong: read the buffer the previous layer wrote; this
                # layer writes the other one (no WAR on a single buffer).
                inp2d = seq_bufs[(layer - 1) % 2][...].reshape(seq * batch_pad, H)
            dst = seq_bufs[layer % 2]

            # Hoisted input projection (+ bias) for ALL timesteps: one matmul
            # with M = seq*batch_pad instead of seq tiny M=batch matmuls.
            xproj_buf[...] = (
                jnp.dot(inp2d, w_ih_ref[...], preferred_element_type=jnp.float32)
                + b_ref[...]
            ).reshape(seq, batch_pad, 4 * H)
            w_hh = w_hh_ref[...]

            def step(t, carry, dst=dst, w_hh=w_hh):
                h, c = carry
                # Leading-axis index -> aligned (batch_pad, 4H) tile access.
                gates = xproj_buf[t] + jnp.dot(
                    h, w_hh, preferred_element_type=jnp.float32
                )  # (batch_pad, 4H); g columns already carry a factor of 2.

                # Single full-width transcendental (EUP slot).  tanh recovered
                # via tanh(x) = 2*sigmoid(2x) - 1 (exact; weights pre-scaled).
                sig = jax.nn.sigmoid(gates)
                i_g = sig[:, 0 * H:1 * H]
                f_g = sig[:, 1 * H:2 * H]
                g_g = 2.0 * sig[:, 2 * H:3 * H] - 1.0
                o_g = sig[:, 3 * H:4 * H]

                c_new = f_g * c + i_g * g_g
                h_new = o_g * jnp.tanh(c_new)

                # Hidden sequence stays VMEM-resident; next layer's input.
                dst[t] = h_new
                return h_new, c_new

            # Padded batch rows (batch..batch_pad-1) carry garbage h/c driven
            # purely by the bias; they never mix into real rows and are sliced
            # off in the wrapper.
            h0 = jnp.zeros((batch_pad, H), jnp.float32)
            c0 = jnp.zeros((batch_pad, H), jnp.float32)
            h_last, _ = lax.fori_loop(0, seq, step, (h0, c0), unroll=unroll)
            h_finals.append(h_last)

        # Final FC fused in-kernel: (num_layers*batch_pad, H) @ (H, c_pad) + b,
        # lane-dense (c_pad = 128) single writeback.
        h_stack = jnp.concatenate(h_finals, axis=0)
        out_ref[...] = (
            jnp.dot(h_stack, w_fc_ref[...], preferred_element_type=jnp.float32)
            + b_fc_ref[...]
        )

    return kernel


# ----------------------------------------------------------------------------
# Wrapper: matches PyTorch LSTM module forward semantics.
# ----------------------------------------------------------------------------
def lstm_module_forward(x, layer_params, w_fc_t, b_fc, num_classes):
    """x: (batch, seq, input_size) batch_first, like PyTorch.
    layer_params: list of (w_ih_t (in,4H), w_hh_t (H,4H), b (1,4H)) with
    b = b_ih + b_hh, PyTorch gate order [i, f, g, o].
    w_fc_t: (H, num_classes); b_fc: (num_classes,).
    Returns (num_layers*batch, num_classes)."""
    batch, seq, input_size = x.shape
    num_layers = len(layer_params)
    H = layer_params[0][1].shape[0]

    batch_pad = _round_up(batch, SUBLANE)   # pad batch to sublane width
    c_pad = _round_up(num_classes, LANE)    # pad FC output to lane width
    in_pad = _round_up(input_size, SUBLANE)  # pad layer-0 feature dim to sublanes

    # (batch, seq, in) -> (seq, batch_pad, in_pad) -> (seq*batch_pad, in_pad)
    x_sbf = jnp.transpose(x, (1, 0, 2)).astype(jnp.float32)
    x_sbf = jnp.pad(x_sbf, ((0, 0), (0, batch_pad - batch), (0, in_pad - input_size)))
    x_flat = x_sbf.reshape(seq * batch_pad, in_pad)

    w_fc_pad = jnp.pad(w_fc_t.astype(jnp.float32),
                       ((0, 0), (0, c_pad - num_classes)))
    b_fc_pad = jnp.pad(jnp.reshape(b_fc, (1, -1)).astype(jnp.float32),
                       ((0, 0), (0, c_pad - num_classes)))

    # tanh(x) = 2*sigmoid(2x) - 1  =>  pre-scale the g-gate columns by 2 so the
    # kernel needs a single sigmoid per step (one-time weight transform).
    gate_scale = jnp.concatenate(
        [jnp.ones((1, 2 * H), jnp.float32),
         jnp.full((1, H), 2.0, jnp.float32),
         jnp.ones((1, H), jnp.float32)], axis=1)

    inputs = [x_flat]
    in_specs = [pl.BlockSpec(x_flat.shape, lambda: (0, 0))]
    for layer, (w_ih_t, w_hh_t, b) in enumerate(layer_params):
        w_ih = w_ih_t.astype(jnp.float32) * gate_scale
        if layer == 0 and in_pad != input_size:
            # Zero rows match the zero-padded input columns -> exact result.
            w_ih = jnp.pad(w_ih, ((0, in_pad - input_size), (0, 0)))
        w_hh = w_hh_t.astype(jnp.float32) * gate_scale
        b2 = jnp.reshape(b, (1, 4 * H)).astype(jnp.float32) * gate_scale
        inputs += [w_ih, w_hh, b2]
        in_specs += [
            pl.BlockSpec(w_ih.shape, lambda: (0, 0)),
            pl.BlockSpec(w_hh.shape, lambda: (0, 0)),
            pl.BlockSpec(b2.shape, lambda: (0, 0)),
        ]
    inputs += [w_fc_pad, b_fc_pad]
    in_specs += [pl.BlockSpec(w_fc_pad.shape, lambda: (0, 0)),
                 pl.BlockSpec(b_fc_pad.shape, lambda: (0, 0))]

    out_rows = num_layers * batch_pad
    kernel = make_fused_lstm_kernel(num_layers, seq, batch_pad, H)

    # --- VMEM footprint (bytes, f32) + headroom for the scoped limit. --------
    f32 = 4
    fp = seq * batch_pad * in_pad * f32                       # x_flat
    for layer, (w_ih_t, _, _) in enumerate(layer_params):
        in_dim = in_pad if layer == 0 else w_ih_t.shape[0]
        fp += (in_dim * 4 * H + H * 4 * H + 4 * H) * f32      # weights + bias
    fp += (H * c_pad + c_pad) * f32                           # FC
    fp += out_rows * c_pad * f32                              # out
    fp += (2 * seq * batch_pad * H + seq * batch_pad * 4 * H) * f32  # scratch
    vmem_limit = int(min(max(2 * fp + (2 << 20), 8 << 20), 64 << 20))

    # --- Advisory cost estimate. ---------------------------------------------
    flops = 0
    for layer, (w_ih_t, _, _) in enumerate(layer_params):
        in_dim = in_pad if layer == 0 else w_ih_t.shape[0]
        flops += 2 * seq * batch_pad * in_dim * 4 * H          # hoisted proj
        flops += 2 * seq * batch_pad * H * 4 * H               # recurrent matmuls
    flops += 2 * out_rows * H * c_pad                          # FC
    transcendentals = num_layers * seq * batch_pad * (4 * H + H)
    bytes_accessed = fp

    out_pad = pl.pallas_call(
        kernel,
        out_shape=jax.ShapeDtypeStruct((out_rows, c_pad), jnp.float32),
        in_specs=in_specs,
        out_specs=pl.BlockSpec((out_rows, c_pad), lambda: (0, 0)),
        scratch_shapes=[
            pltpu.VMEM((seq, batch_pad, H), jnp.float32),      # seq ping buffer
            pltpu.VMEM((seq, batch_pad, H), jnp.float32),      # seq pong buffer
            pltpu.VMEM((seq, batch_pad, 4 * H), jnp.float32),  # hoisted projection
        ],
        compiler_params=pltpu.CompilerParams(vmem_limit_bytes=vmem_limit),
        cost_estimate=pl.CostEstimate(flops=flops,
                                      transcendentals=transcendentals,
                                      bytes_accessed=bytes_accessed),
    )(*inputs)

    # Un-pad: (num_layers, batch_pad, c_pad) -> (num_layers*batch, num_classes)
    out = out_pad.reshape(num_layers, batch_pad, c_pad)[:, :batch, :num_classes]
    return out.reshape(num_layers * batch, num_classes)


# ----------------------------------------------------------------------------
# Pure-JAX reference for sanity checking (unscaled weights, true tanh).
# ----------------------------------------------------------------------------
def lstm_module_ref(x, layer_params, w_fc_t, b_fc):
    hidden_size = layer_params[0][1].shape[0]
    h_finals = []
    layer_in = x  # (batch, seq, in)
    for (w_ih_t, w_hh_t, b) in layer_params:
        H = w_hh_t.shape[0]
        h = jnp.zeros((x.shape[0], H), jnp.float32)
        c = jnp.zeros((x.shape[0], H), jnp.float32)
        outs = []
        for t in range(layer_in.shape[1]):
            gates = layer_in[:, t] @ w_ih_t + h @ w_hh_t + b
            i = jax.nn.sigmoid(gates[:, 0 * H:1 * H])
            f = jax.nn.sigmoid(gates[:, 1 * H:2 * H])
            g = jnp.tanh(gates[:, 2 * H:3 * H])
            o = jax.nn.sigmoid(gates[:, 3 * H:4 * H])
            c = f * c + i * g
            h = o * jnp.tanh(c)
            outs.append(h)
        layer_in = jnp.stack(outs, axis=1)
        h_finals.append(h)
    h_out = jnp.stack(h_finals, axis=0).reshape(-1, hidden_size)
    return h_out @ w_fc_t + b_fc


if __name__ == "__main__":
    # Small shapes consistent with the module's forward (seq_length = 21).
    batch = 2
    seq_length = 21
    input_size = 4
    hidden_size = 32
    num_layers = 2
    num_classes = 5

    key = jax.random.PRNGKey(0)
    k = 1.0 / jnp.sqrt(hidden_size)

    layer_params = []
    for layer in range(num_layers):
        in_dim = input_size if layer == 0 else hidden_size
        key, k1, k2, k3, k4 = jax.random.split(key, 5)
        # PyTorch stores weight_ih as (4H, in); we pass the transpose (in, 4H).
        w_ih_t = jax.random.uniform(k1, (in_dim, 4 * hidden_size),
                                    jnp.float32, -k, k)
        w_hh_t = jax.random.uniform(k2, (hidden_size, 4 * hidden_size),
                                    jnp.float32, -k, k)
        b_ih = jax.random.uniform(k3, (4 * hidden_size,), jnp.float32, -k, k)
        b_hh = jax.random.uniform(k4, (4 * hidden_size,), jnp.float32, -k, k)
        b = (b_ih + b_hh).reshape(1, 4 * hidden_size)
        layer_params.append((w_ih_t, w_hh_t, b))

    key, kf1, kf2, kx = jax.random.split(key, 4)
    w_fc_t = jax.random.uniform(kf1, (hidden_size, num_classes), jnp.float32, -k, k)
    b_fc = jax.random.uniform(kf2, (num_classes,), jnp.float32, -k, k)

    x = jax.random.normal(kx, (batch, seq_length, input_size), jnp.float32)

    out = lstm_module_forward(x, layer_params, w_fc_t, b_fc, num_classes)
    out = jax.block_until_ready(out)

    ref = lstm_module_ref(x, layer_params, w_fc_t, b_fc)
    assert out.shape == (num_layers * batch, num_classes), out.shape
    assert jnp.allclose(out, ref, atol=1e-5, rtol=1e-5), "mismatch vs reference"

    print("KERNEL_OK")
</pallas_src>

<mosaic_0001>
module attributes {stable_mosaic.version = 11 : i64} {
  func.func @kernel(%arg0: memref<168x8xf32, #tpu.memory_space<vmem>>, %arg1: memref<8x128xf32, #tpu.memory_space<vmem>>, %arg2: memref<32x128xf32, #tpu.memory_space<vmem>>, %arg3: memref<1x128xf32, #tpu.memory_space<vmem>>, %arg4: memref<32x128xf32, #tpu.memory_space<vmem>>, %arg5: memref<32x128xf32, #tpu.memory_space<vmem>>, %arg6: memref<1x128xf32, #tpu.memory_space<vmem>>, %arg7: memref<32x128xf32, #tpu.memory_space<vmem>>, %arg8: memref<1x128xf32, #tpu.memory_space<vmem>>, %arg9: memref<16x128xf32, #tpu.memory_space<vmem>>, %arg10: memref<21x8x32xf32, #tpu.memory_space<vmem>>, %arg11: memref<21x8x32xf32, #tpu.memory_space<vmem>>, %arg12: memref<21x8x128xf32, #tpu.memory_space<vmem>>) attributes {dimension_semantics = [], scalar_prefetch = 0 : i64, scratch_operands = 3 : i64, tpu.core_type = #tpu.core_type<tc>} {
    %c0 = arith.constant 0 : index
    %c0_0 = arith.constant 0 : index
    %0 = vector.load %arg0[%c0, %c0_0] : memref<168x8xf32, #tpu.memory_space<vmem>>, vector<168x8xf32>
    %c0_1 = arith.constant 0 : index
    %c0_2 = arith.constant 0 : index
    %1 = vector.load %arg1[%c0_1, %c0_2] : memref<8x128xf32, #tpu.memory_space<vmem>>, vector<8x128xf32>
    %cst = arith.constant dense<0.000000e+00> : vector<168x128xf32>
    %2 = tpu.matmul %0, %1, %cst {dimension_numbers = #tpu.dot_dimension_numbers<[1], [0], [0], [1], [0, 0, 1, 1], [], []>} : vector<168x8xf32>, vector<8x128xf32>, vector<168x128xf32> -> vector<168x128xf32>
    %c0_3 = arith.constant 0 : index
    %c0_4 = arith.constant 0 : index
    %3 = vector.load %arg3[%c0_3, %c0_4] : memref<1x128xf32, #tpu.memory_space<vmem>>, vector<1x128xf32>
    %4 = vector.broadcast %3 : vector<1x128xf32> to vector<168x128xf32>
    %5 = arith.addf %2, %4 : vector<168x128xf32>
    %6 = vector.shape_cast %5 : vector<168x128xf32> to vector<21x8x128xf32>
    %c0_5 = arith.constant 0 : index
    %c0_6 = arith.constant 0 : index
    %c0_7 = arith.constant 0 : index
    %7 = vector.load %arg12[%c0_5, %c0_6, %c0_7] : memref<21x8x128xf32, #tpu.memory_space<vmem>>, vector<21x8x128xf32>
    tpu.vector_store %arg12[%c0_5, %c0_6, %c0_7], %6 {strides = array<i32>} : memref<21x8x128xf32, #tpu.memory_space<vmem>>, vector<21x8x128xf32>,
    %c0_8 = arith.constant 0 : index
    %c0_9 = arith.constant 0 : index
    %8 = vector.load %arg2[%c0_8, %c0_9] : memref<32x128xf32, #tpu.memory_space<vmem>>, vector<32x128xf32>
    %cst_10 = arith.constant 0.000000e+00 : f32
    %9 = vector.broadcast %cst_10 : f32 to vector<8x32xf32>
    %cst_11 = arith.constant 0.000000e+00 : f32
    %10 = vector.broadcast %cst_11 : f32 to vector<8x32xf32>
    %c0_i32 = arith.constant 0 : i32
    %11 = arith.index_cast %c0_i32 : i32 to index
    %c0_12 = arith.constant 0 : index
    %c0_13 = arith.constant 0 : index
    %12 = vector.load %arg12[%11, %c0_12, %c0_13] : memref<21x8x128xf32, #tpu.memory_space<vmem>>, vector<1x8x128xf32>
    %13 = vector.shape_cast %12 : vector<1x8x128xf32> to vector<8x128xf32>
    %cst_14 = arith.constant dense<0.000000e+00> : vector<8x128xf32>
    %14 = tpu.matmul %9, %8, %cst_14 {dimension_numbers = #tpu.dot_dimension_numbers<[1], [0], [0], [1], [0, 0, 1, 1], [], []>} : vector<8x32xf32>, vector<32x128xf32>, vector<8x128xf32> -> vector<8x128xf32>
    %15 = arith.addf %13, %14 : vector<8x128xf32>
    %16 = arith.negf %15 : vector<8x128xf32>
    %17 = math.exp %16 : vector<8x128xf32>
    %cst_15 = arith.constant 1.000000e+00 : f32
    %18 = vector.broadcast %cst_15 : f32 to vector<8x128xf32>
    %19 = arith.addf %18, %17 : vector<8x128xf32>
    %20 = arith.divf %18, %19 : vector<8x128xf32>
    %21 = vector.extract_strided_slice %20 {offsets = [0, 0], sizes = [8, 32], strides = [1, 1]} : vector<8x128xf32> to vector<8x32xf32>
    %22 = vector.extract_strided_slice %20 {offsets = [0, 32], sizes = [8, 32], strides = [1, 1]} : vector<8x128xf32> to vector<8x32xf32>
    %23 = vector.extract_strided_slice %20 {offsets = [0, 64], sizes = [8, 32], strides = [1, 1]} : vector<8x128xf32> to vector<8x32xf32>
    %cst_16 = arith.constant 2.000000e+00 : f32
    %24 = vector.broadcast %cst_16 : f32 to vector<8x32xf32>
    %25 = arith.mulf %24, %23 : vector<8x32xf32>
    %cst_17 = arith.constant 1.000000e+00 : f32
    %26 = vector.broadcast %cst_17 : f32 to vector<8x32xf32>
    %27 = arith.subf %25, %26 : vector<8x32xf32>
    %28 = vector.extract_strided_slice %20 {offsets = [0, 96], sizes = [8, 32], strides = [1, 1]} : vector<8x128xf32> to vector<8x32xf32>
    %29 = arith.mulf %22, %10 : vector<8x32xf32>
    %30 = arith.mulf %21, %27 : vector<8x32xf32>
    %31 = arith.addf %29, %30 : vector<8x32xf32>
    %32 = math.tanh %31 : vector<8x32xf32>
    %33 = arith.mulf %28, %32 : vector<8x32xf32>
    %34 = arith.index_cast %c0_i32 : i32 to index
    %c0_18 = arith.constant 0 : index
    %c0_19 = arith.constant 0 : index
    %35 = vector.load %arg10[%34, %c0_18, %c0_19] : memref<21x8x32xf32, #tpu.memory_space<vmem>>, vector<1x8x32xf32>
    %36 = vector.shape_cast %35 : vector<1x8x32xf32> to vector<8x32xf32>
    %37 = vector.shape_cast %33 : vector<8x32xf32> to vector<1x8x32xf32>
    tpu.vector_store %arg10[%34, %c0_18, %c0_19], %37 {strides = array<i32>} : memref<21x8x32xf32, #tpu.memory_space<vmem>>, vector<1x8x32xf32>,
    %c1_i32 = arith.constant 1 : i32
    %38 = arith.index_cast %c1_i32 : i32 to index
    %c0_20 = arith.constant 0 : index
    %c0_21 = arith.constant 0 : index
    %39 = vector.load %arg12[%38, %c0_20, %c0_21] : memref<21x8x128xf32, #tpu.memory_space<vmem>>, vector<1x8x128xf32>
    %40 = vector.shape_cast %39 : vector<1x8x128xf32> to vector<8x128xf32>
    %cst_22 = arith.constant dense<0.000000e+00> : vector<8x128xf32>
    %41 = tpu.matmul %33, %8, %cst_22 {dimension_numbers = #tpu.dot_dimension_numbers<[1], [0], [0], [1], [0, 0, 1, 1], [], []>} : vector<8x32xf32>, vector<32x128xf32>, vector<8x128xf32> -> vector<8x128xf32>
    %42 = arith.addf %40, %41 : vector<8x128xf32>
    %43 = arith.negf %42 : vector<8x128xf32>
    %44 = math.exp %43 : vector<8x128xf32>
    %cst_23 = arith.constant 1.000000e+00 : f32
    %45 = vector.broadcast %cst_23 : f32 to vector<8x128xf32>
    %46 = arith.addf %45, %44 : vector<8x128xf32>
    %47 = arith.divf %45, %46 : vector<8x128xf32>
    %48 = vector.extract_strided_slice %47 {offsets = [0, 0], sizes = [8, 32], strides = [1, 1]} : vector<8x128xf32> to vector<8x32xf32>
    %49 = vector.extract_strided_slice %47 {offsets = [0, 32], sizes = [8, 32], strides = [1, 1]} : vector<8x128xf32> to vector<8x32xf32>
    %50 = vector.extract_strided_slice %47 {offsets = [0, 64], sizes = [8, 32], strides = [1, 1]} : vector<8x128xf32> to vector<8x32xf32>
    %cst_24 = arith.constant 2.000000e+00 : f32
    %51 = vector.broadcast %cst_24 : f32 to vector<8x32xf32>
    %52 = arith.mulf %51, %50 : vector<8x32xf32>
    %cst_25 = arith.constant 1.000000e+00 : f32
    %53 = vector.broadcast %cst_25 : f32 to vector<8x32xf32>
    %54 = arith.subf %52, %53 : vector<8x32xf32>
    %55 = vector.extract_strided_slice %47 {offsets = [0, 96], sizes = [8, 32], strides = [1, 1]} : vector<8x128xf32> to vector<8x32xf32>
    %56 = arith.mulf %49, %31 : vector<8x32xf32>
    %57 = arith.mulf %48, %54 : vector<8x32xf32>
    %58 = arith.addf %56, %57 : vector<8x32xf32>
    %59 = math.tanh %58 : vector<8x32xf32>
    %60 = arith.mulf %55, %59 : vector<8x32xf32>
    %61 = arith.index_cast %c1_i32 : i32 to index
    %c0_26 = arith.constant 0 : index
    %c0_27 = arith.constant 0 : index
    %62 = vector.load %arg10[%61, %c0_26, %c0_27] : memref<21x8x32xf32, #tpu.memory_space<vmem>>, vector<1x8x32xf32>
    %63 = vector.shape_cast %62 : vector<1x8x32xf32> to vector<8x32xf32>
    %64 = vector.shape_cast %60 : vector<8x32xf32> to vector<1x8x32xf32>
    tpu.vector_store %arg10[%61, %c0_26, %c0_27], %64 {strides = array<i32>} : memref<21x8x32xf32, #tpu.memory_space<vmem>>, vector<1x8x32xf32>,
    %c2_i32 = arith.constant 2 : i32
    %65 = arith.index_cast %c2_i32 : i32 to index
    %c0_28 = arith.constant 0 : index
    %c0_29 = arith.constant 0 : index
    %66 = vector.load %arg12[%65, %c0_28, %c0_29] : memref<21x8x128xf32, #tpu.memory_space<vmem>>, vector<1x8x128xf32>
    %67 = vector.shape_cast %66 : vector<1x8x128xf32> to vector<8x128xf32>
    %cst_30 = arith.constant dense<0.000000e+00> : vector<8x128xf32>
    %68 = tpu.matmul %60, %8, %cst_30 {dimension_numbers = #tpu.dot_dimension_numbers<[1], [0], [0], [1], [0, 0, 1, 1], [], []>} : vector<8x32xf32>, vector<32x128xf32>, vector<8x128xf32> -> vector<8x128xf32>
    %69 = arith.addf %67, %68 : vector<8x128xf32>
    %70 = arith.negf %69 : vector<8x128xf32>
    %71 = math.exp %70 : vector<8x128xf32>
    %cst_31 = arith.constant 1.000000e+00 : f32
    %72 = vector.broadcast %cst_31 : f32 to vector<8x128xf32>
    %73 = arith.addf %72, %71 : vector<8x128xf32>
    %74 = arith.divf %72, %73 : vector<8x128xf32>
    %75 = vector.extract_strided_slice %74 {offsets = [0, 0], sizes = [8, 32], strides = [1, 1]} : vector<8x128xf32> to vector<8x32xf32>
    %76 = vector.extract_strided_slice %74 {offsets = [0, 32], sizes = [8, 32], strides = [1, 1]} : vector<8x128xf32> to vector<8x32xf32>
    %77 = vector.extract_strided_slice %74 {offsets = [0, 64], sizes = [8, 32], strides = [1, 1]} : vector<8x128xf32> to vector<8x32xf32>
    %cst_32 = arith.constant 2.000000e+00 : f32
    %78 = vector.broadcast %cst_32 : f32 to vector<8x32xf32>
    %79 = arith.mulf %78, %77 : vector<8x32xf32>
    %cst_33 = arith.constant 1.000000e+00 : f32
    %80 = vector.broadcast %cst_33 : f32 to vector<8x32xf32>
    %81 = arith.subf %79, %80 : vector<8x32xf32>
    %82 = vector.extract_strided_slice %74 {offsets = [0, 96], sizes = [8, 32], strides = [1, 1]} : vector<8x128xf32> to vector<8x32xf32>
    %83 = arith.mulf %76, %58 : vector<8x32xf32>
    %84 = arith.mulf %75, %81 : vector<8x32xf32>
    %85 = arith.addf %83, %84 : vector<8x32xf32>
    %86 = math.tanh %85 : vector<8x32xf32>
    %87 = arith.mulf %82, %86 : vector<8x32xf32>
    %88 = arith.index_cast %c2_i32 : i32 to index
    %c0_34 = arith.constant 0 : index
    %c0_35 = arith.constant 0 : index
    %89 = vector.load %arg10[%88, %c0_34, %c0_35] : memref<21x8x32xf32, #tpu.memory_space<vmem>>, vector<1x8x32xf32>
    %90 = vector.shape_cast %89 : vector<1x8x32xf32> to vector<8x32xf32>
    %91 = vector.shape_cast %87 : vector<8x32xf32> to vector<1x8x32xf32>
    tpu.vector_store %arg10[%88, %c0_34, %c0_35], %91 {strides = array<i32>} : memref<21x8x32xf32, #tpu.memory_space<vmem>>, vector<1x8x32xf32>,
    %c3_i32 = arith.constant 3 : i32
    %92 = arith.index_cast %c3_i32 : i32 to index
    %c0_36 = arith.constant 0 : index
    %c0_37 = arith.constant 0 : index
    %93 = vector.load %arg12[%92, %c0_36, %c0_37] : memref<21x8x128xf32, #tpu.memory_space<vmem>>, vector<1x8x128xf32>
    %94 = vector.shape_cast %93 : vector<1x8x128xf32> to vector<8x128xf32>
    %cst_38 = arith.constant dense<0.000000e+00> : vector<8x128xf32>
    %95 = tpu.matmul %87, %8, %cst_38 {dimension_numbers = #tpu.dot_dimension_numbers<[1], [0], [0], [1], [0, 0, 1, 1], [], []>} : vector<8x32xf32>, vector<32x128xf32>, vector<8x128xf32> -> vector<8x128xf32>
    %96 = arith.addf %94, %95 : vector<8x128xf32>
    %97 = arith.negf %96 : vector<8x128xf32>
    %98 = math.exp %97 : vector<8x128xf32>
    %cst_39 = arith.constant 1.000000e+00 : f32
    %99 = vector.broadcast %cst_39 : f32 to vector<8x128xf32>
    %100 = arith.addf %99, %98 : vector<8x128xf32>
    %101 = arith.divf %99, %100 : vector<8x128xf32>
    %102 = vector.extract_strided_slice %101 {offsets = [0, 0], sizes = [8, 32], strides = [1, 1]} : vector<8x128xf32> to vector<8x32xf32>
    %103 = vector.extract_strided_slice %101 {offsets = [0, 32], sizes = [8, 32], strides = [1, 1]} : vector<8x128xf32> to vector<8x32xf32>
    %104 = vector.extract_strided_slice %101 {offsets = [0, 64], sizes = [8, 32], strides = [1, 1]} : vector<8x128xf32> to vector<8x32xf32>
    %cst_40 = arith.constant 2.000000e+00 : f32
    %105 = vector.broadcast %cst_40 : f32 to vector<8x32xf32>
    %106 = arith.mulf %105, %104 : vector<8x32xf32>
    %cst_41 = arith.constant 1.000000e+00 : f32
    %107 = vector.broadcast %cst_41 : f32 to vector<8x32xf32>
    %108 = arith.subf %106, %107 : vector<8x32xf32>
    %109 = vector.extract_strided_slice %101 {offsets = [0, 96], sizes = [8, 32], strides = [1, 1]} : vector<8x128xf32> to vector<8x32xf32>
    %110 = arith.mulf %103, %85 : vector<8x32xf32>
    %111 = arith.mulf %102, %108 : vector<8x32xf32>
    %112 = arith.addf %110, %111 : vector<8x32xf32>
    %113 = math.tanh %112 : vector<8x32xf32>
    %114 = arith.mulf %109, %113 : vector<8x32xf32>
    %115 = arith.index_cast %c3_i32 : i32 to index
    %c0_42 = arith.constant 0 : index
    %c0_43 = arith.constant 0 : index
    %116 = vector.load %arg10[%115, %c0_42, %c0_43] : memref<21x8x32xf32, #tpu.memory_space<vmem>>, vector<1x8x32xf32>
    %117 = vector.shape_cast %116 : vector<1x8x32xf32> to vector<8x32xf32>
    %118 = vector.shape_cast %114 : vector<8x32xf32> to vector<1x8x32xf32>
    tpu.vector_store %arg10[%115, %c0_42, %c0_43], %118 {strides = array<i32>} : memref<21x8x32xf32, #tpu.memory_space<vmem>>, vector<1x8x32xf32>,
    %c4_i32 = arith.constant 4 : i32
    %119 = arith.index_cast %c4_i32 : i32 to index
    %c0_44 = arith.constant 0 : index
    %c0_45 = arith.constant 0 : index
    %120 = vector.load %arg12[%119, %c0_44, %c0_45] : memref<21x8x128xf32, #tpu.memory_space<vmem>>, vector<1x8x128xf32>
    %121 = vector.shape_cast %120 : vector<1x8x128xf32> to vector<8x128xf32>
    %cst_46 = arith.constant dense<0.000000e+00> : vector<8x128xf32>
    %122 = tpu.matmul %114, %8, %cst_46 {dimension_numbers = #tpu.dot_dimension_numbers<[1], [0], [0], [1], [0, 0, 1, 1], [], []>} : vector<8x32xf32>, vector<32x128xf32>, vector<8x128xf32> -> vector<8x128xf32>
    %123 = arith.addf %121, %122 : vector<8x128xf32>
    %124 = arith.negf %123 : vector<8x128xf32>
    %125 = math.exp %124 : vector<8x128xf32>
    %cst_47 = arith.constant 1.000000e+00 : f32
    %126 = vector.broadcast %cst_47 : f32 to vector<8x128xf32>
    %127 = arith.addf %126, %125 : vector<8x128xf32>
    %128 = arith.divf %126, %127 : vector<8x128xf32>
    %129 = vector.extract_strided_slice %128 {offsets = [0, 0], sizes = [8, 32], strides = [1, 1]} : vector<8x128xf32> to vector<8x32xf32>
    %130 = vector.extract_strided_slice %128 {offsets = [0, 32], sizes = [8, 32], strides = [1, 1]} : vector<8x128xf32> to vector<8x32xf32>
    %131 = vector.extract_strided_slice %128 {offsets = [0, 64], sizes = [8, 32], strides = [1, 1]} : vector<8x128xf32> to vector<8x32xf32>
    %cst_48 = arith.constant 2.000000e+00 : f32
    %132 = vector.broadcast %cst_48 : f32 to vector<8x32xf32>
    %133 = arith.mulf %132, %131 : vector<8x32xf32>
    %cst_49 = arith.constant 1.000000e+00 : f32
    %134 = vector.broadcast %cst_49 : f32 to vector<8x32xf32>
    %135 = arith.subf %133, %134 : vector<8x32xf32>
    %136 = vector.extract_strided_slice %128 {offsets = [0, 96], sizes = [8, 32], strides = [1, 1]} : vector<8x128xf32> to vector<8x32xf32>
    %137 = arith.mulf %130, %112 : vector<8x32xf32>
    %138 = arith.mulf %129, %135 : vector<8x32xf32>
    %139 = arith.addf %137, %138 : vector<8x32xf32>
    %140 = math.tanh %139 : vector<8x32xf32>
    %141 = arith.mulf %136, %140 : vector<8x32xf32>
    %142 = arith.index_cast %c4_i32 : i32 to index
    %c0_50 = arith.constant 0 : index
    %c0_51 = arith.constant 0 : index
    %143 = vector.load %arg10[%142, %c0_50, %c0_51] : memref<21x8x32xf32, #tpu.memory_space<vmem>>, vector<1x8x32xf32>
    %144 = vector.shape_cast %143 : vector<1x8x32xf32> to vector<8x32xf32>
    %145 = vector.shape_cast %141 : vector<8x32xf32> to vector<1x8x32xf32>
    tpu.vector_store %arg10[%142, %c0_50, %c0_51], %145 {strides = array<i32>} : memref<21x8x32xf32, #tpu.memory_space<vmem>>, vector<1x8x32xf32>,
    %c5_i32 = arith.constant 5 : i32
    %146 = arith.index_cast %c5_i32 : i32 to index
    %c0_52 = arith.constant 0 : index
    %c0_53 = arith.constant 0 : index
    %147 = vector.load %arg12[%146, %c0_52, %c0_53] : memref<21x8x128xf32, #tpu.memory_space<vmem>>, vector<1x8x128xf32>
    %148 = vector.shape_cast %147 : vector<1x8x128xf32> to vector<8x128xf32>
    %cst_54 = arith.constant dense<0.000000e+00> : vector<8x128xf32>
    %149 = tpu.matmul %141, %8, %cst_54 {dimension_numbers = #tpu.dot_dimension_numbers<[1], [0], [0], [1], [0, 0, 1, 1], [], []>} : vector<8x32xf32>, vector<32x128xf32>, vector<8x128xf32> -> vector<8x128xf32>
    %150 = arith.addf %148, %149 : vector<8x128xf32>
    %151 = arith.negf %150 : vector<8x128xf32>
    %152 = math.exp %151 : vector<8x128xf32>
    %cst_55 = arith.constant 1.000000e+00 : f32
    %153 = vector.broadcast %cst_55 : f32 to vector<8x128xf32>
    %154 = arith.addf %153, %152 : vector<8x128xf32>
    %155 = arith.divf %153, %154 : vector<8x128xf32>
    %156 = vector.extract_strided_slice %155 {offsets = [0, 0], sizes = [8, 32], strides = [1, 1]} : vector<8x128xf32> to vector<8x32xf32>
    %157 = vector.extract_strided_slice %155 {offsets = [0, 32], sizes = [8, 32], strides = [1, 1]} : vector<8x128xf32> to vector<8x32xf32>
    %158 = vector.extract_strided_slice %155 {offsets = [0, 64], sizes = [8, 32], strides = [1, 1]} : vector<8x128xf32> to vector<8x32xf32>
    %cst_56 = arith.constant 2.000000e+00 : f32
    %159 = vector.broadcast %cst_56 : f32 to vector<8x32xf32>
    %160 = arith.mulf %159, %158 : vector<8x32xf32>
    %cst_57 = arith.constant 1.000000e+00 : f32
    %161 = vector.broadcast %cst_57 : f32 to vector<8x32xf32>
    %162 = arith.subf %160, %161 : vector<8x32xf32>
    %163 = vector.extract_strided_slice %155 {offsets = [0, 96], sizes = [8, 32], strides = [1, 1]} : vector<8x128xf32> to vector<8x32xf32>
    %164 = arith.mulf %157, %139 : vector<8x32xf32>
    %165 = arith.mulf %156, %162 : vector<8x32xf32>
    %166 = arith.addf %164, %165 : vector<8x32xf32>
    %167 = math.tanh %166 : vector<8x32xf32>
    %168 = arith.mulf %163, %167 : vector<8x32xf32>
    %169 = arith.index_cast %c5_i32 : i32 to index
    %c0_58 = arith.constant 0 : index
    %c0_59 = arith.constant 0 : index
    %170 = vector.load %arg10[%169, %c0_58, %c0_59] : memref<21x8x32xf32, #tpu.memory_space<vmem>>, vector<1x8x32xf32>
    %171 = vector.shape_cast %170 : vector<1x8x32xf32> to vector<8x32xf32>
    %172 = vector.shape_cast %168 : vector<8x32xf32> to vector<1x8x32xf32>
    tpu.vector_store %arg10[%169, %c0_58, %c0_59], %172 {strides = array<i32>} : memref<21x8x32xf32, #tpu.memory_space<vmem>>, vector<1x8x32xf32>,
    %c6_i32 = arith.constant 6 : i32
    %173 = arith.index_cast %c6_i32 : i32 to index
    %c0_60 = arith.constant 0 : index
    %c0_61 = arith.constant 0 : index
    %174 = vector.load %arg12[%173, %c0_60, %c0_61] : memref<21x8x128xf32, #tpu.memory_space<vmem>>, vector<1x8x128xf32>
    %175 = vector.shape_cast %174 : vector<1x8x128xf32> to vector<8x128xf32>
    %cst_62 = arith.constant dense<0.000000e+00> : vector<8x128xf32>
    %176 = tpu.matmul %168, %8, %cst_62 {dimension_numbers = #tpu.dot_dimension_numbers<[1], [0], [0], [1], [0, 0, 1, 1], [], []>} : vector<8x32xf32>, vector<32x128xf32>, vector<8x128xf32> -> vector<8x128xf32>
    %177 = arith.addf %175, %176 : vector<8x128xf32>
    %178 = arith.negf %177 : vector<8x128xf32>
    %179 = math.exp %178 : vector<8x128xf32>
    %cst_63 = arith.constant 1.000000e+00 : f32
    %180 = vector.broadcast %cst_63 : f32 to vector<8x128xf32>
    %181 = arith.addf %180, %179 : vector<8x128xf32>
    %182 = arith.divf %180, %181 : vector<8x128xf32>
    %183 = vector.extract_strided_slice %182 {offsets = [0, 0], sizes = [8, 32], strides = [1, 1]} : vector<8x128xf32> to vector<8x32xf32>
    %184 = vector.extract_strided_slice %182 {offsets = [0, 32], sizes = [8, 32], strides = [1, 1]} : vector<8x128xf32> to vector<8x32xf32>
    %185 = vector.extract_strided_slice %182 {offsets = [0, 64], sizes = [8, 32], strides = [1, 1]} : vector<8x128xf32> to vector<8x32xf32>
    %cst_64 = arith.constant 2.000000e+00 : f32
    %186 = vector.broadcast %cst_64 : f32 to vector<8x32xf32>
    %187 = arith.mulf %186, %185 : vector<8x32xf32>
    %cst_65 = arith.constant 1.000000e+00 : f32
    %188 = vector.broadcast %cst_65 : f32 to vector<8x32xf32>
    %189 = arith.subf %187, %188 : vector<8x32xf32>
    %190 = vector.extract_strided_slice %182 {offsets = [0, 96], sizes = [8, 32], strides = [1, 1]} : vector<8x128xf32> to vector<8x32xf32>
    %191 = arith.mulf %184, %166 : vector<8x32xf32>
    %192 = arith.mulf %183, %189 : vector<8x32xf32>
    %193 = arith.addf %191, %192 : vector<8x32xf32>
    %194 = math.tanh %193 : vector<8x32xf32>
    %195 = arith.mulf %190, %194 : vector<8x32xf32>
    %196 = arith.index_cast %c6_i32 : i32 to index
    %c0_66 = arith.constant 0 : index
    %c0_67 = arith.constant 0 : index
    %197 = vector.load %arg10[%196, %c0_66, %c0_67] : memref<21x8x32xf32, #tpu.memory_space<vmem>>, vector<1x8x32xf32>
    %198 = vector.shape_cast %197 : vector<1x8x32xf32> to vector<8x32xf32>
    %199 = vector.shape_cast %195 : vector<8x32xf32> to vector<1x8x32xf32>
    tpu.vector_store %arg10[%196, %c0_66, %c0_67], %199 {strides = array<i32>} : memref<21x8x32xf32, #tpu.memory_space<vmem>>, vector<1x8x32xf32>,
    %c7_i32 = arith.constant 7 : i32
    %200 = arith.index_cast %c7_i32 : i32 to index
    %c0_68 = arith.constant 0 : index
    %c0_69 = arith.constant 0 : index
    %201 = vector.load %arg12[%200, %c0_68, %c0_69] : memref<21x8x128xf32, #tpu.memory_space<vmem>>, vector<1x8x128xf32>
    %202 = vector.shape_cast %201 : vector<1x8x128xf32> to vector<8x128xf32>
    %cst_70 = arith.constant dense<0.000000e+00> : vector<8x128xf32>
    %203 = tpu.matmul %195, %8, %cst_70 {dimension_numbers = #tpu.dot_dimension_numbers<[1], [0], [0], [1], [0, 0, 1, 1], [], []>} : vector<8x32xf32>, vector<32x128xf32>, vector<8x128xf32> -> vector<8x128xf32>
    %204 = arith.addf %202, %203 : vector<8x128xf32>
    %205 = arith.negf %204 : vector<8x128xf32>
    %206 = math.exp %205 : vector<8x128xf32>
    %cst_71 = arith.constant 1.000000e+00 : f32
    %207 = vector.broadcast %cst_71 : f32 to vector<8x128xf32>
    %208 = arith.addf %207, %206 : vector<8x128xf32>
    %209 = arith.divf %207, %208 : vector<8x128xf32>
    %210 = vector.extract_strided_slice %209 {offsets = [0, 0], sizes = [8, 32], strides = [1, 1]} : vector<8x128xf32> to vector<8x32xf32>
    %211 = vector.extract_strided_slice %209 {offsets = [0, 32], sizes = [8, 32], strides = [1, 1]} : vector<8x128xf32> to vector<8x32xf32>
    %212 = vector.extract_strided_slice %209 {offsets = [0, 64], sizes = [8, 32], strides = [1, 1]} : vector<8x128xf32> to vector<8x32xf32>
    %cst_72 = arith.constant 2.000000e+00 : f32
    %213 = vector.broadcast %cst_72 : f32 to vector<8x32xf32>
    %214 = arith.mulf %213, %212 : vector<8x32xf32>
    %cst_73 = arith.constant 1.000000e+00 : f32
    %215 = vector.broadcast %cst_73 : f32 to vector<8x32xf32>
    %216 = arith.subf %214, %215 : vector<8x32xf32>
    %217 = vector.extract_strided_slice %209 {offsets = [0, 96], sizes = [8, 32], strides = [1, 1]} : vector<8x128xf32> to vector<8x32xf32>
    %218 = arith.mulf %211, %193 : vector<8x32xf32>
    %219 = arith.mulf %210, %216 : vector<8x32xf32>
    %220 = arith.addf %218, %219 : vector<8x32xf32>
    %221 = math.tanh %220 : vector<8x32xf32>
    %222 = arith.mulf %217, %221 : vector<8x32xf32>
    %223 = arith.index_cast %c7_i32 : i32 to index
    %c0_74 = arith.constant 0 : index
    %c0_75 = arith.constant 0 : index
    %224 = vector.load %arg10[%223, %c0_74, %c0_75] : memref<21x8x32xf32, #tpu.memory_space<vmem>>, vector<1x8x32xf32>
    %225 = vector.shape_cast %224 : vector<1x8x32xf32> to vector<8x32xf32>
    %226 = vector.shape_cast %222 : vector<8x32xf32> to vector<1x8x32xf32>
    tpu.vector_store %arg10[%223, %c0_74, %c0_75], %226 {strides = array<i32>} : memref<21x8x32xf32, #tpu.memory_space<vmem>>, vector<1x8x32xf32>,
    %c8_i32 = arith.constant 8 : i32
    %227 = arith.index_cast %c8_i32 : i32 to index
    %c0_76 = arith.constant 0 : index
    %c0_77 = arith.constant 0 : index
    %228 = vector.load %arg12[%227, %c0_76, %c0_77] : memref<21x8x128xf32, #tpu.memory_space<vmem>>, vector<1x8x128xf32>
    %229 = vector.shape_cast %228 : vector<1x8x128xf32> to vector<8x128xf32>
    %cst_78 = arith.constant dense<0.000000e+00> : vector<8x128xf32>
    %230 = tpu.matmul %222, %8, %cst_78 {dimension_numbers = #tpu.dot_dimension_numbers<[1], [0], [0], [1], [0, 0, 1, 1], [], []>} : vector<8x32xf32>, vector<32x128xf32>, vector<8x128xf32> -> vector<8x128xf32>
    %231 = arith.addf %229, %230 : vector<8x128xf32>
    %232 = arith.negf %231 : vector<8x128xf32>
    %233 = math.exp %232 : vector<8x128xf32>
    %cst_79 = arith.constant 1.000000e+00 : f32
    %234 = vector.broadcast %cst_79 : f32 to vector<8x128xf32>
    %235 = arith.addf %234, %233 : vector<8x128xf32>
    %236 = arith.divf %234, %235 : vector<8x128xf32>
    %237 = vector.extract_strided_slice %236 {offsets = [0, 0], sizes = [8, 32], strides = [1, 1]} : vector<8x128xf32> to vector<8x32xf32>
    %238 = vector.extract_strided_slice %236 {offsets = [0, 32], sizes = [8, 32], strides = [1, 1]} : vector<8x128xf32> to vector<8x32xf32>
    %239 = vector.extract_strided_slice %236 {offsets = [0, 64], sizes = [8, 32], strides = [1, 1]} : vector<8x128xf32> to vector<8x32xf32>
    %cst_80 = arith.constant 2.000000e+00 : f32
    %240 = vector.broadcast %cst_80 : f32 to vector<8x32xf32>
    %241 = arith.mulf %240, %239 : vector<8x32xf32>
    %cst_81 = arith.constant 1.000000e+00 : f32
    %242 = vector.broadcast %cst_81 : f32 to vector<8x32xf32>
    %243 = arith.subf %241, %242 : vector<8x32xf32>
    %244 = vector.extract_strided_slice %236 {offsets = [0, 96], sizes = [8, 32], strides = [1, 1]} : vector<8x128xf32> to vector<8x32xf32>
    %245 = arith.mulf %238, %220 : vector<8x32xf32>
    %246 = arith.mulf %237, %243 : vector<8x32xf32>
    %247 = arith.addf %245, %246 : vector<8x32xf32>
    %248 = math.tanh %247 : vector<8x32xf32>
    %249 = arith.mulf %244, %248 : vector<8x32xf32>
    %250 = arith.index_cast %c8_i32 : i32 to index
    %c0_82 = arith.constant 0 : index
    %c0_83 = arith.constant 0 : index
    %251 = vector.load %arg10[%250, %c0_82, %c0_83] : memref<21x8x32xf32, #tpu.memory_space<vmem>>, vector<1x8x32xf32>
    %252 = vector.shape_cast %251 : vector<1x8x32xf32> to vector<8x32xf32>
    %253 = vector.shape_cast %249 : vector<8x32xf32> to vector<1x8x32xf32>
    tpu.vector_store %arg10[%250, %c0_82, %c0_83], %253 {strides = array<i32>} : memref<21x8x32xf32, #tpu.memory_space<vmem>>, vector<1x8x32xf32>,
    %c9_i32 = arith.constant 9 : i32
    %254 = arith.index_cast %c9_i32 : i32 to index
    %c0_84 = arith.constant 0 : index
    %c0_85 = arith.constant 0 : index
    %255 = vector.load %arg12[%254, %c0_84, %c0_85] : memref<21x8x128xf32, #tpu.memory_space<vmem>>, vector<1x8x128xf32>
    %256 = vector.shape_cast %255 : vector<1x8x128xf32> to vector<8x128xf32>
    %cst_86 = arith.constant dense<0.000000e+00> : vector<8x128xf32>
    %257 = tpu.matmul %249, %8, %cst_86 {dimension_numbers = #tpu.dot_dimension_numbers<[1], [0], [0], [1], [0, 0, 1, 1], [], []>} : vector<8x32xf32>, vector<32x128xf32>, vector<8x128xf32> -> vector<8x128xf32>
    %258 = arith.addf %256, %257 : vector<8x128xf32>
    %259 = arith.negf %258 : vector<8x128xf32>
    %260 = math.exp %259 : vector<8x128xf32>
    %cst_87 = arith.constant 1.000000e+00 : f32
    %261 = vector.broadcast %cst_87 : f32 to vector<8x128xf32>
    %262 = arith.addf %261, %260 : vector<8x128xf32>
    %263 = arith.divf %261, %262 : vector<8x128xf32>
    %264 = vector.extract_strided_slice %263 {offsets = [0, 0], sizes = [8, 32], strides = [1, 1]} : vector<8x128xf32> to vector<8x32xf32>
    %265 = vector.extract_strided_slice %263 {offsets = [0, 32], sizes = [8, 32], strides = [1, 1]} : vector<8x128xf32> to vector<8x32xf32>
    %266 = vector.extract_strided_slice %263 {offsets = [0, 64], sizes = [8, 32], strides = [1, 1]} : vector<8x128xf32> to vector<8x32xf32>
    %cst_88 = arith.constant 2.000000e+00 : f32
    %267 = vector.broadcast %cst_88 : f32 to vector<8x32xf32>
    %268 = arith.mulf %267, %266 : vector<8x32xf32>
    %cst_89 = arith.constant 1.000000e+00 : f32
    %269 = vector.broadcast %cst_89 : f32 to vector<8x32xf32>
    %270 = arith.subf %268, %269 : vector<8x32xf32>
    %271 = vector.extract_strided_slice %263 {offsets = [0, 96], sizes = [8, 32], strides = [1, 1]} : vector<8x128xf32> to vector<8x32xf32>
    %272 = arith.mulf %265, %247 : vector<8x32xf32>
    %273 = arith.mulf %264, %270 : vector<8x32xf32>
    %274 = arith.addf %272, %273 : vector<8x32xf32>
    %275 = math.tanh %274 : vector<8x32xf32>
    %276 = arith.mulf %271, %275 : vector<8x32xf32>
    %277 = arith.index_cast %c9_i32 : i32 to index
    %c0_90 = arith.constant 0 : index
    %c0_91 = arith.constant 0 : index
    %278 = vector.load %arg10[%277, %c0_90, %c0_91] : memref<21x8x32xf32, #tpu.memory_space<vmem>>, vector<1x8x32xf32>
    %279 = vector.shape_cast %278 : vector<1x8x32xf32> to vector<8x32xf32>
    %280 = vector.shape_cast %276 : vector<8x32xf32> to vector<1x8x32xf32>
    tpu.vector_store %arg10[%277, %c0_90, %c0_91], %280 {strides = array<i32>} : memref<21x8x32xf32, #tpu.memory_space<vmem>>, vector<1x8x32xf32>,
    %c10_i32 = arith.constant 10 : i32
    %281 = arith.index_cast %c10_i32 : i32 to index
    %c0_92 = arith.constant 0 : index
    %c0_93 = arith.constant 0 : index
    %282 = vector.load %arg12[%281, %c0_92, %c0_93] : memref<21x8x128xf32, #tpu.memory_space<vmem>>, vector<1x8x128xf32>
    %283 = vector.shape_cast %282 : vector<1x8x128xf32> to vector<8x128xf32>
    %cst_94 = arith.constant dense<0.000000e+00> : vector<8x128xf32>
    %284 = tpu.matmul %276, %8, %cst_94 {dimension_numbers = #tpu.dot_dimension_numbers<[1], [0], [0], [1], [0, 0, 1, 1], [], []>} : vector<8x32xf32>, vector<32x128xf32>, vector<8x128xf32> -> vector<8x128xf32>
    %285 = arith.addf %283, %284 : vector<8x128xf32>
    %286 = arith.negf %285 : vector<8x128xf32>
    %287 = math.exp %286 : vector<8x128xf32>
    %cst_95 = arith.constant 1.000000e+00 : f32
    %288 = vector.broadcast %cst_95 : f32 to vector<8x128xf32>
    %289 = arith.addf %288, %287 : vector<8x128xf32>
    %290 = arith.divf %288, %289 : vector<8x128xf32>
    %291 = vector.extract_strided_slice %290 {offsets = [0, 0], sizes = [8, 32], strides = [1, 1]} : vector<8x128xf32> to vector<8x32xf32>
    %292 = vector.extract_strided_slice %290 {offsets = [0, 32], sizes = [8, 32], strides = [1, 1]} : vector<8x128xf32> to vector<8x32xf32>
    %293 = vector.extract_strided_slice %290 {offsets = [0, 64], sizes = [8, 32], strides = [1, 1]} : vector<8x128xf32> to vector<8x32xf32>
    %cst_96 = arith.constant 2.000000e+00 : f32
    %294 = vector.broadcast %cst_96 : f32 to vector<8x32xf32>
    %295 = arith.mulf %294, %293 : vector<8x32xf32>
    %cst_97 = arith.constant 1.000000e+00 : f32
    %296 = vector.broadcast %cst_97 : f32 to vector<8x32xf32>
    %297 = arith.subf %295, %296 : vector<8x32xf32>
    %298 = vector.extract_strided_slice %290 {offsets = [0, 96], sizes = [8, 32], strides = [1, 1]} : vector<8x128xf32> to vector<8x32xf32>
    %299 = arith.mulf %292, %274 : vector<8x32xf32>
    %300 = arith.mulf %291, %297 : vector<8x32xf32>
    %301 = arith.addf %299, %300 : vector<8x32xf32>
    %302 = math.tanh %301 : vector<8x32xf32>
    %303 = arith.mulf %298, %302 : vector<8x32xf32>
    %304 = arith.index_cast %c10_i32 : i32 to index
    %c0_98 = arith.constant 0 : index
    %c0_99 = arith.constant 0 : index
    %305 = vector.load %arg10[%304, %c0_98, %c0_99] : memref<21x8x32xf32, #tpu.memory_space<vmem>>, vector<1x8x32xf32>
    %306 = vector.shape_cast %305 : vector<1x8x32xf32> to vector<8x32xf32>
    %307 = vector.shape_cast %303 : vector<8x32xf32> to vector<1x8x32xf32>
    tpu.vector_store %arg10[%304, %c0_98, %c0_99], %307 {strides = array<i32>} : memref<21x8x32xf32, #tpu.memory_space<vmem>>, vector<1x8x32xf32>,
    %c11_i32 = arith.constant 11 : i32
    %308 = arith.index_cast %c11_i32 : i32 to index
    %c0_100 = arith.constant 0 : index
    %c0_101 = arith.constant 0 : index
    %309 = vector.load %arg12[%308, %c0_100, %c0_101] : memref<21x8x128xf32, #tpu.memory_space<vmem>>, vector<1x8x128xf32>
    %310 = vector.shape_cast %309 : vector<1x8x128xf32> to vector<8x128xf32>
    %cst_102 = arith.constant dense<0.000000e+00> : vector<8x128xf32>
    %311 = tpu.matmul %303, %8, %cst_102 {dimension_numbers = #tpu.dot_dimension_numbers<[1], [0], [0], [1], [0, 0, 1, 1], [], []>} : vector<8x32xf32>, vector<32x128xf32>, vector<8x128xf32> -> vector<8x128xf32>
    %312 = arith.addf %310, %311 : vector<8x128xf32>
    %313 = arith.negf %312 : vector<8x128xf32>
    %314 = math.exp %313 : vector<8x128xf32>
    %cst_103 = arith.constant 1.000000e+00 : f32
    %315 = vector.broadcast %cst_103 : f32 to vector<8x128xf32>
    %316 = arith.addf %315, %314 : vector<8x128xf32>
    %317 = arith.divf %315, %316 : vector<8x128xf32>
    %318 = vector.extract_strided_slice %317 {offsets = [0, 0], sizes = [8, 32], strides = [1, 1]} : vector<8x128xf32> to vector<8x32xf32>
    %319 = vector.extract_strided_slice %317 {offsets = [0, 32], sizes = [8, 32], strides = [1, 1]} : vector<8x128xf32> to vector<8x32xf32>
    %320 = vector.extract_strided_slice %317 {offsets = [0, 64], sizes = [8, 32], strides = [1, 1]} : vector<8x128xf32> to vector<8x32xf32>
    %cst_104 = arith.constant 2.000000e+00 : f32
    %321 = vector.broadcast %cst_104 : f32 to vector<8x32xf32>
    %322 = arith.mulf %321, %320 : vector<8x32xf32>
    %cst_105 = arith.constant 1.000000e+00 : f32
    %323 = vector.broadcast %cst_105 : f32 to vector<8x32xf32>
    %324 = arith.subf %322, %323 : vector<8x32xf32>
    %325 = vector.extract_strided_slice %317 {offsets = [0, 96], sizes = [8, 32], strides = [1, 1]} : vector<8x128xf32> to vector<8x32xf32>
    %326 = arith.mulf %319, %301 : vector<8x32xf32>
    %327 = arith.mulf %318, %324 : vector<8x32xf32>
    %328 = arith.addf %326, %327 : vector<8x32xf32>
    %329 = math.tanh %328 : vector<8x32xf32>
    %330 = arith.mulf %325, %329 : vector<8x32xf32>
    %331 = arith.index_cast %c11_i32 : i32 to index
    %c0_106 = arith.constant 0 : index
    %c0_107 = arith.constant 0 : index
    %332 = vector.load %arg10[%331, %c0_106, %c0_107] : memref<21x8x32xf32, #tpu.memory_space<vmem>>, vector<1x8x32xf32>
    %333 = vector.shape_cast %332 : vector<1x8x32xf32> to vector<8x32xf32>
    %334 = vector.shape_cast %330 : vector<8x32xf32> to vector<1x8x32xf32>
    tpu.vector_store %arg10[%331, %c0_106, %c0_107], %334 {strides = array<i32>} : memref<21x8x32xf32, #tpu.memory_space<vmem>>, vector<1x8x32xf32>,
    %c12_i32 = arith.constant 12 : i32
    %335 = arith.index_cast %c12_i32 : i32 to index
    %c0_108 = arith.constant 0 : index
    %c0_109 = arith.constant 0 : index
    %336 = vector.load %arg12[%335, %c0_108, %c0_109] : memref<21x8x128xf32, #tpu.memory_space<vmem>>, vector<1x8x128xf32>
    %337 = vector.shape_cast %336 : vector<1x8x128xf32> to vector<8x128xf32>
    %cst_110 = arith.constant dense<0.000000e+00> : vector<8x128xf32>
    %338 = tpu.matmul %330, %8, %cst_110 {dimension_numbers = #tpu.dot_dimension_numbers<[1], [0], [0], [1], [0, 0, 1, 1], [], []>} : vector<8x32xf32>, vector<32x128xf32>, vector<8x128xf32> -> vector<8x128xf32>
    %339 = arith.addf %337, %338 : vector<8x128xf32>
    %340 = arith.negf %339 : vector<8x128xf32>
    %341 = math.exp %340 : vector<8x128xf32>
    %cst_111 = arith.constant 1.000000e+00 : f32
    %342 = vector.broadcast %cst_111 : f32 to vector<8x128xf32>
    %343 = arith.addf %342, %341 : vector<8x128xf32>
    %344 = arith.divf %342, %343 : vector<8x128xf32>
    %345 = vector.extract_strided_slice %344 {offsets = [0, 0], sizes = [8, 32], strides = [1, 1]} : vector<8x128xf32> to vector<8x32xf32>
    %346 = vector.extract_strided_slice %344 {offsets = [0, 32], sizes = [8, 32], strides = [1, 1]} : vector<8x128xf32> to vector<8x32xf32>
    %347 = vector.extract_strided_slice %344 {offsets = [0, 64], sizes = [8, 32], strides = [1, 1]} : vector<8x128xf32> to vector<8x32xf32>
    %cst_112 = arith.constant 2.000000e+00 : f32
    %348 = vector.broadcast %cst_112 : f32 to vector<8x32xf32>
    %349 = arith.mulf %348, %347 : vector<8x32xf32>
    %cst_113 = arith.constant 1.000000e+00 : f32
    %350 = vector.broadcast %cst_113 : f32 to vector<8x32xf32>
    %351 = arith.subf %349, %350 : vector<8x32xf32>
    %352 = vector.extract_strided_slice %344 {offsets = [0, 96], sizes = [8, 32], strides = [1, 1]} : vector<8x128xf32> to vector<8x32xf32>
    %353 = arith.mulf %346, %328 : vector<8x32xf32>
    %354 = arith.mulf %345, %351 : vector<8x32xf32>
    %355 = arith.addf %353, %354 : vector<8x32xf32>
    %356 = math.tanh %355 : vector<8x32xf32>
    %357 = arith.mulf %352, %356 : vector<8x32xf32>
    %358 = arith.index_cast %c12_i32 : i32 to index
    %c0_114 = arith.constant 0 : index
    %c0_115 = arith.constant 0 : index
    %359 = vector.load %arg10[%358, %c0_114, %c0_115] : memref<21x8x32xf32, #tpu.memory_space<vmem>>, vector<1x8x32xf32>
    %360 = vector.shape_cast %359 : vector<1x8x32xf32> to vector<8x32xf32>
    %361 = vector.shape_cast %357 : vector<8x32xf32> to vector<1x8x32xf32>
    tpu.vector_store %arg10[%358, %c0_114, %c0_115], %361 {strides = array<i32>} : memref<21x8x32xf32, #tpu.memory_space<vmem>>, vector<1x8x32xf32>,
    %c13_i32 = arith.constant 13 : i32
    %362 = arith.index_cast %c13_i32 : i32 to index
    %c0_116 = arith.constant 0 : index
    %c0_117 = arith.constant 0 : index
    %363 = vector.load %arg12[%362, %c0_116, %c0_117] : memref<21x8x128xf32, #tpu.memory_space<vmem>>, vector<1x8x128xf32>
    %364 = vector.shape_cast %363 : vector<1x8x128xf32> to vector<8x128xf32>
    %cst_118 = arith.constant dense<0.000000e+00> : vector<8x128xf32>
    %365 = tpu.matmul %357, %8, %cst_118 {dimension_numbers = #tpu.dot_dimension_numbers<[1], [0], [0], [1], [0, 0, 1, 1], [], []>} : vector<8x32xf32>, vector<32x128xf32>, vector<8x128xf32> -> vector<8x128xf32>
    %366 = arith.addf %364, %365 : vector<8x128xf32>
    %367 = arith.negf %366 : vector<8x128xf32>
    %368 = math.exp %367 : vector<8x128xf32>
    %cst_119 = arith.constant 1.000000e+00 : f32
    %369 = vector.broadcast %cst_119 : f32 to vector<8x128xf32>
    %370 = arith.addf %369, %368 : vector<8x128xf32>
    %371 = arith.divf %369, %370 : vector<8x128xf32>
    %372 = vector.extract_strided_slice %371 {offsets = [0, 0], sizes = [8, 32], strides = [1, 1]} : vector<8x128xf32> to vector<8x32xf32>
    %373 = vector.extract_strided_slice %371 {offsets = [0, 32], sizes = [8, 32], strides = [1, 1]} : vector<8x128xf32> to vector<8x32xf32>
    %374 = vector.extract_strided_slice %371 {offsets = [0, 64], sizes = [8, 32], strides = [1, 1]} : vector<8x128xf32> to vector<8x32xf32>
    %cst_120 = arith.constant 2.000000e+00 : f32
    %375 = vector.broadcast %cst_120 : f32 to vector<8x32xf32>
    %376 = arith.mulf %375, %374 : vector<8x32xf32>
    %cst_121 = arith.constant 1.000000e+00 : f32
    %377 = vector.broadcast %cst_121 : f32 to vector<8x32xf32>
    %378 = arith.subf %376, %377 : vector<8x32xf32>
    %379 = vector.extract_strided_slice %371 {offsets = [0, 96], sizes = [8, 32], strides = [1, 1]} : vector<8x128xf32> to vector<8x32xf32>
    %380 = arith.mulf %373, %355 : vector<8x32xf32>
    %381 = arith.mulf %372, %378 : vector<8x32xf32>
    %382 = arith.addf %380, %381 : vector<8x32xf32>
    %383 = math.tanh %382 : vector<8x32xf32>
    %384 = arith.mulf %379, %383 : vector<8x32xf32>
    %385 = arith.index_cast %c13_i32 : i32 to index
    %c0_122 = arith.constant 0 : index
    %c0_123 = arith.constant 0 : index
    %386 = vector.load %arg10[%385, %c0_122, %c0_123] : memref<21x8x32xf32, #tpu.memory_space<vmem>>, vector<1x8x32xf32>
    %387 = vector.shape_cast %386 : vector<1x8x32xf32> to vector<8x32xf32>
    %388 = vector.shape_cast %384 : vector<8x32xf32> to vector<1x8x32xf32>
    tpu.vector_store %arg10[%385, %c0_122, %c0_123], %388 {strides = array<i32>} : memref<21x8x32xf32, #tpu.memory_space<vmem>>, vector<1x8x32xf32>,
    %c14_i32 = arith.constant 14 : i32
    %389 = arith.index_cast %c14_i32 : i32 to index
    %c0_124 = arith.constant 0 : index
    %c0_125 = arith.constant 0 : index
    %390 = vector.load %arg12[%389, %c0_124, %c0_125] : memref<21x8x128xf32, #tpu.memory_space<vmem>>, vector<1x8x128xf32>
    %391 = vector.shape_cast %390 : vector<1x8x128xf32> to vector<8x128xf32>
    %cst_126 = arith.constant dense<0.000000e+00> : vector<8x128xf32>
    %392 = tpu.matmul %384, %8, %cst_126 {dimension_numbers = #tpu.dot_dimension_numbers<[1], [0], [0], [1], [0, 0, 1, 1], [], []>} : vector<8x32xf32>, vector<32x128xf32>, vector<8x128xf32> -> vector<8x128xf32>
    %393 = arith.addf %391, %392 : vector<8x128xf32>
    %394 = arith.negf %393 : vector<8x128xf32>
    %395 = math.exp %394 : vector<8x128xf32>
    %cst_127 = arith.constant 1.000000e+00 : f32
    %396 = vector.broadcast %cst_127 : f32 to vector<8x128xf32>
    %397 = arith.addf %396, %395 : vector<8x128xf32>
    %398 = arith.divf %396, %397 : vector<8x128xf32>
    %399 = vector.extract_strided_slice %398 {offsets = [0, 0], sizes = [8, 32], strides = [1, 1]} : vector<8x128xf32> to vector<8x32xf32>
    %400 = vector.extract_strided_slice %398 {offsets = [0, 32], sizes = [8, 32], strides = [1, 1]} : vector<8x128xf32> to vector<8x32xf32>
    %401 = vector.extract_strided_slice %398 {offsets = [0, 64], sizes = [8, 32], strides = [1, 1]} : vector<8x128xf32> to vector<8x32xf32>
    %cst_128 = arith.constant 2.000000e+00 : f32
    %402 = vector.broadcast %cst_128 : f32 to vector<8x32xf32>
    %403 = arith.mulf %402, %401 : vector<8x32xf32>
    %cst_129 = arith.constant 1.000000e+00 : f32
    %404 = vector.broadcast %cst_129 : f32 to vector<8x32xf32>
    %405 = arith.subf %403, %404 : vector<8x32xf32>
    %406 = vector.extract_strided_slice %398 {offsets = [0, 96], sizes = [8, 32], strides = [1, 1]} : vector<8x128xf32> to vector<8x32xf32>
    %407 = arith.mulf %400, %382 : vector<8x32xf32>
    %408 = arith.mulf %399, %405 : vector<8x32xf32>
    %409 = arith.addf %407, %408 : vector<8x32xf32>
    %410 = math.tanh %409 : vector<8x32xf32>
    %411 = arith.mulf %406, %410 : vector<8x32xf32>
    %412 = arith.index_cast %c14_i32 : i32 to index
    %c0_130 = arith.constant 0 : index
    %c0_131 = arith.constant 0 : index
    %413 = vector.load %arg10[%412, %c0_130, %c0_131] : memref<21x8x32xf32, #tpu.memory_space<vmem>>, vector<1x8x32xf32>
    %414 = vector.shape_cast %413 : vector<1x8x32xf32> to vector<8x32xf32>
    %415 = vector.shape_cast %411 : vector<8x32xf32> to vector<1x8x32xf32>
    tpu.vector_store %arg10[%412, %c0_130, %c0_131], %415 {strides = array<i32>} : memref<21x8x32xf32, #tpu.memory_space<vmem>>, vector<1x8x32xf32>,
    %c15_i32 = arith.constant 15 : i32
    %416 = arith.index_cast %c15_i32 : i32 to index
    %c0_132 = arith.constant 0 : index
    %c0_133 = arith.constant 0 : index
    %417 = vector.load %arg12[%416, %c0_132, %c0_133] : memref<21x8x128xf32, #tpu.memory_space<vmem>>, vector<1x8x128xf32>
    %418 = vector.shape_cast %417 : vector<1x8x128xf32> to vector<8x128xf32>
    %cst_134 = arith.constant dense<0.000000e+00> : vector<8x128xf32>
    %419 = tpu.matmul %411, %8, %cst_134 {dimension_numbers = #tpu.dot_dimension_numbers<[1], [0], [0], [1], [0, 0, 1, 1], [], []>} : vector<8x32xf32>, vector<32x128xf32>, vector<8x128xf32> -> vector<8x128xf32>
    %420 = arith.addf %418, %419 : vector<8x128xf32>
    %421 = arith.negf %420 : vector<8x128xf32>
    %422 = math.exp %421 : vector<8x128xf32>
    %cst_135 = arith.constant 1.000000e+00 : f32
    %423 = vector.broadcast %cst_135 : f32 to vector<8x128xf32>
    %424 = arith.addf %423, %422 : vector<8x128xf32>
    %425 = arith.divf %423, %424 : vector<8x128xf32>
    %426 = vector.extract_strided_slice %425 {offsets = [0, 0], sizes = [8, 32], strides = [1, 1]} : vector<8x128xf32> to vector<8x32xf32>
    %427 = vector.extract_strided_slice %425 {offsets = [0, 32], sizes = [8, 32], strides = [1, 1]} : vector<8x128xf32> to vector<8x32xf32>
    %428 = vector.extract_strided_slice %425 {offsets = [0, 64], sizes = [8, 32], strides = [1, 1]} : vector<8x128xf32> to vector<8x32xf32>
    %cst_136 = arith.constant 2.000000e+00 : f32
    %429 = vector.broadcast %cst_136 : f32 to vector<8x32xf32>
    %430 = arith.mulf %429, %428 : vector<8x32xf32>
    %cst_137 = arith.constant 1.000000e+00 : f32
    %431 = vector.broadcast %cst_137 : f32 to vector<8x32xf32>
    %432 = arith.subf %430, %431 : vector<8x32xf32>
    %433 = vector.extract_strided_slice %425 {offsets = [0, 96], sizes = [8, 32], strides = [1, 1]} : vector<8x128xf32> to vector<8x32xf32>
    %434 = arith.mulf %427, %409 : vector<8x32xf32>
    %435 = arith.mulf %426, %432 : vector<8x32xf32>
    %436 = arith.addf %434, %435 : vector<8x32xf32>
    %437 = math.tanh %436 : vector<8x32xf32>
    %438 = arith.mulf %433, %437 : vector<8x32xf32>
    %439 = arith.index_cast %c15_i32 : i32 to index
    %c0_138 = arith.constant 0 : index
    %c0_139 = arith.constant 0 : index
    %440 = vector.load %arg10[%439, %c0_138, %c0_139] : memref<21x8x32xf32, #tpu.memory_space<vmem>>, vector<1x8x32xf32>
    %441 = vector.shape_cast %440 : vector<1x8x32xf32> to vector<8x32xf32>
    %442 = vector.shape_cast %438 : vector<8x32xf32> to vector<1x8x32xf32>
    tpu.vector_store %arg10[%439, %c0_138, %c0_139], %442 {strides = array<i32>} : memref<21x8x32xf32, #tpu.memory_space<vmem>>, vector<1x8x32xf32>,
    %c16_i32 = arith.constant 16 : i32
    %443 = arith.index_cast %c16_i32 : i32 to index
    %c0_140 = arith.constant 0 : index
    %c0_141 = arith.constant 0 : index
    %444 = vector.load %arg12[%443, %c0_140, %c0_141] : memref<21x8x128xf32, #tpu.memory_space<vmem>>, vector<1x8x128xf32>
    %445 = vector.shape_cast %444 : vector<1x8x128xf32> to vector<8x128xf32>
    %cst_142 = arith.constant dense<0.000000e+00> : vector<8x128xf32>
    %446 = tpu.matmul %438, %8, %cst_142 {dimension_numbers = #tpu.dot_dimension_numbers<[1], [0], [0], [1], [0, 0, 1, 1], [], []>} : vector<8x32xf32>, vector<32x128xf32>, vector<8x128xf32> -> vector<8x128xf32>
    %447 = arith.addf %445, %446 : vector<8x128xf32>
    %448 = arith.negf %447 : vector<8x128xf32>
    %449 = math.exp %448 : vector<8x128xf32>
    %cst_143 = arith.constant 1.000000e+00 : f32
    %450 = vector.broadcast %cst_143 : f32 to vector<8x128xf32>
    %451 = arith.addf %450, %449 : vector<8x128xf32>
    %452 = arith.divf %450, %451 : vector<8x128xf32>
    %453 = vector.extract_strided_slice %452 {offsets = [0, 0], sizes = [8, 32], strides = [1, 1]} : vector<8x128xf32> to vector<8x32xf32>
    %454 = vector.extract_strided_slice %452 {offsets = [0, 32], sizes = [8, 32], strides = [1, 1]} : vector<8x128xf32> to vector<8x32xf32>
    %455 = vector.extract_strided_slice %452 {offsets = [0, 64], sizes = [8, 32], strides = [1, 1]} : vector<8x128xf32> to vector<8x32xf32>
    %cst_144 = arith.constant 2.000000e+00 : f32
    %456 = vector.broadcast %cst_144 : f32 to vector<8x32xf32>
    %457 = arith.mulf %456, %455 : vector<8x32xf32>
    %cst_145 = arith.constant 1.000000e+00 : f32
    %458 = vector.broadcast %cst_145 : f32 to vector<8x32xf32>
    %459 = arith.subf %457, %458 : vector<8x32xf32>
    %460 = vector.extract_strided_slice %452 {offsets = [0, 96], sizes = [8, 32], strides = [1, 1]} : vector<8x128xf32> to vector<8x32xf32>
    %461 = arith.mulf %454, %436 : vector<8x32xf32>
    %462 = arith.mulf %453, %459 : vector<8x32xf32>
    %463 = arith.addf %461, %462 : vector<8x32xf32>
    %464 = math.tanh %463 : vector<8x32xf32>
    %465 = arith.mulf %460, %464 : vector<8x32xf32>
    %466 = arith.index_cast %c16_i32 : i32 to index
    %c0_146 = arith.constant 0 : index
    %c0_147 = arith.constant 0 : index
    %467 = vector.load %arg10[%466, %c0_146, %c0_147] : memref<21x8x32xf32, #tpu.memory_space<vmem>>, vector<1x8x32xf32>
    %468 = vector.shape_cast %467 : vector<1x8x32xf32> to vector<8x32xf32>
    %469 = vector.shape_cast %465 : vector<8x32xf32> to vector<1x8x32xf32>
    tpu.vector_store %arg10[%466, %c0_146, %c0_147], %469 {strides = array<i32>} : memref<21x8x32xf32, #tpu.memory_space<vmem>>, vector<1x8x32xf32>,
    %c17_i32 = arith.constant 17 : i32
    %470 = arith.index_cast %c17_i32 : i32 to index
    %c0_148 = arith.constant 0 : index
    %c0_149 = arith.constant 0 : index
    %471 = vector.load %arg12[%470, %c0_148, %c0_149] : memref<21x8x128xf32, #tpu.memory_space<vmem>>, vector<1x8x128xf32>
    %472 = vector.shape_cast %471 : vector<1x8x128xf32> to vector<8x128xf32>
    %cst_150 = arith.constant dense<0.000000e+00> : vector<8x128xf32>
    %473 = tpu.matmul %465, %8, %cst_150 {dimension_numbers = #tpu.dot_dimension_numbers<[1], [0], [0], [1], [0, 0, 1, 1], [], []>} : vector<8x32xf32>, vector<32x128xf32>, vector<8x128xf32> -> vector<8x128xf32>
    %474 = arith.addf %472, %473 : vector<8x128xf32>
    %475 = arith.negf %474 : vector<8x128xf32>
    %476 = math.exp %475 : vector<8x128xf32>
    %cst_151 = arith.constant 1.000000e+00 : f32
    %477 = vector.broadcast %cst_151 : f32 to vector<8x128xf32>
    %478 = arith.addf %477, %476 : vector<8x128xf32>
    %479 = arith.divf %477, %478 : vector<8x128xf32>
    %480 = vector.extract_strided_slice %479 {offsets = [0, 0], sizes = [8, 32], strides = [1, 1]} : vector<8x128xf32> to vector<8x32xf32>
    %481 = vector.extract_strided_slice %479 {offsets = [0, 32], sizes = [8, 32], strides = [1, 1]} : vector<8x128xf32> to vector<8x32xf32>
    %482 = vector.extract_strided_slice %479 {offsets = [0, 64], sizes = [8, 32], strides = [1, 1]} : vector<8x128xf32> to vector<8x32xf32>
    %cst_152 = arith.constant 2.000000e+00 : f32
    %483 = vector.broadcast %cst_152 : f32 to vector<8x32xf32>
    %484 = arith.mulf %483, %482 : vector<8x32xf32>
    %cst_153 = arith.constant 1.000000e+00 : f32
    %485 = vector.broadcast %cst_153 : f32 to vector<8x32xf32>
    %486 = arith.subf %484, %485 : vector<8x32xf32>
    %487 = vector.extract_strided_slice %479 {offsets = [0, 96], sizes = [8, 32], strides = [1, 1]} : vector<8x128xf32> to vector<8x32xf32>
    %488 = arith.mulf %481, %463 : vector<8x32xf32>
    %489 = arith.mulf %480, %486 : vector<8x32xf32>
    %490 = arith.addf %488, %489 : vector<8x32xf32>
    %491 = math.tanh %490 : vector<8x32xf32>
    %492 = arith.mulf %487, %491 : vector<8x32xf32>
    %493 = arith.index_cast %c17_i32 : i32 to index
    %c0_154 = arith.constant 0 : index
    %c0_155 = arith.constant 0 : index
    %494 = vector.load %arg10[%493, %c0_154, %c0_155] : memref<21x8x32xf32, #tpu.memory_space<vmem>>, vector<1x8x32xf32>
    %495 = vector.shape_cast %494 : vector<1x8x32xf32> to vector<8x32xf32>
    %496 = vector.shape_cast %492 : vector<8x32xf32> to vector<1x8x32xf32>
    tpu.vector_store %arg10[%493, %c0_154, %c0_155], %496 {strides = array<i32>} : memref<21x8x32xf32, #tpu.memory_space<vmem>>, vector<1x8x32xf32>,
    %c18_i32 = arith.constant 18 : i32
    %497 = arith.index_cast %c18_i32 : i32 to index
    %c0_156 = arith.constant 0 : index
    %c0_157 = arith.constant 0 : index
    %498 = vector.load %arg12[%497, %c0_156, %c0_157] : memref<21x8x128xf32, #tpu.memory_space<vmem>>, vector<1x8x128xf32>
    %499 = vector.shape_cast %498 : vector<1x8x128xf32> to vector<8x128xf32>
    %cst_158 = arith.constant dense<0.000000e+00> : vector<8x128xf32>
    %500 = tpu.matmul %492, %8, %cst_158 {dimension_numbers = #tpu.dot_dimension_numbers<[1], [0], [0], [1], [0, 0, 1, 1], [], []>} : vector<8x32xf32>, vector<32x128xf32>, vector<8x128xf32> -> vector<8x128xf32>
    %501 = arith.addf %499, %500 : vector<8x128xf32>
    %502 = arith.negf %501 : vector<8x128xf32>
    %503 = math.exp %502 : vector<8x128xf32>
    %cst_159 = arith.constant 1.000000e+00 : f32
    %504 = vector.broadcast %cst_159 : f32 to vector<8x128xf32>
    %505 = arith.addf %504, %503 : vector<8x128xf32>
    %506 = arith.divf %504, %505 : vector<8x128xf32>
    %507 = vector.extract_strided_slice %506 {offsets = [0, 0], sizes = [8, 32], strides = [1, 1]} : vector<8x128xf32> to vector<8x32xf32>
    %508 = vector.extract_strided_slice %506 {offsets = [0, 32], sizes = [8, 32], strides = [1, 1]} : vector<8x128xf32> to vector<8x32xf32>
    %509 = vector.extract_strided_slice %506 {offsets = [0, 64], sizes = [8, 32], strides = [1, 1]} : vector<8x128xf32> to vector<8x32xf32>
    %cst_160 = arith.constant 2.000000e+00 : f32
    %510 = vector.broadcast %cst_160 : f32 to vector<8x32xf32>
    %511 = arith.mulf %510, %509 : vector<8x32xf32>
    %cst_161 = arith.constant 1.000000e+00 : f32
    %512 = vector.broadcast %cst_161 : f32 to vector<8x32xf32>
    %513 = arith.subf %511, %512 : vector<8x32xf32>
    %514 = vector.extract_strided_slice %506 {offsets = [0, 96], sizes = [8, 32], strides = [1, 1]} : vector<8x128xf32> to vector<8x32xf32>
    %515 = arith.mulf %508, %490 : vector<8x32xf32>
    %516 = arith.mulf %507, %513 : vector<8x32xf32>
    %517 = arith.addf %515, %516 : vector<8x32xf32>
    %518 = math.tanh %517 : vector<8x32xf32>
    %519 = arith.mulf %514, %518 : vector<8x32xf32>
    %520 = arith.index_cast %c18_i32 : i32 to index
    %c0_162 = arith.constant 0 : index
    %c0_163 = arith.constant 0 : index
    %521 = vector.load %arg10[%520, %c0_162, %c0_163] : memref<21x8x32xf32, #tpu.memory_space<vmem>>, vector<1x8x32xf32>
    %522 = vector.shape_cast %521 : vector<1x8x32xf32> to vector<8x32xf32>
    %523 = vector.shape_cast %519 : vector<8x32xf32> to vector<1x8x32xf32>
    tpu.vector_store %arg10[%520, %c0_162, %c0_163], %523 {strides = array<i32>} : memref<21x8x32xf32, #tpu.memory_space<vmem>>, vector<1x8x32xf32>,
    %c19_i32 = arith.constant 19 : i32
    %524 = arith.index_cast %c19_i32 : i32 to index
    %c0_164 = arith.constant 0 : index
    %c0_165 = arith.constant 0 : index
    %525 = vector.load %arg12[%524, %c0_164, %c0_165] : memref<21x8x128xf32, #tpu.memory_space<vmem>>, vector<1x8x128xf32>
    %526 = vector.shape_cast %525 : vector<1x8x128xf32> to vector<8x128xf32>
    %cst_166 = arith.constant dense<0.000000e+00> : vector<8x128xf32>
    %527 = tpu.matmul %519, %8, %cst_166 {dimension_numbers = #tpu.dot_dimension_numbers<[1], [0], [0], [1], [0, 0, 1, 1], [], []>} : vector<8x32xf32>, vector<32x128xf32>, vector<8x128xf32> -> vector<8x128xf32>
    %528 = arith.addf %526, %527 : vector<8x128xf32>
    %529 = arith.negf %528 : vector<8x128xf32>
    %530 = math.exp %529 : vector<8x128xf32>
    %cst_167 = arith.constant 1.000000e+00 : f32
    %531 = vector.broadcast %cst_167 : f32 to vector<8x128xf32>
    %532 = arith.addf %531, %530 : vector<8x128xf32>
    %533 = arith.divf %531, %532 : vector<8x128xf32>
    %534 = vector.extract_strided_slice %533 {offsets = [0, 0], sizes = [8, 32], strides = [1, 1]} : vector<8x128xf32> to vector<8x32xf32>
    %535 = vector.extract_strided_slice %533 {offsets = [0, 32], sizes = [8, 32], strides = [1, 1]} : vector<8x128xf32> to vector<8x32xf32>
    %536 = vector.extract_strided_slice %533 {offsets = [0, 64], sizes = [8, 32], strides = [1, 1]} : vector<8x128xf32> to vector<8x32xf32>
    %cst_168 = arith.constant 2.000000e+00 : f32
    %537 = vector.broadcast %cst_168 : f32 to vector<8x32xf32>
    %538 = arith.mulf %537, %536 : vector<8x32xf32>
    %cst_169 = arith.constant 1.000000e+00 : f32
    %539 = vector.broadcast %cst_169 : f32 to vector<8x32xf32>
    %540 = arith.subf %538, %539 : vector<8x32xf32>
    %541 = vector.extract_strided_slice %533 {offsets = [0, 96], sizes = [8, 32], strides = [1, 1]} : vector<8x128xf32> to vector<8x32xf32>
    %542 = arith.mulf %535, %517 : vector<8x32xf32>
    %543 = arith.mulf %534, %540 : vector<8x32xf32>
    %544 = arith.addf %542, %543 : vector<8x32xf32>
    %545 = math.tanh %544 : vector<8x32xf32>
    %546 = arith.mulf %541, %545 : vector<8x32xf32>
    %547 = arith.index_cast %c19_i32 : i32 to index
    %c0_170 = arith.constant 0 : index
    %c0_171 = arith.constant 0 : index
    %548 = vector.load %arg10[%547, %c0_170, %c0_171] : memref<21x8x32xf32, #tpu.memory_space<vmem>>, vector<1x8x32xf32>
    %549 = vector.shape_cast %548 : vector<1x8x32xf32> to vector<8x32xf32>
    %550 = vector.shape_cast %546 : vector<8x32xf32> to vector<1x8x32xf32>
    tpu.vector_store %arg10[%547, %c0_170, %c0_171], %550 {strides = array<i32>} : memref<21x8x32xf32, #tpu.memory_space<vmem>>, vector<1x8x32xf32>,
    %c20_i32 = arith.constant 20 : i32
    %551 = arith.index_cast %c20_i32 : i32 to index
    %c0_172 = arith.constant 0 : index
    %c0_173 = arith.constant 0 : index
    %552 = vector.load %arg12[%551, %c0_172, %c0_173] : memref<21x8x128xf32, #tpu.memory_space<vmem>>, vector<1x8x128xf32>
    %553 = vector.shape_cast %552 : vector<1x8x128xf32> to vector<8x128xf32>
    %cst_174 = arith.constant dense<0.000000e+00> : vector<8x128xf32>
    %554 = tpu.matmul %546, %8, %cst_174 {dimension_numbers = #tpu.dot_dimension_numbers<[1], [0], [0], [1], [0, 0, 1, 1], [], []>} : vector<8x32xf32>, vector<32x128xf32>, vector<8x128xf32> -> vector<8x128xf32>
    %555 = arith.addf %553, %554 : vector<8x128xf32>
    %556 = arith.negf %555 : vector<8x128xf32>
    %557 = math.exp %556 : vector<8x128xf32>
    %cst_175 = arith.constant 1.000000e+00 : f32
    %558 = vector.broadcast %cst_175 : f32 to vector<8x128xf32>
    %559 = arith.addf %558, %557 : vector<8x128xf32>
    %560 = arith.divf %558, %559 : vector<8x128xf32>
    %561 = vector.extract_strided_slice %560 {offsets = [0, 0], sizes = [8, 32], strides = [1, 1]} : vector<8x128xf32> to vector<8x32xf32>
    %562 = vector.extract_strided_slice %560 {offsets = [0, 32], sizes = [8, 32], strides = [1, 1]} : vector<8x128xf32> to vector<8x32xf32>
    %563 = vector.extract_strided_slice %560 {offsets = [0, 64], sizes = [8, 32], strides = [1, 1]} : vector<8x128xf32> to vector<8x32xf32>
    %cst_176 = arith.constant 2.000000e+00 : f32
    %564 = vector.broadcast %cst_176 : f32 to vector<8x32xf32>
    %565 = arith.mulf %564, %563 : vector<8x32xf32>
    %cst_177 = arith.constant 1.000000e+00 : f32
    %566 = vector.broadcast %cst_177 : f32 to vector<8x32xf32>
    %567 = arith.subf %565, %566 : vector<8x32xf32>
    %568 = vector.extract_strided_slice %560 {offsets = [0, 96], sizes = [8, 32], strides = [1, 1]} : vector<8x128xf32> to vector<8x32xf32>
    %569 = arith.mulf %562, %544 : vector<8x32xf32>
    %570 = arith.mulf %561, %567 : vector<8x32xf32>
    %571 = arith.addf %569, %570 : vector<8x32xf32>
    %572 = math.tanh %571 : vector<8x32xf32>
    %573 = arith.mulf %568, %572 : vector<8x32xf32>
    %574 = arith.index_cast %c20_i32 : i32 to index
    %c0_178 = arith.constant 0 : index
    %c0_179 = arith.constant 0 : index
    %575 = vector.load %arg10[%574, %c0_178, %c0_179] : memref<21x8x32xf32, #tpu.memory_space<vmem>>, vector<1x8x32xf32>
    %576 = vector.shape_cast %575 : vector<1x8x32xf32> to vector<8x32xf32>
    %577 = vector.shape_cast %573 : vector<8x32xf32> to vector<1x8x32xf32>
    tpu.vector_store %arg10[%574, %c0_178, %c0_179], %577 {strides = array<i32>} : memref<21x8x32xf32, #tpu.memory_space<vmem>>, vector<1x8x32xf32>,
    %c21_i32 = arith.constant 21 : i32
    %c0_180 = arith.constant 0 : index
    %c0_181 = arith.constant 0 : index
    %c0_182 = arith.constant 0 : index
    %578 = vector.load %arg10[%c0_180, %c0_181, %c0_182] : memref<21x8x32xf32, #tpu.memory_space<vmem>>, vector<21x8x32xf32>
    %579 = vector.shape_cast %578 : vector<21x8x32xf32> to vector<168x32xf32>
    %c0_183 = arith.constant 0 : index
    %c0_184 = arith.constant 0 : index
    %580 = vector.load %arg4[%c0_183, %c0_184] : memref<32x128xf32, #tpu.memory_space<vmem>>, vector<32x128xf32>
    %cst_185 = arith.constant dense<0.000000e+00> : vector<168x128xf32>
    %581 = tpu.matmul %579, %580, %cst_185 {dimension_numbers = #tpu.dot_dimension_numbers<[1], [0], [0], [1], [0, 0, 1, 1], [], []>} : vector<168x32xf32>, vector<32x128xf32>, vector<168x128xf32> -> vector<168x128xf32>
    %c0_186 = arith.constant 0 : index
    %c0_187 = arith.constant 0 : index
    %582 = vector.load %arg6[%c0_186, %c0_187] : memref<1x128xf32, #tpu.memory_space<vmem>>, vector<1x128xf32>
    %583 = vector.broadcast %582 : vector<1x128xf32> to vector<168x128xf32>
    %584 = arith.addf %581, %583 : vector<168x128xf32>
    %585 = vector.shape_cast %584 : vector<168x128xf32> to vector<21x8x128xf32>
    %c0_188 = arith.constant 0 : index
    %c0_189 = arith.constant 0 : index
    %c0_190 = arith.constant 0 : index
    %586 = vector.load %arg12[%c0_188, %c0_189, %c0_190] : memref<21x8x128xf32, #tpu.memory_space<vmem>>, vector<21x8x128xf32>
    tpu.vector_store %arg12[%c0_188, %c0_189, %c0_190], %585 {strides = array<i32>} : memref<21x8x128xf32, #tpu.memory_space<vmem>>, vector<21x8x128xf32>,
    %c0_191 = arith.constant 0 : index
    %c0_192 = arith.constant 0 : index
    %587 = vector.load %arg5[%c0_191, %c0_192] : memref<32x128xf32, #tpu.memory_space<vmem>>, vector<32x128xf32>
    %cst_193 = arith.constant 0.000000e+00 : f32
    %588 = vector.broadcast %cst_193 : f32 to vector<8x32xf32>
    %cst_194 = arith.constant 0.000000e+00 : f32
    %589 = vector.broadcast %cst_194 : f32 to vector<8x32xf32>
    %c0_i32_195 = arith.constant 0 : i32
    %590 = arith.index_cast %c0_i32_195 : i32 to index
    %c0_196 = arith.constant 0 : index
    %c0_197 = arith.constant 0 : index
    %591 = vector.load %arg12[%590, %c0_196, %c0_197] : memref<21x8x128xf32, #tpu.memory_space<vmem>>, vector<1x8x128xf32>
    %592 = vector.shape_cast %591 : vector<1x8x128xf32> to vector<8x128xf32>
    %cst_198 = arith.constant dense<0.000000e+00> : vector<8x128xf32>
    %593 = tpu.matmul %588, %587, %cst_198 {dimension_numbers = #tpu.dot_dimension_numbers<[1], [0], [0], [1], [0, 0, 1, 1], [], []>} : vector<8x32xf32>, vector<32x128xf32>, vector<8x128xf32> -> vector<8x128xf32>
    %594 = arith.addf %592, %593 : vector<8x128xf32>
    %595 = arith.negf %594 : vector<8x128xf32>
    %596 = math.exp %595 : vector<8x128xf32>
    %cst_199 = arith.constant 1.000000e+00 : f32
    %597 = vector.broadcast %cst_199 : f32 to vector<8x128xf32>
    %598 = arith.addf %597, %596 : vector<8x128xf32>
    %599 = arith.divf %597, %598 : vector<8x128xf32>
    %600 = vector.extract_strided_slice %599 {offsets = [0, 0], sizes = [8, 32], strides = [1, 1]} : vector<8x128xf32> to vector<8x32xf32>
    %601 = vector.extract_strided_slice %599 {offsets = [0, 32], sizes = [8, 32], strides = [1, 1]} : vector<8x128xf32> to vector<8x32xf32>
    %602 = vector.extract_strided_slice %599 {offsets = [0, 64], sizes = [8, 32], strides = [1, 1]} : vector<8x128xf32> to vector<8x32xf32>
    %cst_200 = arith.constant 2.000000e+00 : f32
    %603 = vector.broadcast %cst_200 : f32 to vector<8x32xf32>
    %604 = arith.mulf %603, %602 : vector<8x32xf32>
    %cst_201 = arith.constant 1.000000e+00 : f32
    %605 = vector.broadcast %cst_201 : f32 to vector<8x32xf32>
    %606 = arith.subf %604, %605 : vector<8x32xf32>
    %607 = vector.extract_strided_slice %599 {offsets = [0, 96], sizes = [8, 32], strides = [1, 1]} : vector<8x128xf32> to vector<8x32xf32>
    %608 = arith.mulf %601, %589 : vector<8x32xf32>
    %609 = arith.mulf %600, %606 : vector<8x32xf32>
    %610 = arith.addf %608, %609 : vector<8x32xf32>
    %611 = math.tanh %610 : vector<8x32xf32>
    %612 = arith.mulf %607, %611 : vector<8x32xf32>
    %613 = arith.index_cast %c0_i32_195 : i32 to index
    %c0_202 = arith.constant 0 : index
    %c0_203 = arith.constant 0 : index
    %614 = vector.load %arg11[%613, %c0_202, %c0_203] : memref<21x8x32xf32, #tpu.memory_space<vmem>>, vector<1x8x32xf32>
    %615 = vector.shape_cast %614 : vector<1x8x32xf32> to vector<8x32xf32>
    %616 = vector.shape_cast %612 : vector<8x32xf32> to vector<1x8x32xf32>
    tpu.vector_store %arg11[%613, %c0_202, %c0_203], %616 {strides = array<i32>} : memref<21x8x32xf32, #tpu.memory_space<vmem>>, vector<1x8x32xf32>,
    %c1_i32_204 = arith.constant 1 : i32
    %617 = arith.index_cast %c1_i32_204 : i32 to index
    %c0_205 = arith.constant 0 : index
    %c0_206 = arith.constant 0 : index
    %618 = vector.load %arg12[%617, %c0_205, %c0_206] : memref<21x8x128xf32, #tpu.memory_space<vmem>>, vector<1x8x128xf32>
    %619 = vector.shape_cast %618 : vector<1x8x128xf32> to vector<8x128xf32>
    %cst_207 = arith.constant dense<0.000000e+00> : vector<8x128xf32>
    %620 = tpu.matmul %612, %587, %cst_207 {dimension_numbers = #tpu.dot_dimension_numbers<[1], [0], [0], [1], [0, 0, 1, 1], [], []>} : vector<8x32xf32>, vector<32x128xf32>, vector<8x128xf32> -> vector<8x128xf32>
    %621 = arith.addf %619, %620 : vector<8x128xf32>
    %622 = arith.negf %621 : vector<8x128xf32>
    %623 = math.exp %622 : vector<8x128xf32>
    %cst_208 = arith.constant 1.000000e+00 : f32
    %624 = vector.broadcast %cst_208 : f32 to vector<8x128xf32>
    %625 = arith.addf %624, %623 : vector<8x128xf32>
    %626 = arith.divf %624, %625 : vector<8x128xf32>
    %627 = vector.extract_strided_slice %626 {offsets = [0, 0], sizes = [8, 32], strides = [1, 1]} : vector<8x128xf32> to vector<8x32xf32>
    %628 = vector.extract_strided_slice %626 {offsets = [0, 32], sizes = [8, 32], strides = [1, 1]} : vector<8x128xf32> to vector<8x32xf32>
    %629 = vector.extract_strided_slice %626 {offsets = [0, 64], sizes = [8, 32], strides = [1, 1]} : vector<8x128xf32> to vector<8x32xf32>
    %cst_209 = arith.constant 2.000000e+00 : f32
    %630 = vector.broadcast %cst_209 : f32 to vector<8x32xf32>
    %631 = arith.mulf %630, %629 : vector<8x32xf32>
    %cst_210 = arith.constant 1.000000e+00 : f32
    %632 = vector.broadcast %cst_210 : f32 to vector<8x32xf32>
    %633 = arith.subf %631, %632 : vector<8x32xf32>
    %634 = vector.extract_strided_slice %626 {offsets = [0, 96], sizes = [8, 32], strides = [1, 1]} : vector<8x128xf32> to vector<8x32xf32>
    %635 = arith.mulf %628, %610 : vector<8x32xf32>
    %636 = arith.mulf %627, %633 : vector<8x32xf32>
    %637 = arith.addf %635, %636 : vector<8x32xf32>
    %638 = math.tanh %637 : vector<8x32xf32>
    %639 = arith.mulf %634, %638 : vector<8x32xf32>
    %640 = arith.index_cast %c1_i32_204 : i32 to index
    %c0_211 = arith.constant 0 : index
    %c0_212 = arith.constant 0 : index
    %641 = vector.load %arg11[%640, %c0_211, %c0_212] : memref<21x8x32xf32, #tpu.memory_space<vmem>>, vector<1x8x32xf32>
    %642 = vector.shape_cast %641 : vector<1x8x32xf32> to vector<8x32xf32>
    %643 = vector.shape_cast %639 : vector<8x32xf32> to vector<1x8x32xf32>
    tpu.vector_store %arg11[%640, %c0_211, %c0_212], %643 {strides = array<i32>} : memref<21x8x32xf32, #tpu.memory_space<vmem>>, vector<1x8x32xf32>,
    %c2_i32_213 = arith.constant 2 : i32
    %644 = arith.index_cast %c2_i32_213 : i32 to index
    %c0_214 = arith.constant 0 : index
    %c0_215 = arith.constant 0 : index
    %645 = vector.load %arg12[%644, %c0_214, %c0_215] : memref<21x8x128xf32, #tpu.memory_space<vmem>>, vector<1x8x128xf32>
    %646 = vector.shape_cast %645 : vector<1x8x128xf32> to vector<8x128xf32>
    %cst_216 = arith.constant dense<0.000000e+00> : vector<8x128xf32>
    %647 = tpu.matmul %639, %587, %cst_216 {dimension_numbers = #tpu.dot_dimension_numbers<[1], [0], [0], [1], [0, 0, 1, 1], [], []>} : vector<8x32xf32>, vector<32x128xf32>, vector<8x128xf32> -> vector<8x128xf32>
    %648 = arith.addf %646, %647 : vector<8x128xf32>
    %649 = arith.negf %648 : vector<8x128xf32>
    %650 = math.exp %649 : vector<8x128xf32>
    %cst_217 = arith.constant 1.000000e+00 : f32
    %651 = vector.broadcast %cst_217 : f32 to vector<8x128xf32>
    %652 = arith.addf %651, %650 : vector<8x128xf32>
    %653 = arith.divf %651, %652 : vector<8x128xf32>
    %654 = vector.extract_strided_slice %653 {offsets = [0, 0], sizes = [8, 32], strides = [1, 1]} : vector<8x128xf32> to vector<8x32xf32>
    %655 = vector.extract_strided_slice %653 {offsets = [0, 32], sizes = [8, 32], strides = [1, 1]} : vector<8x128xf32> to vector<8x32xf32>
    %656 = vector.extract_strided_slice %653 {offsets = [0, 64], sizes = [8, 32], strides = [1, 1]} : vector<8x128xf32> to vector<8x32xf32>
    %cst_218 = arith.constant 2.000000e+00 : f32
    %657 = vector.broadcast %cst_218 : f32 to vector<8x32xf32>
    %658 = arith.mulf %657, %656 : vector<8x32xf32>
    %cst_219 = arith.constant 1.000000e+00 : f32
    %659 = vector.broadcast %cst_219 : f32 to vector<8x32xf32>
    %660 = arith.subf %658, %659 : vector<8x32xf32>
    %661 = vector.extract_strided_slice %653 {offsets = [0, 96], sizes = [8, 32], strides = [1, 1]} : vector<8x128xf32> to vector<8x32xf32>
    %662 = arith.mulf %655, %637 : vector<8x32xf32>
    %663 = arith.mulf %654, %660 : vector<8x32xf32>
    %664 = arith.addf %662, %663 : vector<8x32xf32>
    %665 = math.tanh %664 : vector<8x32xf32>
    %666 = arith.mulf %661, %665 : vector<8x32xf32>
    %667 = arith.index_cast %c2_i32_213 : i32 to index
    %c0_220 = arith.constant 0 : index
    %c0_221 = arith.constant 0 : index
    %668 = vector.load %arg11[%667, %c0_220, %c0_221] : memref<21x8x32xf32, #tpu.memory_space<vmem>>, vector<1x8x32xf32>
    %669 = vector.shape_cast %668 : vector<1x8x32xf32> to vector<8x32xf32>
    %670 = vector.shape_cast %666 : vector<8x32xf32> to vector<1x8x32xf32>
    tpu.vector_store %arg11[%667, %c0_220, %c0_221], %670 {strides = array<i32>} : memref<21x8x32xf32, #tpu.memory_space<vmem>>, vector<1x8x32xf32>,
    %c3_i32_222 = arith.constant 3 : i32
    %671 = arith.index_cast %c3_i32_222 : i32 to index
    %c0_223 = arith.constant 0 : index
    %c0_224 = arith.constant 0 : index
    %672 = vector.load %arg12[%671, %c0_223, %c0_224] : memref<21x8x128xf32, #tpu.memory_space<vmem>>, vector<1x8x128xf32>
    %673 = vector.shape_cast %672 : vector<1x8x128xf32> to vector<8x128xf32>
    %cst_225 = arith.constant dense<0.000000e+00> : vector<8x128xf32>
    %674 = tpu.matmul %666, %587, %cst_225 {dimension_numbers = #tpu.dot_dimension_numbers<[1], [0], [0], [1], [0, 0, 1, 1], [], []>} : vector<8x32xf32>, vector<32x128xf32>, vector<8x128xf32> -> vector<8x128xf32>
    %675 = arith.addf %673, %674 : vector<8x128xf32>
    %676 = arith.negf %675 : vector<8x128xf32>
    %677 = math.exp %676 : vector<8x128xf32>
    %cst_226 = arith.constant 1.000000e+00 : f32
    %678 = vector.broadcast %cst_226 : f32 to vector<8x128xf32>
    %679 = arith.addf %678, %677 : vector<8x128xf32>
    %680 = arith.divf %678, %679 : vector<8x128xf32>
    %681 = vector.extract_strided_slice %680 {offsets = [0, 0], sizes = [8, 32], strides = [1, 1]} : vector<8x128xf32> to vector<8x32xf32>
    %682 = vector.extract_strided_slice %680 {offsets = [0, 32], sizes = [8, 32], strides = [1, 1]} : vector<8x128xf32> to vector<8x32xf32>
    %683 = vector.extract_strided_slice %680 {offsets = [0, 64], sizes = [8, 32], strides = [1, 1]} : vector<8x128xf32> to vector<8x32xf32>
    %cst_227 = arith.constant 2.000000e+00 : f32
    %684 = vector.broadcast %cst_227 : f32 to vector<8x32xf32>
    %685 = arith.mulf %684, %683 : vector<8x32xf32>
    %cst_228 = arith.constant 1.000000e+00 : f32
    %686 = vector.broadcast %cst_228 : f32 to vector<8x32xf32>
    %687 = arith.subf %685, %686 : vector<8x32xf32>
    %688 = vector.extract_strided_slice %680 {offsets = [0, 96], sizes = [8, 32], strides = [1, 1]} : vector<8x128xf32> to vector<8x32xf32>
    %689 = arith.mulf %682, %664 : vector<8x32xf32>
    %690 = arith.mulf %681, %687 : vector<8x32xf32>
    %691 = arith.addf %689, %690 : vector<8x32xf32>
    %692 = math.tanh %691 : vector<8x32xf32>
    %693 = arith.mulf %688, %692 : vector<8x32xf32>
    %694 = arith.index_cast %c3_i32_222 : i32 to index
    %c0_229 = arith.constant 0 : index
    %c0_230 = arith.constant 0 : index
    %695 = vector.load %arg11[%694, %c0_229, %c0_230] : memref<21x8x32xf32, #tpu.memory_space<vmem>>, vector<1x8x32xf32>
    %696 = vector.shape_cast %695 : vector<1x8x32xf32> to vector<8x32xf32>
    %697 = vector.shape_cast %693 : vector<8x32xf32> to vector<1x8x32xf32>
    tpu.vector_store %arg11[%694, %c0_229, %c0_230], %697 {strides = array<i32>} : memref<21x8x32xf32, #tpu.memory_space<vmem>>, vector<1x8x32xf32>,
    %c4_i32_231 = arith.constant 4 : i32
    %698 = arith.index_cast %c4_i32_231 : i32 to index
    %c0_232 = arith.constant 0 : index
    %c0_233 = arith.constant 0 : index
    %699 = vector.load %arg12[%698, %c0_232, %c0_233] : memref<21x8x128xf32, #tpu.memory_space<vmem>>, vector<1x8x128xf32>
    %700 = vector.shape_cast %699 : vector<1x8x128xf32> to vector<8x128xf32>
    %cst_234 = arith.constant dense<0.000000e+00> : vector<8x128xf32>
    %701 = tpu.matmul %693, %587, %cst_234 {dimension_numbers = #tpu.dot_dimension_numbers<[1], [0], [0], [1], [0, 0, 1, 1], [], []>} : vector<8x32xf32>, vector<32x128xf32>, vector<8x128xf32> -> vector<8x128xf32>
    %702 = arith.addf %700, %701 : vector<8x128xf32>
    %703 = arith.negf %702 : vector<8x128xf32>
    %704 = math.exp %703 : vector<8x128xf32>
    %cst_235 = arith.constant 1.000000e+00 : f32
    %705 = vector.broadcast %cst_235 : f32 to vector<8x128xf32>
    %706 = arith.addf %705, %704 : vector<8x128xf32>
    %707 = arith.divf %705, %706 : vector<8x128xf32>
    %708 = vector.extract_strided_slice %707 {offsets = [0, 0], sizes = [8, 32], strides = [1, 1]} : vector<8x128xf32> to vector<8x32xf32>
    %709 = vector.extract_strided_slice %707 {offsets = [0, 32], sizes = [8, 32], strides = [1, 1]} : vector<8x128xf32> to vector<8x32xf32>
    %710 = vector.extract_strided_slice %707 {offsets = [0, 64], sizes = [8, 32], strides = [1, 1]} : vector<8x128xf32> to vector<8x32xf32>
    %cst_236 = arith.constant 2.000000e+00 : f32
    %711 = vector.broadcast %cst_236 : f32 to vector<8x32xf32>
    %712 = arith.mulf %711, %710 : vector<8x32xf32>
    %cst_237 = arith.constant 1.000000e+00 : f32
    %713 = vector.broadcast %cst_237 : f32 to vector<8x32xf32>
    %714 = arith.subf %712, %713 : vector<8x32xf32>
    %715 = vector.extract_strided_slice %707 {offsets = [0, 96], sizes = [8, 32], strides = [1, 1]} : vector<8x128xf32> to vector<8x32xf32>
    %716 = arith.mulf %709, %691 : vector<8x32xf32>
    %717 = arith.mulf %708, %714 : vector<8x32xf32>
    %718 = arith.addf %716, %717 : vector<8x32xf32>
    %719 = math.tanh %718 : vector<8x32xf32>
    %720 = arith.mulf %715, %719 : vector<8x32xf32>
    %721 = arith.index_cast %c4_i32_231 : i32 to index
    %c0_238 = arith.constant 0 : index
    %c0_239 = arith.constant 0 : index
    %722 = vector.load %arg11[%721, %c0_238, %c0_239] : memref<21x8x32xf32, #tpu.memory_space<vmem>>, vector<1x8x32xf32>
    %723 = vector.shape_cast %722 : vector<1x8x32xf32> to vector<8x32xf32>
    %724 = vector.shape_cast %720 : vector<8x32xf32> to vector<1x8x32xf32>
    tpu.vector_store %arg11[%721, %c0_238, %c0_239], %724 {strides = array<i32>} : memref<21x8x32xf32, #tpu.memory_space<vmem>>, vector<1x8x32xf32>,
    %c5_i32_240 = arith.constant 5 : i32
    %725 = arith.index_cast %c5_i32_240 : i32 to index
    %c0_241 = arith.constant 0 : index
    %c0_242 = arith.constant 0 : index
    %726 = vector.load %arg12[%725, %c0_241, %c0_242] : memref<21x8x128xf32, #tpu.memory_space<vmem>>, vector<1x8x128xf32>
    %727 = vector.shape_cast %726 : vector<1x8x128xf32> to vector<8x128xf32>
    %cst_243 = arith.constant dense<0.000000e+00> : vector<8x128xf32>
    %728 = tpu.matmul %720, %587, %cst_243 {dimension_numbers = #tpu.dot_dimension_numbers<[1], [0], [0], [1], [0, 0, 1, 1], [], []>} : vector<8x32xf32>, vector<32x128xf32>, vector<8x128xf32> -> vector<8x128xf32>
    %729 = arith.addf %727, %728 : vector<8x128xf32>
    %730 = arith.negf %729 : vector<8x128xf32>
    %731 = math.exp %730 : vector<8x128xf32>
    %cst_244 = arith.constant 1.000000e+00 : f32
    %732 = vector.broadcast %cst_244 : f32 to vector<8x128xf32>
    %733 = arith.addf %732, %731 : vector<8x128xf32>
    %734 = arith.divf %732, %733 : vector<8x128xf32>
    %735 = vector.extract_strided_slice %734 {offsets = [0, 0], sizes = [8, 32], strides = [1, 1]} : vector<8x128xf32> to vector<8x32xf32>
    %736 = vector.extract_strided_slice %734 {offsets = [0, 32], sizes = [8, 32], strides = [1, 1]} : vector<8x128xf32> to vector<8x32xf32>
    %737 = vector.extract_strided_slice %734 {offsets = [0, 64], sizes = [8, 32], strides = [1, 1]} : vector<8x128xf32> to vector<8x32xf32>
    %cst_245 = arith.constant 2.000000e+00 : f32
    %738 = vector.broadcast %cst_245 : f32 to vector<8x32xf32>
    %739 = arith.mulf %738, %737 : vector<8x32xf32>
    %cst_246 = arith.constant 1.000000e+00 : f32
    %740 = vector.broadcast %cst_246 : f32 to vector<8x32xf32>
    %741 = arith.subf %739, %740 : vector<8x32xf32>
    %742 = vector.extract_strided_slice %734 {offsets = [0, 96], sizes = [8, 32], strides = [1, 1]} : vector<8x128xf32> to vector<8x32xf32>
    %743 = arith.mulf %736, %718 : vector<8x32xf32>
    %744 = arith.mulf %735, %741 : vector<8x32xf32>
    %745 = arith.addf %743, %744 : vector<8x32xf32>
    %746 = math.tanh %745 : vector<8x32xf32>
    %747 = arith.mulf %742, %746 : vector<8x32xf32>
    %748 = arith.index_cast %c5_i32_240 : i32 to index
    %c0_247 = arith.constant 0 : index
    %c0_248 = arith.constant 0 : index
    %749 = vector.load %arg11[%748, %c0_247, %c0_248] : memref<21x8x32xf32, #tpu.memory_space<vmem>>, vector<1x8x32xf32>
    %750 = vector.shape_cast %749 : vector<1x8x32xf32> to vector<8x32xf32>
    %751 = vector.shape_cast %747 : vector<8x32xf32> to vector<1x8x32xf32>
    tpu.vector_store %arg11[%748, %c0_247, %c0_248], %751 {strides = array<i32>} : memref<21x8x32xf32, #tpu.memory_space<vmem>>, vector<1x8x32xf32>,
    %c6_i32_249 = arith.constant 6 : i32
    %752 = arith.index_cast %c6_i32_249 : i32 to index
    %c0_250 = arith.constant 0 : index
    %c0_251 = arith.constant 0 : index
    %753 = vector.load %arg12[%752, %c0_250, %c0_251] : memref<21x8x128xf32, #tpu.memory_space<vmem>>, vector<1x8x128xf32>
    %754 = vector.shape_cast %753 : vector<1x8x128xf32> to vector<8x128xf32>
    %cst_252 = arith.constant dense<0.000000e+00> : vector<8x128xf32>
    %755 = tpu.matmul %747, %587, %cst_252 {dimension_numbers = #tpu.dot_dimension_numbers<[1], [0], [0], [1], [0, 0, 1, 1], [], []>} : vector<8x32xf32>, vector<32x128xf32>, vector<8x128xf32> -> vector<8x128xf32>
    %756 = arith.addf %754, %755 : vector<8x128xf32>
    %757 = arith.negf %756 : vector<8x128xf32>
    %758 = math.exp %757 : vector<8x128xf32>
    %cst_253 = arith.constant 1.000000e+00 : f32
    %759 = vector.broadcast %cst_253 : f32 to vector<8x128xf32>
    %760 = arith.addf %759, %758 : vector<8x128xf32>
    %761 = arith.divf %759, %760 : vector<8x128xf32>
    %762 = vector.extract_strided_slice %761 {offsets = [0, 0], sizes = [8, 32], strides = [1, 1]} : vector<8x128xf32> to vector<8x32xf32>
    %763 = vector.extract_strided_slice %761 {offsets = [0, 32], sizes = [8, 32], strides = [1, 1]} : vector<8x128xf32> to vector<8x32xf32>
    %764 = vector.extract_strided_slice %761 {offsets = [0, 64], sizes = [8, 32], strides = [1, 1]} : vector<8x128xf32> to vector<8x32xf32>
    %cst_254 = arith.constant 2.000000e+00 : f32
    %765 = vector.broadcast %cst_254 : f32 to vector<8x32xf32>
    %766 = arith.mulf %765, %764 : vector<8x32xf32>
    %cst_255 = arith.constant 1.000000e+00 : f32
    %767 = vector.broadcast %cst_255 : f32 to vector<8x32xf32>
    %768 = arith.subf %766, %767 : vector<8x32xf32>
    %769 = vector.extract_strided_slice %761 {offsets = [0, 96], sizes = [8, 32], strides = [1, 1]} : vector<8x128xf32> to vector<8x32xf32>
    %770 = arith.mulf %763, %745 : vector<8x32xf32>
    %771 = arith.mulf %762, %768 : vector<8x32xf32>
    %772 = arith.addf %770, %771 : vector<8x32xf32>
    %773 = math.tanh %772 : vector<8x32xf32>
    %774 = arith.mulf %769, %773 : vector<8x32xf32>
    %775 = arith.index_cast %c6_i32_249 : i32 to index
    %c0_256 = arith.constant 0 : index
    %c0_257 = arith.constant 0 : index
    %776 = vector.load %arg11[%775, %c0_256, %c0_257] : memref<21x8x32xf32, #tpu.memory_space<vmem>>, vector<1x8x32xf32>
    %777 = vector.shape_cast %776 : vector<1x8x32xf32> to vector<8x32xf32>
    %778 = vector.shape_cast %774 : vector<8x32xf32> to vector<1x8x32xf32>
    tpu.vector_store %arg11[%775, %c0_256, %c0_257], %778 {strides = array<i32>} : memref<21x8x32xf32, #tpu.memory_space<vmem>>, vector<1x8x32xf32>,
    %c7_i32_258 = arith.constant 7 : i32
    %779 = arith.index_cast %c7_i32_258 : i32 to index
    %c0_259 = arith.constant 0 : index
    %c0_260 = arith.constant 0 : index
    %780 = vector.load %arg12[%779, %c0_259, %c0_260] : memref<21x8x128xf32, #tpu.memory_space<vmem>>, vector<1x8x128xf32>
    %781 = vector.shape_cast %780 : vector<1x8x128xf32> to vector<8x128xf32>
    %cst_261 = arith.constant dense<0.000000e+00> : vector<8x128xf32>
    %782 = tpu.matmul %774, %587, %cst_261 {dimension_numbers = #tpu.dot_dimension_numbers<[1], [0], [0], [1], [0, 0, 1, 1], [], []>} : vector<8x32xf32>, vector<32x128xf32>, vector<8x128xf32> -> vector<8x128xf32>
    %783 = arith.addf %781, %782 : vector<8x128xf32>
    %784 = arith.negf %783 : vector<8x128xf32>
    %785 = math.exp %784 : vector<8x128xf32>
    %cst_262 = arith.constant 1.000000e+00 : f32
    %786 = vector.broadcast %cst_262 : f32 to vector<8x128xf32>
    %787 = arith.addf %786, %785 : vector<8x128xf32>
    %788 = arith.divf %786, %787 : vector<8x128xf32>
    %789 = vector.extract_strided_slice %788 {offsets = [0, 0], sizes = [8, 32], strides = [1, 1]} : vector<8x128xf32> to vector<8x32xf32>
    %790 = vector.extract_strided_slice %788 {offsets = [0, 32], sizes = [8, 32], strides = [1, 1]} : vector<8x128xf32> to vector<8x32xf32>
    %791 = vector.extract_strided_slice %788 {offsets = [0, 64], sizes = [8, 32], strides = [1, 1]} : vector<8x128xf32> to vector<8x32xf32>
    %cst_263 = arith.constant 2.000000e+00 : f32
    %792 = vector.broadcast %cst_263 : f32 to vector<8x32xf32>
    %793 = arith.mulf %792, %791 : vector<8x32xf32>
    %cst_264 = arith.constant 1.000000e+00 : f32
    %794 = vector.broadcast %cst_264 : f32 to vector<8x32xf32>
    %795 = arith.subf %793, %794 : vector<8x32xf32>
    %796 = vector.extract_strided_slice %788 {offsets = [0, 96], sizes = [8, 32], strides = [1, 1]} : vector<8x128xf32> to vector<8x32xf32>
    %797 = arith.mulf %790, %772 : vector<8x32xf32>
    %798 = arith.mulf %789, %795 : vector<8x32xf32>
    %799 = arith.addf %797, %798 : vector<8x32xf32>
    %800 = math.tanh %799 : vector<8x32xf32>
    %801 = arith.mulf %796, %800 : vector<8x32xf32>
    %802 = arith.index_cast %c7_i32_258 : i32 to index
    %c0_265 = arith.constant 0 : index
    %c0_266 = arith.constant 0 : index
    %803 = vector.load %arg11[%802, %c0_265, %c0_266] : memref<21x8x32xf32, #tpu.memory_space<vmem>>, vector<1x8x32xf32>
    %804 = vector.shape_cast %803 : vector<1x8x32xf32> to vector<8x32xf32>
    %805 = vector.shape_cast %801 : vector<8x32xf32> to vector<1x8x32xf32>
    tpu.vector_store %arg11[%802, %c0_265, %c0_266], %805 {strides = array<i32>} : memref<21x8x32xf32, #tpu.memory_space<vmem>>, vector<1x8x32xf32>,
    %c8_i32_267 = arith.constant 8 : i32
    %806 = arith.index_cast %c8_i32_267 : i32 to index
    %c0_268 = arith.constant 0 : index
    %c0_269 = arith.constant 0 : index
    %807 = vector.load %arg12[%806, %c0_268, %c0_269] : memref<21x8x128xf32, #tpu.memory_space<vmem>>, vector<1x8x128xf32>
    %808 = vector.shape_cast %807 : vector<1x8x128xf32> to vector<8x128xf32>
    %cst_270 = arith.constant dense<0.000000e+00> : vector<8x128xf32>
    %809 = tpu.matmul %801, %587, %cst_270 {dimension_numbers = #tpu.dot_dimension_numbers<[1], [0], [0], [1], [0, 0, 1, 1], [], []>} : vector<8x32xf32>, vector<32x128xf32>, vector<8x128xf32> -> vector<8x128xf32>
    %810 = arith.addf %808, %809 : vector<8x128xf32>
    %811 = arith.negf %810 : vector<8x128xf32>
    %812 = math.exp %811 : vector<8x128xf32>
    %cst_271 = arith.constant 1.000000e+00 : f32
    %813 = vector.broadcast %cst_271 : f32 to vector<8x128xf32>
    %814 = arith.addf %813, %812 : vector<8x128xf32>
    %815 = arith.divf %813, %814 : vector<8x128xf32>
    %816 = vector.extract_strided_slice %815 {offsets = [0, 0], sizes = [8, 32], strides = [1, 1]} : vector<8x128xf32> to vector<8x32xf32>
    %817 = vector.extract_strided_slice %815 {offsets = [0, 32], sizes = [8, 32], strides = [1, 1]} : vector<8x128xf32> to vector<8x32xf32>
    %818 = vector.extract_strided_slice %815 {offsets = [0, 64], sizes = [8, 32], strides = [1, 1]} : vector<8x128xf32> to vector<8x32xf32>
    %cst_272 = arith.constant 2.000000e+00 : f32
    %819 = vector.broadcast %cst_272 : f32 to vector<8x32xf32>
    %820 = arith.mulf %819, %818 : vector<8x32xf32>
    %cst_273 = arith.constant 1.000000e+00 : f32
    %821 = vector.broadcast %cst_273 : f32 to vector<8x32xf32>
    %822 = arith.subf %820, %821 : vector<8x32xf32>
    %823 = vector.extract_strided_slice %815 {offsets = [0, 96], sizes = [8, 32], strides = [1, 1]} : vector<8x128xf32> to vector<8x32xf32>
    %824 = arith.mulf %817, %799 : vector<8x32xf32>
    %825 = arith.mulf %816, %822 : vector<8x32xf32>
    %826 = arith.addf %824, %825 : vector<8x32xf32>
    %827 = math.tanh %826 : vector<8x32xf32>
    %828 = arith.mulf %823, %827 : vector<8x32xf32>
    %829 = arith.index_cast %c8_i32_267 : i32 to index
    %c0_274 = arith.constant 0 : index
    %c0_275 = arith.constant 0 : index
    %830 = vector.load %arg11[%829, %c0_274, %c0_275] : memref<21x8x32xf32, #tpu.memory_space<vmem>>, vector<1x8x32xf32>
    %831 = vector.shape_cast %830 : vector<1x8x32xf32> to vector<8x32xf32>
    %832 = vector.shape_cast %828 : vector<8x32xf32> to vector<1x8x32xf32>
    tpu.vector_store %arg11[%829, %c0_274, %c0_275], %832 {strides = array<i32>} : memref<21x8x32xf32, #tpu.memory_space<vmem>>, vector<1x8x32xf32>,
    %c9_i32_276 = arith.constant 9 : i32
    %833 = arith.index_cast %c9_i32_276 : i32 to index
    %c0_277 = arith.constant 0 : index
    %c0_278 = arith.constant 0 : index
    %834 = vector.load %arg12[%833, %c0_277, %c0_278] : memref<21x8x128xf32, #tpu.memory_space<vmem>>, vector<1x8x128xf32>
    %835 = vector.shape_cast %834 : vector<1x8x128xf32> to vector<8x128xf32>
    %cst_279 = arith.constant dense<0.000000e+00> : vector<8x128xf32>
    %836 = tpu.matmul %828, %587, %cst_279 {dimension_numbers = #tpu.dot_dimension_numbers<[1], [0], [0], [1], [0, 0, 1, 1], [], []>} : vector<8x32xf32>, vector<32x128xf32>, vector<8x128xf32> -> vector<8x128xf32>
    %837 = arith.addf %835, %836 : vector<8x128xf32>
    %838 = arith.negf %837 : vector<8x128xf32>
    %839 = math.exp %838 : vector<8x128xf32>
    %cst_280 = arith.constant 1.000000e+00 : f32
    %840 = vector.broadcast %cst_280 : f32 to vector<8x128xf32>
    %841 = arith.addf %840, %839 : vector<8x128xf32>
    %842 = arith.divf %840, %841 : vector<8x128xf32>
    %843 = vector.extract_strided_slice %842 {offsets = [0, 0], sizes = [8, 32], strides = [1, 1]} : vector<8x128xf32> to vector<8x32xf32>
    %844 = vector.extract_strided_slice %842 {offsets = [0, 32], sizes = [8, 32], strides = [1, 1]} : vector<8x128xf32> to vector<8x32xf32>
    %845 = vector.extract_strided_slice %842 {offsets = [0, 64], sizes = [8, 32], strides = [1, 1]} : vector<8x128xf32> to vector<8x32xf32>
    %cst_281 = arith.constant 2.000000e+00 : f32
    %846 = vector.broadcast %cst_281 : f32 to vector<8x32xf32>
    %847 = arith.mulf %846, %845 : vector<8x32xf32>
    %cst_282 = arith.constant 1.000000e+00 : f32
    %848 = vector.broadcast %cst_282 : f32 to vector<8x32xf32>
    %849 = arith.subf %847, %848 : vector<8x32xf32>
    %850 = vector.extract_strided_slice %842 {offsets = [0, 96], sizes = [8, 32], strides = [1, 1]} : vector<8x128xf32> to vector<8x32xf32>
    %851 = arith.mulf %844, %826 : vector<8x32xf32>
    %852 = arith.mulf %843, %849 : vector<8x32xf32>
    %853 = arith.addf %851, %852 : vector<8x32xf32>
    %854 = math.tanh %853 : vector<8x32xf32>
    %855 = arith.mulf %850, %854 : vector<8x32xf32>
    %856 = arith.index_cast %c9_i32_276 : i32 to index
    %c0_283 = arith.constant 0 : index
    %c0_284 = arith.constant 0 : index
    %857 = vector.load %arg11[%856, %c0_283, %c0_284] : memref<21x8x32xf32, #tpu.memory_space<vmem>>, vector<1x8x32xf32>
    %858 = vector.shape_cast %857 : vector<1x8x32xf32> to vector<8x32xf32>
    %859 = vector.shape_cast %855 : vector<8x32xf32> to vector<1x8x32xf32>
    tpu.vector_store %arg11[%856, %c0_283, %c0_284], %859 {strides = array<i32>} : memref<21x8x32xf32, #tpu.memory_space<vmem>>, vector<1x8x32xf32>,
    %c10_i32_285 = arith.constant 10 : i32
    %860 = arith.index_cast %c10_i32_285 : i32 to index
    %c0_286 = arith.constant 0 : index
    %c0_287 = arith.constant 0 : index
    %861 = vector.load %arg12[%860, %c0_286, %c0_287] : memref<21x8x128xf32, #tpu.memory_space<vmem>>, vector<1x8x128xf32>
    %862 = vector.shape_cast %861 : vector<1x8x128xf32> to vector<8x128xf32>
    %cst_288 = arith.constant dense<0.000000e+00> : vector<8x128xf32>
    %863 = tpu.matmul %855, %587, %cst_288 {dimension_numbers = #tpu.dot_dimension_numbers<[1], [0], [0], [1], [0, 0, 1, 1], [], []>} : vector<8x32xf32>, vector<32x128xf32>, vector<8x128xf32> -> vector<8x128xf32>
    %864 = arith.addf %862, %863 : vector<8x128xf32>
    %865 = arith.negf %864 : vector<8x128xf32>
    %866 = math.exp %865 : vector<8x128xf32>
    %cst_289 = arith.constant 1.000000e+00 : f32
    %867 = vector.broadcast %cst_289 : f32 to vector<8x128xf32>
    %868 = arith.addf %867, %866 : vector<8x128xf32>
    %869 = arith.divf %867, %868 : vector<8x128xf32>
    %870 = vector.extract_strided_slice %869 {offsets = [0, 0], sizes = [8, 32], strides = [1, 1]} : vector<8x128xf32> to vector<8x32xf32>
    %871 = vector.extract_strided_slice %869 {offsets = [0, 32], sizes = [8, 32], strides = [1, 1]} : vector<8x128xf32> to vector<8x32xf32>
    %872 = vector.extract_strided_slice %869 {offsets = [0, 64], sizes = [8, 32], strides = [1, 1]} : vector<8x128xf32> to vector<8x32xf32>
    %cst_290 = arith.constant 2.000000e+00 : f32
    %873 = vector.broadcast %cst_290 : f32 to vector<8x32xf32>
    %874 = arith.mulf %873, %872 : vector<8x32xf32>
    %cst_291 = arith.constant 1.000000e+00 : f32
    %875 = vector.broadcast %cst_291 : f32 to vector<8x32xf32>
    %876 = arith.subf %874, %875 : vector<8x32xf32>
    %877 = vector.extract_strided_slice %869 {offsets = [0, 96], sizes = [8, 32], strides = [1, 1]} : vector<8x128xf32> to vector<8x32xf32>
    %878 = arith.mulf %871, %853 : vector<8x32xf32>
    %879 = arith.mulf %870, %876 : vector<8x32xf32>
    %880 = arith.addf %878, %879 : vector<8x32xf32>
    %881 = math.tanh %880 : vector<8x32xf32>
    %882 = arith.mulf %877, %881 : vector<8x32xf32>
    %883 = arith.index_cast %c10_i32_285 : i32 to index
    %c0_292 = arith.constant 0 : index
    %c0_293 = arith.constant 0 : index
    %884 = vector.load %arg11[%883, %c0_292, %c0_293] : memref<21x8x32xf32, #tpu.memory_space<vmem>>, vector<1x8x32xf32>
    %885 = vector.shape_cast %884 : vector<1x8x32xf32> to vector<8x32xf32>
    %886 = vector.shape_cast %882 : vector<8x32xf32> to vector<1x8x32xf32>
    tpu.vector_store %arg11[%883, %c0_292, %c0_293], %886 {strides = array<i32>} : memref<21x8x32xf32, #tpu.memory_space<vmem>>, vector<1x8x32xf32>,
    %c11_i32_294 = arith.constant 11 : i32
    %887 = arith.index_cast %c11_i32_294 : i32 to index
    %c0_295 = arith.constant 0 : index
    %c0_296 = arith.constant 0 : index
    %888 = vector.load %arg12[%887, %c0_295, %c0_296] : memref<21x8x128xf32, #tpu.memory_space<vmem>>, vector<1x8x128xf32>
    %889 = vector.shape_cast %888 : vector<1x8x128xf32> to vector<8x128xf32>
    %cst_297 = arith.constant dense<0.000000e+00> : vector<8x128xf32>
    %890 = tpu.matmul %882, %587, %cst_297 {dimension_numbers = #tpu.dot_dimension_numbers<[1], [0], [0], [1], [0, 0, 1, 1], [], []>} : vector<8x32xf32>, vector<32x128xf32>, vector<8x128xf32> -> vector<8x128xf32>
    %891 = arith.addf %889, %890 : vector<8x128xf32>
    %892 = arith.negf %891 : vector<8x128xf32>
    %893 = math.exp %892 : vector<8x128xf32>
    %cst_298 = arith.constant 1.000000e+00 : f32
    %894 = vector.broadcast %cst_298 : f32 to vector<8x128xf32>
    %895 = arith.addf %894, %893 : vector<8x128xf32>
    %896 = arith.divf %894, %895 : vector<8x128xf32>
    %897 = vector.extract_strided_slice %896 {offsets = [0, 0], sizes = [8, 32], strides = [1, 1]} : vector<8x128xf32> to vector<8x32xf32>
    %898 = vector.extract_strided_slice %896 {offsets = [0, 32], sizes = [8, 32], strides = [1, 1]} : vector<8x128xf32> to vector<8x32xf32>
    %899 = vector.extract_strided_slice %896 {offsets = [0, 64], sizes = [8, 32], strides = [1, 1]} : vector<8x128xf32> to vector<8x32xf32>
    %cst_299 = arith.constant 2.000000e+00 : f32
    %900 = vector.broadcast %cst_299 : f32 to vector<8x32xf32>
    %901 = arith.mulf %900, %899 : vector<8x32xf32>
    %cst_300 = arith.constant 1.000000e+00 : f32
    %902 = vector.broadcast %cst_300 : f32 to vector<8x32xf32>
    %903 = arith.subf %901, %902 : vector<8x32xf32>
    %904 = vector.extract_strided_slice %896 {offsets = [0, 96], sizes = [8, 32], strides = [1, 1]} : vector<8x128xf32> to vector<8x32xf32>
    %905 = arith.mulf %898, %880 : vector<8x32xf32>
    %906 = arith.mulf %897, %903 : vector<8x32xf32>
    %907 = arith.addf %905, %906 : vector<8x32xf32>
    %908 = math.tanh %907 : vector<8x32xf32>
    %909 = arith.mulf %904, %908 : vector<8x32xf32>
    %910 = arith.index_cast %c11_i32_294 : i32 to index
    %c0_301 = arith.constant 0 : index
    %c0_302 = arith.constant 0 : index
    %911 = vector.load %arg11[%910, %c0_301, %c0_302] : memref<21x8x32xf32, #tpu.memory_space<vmem>>, vector<1x8x32xf32>
    %912 = vector.shape_cast %911 : vector<1x8x32xf32> to vector<8x32xf32>
    %913 = vector.shape_cast %909 : vector<8x32xf32> to vector<1x8x32xf32>
    tpu.vector_store %arg11[%910, %c0_301, %c0_302], %913 {strides = array<i32>} : memref<21x8x32xf32, #tpu.memory_space<vmem>>, vector<1x8x32xf32>,
    %c12_i32_303 = arith.constant 12 : i32
    %914 = arith.index_cast %c12_i32_303 : i32 to index
    %c0_304 = arith.constant 0 : index
    %c0_305 = arith.constant 0 : index
    %915 = vector.load %arg12[%914, %c0_304, %c0_305] : memref<21x8x128xf32, #tpu.memory_space<vmem>>, vector<1x8x128xf32>
    %916 = vector.shape_cast %915 : vector<1x8x128xf32> to vector<8x128xf32>
    %cst_306 = arith.constant dense<0.000000e+00> : vector<8x128xf32>
    %917 = tpu.matmul %909, %587, %cst_306 {dimension_numbers = #tpu.dot_dimension_numbers<[1], [0], [0], [1], [0, 0, 1, 1], [], []>} : vector<8x32xf32>, vector<32x128xf32>, vector<8x128xf32> -> vector<8x128xf32>
    %918 = arith.addf %916, %917 : vector<8x128xf32>
    %919 = arith.negf %918 : vector<8x128xf32>
    %920 = math.exp %919 : vector<8x128xf32>
    %cst_307 = arith.constant 1.000000e+00 : f32
    %921 = vector.broadcast %cst_307 : f32 to vector<8x128xf32>
    %922 = arith.addf %921, %920 : vector<8x128xf32>
    %923 = arith.divf %921, %922 : vector<8x128xf32>
    %924 = vector.extract_strided_slice %923 {offsets = [0, 0], sizes = [8, 32], strides = [1, 1]} : vector<8x128xf32> to vector<8x32xf32>
    %925 = vector.extract_strided_slice %923 {offsets = [0, 32], sizes = [8, 32], strides = [1, 1]} : vector<8x128xf32> to vector<8x32xf32>
    %926 = vector.extract_strided_slice %923 {offsets = [0, 64], sizes = [8, 32], strides = [1, 1]} : vector<8x128xf32> to vector<8x32xf32>
    %cst_308 = arith.constant 2.000000e+00 : f32
    %927 = vector.broadcast %cst_308 : f32 to vector<8x32xf32>
    %928 = arith.mulf %927, %926 : vector<8x32xf32>
    %cst_309 = arith.constant 1.000000e+00 : f32
    %929 = vector.broadcast %cst_309 : f32 to vector<8x32xf32>
    %930 = arith.subf %928, %929 : vector<8x32xf32>
    %931 = vector.extract_strided_slice %923 {offsets = [0, 96], sizes = [8, 32], strides = [1, 1]} : vector<8x128xf32> to vector<8x32xf32>
    %932 = arith.mulf %925, %907 : vector<8x32xf32>
    %933 = arith.mulf %924, %930 : vector<8x32xf32>
    %934 = arith.addf %932, %933 : vector<8x32xf32>
    %935 = math.tanh %934 : vector<8x32xf32>
    %936 = arith.mulf %931, %935 : vector<8x32xf32>
    %937 = arith.index_cast %c12_i32_303 : i32 to index
    %c0_310 = arith.constant 0 : index
    %c0_311 = arith.constant 0 : index
    %938 = vector.load %arg11[%937, %c0_310, %c0_311] : memref<21x8x32xf32, #tpu.memory_space<vmem>>, vector<1x8x32xf32>
    %939 = vector.shape_cast %938 : vector<1x8x32xf32> to vector<8x32xf32>
    %940 = vector.shape_cast %936 : vector<8x32xf32> to vector<1x8x32xf32>
    tpu.vector_store %arg11[%937, %c0_310, %c0_311], %940 {strides = array<i32>} : memref<21x8x32xf32, #tpu.memory_space<vmem>>, vector<1x8x32xf32>,
    %c13_i32_312 = arith.constant 13 : i32
    %941 = arith.index_cast %c13_i32_312 : i32 to index
    %c0_313 = arith.constant 0 : index
    %c0_314 = arith.constant 0 : index
    %942 = vector.load %arg12[%941, %c0_313, %c0_314] : memref<21x8x128xf32, #tpu.memory_space<vmem>>, vector<1x8x128xf32>
    %943 = vector.shape_cast %942 : vector<1x8x128xf32> to vector<8x128xf32>
    %cst_315 = arith.constant dense<0.000000e+00> : vector<8x128xf32>
    %944 = tpu.matmul %936, %587, %cst_315 {dimension_numbers = #tpu.dot_dimension_numbers<[1], [0], [0], [1], [0, 0, 1, 1], [], []>} : vector<8x32xf32>, vector<32x128xf32>, vector<8x128xf32> -> vector<8x128xf32>
    %945 = arith.addf %943, %944 : vector<8x128xf32>
    %946 = arith.negf %945 : vector<8x128xf32>
    %947 = math.exp %946 : vector<8x128xf32>
    %cst_316 = arith.constant 1.000000e+00 : f32
    %948 = vector.broadcast %cst_316 : f32 to vector<8x128xf32>
    %949 = arith.addf %948, %947 : vector<8x128xf32>
    %950 = arith.divf %948, %949 : vector<8x128xf32>
    %951 = vector.extract_strided_slice %950 {offsets = [0, 0], sizes = [8, 32], strides = [1, 1]} : vector<8x128xf32> to vector<8x32xf32>
    %952 = vector.extract_strided_slice %950 {offsets = [0, 32], sizes = [8, 32], strides = [1, 1]} : vector<8x128xf32> to vector<8x32xf32>
    %953 = vector.extract_strided_slice %950 {offsets = [0, 64], sizes = [8, 32], strides = [1, 1]} : vector<8x128xf32> to vector<8x32xf32>
    %cst_317 = arith.constant 2.000000e+00 : f32
    %954 = vector.broadcast %cst_317 : f32 to vector<8x32xf32>
    %955 = arith.mulf %954, %953 : vector<8x32xf32>
    %cst_318 = arith.constant 1.000000e+00 : f32
    %956 = vector.broadcast %cst_318 : f32 to vector<8x32xf32>
    %957 = arith.subf %955, %956 : vector<8x32xf32>
    %958 = vector.extract_strided_slice %950 {offsets = [0, 96], sizes = [8, 32], strides = [1, 1]} : vector<8x128xf32> to vector<8x32xf32>
    %959 = arith.mulf %952, %934 : vector<8x32xf32>
    %960 = arith.mulf %951, %957 : vector<8x32xf32>
    %961 = arith.addf %959, %960 : vector<8x32xf32>
    %962 = math.tanh %961 : vector<8x32xf32>
    %963 = arith.mulf %958, %962 : vector<8x32xf32>
    %964 = arith.index_cast %c13_i32_312 : i32 to index
    %c0_319 = arith.constant 0 : index
    %c0_320 = arith.constant 0 : index
    %965 = vector.load %arg11[%964, %c0_319, %c0_320] : memref<21x8x32xf32, #tpu.memory_space<vmem>>, vector<1x8x32xf32>
    %966 = vector.shape_cast %965 : vector<1x8x32xf32> to vector<8x32xf32>
    %967 = vector.shape_cast %963 : vector<8x32xf32> to vector<1x8x32xf32>
    tpu.vector_store %arg11[%964, %c0_319, %c0_320], %967 {strides = array<i32>} : memref<21x8x32xf32, #tpu.memory_space<vmem>>, vector<1x8x32xf32>,
    %c14_i32_321 = arith.constant 14 : i32
    %968 = arith.index_cast %c14_i32_321 : i32 to index
    %c0_322 = arith.constant 0 : index
    %c0_323 = arith.constant 0 : index
    %969 = vector.load %arg12[%968, %c0_322, %c0_323] : memref<21x8x128xf32, #tpu.memory_space<vmem>>, vector<1x8x128xf32>
    %970 = vector.shape_cast %969 : vector<1x8x128xf32> to vector<8x128xf32>
    %cst_324 = arith.constant dense<0.000000e+00> : vector<8x128xf32>
    %971 = tpu.matmul %963, %587, %cst_324 {dimension_numbers = #tpu.dot_dimension_numbers<[1], [0], [0], [1], [0, 0, 1, 1], [], []>} : vector<8x32xf32>, vector<32x128xf32>, vector<8x128xf32> -> vector<8x128xf32>
    %972 = arith.addf %970, %971 : vector<8x128xf32>
    %973 = arith.negf %972 : vector<8x128xf32>
    %974 = math.exp %973 : vector<8x128xf32>
    %cst_325 = arith.constant 1.000000e+00 : f32
    %975 = vector.broadcast %cst_325 : f32 to vector<8x128xf32>
    %976 = arith.addf %975, %974 : vector<8x128xf32>
    %977 = arith.divf %975, %976 : vector<8x128xf32>
    %978 = vector.extract_strided_slice %977 {offsets = [0, 0], sizes = [8, 32], strides = [1, 1]} : vector<8x128xf32> to vector<8x32xf32>
    %979 = vector.extract_strided_slice %977 {offsets = [0, 32], sizes = [8, 32], strides = [1, 1]} : vector<8x128xf32> to vector<8x32xf32>
    %980 = vector.extract_strided_slice %977 {offsets = [0, 64], sizes = [8, 32], strides = [1, 1]} : vector<8x128xf32> to vector<8x32xf32>
    %cst_326 = arith.constant 2.000000e+00 : f32
    %981 = vector.broadcast %cst_326 : f32 to vector<8x32xf32>
    %982 = arith.mulf %981, %980 : vector<8x32xf32>
    %cst_327 = arith.constant 1.000000e+00 : f32
    %983 = vector.broadcast %cst_327 : f32 to vector<8x32xf32>
    %984 = arith.subf %982, %983 : vector<8x32xf32>
    %985 = vector.extract_strided_slice %977 {offsets = [0, 96], sizes = [8, 32], strides = [1, 1]} : vector<8x128xf32> to vector<8x32xf32>
    %986 = arith.mulf %979, %961 : vector<8x32xf32>
    %987 = arith.mulf %978, %984 : vector<8x32xf32>
    %988 = arith.addf %986, %987 : vector<8x32xf32>
    %989 = math.tanh %988 : vector<8x32xf32>
    %990 = arith.mulf %985, %989 : vector<8x32xf32>
    %991 = arith.index_cast %c14_i32_321 : i32 to index
    %c0_328 = arith.constant 0 : index
    %c0_329 = arith.constant 0 : index
    %992 = vector.load %arg11[%991, %c0_328, %c0_329] : memref<21x8x32xf32, #tpu.memory_space<vmem>>, vector<1x8x32xf32>
    %993 = vector.shape_cast %992 : vector<1x8x32xf32> to vector<8x32xf32>
    %994 = vector.shape_cast %990 : vector<8x32xf32> to vector<1x8x32xf32>
    tpu.vector_store %arg11[%991, %c0_328, %c0_329], %994 {strides = array<i32>} : memref<21x8x32xf32, #tpu.memory_space<vmem>>, vector<1x8x32xf32>,
    %c15_i32_330 = arith.constant 15 : i32
    %995 = arith.index_cast %c15_i32_330 : i32 to index
    %c0_331 = arith.constant 0 : index
    %c0_332 = arith.constant 0 : index
    %996 = vector.load %arg12[%995, %c0_331, %c0_332] : memref<21x8x128xf32, #tpu.memory_space<vmem>>, vector<1x8x128xf32>
    %997 = vector.shape_cast %996 : vector<1x8x128xf32> to vector<8x128xf32>
    %cst_333 = arith.constant dense<0.000000e+00> : vector<8x128xf32>
    %998 = tpu.matmul %990, %587, %cst_333 {dimension_numbers = #tpu.dot_dimension_numbers<[1], [0], [0], [1], [0, 0, 1, 1], [], []>} : vector<8x32xf32>, vector<32x128xf32>, vector<8x128xf32> -> vector<8x128xf32>
    %999 = arith.addf %997, %998 : vector<8x128xf32>
    %1000 = arith.negf %999 : vector<8x128xf32>
    %1001 = math.exp %1000 : vector<8x128xf32>
    %cst_334 = arith.constant 1.000000e+00 : f32
    %1002 = vector.broadcast %cst_334 : f32 to vector<8x128xf32>
    %1003 = arith.addf %1002, %1001 : vector<8x128xf32>
    %1004 = arith.divf %1002, %1003 : vector<8x128xf32>
    %1005 = vector.extract_strided_slice %1004 {offsets = [0, 0], sizes = [8, 32], strides = [1, 1]} : vector<8x128xf32> to vector<8x32xf32>
    %1006 = vector.extract_strided_slice %1004 {offsets = [0, 32], sizes = [8, 32], strides = [1, 1]} : vector<8x128xf32> to vector<8x32xf32>
    %1007 = vector.extract_strided_slice %1004 {offsets = [0, 64], sizes = [8, 32], strides = [1, 1]} : vector<8x128xf32> to vector<8x32xf32>
    %cst_335 = arith.constant 2.000000e+00 : f32
    %1008 = vector.broadcast %cst_335 : f32 to vector<8x32xf32>
    %1009 = arith.mulf %1008, %1007 : vector<8x32xf32>
    %cst_336 = arith.constant 1.000000e+00 : f32
    %1010 = vector.broadcast %cst_336 : f32 to vector<8x32xf32>
    %1011 = arith.subf %1009, %1010 : vector<8x32xf32>
    %1012 = vector.extract_strided_slice %1004 {offsets = [0, 96], sizes = [8, 32], strides = [1, 1]} : vector<8x128xf32> to vector<8x32xf32>
    %1013 = arith.mulf %1006, %988 : vector<8x32xf32>
    %1014 = arith.mulf %1005, %1011 : vector<8x32xf32>
    %1015 = arith.addf %1013, %1014 : vector<8x32xf32>
    %1016 = math.tanh %1015 : vector<8x32xf32>
    %1017 = arith.mulf %1012, %1016 : vector<8x32xf32>
    %1018 = arith.index_cast %c15_i32_330 : i32 to index
    %c0_337 = arith.constant 0 : index
    %c0_338 = arith.constant 0 : index
    %1019 = vector.load %arg11[%1018, %c0_337, %c0_338] : memref<21x8x32xf32, #tpu.memory_space<vmem>>, vector<1x8x32xf32>
    %1020 = vector.shape_cast %1019 : vector<1x8x32xf32> to vector<8x32xf32>
    %1021 = vector.shape_cast %1017 : vector<8x32xf32> to vector<1x8x32xf32>
    tpu.vector_store %arg11[%1018, %c0_337, %c0_338], %1021 {strides = array<i32>} : memref<21x8x32xf32, #tpu.memory_space<vmem>>, vector<1x8x32xf32>,
    %c16_i32_339 = arith.constant 16 : i32
    %1022 = arith.index_cast %c16_i32_339 : i32 to index
    %c0_340 = arith.constant 0 : index
    %c0_341 = arith.constant 0 : index
    %1023 = vector.load %arg12[%1022, %c0_340, %c0_341] : memref<21x8x128xf32, #tpu.memory_space<vmem>>, vector<1x8x128xf32>
    %1024 = vector.shape_cast %1023 : vector<1x8x128xf32> to vector<8x128xf32>
    %cst_342 = arith.constant dense<0.000000e+00> : vector<8x128xf32>
    %1025 = tpu.matmul %1017, %587, %cst_342 {dimension_numbers = #tpu.dot_dimension_numbers<[1], [0], [0], [1], [0, 0, 1, 1], [], []>} : vector<8x32xf32>, vector<32x128xf32>, vector<8x128xf32> -> vector<8x128xf32>
    %1026 = arith.addf %1024, %1025 : vector<8x128xf32>
    %1027 = arith.negf %1026 : vector<8x128xf32>
    %1028 = math.exp %1027 : vector<8x128xf32>
    %cst_343 = arith.constant 1.000000e+00 : f32
    %1029 = vector.broadcast %cst_343 : f32 to vector<8x128xf32>
    %1030 = arith.addf %1029, %1028 : vector<8x128xf32>
    %1031 = arith.divf %1029, %1030 : vector<8x128xf32>
    %1032 = vector.extract_strided_slice %1031 {offsets = [0, 0], sizes = [8, 32], strides = [1, 1]} : vector<8x128xf32> to vector<8x32xf32>
    %1033 = vector.extract_strided_slice %1031 {offsets = [0, 32], sizes = [8, 32], strides = [1, 1]} : vector<8x128xf32> to vector<8x32xf32>
    %1034 = vector.extract_strided_slice %1031 {offsets = [0, 64], sizes = [8, 32], strides = [1, 1]} : vector<8x128xf32> to vector<8x32xf32>
    %cst_344 = arith.constant 2.000000e+00 : f32
    %1035 = vector.broadcast %cst_344 : f32 to vector<8x32xf32>
    %1036 = arith.mulf %1035, %1034 : vector<8x32xf32>
    %cst_345 = arith.constant 1.000000e+00 : f32
    %1037 = vector.broadcast %cst_345 : f32 to vector<8x32xf32>
    %1038 = arith.subf %1036, %1037 : vector<8x32xf32>
    %1039 = vector.extract_strided_slice %1031 {offsets = [0, 96], sizes = [8, 32], strides = [1, 1]} : vector<8x128xf32> to vector<8x32xf32>
    %1040 = arith.mulf %1033, %1015 : vector<8x32xf32>
    %1041 = arith.mulf %1032, %1038 : vector<8x32xf32>
    %1042 = arith.addf %1040, %1041 : vector<8x32xf32>
    %1043 = math.tanh %1042 : vector<8x32xf32>
    %1044 = arith.mulf %1039, %1043 : vector<8x32xf32>
    %1045 = arith.index_cast %c16_i32_339 : i32 to index
    %c0_346 = arith.constant 0 : index
    %c0_347 = arith.constant 0 : index
    %1046 = vector.load %arg11[%1045, %c0_346, %c0_347] : memref<21x8x32xf32, #tpu.memory_space<vmem>>, vector<1x8x32xf32>
    %1047 = vector.shape_cast %1046 : vector<1x8x32xf32> to vector<8x32xf32>
    %1048 = vector.shape_cast %1044 : vector<8x32xf32> to vector<1x8x32xf32>
    tpu.vector_store %arg11[%1045, %c0_346, %c0_347], %1048 {strides = array<i32>} : memref<21x8x32xf32, #tpu.memory_space<vmem>>, vector<1x8x32xf32>,
    %c17_i32_348 = arith.constant 17 : i32
    %1049 = arith.index_cast %c17_i32_348 : i32 to index
    %c0_349 = arith.constant 0 : index
    %c0_350 = arith.constant 0 : index
    %1050 = vector.load %arg12[%1049, %c0_349, %c0_350] : memref<21x8x128xf32, #tpu.memory_space<vmem>>, vector<1x8x128xf32>
    %1051 = vector.shape_cast %1050 : vector<1x8x128xf32> to vector<8x128xf32>
    %cst_351 = arith.constant dense<0.000000e+00> : vector<8x128xf32>
    %1052 = tpu.matmul %1044, %587, %cst_351 {dimension_numbers = #tpu.dot_dimension_numbers<[1], [0], [0], [1], [0, 0, 1, 1], [], []>} : vector<8x32xf32>, vector<32x128xf32>, vector<8x128xf32> -> vector<8x128xf32>
    %1053 = arith.addf %1051, %1052 : vector<8x128xf32>
    %1054 = arith.negf %1053 : vector<8x128xf32>
    %1055 = math.exp %1054 : vector<8x128xf32>
    %cst_352 = arith.constant 1.000000e+00 : f32
    %1056 = vector.broadcast %cst_352 : f32 to vector<8x128xf32>
    %1057 = arith.addf %1056, %1055 : vector<8x128xf32>
    %1058 = arith.divf %1056, %1057 : vector<8x128xf32>
    %1059 = vector.extract_strided_slice %1058 {offsets = [0, 0], sizes = [8, 32], strides = [1, 1]} : vector<8x128xf32> to vector<8x32xf32>
    %1060 = vector.extract_strided_slice %1058 {offsets = [0, 32], sizes = [8, 32], strides = [1, 1]} : vector<8x128xf32> to vector<8x32xf32>
    %1061 = vector.extract_strided_slice %1058 {offsets = [0, 64], sizes = [8, 32], strides = [1, 1]} : vector<8x128xf32> to vector<8x32xf32>
    %cst_353 = arith.constant 2.000000e+00 : f32
    %1062 = vector.broadcast %cst_353 : f32 to vector<8x32xf32>
    %1063 = arith.mulf %1062, %1061 : vector<8x32xf32>
    %cst_354 = arith.constant 1.000000e+00 : f32
    %1064 = vector.broadcast %cst_354 : f32 to vector<8x32xf32>
    %1065 = arith.subf %1063, %1064 : vector<8x32xf32>
    %1066 = vector.extract_strided_slice %1058 {offsets = [0, 96], sizes = [8, 32], strides = [1, 1]} : vector<8x128xf32> to vector<8x32xf32>
    %1067 = arith.mulf %1060, %1042 : vector<8x32xf32>
    %1068 = arith.mulf %1059, %1065 : vector<8x32xf32>
    %1069 = arith.addf %1067, %1068 : vector<8x32xf32>
    %1070 = math.tanh %1069 : vector<8x32xf32>
    %1071 = arith.mulf %1066, %1070 : vector<8x32xf32>
    %1072 = arith.index_cast %c17_i32_348 : i32 to index
    %c0_355 = arith.constant 0 : index
    %c0_356 = arith.constant 0 : index
    %1073 = vector.load %arg11[%1072, %c0_355, %c0_356] : memref<21x8x32xf32, #tpu.memory_space<vmem>>, vector<1x8x32xf32>
    %1074 = vector.shape_cast %1073 : vector<1x8x32xf32> to vector<8x32xf32>
    %1075 = vector.shape_cast %1071 : vector<8x32xf32> to vector<1x8x32xf32>
    tpu.vector_store %arg11[%1072, %c0_355, %c0_356], %1075 {strides = array<i32>} : memref<21x8x32xf32, #tpu.memory_space<vmem>>, vector<1x8x32xf32>,
    %c18_i32_357 = arith.constant 18 : i32
    %1076 = arith.index_cast %c18_i32_357 : i32 to index
    %c0_358 = arith.constant 0 : index
    %c0_359 = arith.constant 0 : index
    %1077 = vector.load %arg12[%1076, %c0_358, %c0_359] : memref<21x8x128xf32, #tpu.memory_space<vmem>>, vector<1x8x128xf32>
    %1078 = vector.shape_cast %1077 : vector<1x8x128xf32> to vector<8x128xf32>
    %cst_360 = arith.constant dense<0.000000e+00> : vector<8x128xf32>
    %1079 = tpu.matmul %1071, %587, %cst_360 {dimension_numbers = #tpu.dot_dimension_numbers<[1], [0], [0], [1], [0, 0, 1, 1], [], []>} : vector<8x32xf32>, vector<32x128xf32>, vector<8x128xf32> -> vector<8x128xf32>
    %1080 = arith.addf %1078, %1079 : vector<8x128xf32>
    %1081 = arith.negf %1080 : vector<8x128xf32>
    %1082 = math.exp %1081 : vector<8x128xf32>
    %cst_361 = arith.constant 1.000000e+00 : f32
    %1083 = vector.broadcast %cst_361 : f32 to vector<8x128xf32>
    %1084 = arith.addf %1083, %1082 : vector<8x128xf32>
    %1085 = arith.divf %1083, %1084 : vector<8x128xf32>
    %1086 = vector.extract_strided_slice %1085 {offsets = [0, 0], sizes = [8, 32], strides = [1, 1]} : vector<8x128xf32> to vector<8x32xf32>
    %1087 = vector.extract_strided_slice %1085 {offsets = [0, 32], sizes = [8, 32], strides = [1, 1]} : vector<8x128xf32> to vector<8x32xf32>
    %1088 = vector.extract_strided_slice %1085 {offsets = [0, 64], sizes = [8, 32], strides = [1, 1]} : vector<8x128xf32> to vector<8x32xf32>
    %cst_362 = arith.constant 2.000000e+00 : f32
    %1089 = vector.broadcast %cst_362 : f32 to vector<8x32xf32>
    %1090 = arith.mulf %1089, %1088 : vector<8x32xf32>
    %cst_363 = arith.constant 1.000000e+00 : f32
    %1091 = vector.broadcast %cst_363 : f32 to vector<8x32xf32>
    %1092 = arith.subf %1090, %1091 : vector<8x32xf32>
    %1093 = vector.extract_strided_slice %1085 {offsets = [0, 96], sizes = [8, 32], strides = [1, 1]} : vector<8x128xf32> to vector<8x32xf32>
    %1094 = arith.mulf %1087, %1069 : vector<8x32xf32>
    %1095 = arith.mulf %1086, %1092 : vector<8x32xf32>
    %1096 = arith.addf %1094, %1095 : vector<8x32xf32>
    %1097 = math.tanh %1096 : vector<8x32xf32>
    %1098 = arith.mulf %1093, %1097 : vector<8x32xf32>
    %1099 = arith.index_cast %c18_i32_357 : i32 to index
    %c0_364 = arith.constant 0 : index
    %c0_365 = arith.constant 0 : index
    %1100 = vector.load %arg11[%1099, %c0_364, %c0_365] : memref<21x8x32xf32, #tpu.memory_space<vmem>>, vector<1x8x32xf32>
    %1101 = vector.shape_cast %1100 : vector<1x8x32xf32> to vector<8x32xf32>
    %1102 = vector.shape_cast %1098 : vector<8x32xf32> to vector<1x8x32xf32>
    tpu.vector_store %arg11[%1099, %c0_364, %c0_365], %1102 {strides = array<i32>} : memref<21x8x32xf32, #tpu.memory_space<vmem>>, vector<1x8x32xf32>,
    %c19_i32_366 = arith.constant 19 : i32
    %1103 = arith.index_cast %c19_i32_366 : i32 to index
    %c0_367 = arith.constant 0 : index
    %c0_368 = arith.constant 0 : index
    %1104 = vector.load %arg12[%1103, %c0_367, %c0_368] : memref<21x8x128xf32, #tpu.memory_space<vmem>>, vector<1x8x128xf32>
    %1105 = vector.shape_cast %1104 : vector<1x8x128xf32> to vector<8x128xf32>
    %cst_369 = arith.constant dense<0.000000e+00> : vector<8x128xf32>
    %1106 = tpu.matmul %1098, %587, %cst_369 {dimension_numbers = #tpu.dot_dimension_numbers<[1], [0], [0], [1], [0, 0, 1, 1], [], []>} : vector<8x32xf32>, vector<32x128xf32>, vector<8x128xf32> -> vector<8x128xf32>
    %1107 = arith.addf %1105, %1106 : vector<8x128xf32>
    %1108 = arith.negf %1107 : vector<8x128xf32>
    %1109 = math.exp %1108 : vector<8x128xf32>
    %cst_370 = arith.constant 1.000000e+00 : f32
    %1110 = vector.broadcast %cst_370 : f32 to vector<8x128xf32>
    %1111 = arith.addf %1110, %1109 : vector<8x128xf32>
    %1112 = arith.divf %1110, %1111 : vector<8x128xf32>
    %1113 = vector.extract_strided_slice %1112 {offsets = [0, 0], sizes = [8, 32], strides = [1, 1]} : vector<8x128xf32> to vector<8x32xf32>
    %1114 = vector.extract_strided_slice %1112 {offsets = [0, 32], sizes = [8, 32], strides = [1, 1]} : vector<8x128xf32> to vector<8x32xf32>
    %1115 = vector.extract_strided_slice %1112 {offsets = [0, 64], sizes = [8, 32], strides = [1, 1]} : vector<8x128xf32> to vector<8x32xf32>
    %cst_371 = arith.constant 2.000000e+00 : f32
    %1116 = vector.broadcast %cst_371 : f32 to vector<8x32xf32>
    %1117 = arith.mulf %1116, %1115 : vector<8x32xf32>
    %cst_372 = arith.constant 1.000000e+00 : f32
    %1118 = vector.broadcast %cst_372 : f32 to vector<8x32xf32>
    %1119 = arith.subf %1117, %1118 : vector<8x32xf32>
    %1120 = vector.extract_strided_slice %1112 {offsets = [0, 96], sizes = [8, 32], strides = [1, 1]} : vector<8x128xf32> to vector<8x32xf32>
    %1121 = arith.mulf %1114, %1096 : vector<8x32xf32>
    %1122 = arith.mulf %1113, %1119 : vector<8x32xf32>
    %1123 = arith.addf %1121, %1122 : vector<8x32xf32>
    %1124 = math.tanh %1123 : vector<8x32xf32>
    %1125 = arith.mulf %1120, %1124 : vector<8x32xf32>
    %1126 = arith.index_cast %c19_i32_366 : i32 to index
    %c0_373 = arith.constant 0 : index
    %c0_374 = arith.constant 0 : index
    %1127 = vector.load %arg11[%1126, %c0_373, %c0_374] : memref<21x8x32xf32, #tpu.memory_space<vmem>>, vector<1x8x32xf32>
    %1128 = vector.shape_cast %1127 : vector<1x8x32xf32> to vector<8x32xf32>
    %1129 = vector.shape_cast %1125 : vector<8x32xf32> to vector<1x8x32xf32>
    tpu.vector_store %arg11[%1126, %c0_373, %c0_374], %1129 {strides = array<i32>} : memref<21x8x32xf32, #tpu.memory_space<vmem>>, vector<1x8x32xf32>,
    %c20_i32_375 = arith.constant 20 : i32
    %1130 = arith.index_cast %c20_i32_375 : i32 to index
    %c0_376 = arith.constant 0 : index
    %c0_377 = arith.constant 0 : index
    %1131 = vector.load %arg12[%1130, %c0_376, %c0_377] : memref<21x8x128xf32, #tpu.memory_space<vmem>>, vector<1x8x128xf32>
    %1132 = vector.shape_cast %1131 : vector<1x8x128xf32> to vector<8x128xf32>
    %cst_378 = arith.constant dense<0.000000e+00> : vector<8x128xf32>
    %1133 = tpu.matmul %1125, %587, %cst_378 {dimension_numbers = #tpu.dot_dimension_numbers<[1], [0], [0], [1], [0, 0, 1, 1], [], []>} : vector<8x32xf32>, vector<32x128xf32>, vector<8x128xf32> -> vector<8x128xf32>
    %1134 = arith.addf %1132, %1133 : vector<8x128xf32>
    %1135 = arith.negf %1134 : vector<8x128xf32>
    %1136 = math.exp %1135 : vector<8x128xf32>
    %cst_379 = arith.constant 1.000000e+00 : f32
    %1137 = vector.broadcast %cst_379 : f32 to vector<8x128xf32>
    %1138 = arith.addf %1137, %1136 : vector<8x128xf32>
    %1139 = arith.divf %1137, %1138 : vector<8x128xf32>
    %1140 = vector.extract_strided_slice %1139 {offsets = [0, 0], sizes = [8, 32], strides = [1, 1]} : vector<8x128xf32> to vector<8x32xf32>
    %1141 = vector.extract_strided_slice %1139 {offsets = [0, 32], sizes = [8, 32], strides = [1, 1]} : vector<8x128xf32> to vector<8x32xf32>
    %1142 = vector.extract_strided_slice %1139 {offsets = [0, 64], sizes = [8, 32], strides = [1, 1]} : vector<8x128xf32> to vector<8x32xf32>
    %cst_380 = arith.constant 2.000000e+00 : f32
    %1143 = vector.broadcast %cst_380 : f32 to vector<8x32xf32>
    %1144 = arith.mulf %1143, %1142 : vector<8x32xf32>
    %cst_381 = arith.constant 1.000000e+00 : f32
    %1145 = vector.broadcast %cst_381 : f32 to vector<8x32xf32>
    %1146 = arith.subf %1144, %1145 : vector<8x32xf32>
    %1147 = vector.extract_strided_slice %1139 {offsets = [0, 96], sizes = [8, 32], strides = [1, 1]} : vector<8x128xf32> to vector<8x32xf32>
    %1148 = arith.mulf %1141, %1123 : vector<8x32xf32>
    %1149 = arith.mulf %1140, %1146 : vector<8x32xf32>
    %1150 = arith.addf %1148, %1149 : vector<8x32xf32>
    %1151 = math.tanh %1150 : vector<8x32xf32>
    %1152 = arith.mulf %1147, %1151 : vector<8x32xf32>
    %1153 = arith.index_cast %c20_i32_375 : i32 to index
    %c0_382 = arith.constant 0 : index
    %c0_383 = arith.constant 0 : index
    %1154 = vector.load %arg11[%1153, %c0_382, %c0_383] : memref<21x8x32xf32, #tpu.memory_space<vmem>>, vector<1x8x32xf32>
    %1155 = vector.shape_cast %1154 : vector<1x8x32xf32> to vector<8x32xf32>
    %1156 = vector.shape_cast %1152 : vector<8x32xf32> to vector<1x8x32xf32>
    tpu.vector_store %arg11[%1153, %c0_382, %c0_383], %1156 {strides = array<i32>} : memref<21x8x32xf32, #tpu.memory_space<vmem>>, vector<1x8x32xf32>,
    %c21_i32_384 = arith.constant 21 : i32
    %1157 = tpu.concatenate %573, %1152 in 0 : vector<8x32xf32>, vector<8x32xf32> -> vector<16x32xf32>
    %c0_385 = arith.constant 0 : index
    %c0_386 = arith.constant 0 : index
    %1158 = vector.load %arg7[%c0_385, %c0_386] : memref<32x128xf32, #tpu.memory_space<vmem>>, vector<32x128xf32>
    %cst_387 = arith.constant dense<0.000000e+00> : vector<16x128xf32>
    %1159 = tpu.matmul %1157, %1158, %cst_387 {dimension_numbers = #tpu.dot_dimension_numbers<[1], [0], [0], [1], [0, 0, 1, 1], [], []>} : vector<16x32xf32>, vector<32x128xf32>, vector<16x128xf32> -> vector<16x128xf32>
    %c0_388 = arith.constant 0 : index
    %c0_389 = arith.constant 0 : index
    %1160 = vector.load %arg8[%c0_388, %c0_389] : memref<1x128xf32, #tpu.memory_space<vmem>>, vector<1x128xf32>
    %1161 = vector.broadcast %1160 : vector<1x128xf32> to vector<16x128xf32>
    %1162 = arith.addf %1159, %1161 : vector<16x128xf32>
    %c0_390 = arith.constant 0 : index
    %c0_391 = arith.constant 0 : index
    %1163 = vector.load %arg9[%c0_390, %c0_391] : memref<16x128xf32, #tpu.memory_space<vmem>>, vector<16x128xf32>
    tpu.vector_store %arg9[%c0_390, %c0_391], %1162 {strides = array<i32>} : memref<16x128xf32, #tpu.memory_space<vmem>>, vector<16x128xf32>,
    return
  }
}

</mosaic_0001>

<llo_original>
// kernel: tpu_custom_call.1
$region0: #{tpu_custom_call.1}
  #allocation0 [shape = 'u32[]', space=smem, size = 0x4, offset = 0x4, fixed_abs, tag = 'smem constant byte address 0x4 - core index']
  #allocation1 [shape = 'u32[144,128]{1,0:T(1,128)}', space=vmem, size = 0x12000, scoped, tag = 'internal scratch']
  #allocation2 [shape = 'f32[21,8,32]{2,1,0:T(8,128)}', space=vmem, size = 0x15000, scoped, tag = 'scratch operand']
  #allocation3 [shape = 'f32[21,8,32]{2,1,0:T(8,128)}', space=vmem, size = 0x15000, scoped, tag = 'scratch operand']
  #allocation4 [shape = 'f32[21,8,128]{2,1,0:T(8,128)}', space=vmem, size = 0x15000, scoped, tag = 'scratch operand']
  %s0 = inlined_call_operand.vmem [shape: f32[168,8], index: 0, kind: input, shape index: {}]
  %s1 = inlined_call_operand.vmem [shape: f32[8,128], index: 1, kind: input, shape index: {}]
  %s2 = inlined_call_operand.vmem [shape: f32[32,128], index: 2, kind: input, shape index: {}]
  %s3 = inlined_call_operand.vmem [shape: f32[1,128], index: 3, kind: input, shape index: {}]
  %s4 = inlined_call_operand.vmem [shape: f32[32,128], index: 4, kind: input, shape index: {}]
  %s5 = inlined_call_operand.vmem [shape: f32[32,128], index: 5, kind: input, shape index: {}]
  %s6 = inlined_call_operand.vmem [shape: f32[1,128], index: 6, kind: input, shape index: {}]
  %s7 = inlined_call_operand.vmem [shape: f32[32,128], index: 7, kind: input, shape index: {}]
  %s8 = inlined_call_operand.vmem [shape: f32[1,128], index: 8, kind: input, shape index: {}]
  %s9 = inlined_call_operand.hbm [shape: f32[16,128], index: 9, kind: output, shape index: {}]
  %s10 = sld [smem:[#allocation0]]
  $region46: #{tpu_custom_call.1} parent=0
    _
  %s12 = ssub.s32 1, %s10
  %s13 = scalar_select 0, %s12, %s10
  $region1: #{tpu_custom_call.1} parent=0
    #allocation5 [shape = 'u8[8192]{0}', space=vmem, size = 0x2000, scoped, tag = 'output window, operand 0, single buffered']
    #allocation6 [shape = 's32[1]{0}', space=sflag, size = 0x4, scoped, tag = 'scoped memory for tpu_custom_call.1']
    %14 = vsyncpa [#allocation6], 0
    // Predicated region
    $region2: #{tpu_custom_call.1} parent=1 // pred_check
      _
    $region3: #{tpu_custom_call.1} parent=1 // pred_check_branch
      %16 = sbr.rel (0) target = $region5
    $region4: #{tpu_custom_call.1} parent=1 // pred_region
      _
    $region5: #{tpu_custom_call.1} parent=1 // pred_fallthru
      _
    // Predicated region
    $region6: #{tpu_custom_call.1} parent=1 // pred_check
      _
    $region7: #{tpu_custom_call.1} parent=1 // pred_check_branch
      %18 = sbr.rel (0) target = $region9
    $region8: #{tpu_custom_call.1} parent=1 // pred_region
      _
    $region9: #{tpu_custom_call.1} parent=1 // pred_fallthru
      _
    // Predicated region
    $region10: #{tpu_custom_call.1} parent=1 // pred_check
      _
    $region11: #{tpu_custom_call.1} parent=1 // pred_check_branch
      %20 = sbr.rel (0) target = $region13
    $region12: #{tpu_custom_call.1} parent=1 // pred_region
      _
    $region13: #{tpu_custom_call.1} parent=1 // pred_fallthru
      _
    // Predicated region
    $region14: #{tpu_custom_call.1} parent=1 // pred_check
      _
    $region15: #{tpu_custom_call.1} parent=1 // pred_check_branch
      %22 = sbr.rel (0) target = $region17
    $region16: #{tpu_custom_call.1} parent=1 // pred_region
      _
    $region17: #{tpu_custom_call.1} parent=1 // pred_fallthru
      _
    // Predicated region
    $region18: #{tpu_custom_call.1} parent=1 // pred_check
      _
    $region19: #{tpu_custom_call.1} parent=1 // pred_check_branch
      %24 = sbr.rel (0) target = $region21
    $region20: #{tpu_custom_call.1} parent=1 // pred_region
      _
    $region21: #{tpu_custom_call.1} parent=1 // pred_fallthru
      _
    // Predicated region
    $region22: #{tpu_custom_call.1} parent=1 // pred_check
      _
    $region23: #{tpu_custom_call.1} parent=1 // pred_check_branch
      %26 = sbr.rel (0) target = $region25
    $region24: #{tpu_custom_call.1} parent=1 // pred_region
      _
    $region25: #{tpu_custom_call.1} parent=1 // pred_fallthru
      _
    // Predicated region
    $region26: #{tpu_custom_call.1} parent=1 // pred_check
      _
    $region27: #{tpu_custom_call.1} parent=1 // pred_check_branch
      %28 = sbr.rel (0) target = $region29
    $region28: #{tpu_custom_call.1} parent=1 // pred_region
      _
    $region29: #{tpu_custom_call.1} parent=1 // pred_fallthru
      _
    // Predicated region
    $region30: #{tpu_custom_call.1} parent=1 // pred_check
      _
    $region31: #{tpu_custom_call.1} parent=1 // pred_check_branch
      %30 = sbr.rel (0) target = $region33
    $region32: #{tpu_custom_call.1} parent=1 // pred_region
      _
    $region33: #{tpu_custom_call.1} parent=1 // pred_fallthru
      _
    // Predicated region
    $region34: #{tpu_custom_call.1} parent=1 // pred_check
      _
    $region35: #{tpu_custom_call.1} parent=1 // pred_check_branch
      %32 = sbr.rel (0) target = $region37
    $region36: #{tpu_custom_call.1} parent=1 // pred_region
      _
    $region37: #{tpu_custom_call.1} parent=1 // pred_fallthru
      _
    %v33 = vld [vmem:[%s0] sm:$0xff]
    %v34 = vld [vmem:[%s0 + $0x8] sm:$0xff]
    %v35 = vld [vmem:[%s0 + $0x10] sm:$0xff]
    %v36 = vld [vmem:[%s0 + $0x18] sm:$0xff]
    %v37 = vld [vmem:[%s0 + $0x20] sm:$0xff]
    %v38 = vld [vmem:[%s0 + $0x28] sm:$0xff]
    %v39 = vld [vmem:[%s0 + $0x30] sm:$0xff]
    %v40 = vld [vmem:[%s0 + $0x38] sm:$0xff]
    %v41 = vld [vmem:[%s0 + $0x40] sm:$0xff]
    %v42 = vld [vmem:[%s0 + $0x48] sm:$0xff]
    %v43 = vld [vmem:[%s0 + $0x50] sm:$0xff]
    %v44 = vld [vmem:[%s0 + $0x58] sm:$0xff]
    %v45 = vld [vmem:[%s0 + $0x60] sm:$0xff]
    %v46 = vld [vmem:[%s0 + $0x68] sm:$0xff]
    %v47 = vld [vmem:[%s0 + $0x70] sm:$0xff]
    %v48 = vld [vmem:[%s0 + $0x78] sm:$0xff]
    %v49 = vld [vmem:[%s0 + $0x80] sm:$0xff]
    %v50 = vld [vmem:[%s0 + $0x88] sm:$0xff]
    %v51 = vld [vmem:[%s0 + $0x90] sm:$0xff]
    %v52 = vld [vmem:[%s0 + $0x98] sm:$0xff]
    %v53 = vld [vmem:[%s0 + $0xa0] sm:$0xff]
    %v54 = vld [vmem:[%s1] sm:$0xff]
    %v55 = vld [vmem:[%s3] sm:$0x1]
    %v57 = vlaneseq
    %v58 = vshrl.u32 %v57, 7
    %v59 = vsub.s32 0, %v58
    %v60 = vrot.slane %v55, %v59
    %vm62 = vcmask 64512
    %v64 = vsel %vm62, %v33, 0
    %v67 = vsel %vm62, %v34, 0
    %v70 = vsel %vm62, %v35, 0
    %v73 = vsel %vm62, %v36, 0
    %v76 = vsel %vm62, %v37, 0
    %v79 = vsel %vm62, %v38, 0
    %v82 = vsel %vm62, %v39, 0
    %v85 = vsel %vm62, %v40, 0
    %v88 = vsel %vm62, %v41, 0
    %v91 = vsel %vm62, %v42, 0
    %v94 = vsel %vm62, %v43, 0
    %v97 = vsel %vm62, %v44, 0
    %v100 = vsel %vm62, %v45, 0
    %v103 = vsel %vm62, %v46, 0
    %v106 = vsel %vm62, %v47, 0
    %v109 = vsel %vm62, %v48, 0
    %v112 = vsel %vm62, %v49, 0
    %v115 = vsel %vm62, %v50, 0
    %v118 = vsel %vm62, %v51, 0
    %v121 = vsel %vm62, %v52, 0
    %v124 = vsel %vm62, %v53, 0
    %126 = vmatprep.subr.mxu0 0.0
    %127 = vmatpush1.msra.mxu0 %v54
    %128 = vmatprep.subr.mxu0 0.0
    %129 = vmatpush1.msra.mxu0 0.0
    %130 = vmatprep.subr.mxu0 0.0
    %131 = vmatpush1.msra.mxu0 0.0
    %132 = vmatprep.subr.mxu0 0.0
    %133 = vmatpush1.msra.mxu0 0.0
    %134 = vmatprep.subr.mxu0 0.0
    %135 = vmatpush1.msra.mxu0 0.0
    %136 = vmatprep.subr.mxu0 0.0
    %137 = vmatpush1.msra.mxu0 0.0
    %138 = vmatprep.subr.mxu0 0.0
    %139 = vmatpush1.msra.mxu0 0.0
    %140 = vmatprep.subr.mxu0 0.0
    %141 = vmatpush1.msra.mxu0 0.0
    %142 = vmatprep.subr.mxu0 0.0
    %143 = vmatpush1.msra.mxu0 0.0
    %144 = vmatprep.subr.mxu0 0.0
    %145 = vmatpush1.msra.mxu0 0.0
    %146 = vmatprep.subr.mxu0 0.0
    %147 = vmatpush1.msra.mxu0 0.0
    %148 = vmatprep.subr.mxu0 0.0
    %149 = vmatpush1.msra.mxu0 0.0
    %150 = vmatprep.subr.mxu0 0.0
    %151 = vmatpush1.msra.mxu0 0.0
    %152 = vmatprep.subr.mxu0 0.0
    %153 = vmatpush1.msra.mxu0 0.0
    %154 = vmatprep.subr.mxu0 0.0
    %155 = vmatpush1.msra.mxu0 0.0
    %156 = vmatprep.subr.mxu0 0.0
    %157 = vmatpush1.msra.mxu0 0.0
    %158 = vmatprep.subr.mxu0 0.0
    %159 = vmatpush1.msra.mxu0 0.0
    %160 = vmatprep.subr.mxu0 0.0
    %161 = vmatpush1.msra.mxu0 0.0
    %162 = vmatprep.subr.mxu0 0.0
    %163 = vmatpush1.msra.mxu0 0.0
    %164 = vmatprep.subr.mxu0 0.0
    %165 = vmatpush1.msra.mxu0 0.0
    %166 = vmatprep.subr.mxu0 0.0
    %167 = vmatpush1.msra.mxu0 0.0
    %168 = vmatprep.subr.mxu0 0.0
    %169 = vmatpush1.msra.mxu0 0.0
    %170 = vmatprep.subr.mxu0 0.0
    %171 = vmatpush1.msra.mxu0 0.0
    %172 = vmatprep.subr.mxu0 0.0
    %173 = vmatpush1.msra.mxu0 0.0
    %174 = vmatprep.subr.mxu0 0.0
    %175 = vmatpush1.msra.mxu0 0.0
    %176 = vmatprep.subr.mxu0 0.0
    %177 = vmatpush1.msra.mxu0 0.0
    %178 = vmatprep.subr.mxu0 0.0
    %179 = vmatpush1.msra.mxu0 0.0
    %180 = vmatprep.subr.mxu0 0.0
    %181 = vmatpush1.msra.mxu0 0.0
    %182 = vmatprep.subr.mxu0 0.0
    %183 = vmatpush1.msra.mxu0 0.0
    %184 = vmatprep.subr.mxu0 0.0
    %185 = vmatpush1.msra.mxu0 0.0
    %186 = vmatprep.subr.mxu0 0.0
    %187 = vmatpush1.msra.mxu0 0.0
    %188 = vmatprep.subr.mxu0 0.0
    %189 = vmatpush1.msra.mxu0 0.0
    %190 = vmatprep.mubr.f32.mxu0 0.0
    %191 = vmatmul.mubr.f32.gmra.mrb[0].mxu0 %v64
    %v192 = vpop.f32.mrb[0].mxu0
    %v193 = vadd.f32 %v60, %v192
    %v194 = vpop.f32.mrb[0].mxu0
    %195 = vmatprep.mubr.f32.mxu0 0.0
    %196 = vmatmul.mubr.f32.gmra.mrb[0].mxu0 %v67
    %v197 = vpop.f32.mrb[0].mxu0
    %v198 = vadd.f32 %v60, %v197
    %v199 = vpop.f32.mrb[0].mxu0
    %200 = vmatprep.mubr.f32.mxu0 0.0
    %201 = vmatmul.mubr.f32.gmra.mrb[0].mxu0 %v70
    %v202 = vpop.f32.mrb[0].mxu0
    %v203 = vadd.f32 %v60, %v202
    %v204 = vpop.f32.mrb[0].mxu0
    %205 = vmatprep.mubr.f32.mxu0 0.0
    %206 = vmatmul.mubr.f32.gmra.mrb[0].mxu0 %v73
    %v207 = vpop.f32.mrb[0].mxu0
    %v208 = vadd.f32 %v60, %v207
    %v209 = vpop.f32.mrb[0].mxu0
    %210 = vmatprep.mubr.f32.mxu0 0.0
    %211 = vmatmul.mubr.f32.gmra.mrb[0].mxu0 %v76
    %v212 = vpop.f32.mrb[0].mxu0
    %v213 = vadd.f32 %v60, %v212
    %v214 = vpop.f32.mrb[0].mxu0
    %215 = vmatprep.mubr.f32.mxu0 0.0
    %216 = vmatmul.mubr.f32.gmra.mrb[0].mxu0 %v79
    %v217 = vpop.f32.mrb[0].mxu0
    %v218 = vadd.f32 %v60, %v217
    %v219 = vpop.f32.mrb[0].mxu0
    %220 = vmatprep.mubr.f32.mxu0 0.0
    %221 = vmatmul.mubr.f32.gmra.mrb[0].mxu0 %v82
    %v222 = vpop.f32.mrb[0].mxu0
    %v223 = vadd.f32 %v60, %v222
    %v224 = vpop.f32.mrb[0].mxu0
    %225 = vmatprep.mubr.f32.mxu0 0.0
    %226 = vmatmul.mubr.f32.gmra.mrb[0].mxu0 %v85
    %v227 = vpop.f32.mrb[0].mxu0
    %v228 = vadd.f32 %v60, %v227
    %v229 = vpop.f32.mrb[0].mxu0
    %230 = vmatprep.mubr.f32.mxu0 0.0
    %231 = vmatmul.mubr.f32.gmra.mrb[0].mxu0 %v88
    %v232 = vpop.f32.mrb[0].mxu0
    %v233 = vadd.f32 %v60, %v232
    %v234 = vpop.f32.mrb[0].mxu0
    %235 = vmatprep.mubr.f32.mxu0 0.0
    %236 = vmatmul.mubr.f32.gmra.mrb[0].mxu0 %v91
    %v237 = vpop.f32.mrb[0].mxu0
    %v238 = vadd.f32 %v60, %v237
    %v239 = vpop.f32.mrb[0].mxu0
    %240 = vmatprep.mubr.f32.mxu0 0.0
    %241 = vmatmul.mubr.f32.gmra.mrb[0].mxu0 %v94
    %v242 = vpop.f32.mrb[0].mxu0
    %v243 = vadd.f32 %v60, %v242
    %v244 = vpop.f32.mrb[0].mxu0
    %245 = vmatprep.mubr.f32.mxu0 0.0
    %246 = vmatmul.mubr.f32.gmra.mrb[0].mxu0 %v97
    %v247 = vpop.f32.mrb[0].mxu0
    %v248 = vadd.f32 %v60, %v247
    %v249 = vpop.f32.mrb[0].mxu0
    %250 = vmatprep.mubr.f32.mxu0 0.0
    %251 = vmatmul.mubr.f32.gmra.mrb[0].mxu0 %v100
    %v252 = vpop.f32.mrb[0].mxu0
    %v253 = vadd.f32 %v60, %v252
    %v254 = vpop.f32.mrb[0].mxu0
    %255 = vmatprep.mubr.f32.mxu0 0.0
    %256 = vmatmul.mubr.f32.gmra.mrb[0].mxu0 %v103
    %v257 = vpop.f32.mrb[0].mxu0
    %v258 = vadd.f32 %v60, %v257
    %v259 = vpop.f32.mrb[0].mxu0
    %260 = vmatprep.mubr.f32.mxu0 0.0
    %261 = vmatmul.mubr.f32.gmra.mrb[0].mxu0 %v106
    %v262 = vpop.f32.mrb[0].mxu0
    %v263 = vadd.f32 %v60, %v262
    %v264 = vpop.f32.mrb[0].mxu0
    %265 = vmatprep.mubr.f32.mxu0 0.0
    %266 = vmatmul.mubr.f32.gmra.mrb[0].mxu0 %v109
    %v267 = vpop.f32.mrb[0].mxu0
    %v268 = vadd.f32 %v60, %v267
    %v269 = vpop.f32.mrb[0].mxu0
    %270 = vmatprep.mubr.f32.mxu0 0.0
    %271 = vmatmul.mubr.f32.gmra.mrb[0].mxu0 %v112
    %v272 = vpop.f32.mrb[0].mxu0
    %v273 = vadd.f32 %v60, %v272
    %v274 = vpop.f32.mrb[0].mxu0
    %275 = vmatprep.mubr.f32.mxu0 0.0
    %276 = vmatmul.mubr.f32.gmra.mrb[0].mxu0 %v115
    %v277 = vpop.f32.mrb[0].mxu0
    %v278 = vadd.f32 %v60, %v277
    %v279 = vpop.f32.mrb[0].mxu0
    %280 = vmatprep.mubr.f32.mxu0 0.0
    %281 = vmatmul.mubr.f32.gmra.mrb[0].mxu0 %v118
    %v282 = vpop.f32.mrb[0].mxu0
    %v283 = vadd.f32 %v60, %v282
    %v284 = vpop.f32.mrb[0].mxu0
    %285 = vmatprep.mubr.f32.mxu0 0.0
    %286 = vmatmul.mubr.f32.gmra.mrb[0].mxu0 %v121
    %v287 = vpop.f32.mrb[0].mxu0
    %v288 = vadd.f32 %v60, %v287
    %v289 = vpop.f32.mrb[0].mxu0
    %290 = vmatprep.mubr.f32.mxu0 0.0
    %291 = vmatmul.mubr.f32.gmra.mrb[0].mxu0 %v124
    %v292 = vpop.f32.mrb[0].mxu0
    %v293 = vadd.f32 %v60, %v292
    %v294 = vpop.f32.mrb[0].mxu0
    %295 = vdwg.mxu0
    %296 = vst [vmem:[#allocation4] sm:$0xff] %v193
    %297 = vst [vmem:[#allocation4 + $0x8] sm:$0xff] %v198
    %298 = vst [vmem:[#allocation4 + $0x10] sm:$0xff] %v203
    %299 = vst [vmem:[#allocation4 + $0x18] sm:$0xff] %v208
    %300 = vst [vmem:[#allocation4 + $0x20] sm:$0xff] %v213
    %301 = vst [vmem:[#allocation4 + $0x28] sm:$0xff] %v218
    %302 = vst [vmem:[#allocation4 + $0x30] sm:$0xff] %v223
    %303 = vst [vmem:[#allocation4 + $0x38] sm:$0xff] %v228
    %304 = vst [vmem:[#allocation4 + $0x40] sm:$0xff] %v233
    %305 = vst [vmem:[#allocation4 + $0x48] sm:$0xff] %v238
    %306 = vst [vmem:[#allocation4 + $0x50] sm:$0xff] %v243
    %307 = vst [vmem:[#allocation4 + $0x58] sm:$0xff] %v248
    %308 = vst [vmem:[#allocation4 + $0x60] sm:$0xff] %v253
    %309 = vst [vmem:[#allocation4 + $0x68] sm:$0xff] %v258
    %310 = vst [vmem:[#allocation4 + $0x70] sm:$0xff] %v263
    %311 = vst [vmem:[#allocation4 + $0x78] sm:$0xff] %v268
    %312 = vst [vmem:[#allocation4 + $0x80] sm:$0xff] %v273
    %313 = vst [vmem:[#allocation4 + $0x88] sm:$0xff] %v278
    %314 = vst [vmem:[#allocation4 + $0x90] sm:$0xff] %v283
    %315 = vst [vmem:[#allocation4 + $0x98] sm:$0xff] %v288
    %316 = vst [vmem:[#allocation4 + $0xa0] sm:$0xff] %v293
    %v317 = vld [vmem:[%s2] sm:$0xff]
    %v318 = vld [vmem:[%s2 + $0x8] sm:$0xff]
    %v319 = vld [vmem:[%s2 + $0x10] sm:$0xff]
    %v320 = vld [vmem:[%s2 + $0x18] sm:$0xff]
    %v321 = vld [vmem:[#allocation4] sm:$0xff]
    %vm322 = vcmask 261120
    %v324 = vsel %vm322, 0.0, 0
    %326 = vmatprep.subr.mxu0 0.0
    %327 = vmatpush1.msra.mxu0 %v317
    %328 = vmatprep.subr.mxu0 0.0
    %329 = vmatpush1.msra.mxu0 %v318
    %330 = vmatprep.subr.mxu0 0.0
    %331 = vmatpush1.msra.mxu0 %v319
    %332 = vmatprep.subr.mxu0 0.0
    %333 = vmatpush1.msra.mxu0 %v320
    %334 = vmatprep.subr.mxu0 0.0
    %335 = vmatpush1.msra.mxu0 0.0
    %336 = vmatprep.subr.mxu0 0.0
    %337 = vmatpush1.msra.mxu0 0.0
    %338 = vmatprep.subr.mxu0 0.0
    %339 = vmatpush1.msra.mxu0 0.0
    %340 = vmatprep.subr.mxu0 0.0
    %341 = vmatpush1.msra.mxu0 0.0
    %342 = vmatprep.subr.mxu0 0.0
    %343 = vmatpush1.msra.mxu0 0.0
    %344 = vmatprep.subr.mxu0 0.0
    %345 = vmatpush1.msra.mxu0 0.0
    %346 = vmatprep.subr.mxu0 0.0
    %347 = vmatpush1.msra.mxu0 0.0
    %348 = vmatprep.subr.mxu0 0.0
    %349 = vmatpush1.msra.mxu0 0.0
    %350 = vmatprep.subr.mxu0 0.0
    %351 = vmatpush1.msra.mxu0 0.0
    %352 = vmatprep.subr.mxu0 0.0
    %353 = vmatpush1.msra.mxu0 0.0
    %354 = vmatprep.subr.mxu0 0.0
    %355 = vmatpush1.msra.mxu0 0.0
    %356 = vmatprep.subr.mxu0 0.0
    %357 = vmatpush1.msra.mxu0 0.0
    %358 = vmatprep.subr.mxu0 0.0
    %359 = vmatpush1.msra.mxu0 0.0
    %360 = vmatprep.subr.mxu0 0.0
    %361 = vmatpush1.msra.mxu0 0.0
    %362 = vmatprep.subr.mxu0 0.0
    %363 = vmatpush1.msra.mxu0 0.0
    %364 = vmatprep.subr.mxu0 0.0
    %365 = vmatpush1.msra.mxu0 0.0
    %366 = vmatprep.subr.mxu0 0.0
    %367 = vmatpush1.msra.mxu0 0.0
    %368 = vmatprep.subr.mxu0 0.0
    %369 = vmatpush1.msra.mxu0 0.0
    %370 = vmatprep.subr.mxu0 0.0
    %371 = vmatpush1.msra.mxu0 0.0
    %372 = vmatprep.subr.mxu0 0.0
    %373 = vmatpush1.msra.mxu0 0.0
    %374 = vmatprep.subr.mxu0 0.0
    %375 = vmatpush1.msra.mxu0 0.0
    %376 = vmatprep.subr.mxu0 0.0
    %377 = vmatpush1.msra.mxu0 0.0
    %378 = vmatprep.subr.mxu0 0.0
    %379 = vmatpush1.msra.mxu0 0.0
    %380 = vmatprep.subr.mxu0 0.0
    %381 = vmatpush1.msra.mxu0 0.0
    %382 = vmatprep.subr.mxu0 0.0
    %383 = vmatpush1.msra.mxu0 0.0
    %384 = vmatprep.subr.mxu0 0.0
    %385 = vmatpush1.msra.mxu0 0.0
    %386 = vmatprep.subr.mxu0 0.0
    %387 = vmatpush1.msra.mxu0 0.0
    %388 = vmatprep.subr.mxu0 0.0
    %389 = vmatpush1.msra.mxu0 0.0
    %390 = vmatprep.mubr.f32.mxu0 0.0
    %391 = vmatmul.mubr.f32.gmra.mrb[0].mxu0 %v324
    %v392 = vpop.f32.mrb[0].mxu0
    %v393 = vadd.f32 0.0, %v392
    %v394 = vpop.f32.mrb[0].mxu0
    %395 = vdwg.mxu0
    %v396 = vadd.f32 %v321, %v393
    %v397 = vxor.u32 %v396, 2147483648
    %v398 = vmul.f32 %v397, 1.442695
    %v399 = vpow.pop %v398
    %v400 = vadd.f32 %v399, 1.0
    %v401 = vrcp.pop %v400
    %v402 = vmul.f32 1.0, %v401
    %v403 = vmul.f32 %v402, 2.0
    %v404 = vsub.f32 %v403, 1.0
    %v405 = vmul.f32 %v402, 0.0
    %407 = vrot.lane.b32.xlu0 %v404, 64
    %v408 = vpop.permute.xlu0 %407
    %v410 = vmul.f32 %v402, %v408
    %412 = vrot.lane.b32.xlu0 %v410, 32
    %v413 = vpop.permute.xlu0 %412
    %v415 = vadd.f32 %v405, %v413
    %v416 = vtanh.pop %v415
    %418 = vrot.lane.b32.xlu0 %v416, 64
    %v419 = vpop.permute.xlu0 %418
    %v421 = vmul.f32 %v402, %v419
    %423 = vrot.lane.b32.xlu0 %v421, 32
    %v424 = vpop.permute.xlu0 %423
    %426 = vst.msk [vmem:[#allocation2] sm:$0xff] %vm322, %v424
    %s427 = scalar_lea.vmem [#allocation4], 8
    %v428 = vld [vmem:[%s427] sm:$0xff]
    %v429 = vsel %vm322, %v424, 0
    %431 = vmatprep.subr.mxu0 0.0
    %432 = vmatpush1.msra.mxu0 %v317
    %433 = vmatprep.subr.mxu0 0.0
    %434 = vmatpush1.msra.mxu0 %v318
    %435 = vmatprep.subr.mxu0 0.0
    %436 = vmatpush1.msra.mxu0 %v319
    %437 = vmatprep.subr.mxu0 0.0
    %438 = vmatpush1.msra.mxu0 %v320
    %439 = vmatprep.subr.mxu0 0.0
    %440 = vmatpush1.msra.mxu0 0.0
    %441 = vmatprep.subr.mxu0 0.0
    %442 = vmatpush1.msra.mxu0 0.0
    %443 = vmatprep.subr.mxu0 0.0
    %444 = vmatpush1.msra.mxu0 0.0
    %445 = vmatprep.subr.mxu0 0.0
    %446 = vmatpush1.msra.mxu0 0.0
    %447 = vmatprep.subr.mxu0 0.0
    %448 = vmatpush1.msra.mxu0 0.0
    %449 = vmatprep.subr.mxu0 0.0
    %450 = vmatpush1.msra.mxu0 0.0
    %451 = vmatprep.subr.mxu0 0.0
    %452 = vmatpush1.msra.mxu0 0.0
    %453 = vmatprep.subr.mxu0 0.0
    %454 = vmatpush1.msra.mxu0 0.0
    %455 = vmatprep.subr.mxu0 0.0
    %456 = vmatpush1.msra.mxu0 0.0
    %457 = vmatprep.subr.mxu0 0.0
    %458 = vmatpush1.msra.mxu0 0.0
    %459 = vmatprep.subr.mxu0 0.0
    %460 = vmatpush1.msra.mxu0 0.0
    %461 = vmatprep.subr.mxu0 0.0
    %462 = vmatpush1.msra.mxu0 0.0
    %463 = vmatprep.subr.mxu0 0.0
    %464 = vmatpush1.msra.mxu0 0.0
    %465 = vmatprep.subr.mxu0 0.0
    %466 = vmatpush1.msra.mxu0 0.0
    %467 = vmatprep.subr.mxu0 0.0
    %468 = vmatpush1.msra.mxu0 0.0
    %469 = vmatprep.subr.mxu0 0.0
    %470 = vmatpush1.msra.mxu0 0.0
    %471 = vmatprep.subr.mxu0 0.0
    %472 = vmatpush1.msra.mxu0 0.0
    %473 = vmatprep.subr.mxu0 0.0
    %474 = vmatpush1.msra.mxu0 0.0
    %475 = vmatprep.subr.mxu0 0.0
    %476 = vmatpush1.msra.mxu0 0.0
    %477 = vmatprep.subr.mxu0 0.0
    %478 = vmatpush1.msra.mxu0 0.0
    %479 = vmatprep.subr.mxu0 0.0
    %480 = vmatpush1.msra.mxu0 0.0
    %481 = vmatprep.subr.mxu0 0.0
    %482 = vmatpush1.msra.mxu0 0.0
    %483 = vmatprep.subr.mxu0 0.0
    %484 = vmatpush1.msra.mxu0 0.0
    %485 = vmatprep.subr.mxu0 0.0
    %486 = vmatpush1.msra.mxu0 0.0
    %487 = vmatprep.subr.mxu0 0.0
    %488 = vmatpush1.msra.mxu0 0.0
    %489 = vmatprep.subr.mxu0 0.0
    %490 = vmatpush1.msra.mxu0 0.0
    %491 = vmatprep.subr.mxu0 0.0
    %492 = vmatpush1.msra.mxu0 0.0
    %493 = vmatprep.subr.mxu0 0.0
    %494 = vmatpush1.msra.mxu0 0.0
    %495 = vmatprep.mubr.f32.mxu0 0.0
    %496 = vmatmul.mubr.f32.gmra.mrb[0].mxu0 %v429
    %v497 = vpop.f32.mrb[0].mxu0
    %v498 = vadd.f32 0.0, %v497
    %v499 = vpop.f32.mrb[0].mxu0
    %500 = vdwg.mxu0
    %v501 = vadd.f32 %v428, %v498
    %v502 = vxor.u32 %v501, 2147483648
    %v503 = vmul.f32 %v502, 1.442695
    %v504 = vpow.pop %v503
    %v505 = vadd.f32 %v504, 1.0
    %v506 = vrcp.pop %v505
    %v507 = vmul.f32 1.0, %v506
    %v508 = vmul.f32 %v507, 2.0
    %v509 = vsub.f32 %v508, 1.0
    %v510 = vmul.f32 %v507, %v415
    %512 = vrot.lane.b32.xlu0 %v509, 64
    %v513 = vpop.permute.xlu0 %512
    %v515 = vmul.f32 %v507, %v513
    %517 = vrot.lane.b32.xlu0 %v515, 32
    %v518 = vpop.permute.xlu0 %517
    %v520 = vadd.f32 %v510, %v518
    %v521 = vtanh.pop %v520
    %523 = vrot.lane.b32.xlu0 %v521, 64
    %v524 = vpop.permute.xlu0 %523
    %v526 = vmul.f32 %v507, %v524
    %528 = vrot.lane.b32.xlu0 %v526, 32
    %v529 = vpop.permute.xlu0 %528
    %s531 = scalar_lea.vmem [#allocation2], 8
    %532 = vst.msk [vmem:[%s531] sm:$0xff] %vm322, %v529
    %s533 = scalar_lea.vmem [#allocation4], 16
    %v534 = vld [vmem:[%s533] sm:$0xff]
    %v535 = vsel %vm322, %v529, 0
    %537 = vmatprep.subr.mxu0 0.0
    %538 = vmatpush1.msra.mxu0 %v317
    %539 = vmatprep.subr.mxu0 0.0
    %540 = vmatpush1.msra.mxu0 %v318
    %541 = vmatprep.subr.mxu0 0.0
    %542 = vmatpush1.msra.mxu0 %v319
    %543 = vmatprep.subr.mxu0 0.0
    %544 = vmatpush1.msra.mxu0 %v320
    %545 = vmatprep.subr.mxu0 0.0
    %546 = vmatpush1.msra.mxu0 0.0
    %547 = vmatprep.subr.mxu0 0.0
    %548 = vmatpush1.msra.mxu0 0.0
    %549 = vmatprep.subr.mxu0 0.0
    %550 = vmatpush1.msra.mxu0 0.0
    %551 = vmatprep.subr.mxu0 0.0
    %552 = vmatpush1.msra.mxu0 0.0
    %553 = vmatprep.subr.mxu0 0.0
    %554 = vmatpush1.msra.mxu0 0.0
    %555 = vmatprep.subr.mxu0 0.0
    %556 = vmatpush1.msra.mxu0 0.0
    %557 = vmatprep.subr.mxu0 0.0
    %558 = vmatpush1.msra.mxu0 0.0
    %559 = vmatprep.subr.mxu0 0.0
    %560 = vmatpush1.msra.mxu0 0.0
    %561 = vmatprep.subr.mxu0 0.0
    %562 = vmatpush1.msra.mxu0 0.0
    %563 = vmatprep.subr.mxu0 0.0
    %564 = vmatpush1.msra.mxu0 0.0
    %565 = vmatprep.subr.mxu0 0.0
    %566 = vmatpush1.msra.mxu0 0.0
    %567 = vmatprep.subr.mxu0 0.0
    %568 = vmatpush1.msra.mxu0 0.0
    %569 = vmatprep.subr.mxu0 0.0
    %570 = vmatpush1.msra.mxu0 0.0
    %571 = vmatprep.subr.mxu0 0.0
    %572 = vmatpush1.msra.mxu0 0.0
    %573 = vmatprep.subr.mxu0 0.0
    %574 = vmatpush1.msra.mxu0 0.0
    %575 = vmatprep.subr.mxu0 0.0
    %576 = vmatpush1.msra.mxu0 0.0
    %577 = vmatprep.subr.mxu0 0.0
    %578 = vmatpush1.msra.mxu0 0.0
    %579 = vmatprep.subr.mxu0 0.0
    %580 = vmatpush1.msra.mxu0 0.0
    %581 = vmatprep.subr.mxu0 0.0
    %582 = vmatpush1.msra.mxu0 0.0
    %583 = vmatprep.subr.mxu0 0.0
    %584 = vmatpush1.msra.mxu0 0.0
    %585 = vmatprep.subr.mxu0 0.0
    %586 = vmatpush1.msra.mxu0 0.0
    %587 = vmatprep.subr.mxu0 0.0
    %588 = vmatpush1.msra.mxu0 0.0
    %589 = vmatprep.subr.mxu0 0.0
    %590 = vmatpush1.msra.mxu0 0.0
    %591 = vmatprep.subr.mxu0 0.0
    %592 = vmatpush1.msra.mxu0 0.0
    %593 = vmatprep.subr.mxu0 0.0
    %594 = vmatpush1.msra.mxu0 0.0
    %595 = vmatprep.subr.mxu0 0.0
    %596 = vmatpush1.msra.mxu0 0.0
    %597 = vmatprep.subr.mxu0 0.0
    %598 = vmatpush1.msra.mxu0 0.0
    %599 = vmatprep.subr.mxu0 0.0
    %600 = vmatpush1.msra.mxu0 0.0
    %601 = vmatprep.mubr.f32.mxu0 0.0
    %602 = vmatmul.mubr.f32.gmra.mrb[0].mxu0 %v535
    %v603 = vpop.f32.mrb[0].mxu0
    %v604 = vadd.f32 0.0, %v603
    %v605 = vpop.f32.mrb[0].mxu0
    %606 = vdwg.mxu0
    %v607 = vadd.f32 %v534, %v604
    %v608 = vxor.u32 %v607, 2147483648
    %v609 = vmul.f32 %v608, 1.442695
    %v610 = vpow.pop %v609
    %v611 = vadd.f32 %v610, 1.0
    %v612 = vrcp.pop %v611
    %v613 = vmul.f32 1.0, %v612
    %v614 = vmul.f32 %v613, 2.0
    %v615 = vsub.f32 %v614, 1.0
    %v616 = vmul.f32 %v613, %v520
    %618 = vrot.lane.b32.xlu0 %v615, 64
    %v619 = vpop.permute.xlu0 %618
    %v621 = vmul.f32 %v613, %v619
    %623 = vrot.lane.b32.xlu0 %v621, 32
    %v624 = vpop.permute.xlu0 %623
    %v626 = vadd.f32 %v616, %v624
    %v627 = vtanh.pop %v626
    %629 = vrot.lane.b32.xlu0 %v627, 64
    %v630 = vpop.permute.xlu0 %629
    %v632 = vmul.f32 %v613, %v630
    %634 = vrot.lane.b32.xlu0 %v632, 32
    %v635 = vpop.permute.xlu0 %634
    %s637 = scalar_lea.vmem [#allocation2], 16
    %638 = vst.msk [vmem:[%s637] sm:$0xff] %vm322, %v635
    %s639 = scalar_lea.vmem [#allocation4], 24
    %v640 = vld [vmem:[%s639] sm:$0xff]
    %v641 = vsel %vm322, %v635, 0
    %643 = vmatprep.subr.mxu0 0.0
    %644 = vmatpush1.msra.mxu0 %v317
    %645 = vmatprep.subr.mxu0 0.0
    %646 = vmatpush1.msra.mxu0 %v318
    %647 = vmatprep.subr.mxu0 0.0
    %648 = vmatpush1.msra.mxu0 %v319
    %649 = vmatprep.subr.mxu0 0.0
    %650 = vmatpush1.msra.mxu0 %v320
    %651 = vmatprep.subr.mxu0 0.0
    %652 = vmatpush1.msra.mxu0 0.0
    %653 = vmatprep.subr.mxu0 0.0
    %654 = vmatpush1.msra.mxu0 0.0
    %655 = vmatprep.subr.mxu0 0.0
    %656 = vmatpush1.msra.mxu0 0.0
    %657 = vmatprep.subr.mxu0 0.0
    %658 = vmatpush1.msra.mxu0 0.0
    %659 = vmatprep.subr.mxu0 0.0
    %660 = vmatpush1.msra.mxu0 0.0
    %661 = vmatprep.subr.mxu0 0.0
    %662 = vmatpush1.msra.mxu0 0.0
    %663 = vmatprep.subr.mxu0 0.0
    %664 = vmatpush1.msra.mxu0 0.0
    %665 = vmatprep.subr.mxu0 0.0
    %666 = vmatpush1.msra.mxu0 0.0
    %667 = vmatprep.subr.mxu0 0.0
    %668 = vmatpush1.msra.mxu0 0.0
    %669 = vmatprep.subr.mxu0 0.0
    %670 = vmatpush1.msra.mxu0 0.0
    %671 = vmatprep.subr.mxu0 0.0
    %672 = vmatpush1.msra.mxu0 0.0
    %673 = vmatprep.subr.mxu0 0.0
    %674 = vmatpush1.msra.mxu0 0.0
    %675 = vmatprep.subr.mxu0 0.0
    %676 = vmatpush1.msra.mxu0 0.0
    %677 = vmatprep.subr.mxu0 0.0
    %678 = vmatpush1.msra.mxu0 0.0
    %679 = vmatprep.subr.mxu0 0.0
    %680 = vmatpush1.msra.mxu0 0.0
    %681 = vmatprep.subr.mxu0 0.0
    %682 = vmatpush1.msra.mxu0 0.0
    %683 = vmatprep.subr.mxu0 0.0
    %684 = vmatpush1.msra.mxu0 0.0
    %685 = vmatprep.subr.mxu0 0.0
    %686 = vmatpush1.msra.mxu0 0.0
    %687 = vmatprep.subr.mxu0 0.0
    %688 = vmatpush1.msra.mxu0 0.0
    %689 = vmatprep.subr.mxu0 0.0
    %690 = vmatpush1.msra.mxu0 0.0
    %691 = vmatprep.subr.mxu0 0.0
    %692 = vmatpush1.msra.mxu0 0.0
    %693 = vmatprep.subr.mxu0 0.0
    %694 = vmatpush1.msra.mxu0 0.0
    %695 = vmatprep.subr.mxu0 0.0
    %696 = vmatpush1.msra.mxu0 0.0
    %697 = vmatprep.subr.mxu0 0.0
    %698 = vmatpush1.msra.mxu0 0.0
    %699 = vmatprep.subr.mxu0 0.0
    %700 = vmatpush1.msra.mxu0 0.0
    %701 = vmatprep.subr.mxu0 0.0
    %702 = vmatpush1.msra.mxu0 0.0
    %703 = vmatprep.subr.mxu0 0.0
    %704 = vmatpush1.msra.mxu0 0.0
    %705 = vmatprep.subr.mxu0 0.0
    %706 = vmatpush1.msra.mxu0 0.0
    %707 = vmatprep.mubr.f32.mxu0 0.0
    %708 = vmatmul.mubr.f32.gmra.mrb[0].mxu0 %v641
    %v709 = vpop.f32.mrb[0].mxu0
    %v710 = vadd.f32 0.0, %v709
    %v711 = vpop.f32.mrb[0].mxu0
    %712 = vdwg.mxu0
    %v713 = vadd.f32 %v640, %v710
    %v714 = vxor.u32 %v713, 2147483648
    %v715 = vmul.f32 %v714, 1.442695
    %v716 = vpow.pop %v715
    %v717 = vadd.f32 %v716, 1.0
    %v718 = vrcp.pop %v717
    %v719 = vmul.f32 1.0, %v718
    %v720 = vmul.f32 %v719, 2.0
    %v721 = vsub.f32 %v720, 1.0
    %v722 = vmul.f32 %v719, %v626
    %724 = vrot.lane.b32.xlu0 %v721, 64
    %v725 = vpop.permute.xlu0 %724
    %v727 = vmul.f32 %v719, %v725
    %729 = vrot.lane.b32.xlu0 %v727, 32
    %v730 = vpop.permute.xlu0 %729
    %v732 = vadd.f32 %v722, %v730
    %v733 = vtanh.pop %v732
    %735 = vrot.lane.b32.xlu0 %v733, 64
    %v736 = vpop.permute.xlu0 %735
    %v738 = vmul.f32 %v719, %v736
    %740 = vrot.lane.b32.xlu0 %v738, 32
    %v741 = vpop.permute.xlu0 %740
    %s743 = scalar_lea.vmem [#allocation2], 24
    %744 = vst.msk [vmem:[%s743] sm:$0xff] %vm322, %v741
    %s745 = scalar_lea.vmem [#allocation4], 32
    %v746 = vld [vmem:[%s745] sm:$0xff]
    %v747 = vsel %vm322, %v741, 0
    %749 = vmatprep.subr.mxu0 0.0
    %750 = vmatpush1.msra.mxu0 %v317
    %751 = vmatprep.subr.mxu0 0.0
    %752 = vmatpush1.msra.mxu0 %v318
    %753 = vmatprep.subr.mxu0 0.0
    %754 = vmatpush1.msra.mxu0 %v319
    %755 = vmatprep.subr.mxu0 0.0
    %756 = vmatpush1.msra.mxu0 %v320
    %757 = vmatprep.subr.mxu0 0.0
    %758 = vmatpush1.msra.mxu0 0.0
    %759 = vmatprep.subr.mxu0 0.0
    %760 = vmatpush1.msra.mxu0 0.0
    %761 = vmatprep.subr.mxu0 0.0
    %762 = vmatpush1.msra.mxu0 0.0
    %763 = vmatprep.subr.mxu0 0.0
    %764 = vmatpush1.msra.mxu0 0.0
    %765 = vmatprep.subr.mxu0 0.0
    %766 = vmatpush1.msra.mxu0 0.0
    %767 = vmatprep.subr.mxu0 0.0
    %768 = vmatpush1.msra.mxu0 0.0
    %769 = vmatprep.subr.mxu0 0.0
    %770 = vmatpush1.msra.mxu0 0.0
    %771 = vmatprep.subr.mxu0 0.0
    %772 = vmatpush1.msra.mxu0 0.0
    %773 = vmatprep.subr.mxu0 0.0
    %774 = vmatpush1.msra.mxu0 0.0
    %775 = vmatprep.subr.mxu0 0.0
    %776 = vmatpush1.msra.mxu0 0.0
    %777 = vmatprep.subr.mxu0 0.0
    %778 = vmatpush1.msra.mxu0 0.0
    %779 = vmatprep.subr.mxu0 0.0
    %780 = vmatpush1.msra.mxu0 0.0
    %781 = vmatprep.subr.mxu0 0.0
    %782 = vmatpush1.msra.mxu0 0.0
    %783 = vmatprep.subr.mxu0 0.0
    %784 = vmatpush1.msra.mxu0 0.0
    %785 = vmatprep.subr.mxu0 0.0
    %786 = vmatpush1.msra.mxu0 0.0
    %787 = vmatprep.subr.mxu0 0.0
    %788 = vmatpush1.msra.mxu0 0.0
    %789 = vmatprep.subr.mxu0 0.0
    %790 = vmatpush1.msra.mxu0 0.0
    %791 = vmatprep.subr.mxu0 0.0
    %792 = vmatpush1.msra.mxu0 0.0
    %793 = vmatprep.subr.mxu0 0.0
    %794 = vmatpush1.msra.mxu0 0.0
    %795 = vmatprep.subr.mxu0 0.0
    %796 = vmatpush1.msra.mxu0 0.0
    %797 = vmatprep.subr.mxu0 0.0
    %798 = vmatpush1.msra.mxu0 0.0
    %799 = vmatprep.subr.mxu0 0.0
    %800 = vmatpush1.msra.mxu0 0.0
    %801 = vmatprep.subr.mxu0 0.0
    %802 = vmatpush1.msra.mxu0 0.0
    %803 = vmatprep.subr.mxu0 0.0
    %804 = vmatpush1.msra.mxu0 0.0
    %805 = vmatprep.subr.mxu0 0.0
    %806 = vmatpush1.msra.mxu0 0.0
    %807 = vmatprep.subr.mxu0 0.0
    %808 = vmatpush1.msra.mxu0 0.0
    %809 = vmatprep.subr.mxu0 0.0
    %810 = vmatpush1.msra.mxu0 0.0
    %811 = vmatprep.subr.mxu0 0.0
    %812 = vmatpush1.msra.mxu0 0.0
    %813 = vmatprep.mubr.f32.mxu0 0.0
    %814 = vmatmul.mubr.f32.gmra.mrb[0].mxu0 %v747
    %v815 = vpop.f32.mrb[0].mxu0
    %v816 = vadd.f32 0.0, %v815
    %v817 = vpop.f32.mrb[0].mxu0
    %818 = vdwg.mxu0
    %v819 = vadd.f32 %v746, %v816
    %v820 = vxor.u32 %v819, 2147483648
    %v821 = vmul.f32 %v820, 1.442695
    %v822 = vpow.pop %v821
    %v823 = vadd.f32 %v822, 1.0
    %v824 = vrcp.pop %v823
    %v825 = vmul.f32 1.0, %v824
    %v826 = vmul.f32 %v825, 2.0
    %v827 = vsub.f32 %v826, 1.0
    %v828 = vmul.f32 %v825, %v732
    %830 = vrot.lane.b32.xlu0 %v827, 64
    %v831 = vpop.permute.xlu0 %830
    %v833 = vmul.f32 %v825, %v831
    %835 = vrot.lane.b32.xlu0 %v833, 32
    %v836 = vpop.permute.xlu0 %835
    %v838 = vadd.f32 %v828, %v836
    %v839 = vtanh.pop %v838
    %841 = vrot.lane.b32.xlu0 %v839, 64
    %v842 = vpop.permute.xlu0 %841
    %v844 = vmul.f32 %v825, %v842
    %846 = vrot.lane.b32.xlu0 %v844, 32
    %v847 = vpop.permute.xlu0 %846
    %s849 = scalar_lea.vmem [#allocation2], 32
    %850 = vst.msk [vmem:[%s849] sm:$0xff] %vm322, %v847
    %s851 = scalar_lea.vmem [#allocation4], 40
    %v852 = vld [vmem:[%s851] sm:$0xff]
    %v853 = vsel %vm322, %v847, 0
    %855 = vmatprep.subr.mxu0 0.0
    %856 = vmatpush1.msra.mxu0 %v317
    %857 = vmatprep.subr.mxu0 0.0
    %858 = vmatpush1.msra.mxu0 %v318
    %859 = vmatprep.subr.mxu0 0.0
    %860 = vmatpush1.msra.mxu0 %v319
    %861 = vmatprep.subr.mxu0 0.0
    %862 = vmatpush1.msra.mxu0 %v320
    %863 = vmatprep.subr.mxu0 0.0
    %864 = vmatpush1.msra.mxu0 0.0
    %865 = vmatprep.subr.mxu0 0.0
    %866 = vmatpush1.msra.mxu0 0.0
    %867 = vmatprep.subr.mxu0 0.0
    %868 = vmatpush1.msra.mxu0 0.0
    %869 = vmatprep.subr.mxu0 0.0
    %870 = vmatpush1.msra.mxu0 0.0
    %871 = vmatprep.subr.mxu0 0.0
    %872 = vmatpush1.msra.mxu0 0.0
    %873 = vmatprep.subr.mxu0 0.0
    %874 = vmatpush1.msra.mxu0 0.0
    %875 = vmatprep.subr.mxu0 0.0
    %876 = vmatpush1.msra.mxu0 0.0
    %877 = vmatprep.subr.mxu0 0.0
    %878 = vmatpush1.msra.mxu0 0.0
    %879 = vmatprep.subr.mxu0 0.0
    %880 = vmatpush1.msra.mxu0 0.0
    %881 = vmatprep.subr.mxu0 0.0
    %882 = vmatpush1.msra.mxu0 0.0
    %883 = vmatprep.subr.mxu0 0.0
    %884 = vmatpush1.msra.mxu0 0.0
    %885 = vmatprep.subr.mxu0 0.0
    %886 = vmatpush1.msra.mxu0 0.0
    %887 = vmatprep.subr.mxu0 0.0
    %888 = vmatpush1.msra.mxu0 0.0
    %889 = vmatprep.subr.mxu0 0.0
    %890 = vmatpush1.msra.mxu0 0.0
    %891 = vmatprep.subr.mxu0 0.0
    %892 = vmatpush1.msra.mxu0 0.0
    %893 = vmatprep.subr.mxu0 0.0
    %894 = vmatpush1.msra.mxu0 0.0
    %895 = vmatprep.subr.mxu0 0.0
    %896 = vmatpush1.msra.mxu0 0.0
    %897 = vmatprep.subr.mxu0 0.0
    %898 = vmatpush1.msra.mxu0 0.0
    %899 = vmatprep.subr.mxu0 0.0
    %900 = vmatpush1.msra.mxu0 0.0
    %901 = vmatprep.subr.mxu0 0.0
    %902 = vmatpush1.msra.mxu0 0.0
    %903 = vmatprep.subr.mxu0 0.0
    %904 = vmatpush1.msra.mxu0 0.0
    %905 = vmatprep.subr.mxu0 0.0
    %906 = vmatpush1.msra.mxu0 0.0
    %907 = vmatprep.subr.mxu0 0.0
    %908 = vmatpush1.msra.mxu0 0.0
    %909 = vmatprep.subr.mxu0 0.0
    %910 = vmatpush1.msra.mxu0 0.0
    %911 = vmatprep.subr.mxu0 0.0
    %912 = vmatpush1.msra.mxu0 0.0
    %913 = vmatprep.subr.mxu0 0.0
    %914 = vmatpush1.msra.mxu0 0.0
    %915 = vmatprep.subr.mxu0 0.0
    %916 = vmatpush1.msra.mxu0 0.0
    %917 = vmatprep.subr.mxu0 0.0
    %918 = vmatpush1.msra.mxu0 0.0
    %919 = vmatprep.mubr.f32.mxu0 0.0
    %920 = vmatmul.mubr.f32.gmra.mrb[0].mxu0 %v853
    %v921 = vpop.f32.mrb[0].mxu0
    %v922 = vadd.f32 0.0, %v921
    %v923 = vpop.f32.mrb[0].mxu0
    %924 = vdwg.mxu0
    %v925 = vadd.f32 %v852, %v922
    %v926 = vxor.u32 %v925, 2147483648
    %v927 = vmul.f32 %v926, 1.442695
    %v928 = vpow.pop %v927
    %v929 = vadd.f32 %v928, 1.0
    %v930 = vrcp.pop %v929
    %v931 = vmul.f32 1.0, %v930
    %v932 = vmul.f32 %v931, 2.0
    %v933 = vsub.f32 %v932, 1.0
    %v934 = vmul.f32 %v931, %v838
    %936 = vrot.lane.b32.xlu0 %v933, 64
    %v937 = vpop.permute.xlu0 %936
    %v939 = vmul.f32 %v931, %v937
    %941 = vrot.lane.b32.xlu0 %v939, 32
    %v942 = vpop.permute.xlu0 %941
    %v944 = vadd.f32 %v934, %v942
    %v945 = vtanh.pop %v944
    %947 = vrot.lane.b32.xlu0 %v945, 64
    %v948 = vpop.permute.xlu0 %947
    %v950 = vmul.f32 %v931, %v948
    %952 = vrot.lane.b32.xlu0 %v950, 32
    %v953 = vpop.permute.xlu0 %952
    %s955 = scalar_lea.vmem [#allocation2], 40
    %956 = vst.msk [vmem:[%s955] sm:$0xff] %vm322, %v953
    %s957 = scalar_lea.vmem [#allocation4], 48
    %v958 = vld [vmem:[%s957] sm:$0xff]
    %v959 = vsel %vm322, %v953, 0
    %961 = vmatprep.subr.mxu0 0.0
    %962 = vmatpush1.msra.mxu0 %v317
    %963 = vmatprep.subr.mxu0 0.0
    %964 = vmatpush1.msra.mxu0 %v318
    %965 = vmatprep.subr.mxu0 0.0
    %966 = vmatpush1.msra.mxu0 %v319
    %967 = vmatprep.subr.mxu0 0.0
    %968 = vmatpush1.msra.mxu0 %v320
    %969 = vmatprep.subr.mxu0 0.0
    %970 = vmatpush1.msra.mxu0 0.0
    %971 = vmatprep.subr.mxu0 0.0
    %972 = vmatpush1.msra.mxu0 0.0
    %973 = vmatprep.subr.mxu0 0.0
    %974 = vmatpush1.msra.mxu0 0.0
    %975 = vmatprep.subr.mxu0 0.0
    %976 = vmatpush1.msra.mxu0 0.0
    %977 = vmatprep.subr.mxu0 0.0
    %978 = vmatpush1.msra.mxu0 0.0
    %979 = vmatprep.subr.mxu0 0.0
    %980 = vmatpush1.msra.mxu0 0.0
    %981 = vmatprep.subr.mxu0 0.0
    %982 = vmatpush1.msra.mxu0 0.0
    %983 = vmatprep.subr.mxu0 0.0
    %984 = vmatpush1.msra.mxu0 0.0
    %985 = vmatprep.subr.mxu0 0.0
    %986 = vmatpush1.msra.mxu0 0.0
    %987 = vmatprep.subr.mxu0 0.0
    %988 = vmatpush1.msra.mxu0 0.0
    %989 = vmatprep.subr.mxu0 0.0
    %990 = vmatpush1.msra.mxu0 0.0
    %991 = vmatprep.subr.mxu0 0.0
    %992 = vmatpush1.msra.mxu0 0.0
    %993 = vmatprep.subr.mxu0 0.0
    %994 = vmatpush1.msra.mxu0 0.0
    %995 = vmatprep.subr.mxu0 0.0
    %996 = vmatpush1.msra.mxu0 0.0
    %997 = vmatprep.subr.mxu0 0.0
    %998 = vmatpush1.msra.mxu0 0.0
    %999 = vmatprep.subr.mxu0 0.0
    %1000 = vmatpush1.msra.mxu0 0.0
    %1001 = vmatprep.subr.mxu0 0.0
    %1002 = vmatpush1.msra.mxu0 0.0
    %1003 = vmatprep.subr.mxu0 0.0
    %1004 = vmatpush1.msra.mxu0 0.0
    %1005 = vmatprep.subr.mxu0 0.0
    %1006 = vmatpush1.msra.mxu0 0.0
    %1007 = vmatprep.subr.mxu0 0.0
    %1008 = vmatpush1.msra.mxu0 0.0
    %1009 = vmatprep.subr.mxu0 0.0
    %1010 = vmatpush1.msra.mxu0 0.0
    %1011 = vmatprep.subr.mxu0 0.0
    %1012 = vmatpush1.msra.mxu0 0.0
    %1013 = vmatprep.subr.mxu0 0.0
    %1014 = vmatpush1.msra.mxu0 0.0
    %1015 = vmatprep.subr.mxu0 0.0
    %1016 = vmatpush1.msra.mxu0 0.0
    %1017 = vmatprep.subr.mxu0 0.0
    %1018 = vmatpush1.msra.mxu0 0.0
    %1019 = vmatprep.subr.mxu0 0.0
    %1020 = vmatpush1.msra.mxu0 0.0
    %1021 = vmatprep.subr.mxu0 0.0
    %1022 = vmatpush1.msra.mxu0 0.0
    %1023 = vmatprep.subr.mxu0 0.0
    %1024 = vmatpush1.msra.mxu0 0.0
    %1025 = vmatprep.mubr.f32.mxu0 0.0
    %1026 = vmatmul.mubr.f32.gmra.mrb[0].mxu0 %v959
    %v1027 = vpop.f32.mrb[0].mxu0
    %v1028 = vadd.f32 0.0, %v1027
    %v1029 = vpop.f32.mrb[0].mxu0
    %1030 = vdwg.mxu0
    %v1031 = vadd.f32 %v958, %v1028
    %v1032 = vxor.u32 %v1031, 2147483648
    %v1033 = vmul.f32 %v1032, 1.442695
    %v1034 = vpow.pop %v1033
    %v1035 = vadd.f32 %v1034, 1.0
    %v1036 = vrcp.pop %v1035
    %v1037 = vmul.f32 1.0, %v1036
    %v1038 = vmul.f32 %v1037, 2.0
    %v1039 = vsub.f32 %v1038, 1.0
    %v1040 = vmul.f32 %v1037, %v944
    %1042 = vrot.lane.b32.xlu0 %v1039, 64
    %v1043 = vpop.permute.xlu0 %1042
    %v1045 = vmul.f32 %v1037, %v1043
    %1047 = vrot.lane.b32.xlu0 %v1045, 32
    %v1048 = vpop.permute.xlu0 %1047
    %v1050 = vadd.f32 %v1040, %v1048
    %v1051 = vtanh.pop %v1050
    %1053 = vrot.lane.b32.xlu0 %v1051, 64
    %v1054 = vpop.permute.xlu0 %1053
    %v1056 = vmul.f32 %v1037, %v1054
    %1058 = vrot.lane.b32.xlu0 %v1056, 32
    %v1059 = vpop.permute.xlu0 %1058
    %s1061 = scalar_lea.vmem [#allocation2], 48
    %1062 = vst.msk [vmem:[%s1061] sm:$0xff] %vm322, %v1059
    %s1063 = scalar_lea.vmem [#allocation4], 56
    %v1064 = vld [vmem:[%s1063] sm:$0xff]
    %v1065 = vsel %vm322, %v1059, 0
    %1067 = vmatprep.subr.mxu0 0.0
    %1068 = vmatpush1.msra.mxu0 %v317
    %1069 = vmatprep.subr.mxu0 0.0
    %1070 = vmatpush1.msra.mxu0 %v318
    %1071 = vmatprep.subr.mxu0 0.0
    %1072 = vmatpush1.msra.mxu0 %v319
    %1073 = vmatprep.subr.mxu0 0.0
    %1074 = vmatpush1.msra.mxu0 %v320
    %1075 = vmatprep.subr.mxu0 0.0
    %1076 = vmatpush1.msra.mxu0 0.0
    %1077 = vmatprep.subr.mxu0 0.0
    %1078 = vmatpush1.msra.mxu0 0.0
    %1079 = vmatprep.subr.mxu0 0.0
    %1080 = vmatpush1.msra.mxu0 0.0
    %1081 = vmatprep.subr.mxu0 0.0
    %1082 = vmatpush1.msra.mxu0 0.0
    %1083 = vmatprep.subr.mxu0 0.0
    %1084 = vmatpush1.msra.mxu0 0.0
    %1085 = vmatprep.subr.mxu0 0.0
    %1086 = vmatpush1.msra.mxu0 0.0
    %1087 = vmatprep.subr.mxu0 0.0
    %1088 = vmatpush1.msra.mxu0 0.0
    %1089 = vmatprep.subr.mxu0 0.0
    %1090 = vmatpush1.msra.mxu0 0.0
    %1091 = vmatprep.subr.mxu0 0.0
    %1092 = vmatpush1.msra.mxu0 0.0
    %1093 = vmatprep.subr.mxu0 0.0
    %1094 = vmatpush1.msra.mxu0 0.0
    %1095 = vmatprep.subr.mxu0 0.0
    %1096 = vmatpush1.msra.mxu0 0.0
    %1097 = vmatprep.subr.mxu0 0.0
    %1098 = vmatpush1.msra.mxu0 0.0
    %1099 = vmatprep.subr.mxu0 0.0
    %1100 = vmatpush1.msra.mxu0 0.0
    %1101 = vmatprep.subr.mxu0 0.0
    %1102 = vmatpush1.msra.mxu0 0.0
    %1103 = vmatprep.subr.mxu0 0.0
    %1104 = vmatpush1.msra.mxu0 0.0
    %1105 = vmatprep.subr.mxu0 0.0
    %1106 = vmatpush1.msra.mxu0 0.0
    %1107 = vmatprep.subr.mxu0 0.0
    %1108 = vmatpush1.msra.mxu0 0.0
    %1109 = vmatprep.subr.mxu0 0.0
    %1110 = vmatpush1.msra.mxu0 0.0
    %1111 = vmatprep.subr.mxu0 0.0
    %1112 = vmatpush1.msra.mxu0 0.0
    %1113 = vmatprep.subr.mxu0 0.0
    %1114 = vmatpush1.msra.mxu0 0.0
    %1115 = vmatprep.subr.mxu0 0.0
    %1116 = vmatpush1.msra.mxu0 0.0
    %1117 = vmatprep.subr.mxu0 0.0
    %1118 = vmatpush1.msra.mxu0 0.0
    %1119 = vmatprep.subr.mxu0 0.0
    %1120 = vmatpush1.msra.mxu0 0.0
    %1121 = vmatprep.subr.mxu0 0.0
    %1122 = vmatpush1.msra.mxu0 0.0
    %1123 = vmatprep.subr.mxu0 0.0
    %1124 = vmatpush1.msra.mxu0 0.0
    %1125 = vmatprep.subr.mxu0 0.0
    %1126 = vmatpush1.msra.mxu0 0.0
    %1127 = vmatprep.subr.mxu0 0.0
    %1128 = vmatpush1.msra.mxu0 0.0
    %1129 = vmatprep.subr.mxu0 0.0
    %1130 = vmatpush1.msra.mxu0 0.0
    %1131 = vmatprep.mubr.f32.mxu0 0.0
    %1132 = vmatmul.mubr.f32.gmra.mrb[0].mxu0 %v1065
    %v1133 = vpop.f32.mrb[0].mxu0
    %v1134 = vadd.f32 0.0, %v1133
    %v1135 = vpop.f32.mrb[0].mxu0
    %1136 = vdwg.mxu0
    %v1137 = vadd.f32 %v1064, %v1134
    %v1138 = vxor.u32 %v1137, 2147483648
    %v1139 = vmul.f32 %v1138, 1.442695
    %v1140 = vpow.pop %v1139
    %v1141 = vadd.f32 %v1140, 1.0
    %v1142 = vrcp.pop %v1141
    %v1143 = vmul.f32 1.0, %v1142
    %v1144 = vmul.f32 %v1143, 2.0
    %v1145 = vsub.f32 %v1144, 1.0
    %v1146 = vmul.f32 %v1143, %v1050
    %1148 = vrot.lane.b32.xlu0 %v1145, 64
    %v1149 = vpop.permute.xlu0 %1148
    %v1151 = vmul.f32 %v1143, %v1149
    %1153 = vrot.lane.b32.xlu0 %v1151, 32
    %v1154 = vpop.permute.xlu0 %1153
    %v1156 = vadd.f32 %v1146, %v1154
    %v1157 = vtanh.pop %v1156
    %1159 = vrot.lane.b32.xlu0 %v1157, 64
    %v1160 = vpop.permute.xlu0 %1159
    %v1162 = vmul.f32 %v1143, %v1160
    %1164 = vrot.lane.b32.xlu0 %v1162, 32
    %v1165 = vpop.permute.xlu0 %1164
    %s1167 = scalar_lea.vmem [#allocation2], 56
    %1168 = vst.msk [vmem:[%s1167] sm:$0xff] %vm322, %v1165
    %s1169 = scalar_lea.vmem [#allocation4], 64
    %v1170 = vld [vmem:[%s1169] sm:$0xff]
    %v1171 = vsel %vm322, %v1165, 0
    %1173 = vmatprep.subr.mxu0 0.0
    %1174 = vmatpush1.msra.mxu0 %v317
    %1175 = vmatprep.subr.mxu0 0.0
    %1176 = vmatpush1.msra.mxu0 %v318
    %1177 = vmatprep.subr.mxu0 0.0
    %1178 = vmatpush1.msra.mxu0 %v319
    %1179 = vmatprep.subr.mxu0 0.0
    %1180 = vmatpush1.msra.mxu0 %v320
    %1181 = vmatprep.subr.mxu0 0.0
    %1182 = vmatpush1.msra.mxu0 0.0
    %1183 = vmatprep.subr.mxu0 0.0
    %1184 = vmatpush1.msra.mxu0 0.0
    %1185 = vmatprep.subr.mxu0 0.0
    %1186 = vmatpush1.msra.mxu0 0.0
    %1187 = vmatprep.subr.mxu0 0.0
    %1188 = vmatpush1.msra.mxu0 0.0
    %1189 = vmatprep.subr.mxu0 0.0
    %1190 = vmatpush1.msra.mxu0 0.0
    %1191 = vmatprep.subr.mxu0 0.0
    %1192 = vmatpush1.msra.mxu0 0.0
    %1193 = vmatprep.subr.mxu0 0.0
    %1194 = vmatpush1.msra.mxu0 0.0
    %1195 = vmatprep.subr.mxu0 0.0
    %1196 = vmatpush1.msra.mxu0 0.0
    %1197 = vmatprep.subr.mxu0 0.0
    %1198 = vmatpush1.msra.mxu0 0.0
    %1199 = vmatprep.subr.mxu0 0.0
    %1200 = vmatpush1.msra.mxu0 0.0
    %1201 = vmatprep.subr.mxu0 0.0
    %1202 = vmatpush1.msra.mxu0 0.0
    %1203 = vmatprep.subr.mxu0 0.0
    %1204 = vmatpush1.msra.mxu0 0.0
    %1205 = vmatprep.subr.mxu0 0.0
    %1206 = vmatpush1.msra.mxu0 0.0
    %1207 = vmatprep.subr.mxu0 0.0
    %1208 = vmatpush1.msra.mxu0 0.0
    %1209 = vmatprep.subr.mxu0 0.0
    %1210 = vmatpush1.msra.mxu0 0.0
    %1211 = vmatprep.subr.mxu0 0.0
    %1212 = vmatpush1.msra.mxu0 0.0
    %1213 = vmatprep.subr.mxu0 0.0
    %1214 = vmatpush1.msra.mxu0 0.0
    %1215 = vmatprep.subr.mxu0 0.0
    %1216 = vmatpush1.msra.mxu0 0.0
    %1217 = vmatprep.subr.mxu0 0.0
    %1218 = vmatpush1.msra.mxu0 0.0
    %1219 = vmatprep.subr.mxu0 0.0
    %1220 = vmatpush1.msra.mxu0 0.0
    %1221 = vmatprep.subr.mxu0 0.0
    %1222 = vmatpush1.msra.mxu0 0.0
    %1223 = vmatprep.subr.mxu0 0.0
    %1224 = vmatpush1.msra.mxu0 0.0
    %1225 = vmatprep.subr.mxu0 0.0
    %1226 = vmatpush1.msra.mxu0 0.0
    %1227 = vmatprep.subr.mxu0 0.0
    %1228 = vmatpush1.msra.mxu0 0.0
    %1229 = vmatprep.subr.mxu0 0.0
    %1230 = vmatpush1.msra.mxu0 0.0
    %1231 = vmatprep.subr.mxu0 0.0
    %1232 = vmatpush1.msra.mxu0 0.0
    %1233 = vmatprep.subr.mxu0 0.0
    %1234 = vmatpush1.msra.mxu0 0.0
    %1235 = vmatprep.subr.mxu0 0.0
    %1236 = vmatpush1.msra.mxu0 0.0
    %1237 = vmatprep.mubr.f32.mxu0 0.0
    %1238 = vmatmul.mubr.f32.gmra.mrb[0].mxu0 %v1171
    %v1239 = vpop.f32.mrb[0].mxu0
    %v1240 = vadd.f32 0.0, %v1239
    %v1241 = vpop.f32.mrb[0].mxu0
    %1242 = vdwg.mxu0
    %v1243 = vadd.f32 %v1170, %v1240
    %v1244 = vxor.u32 %v1243, 2147483648
    %v1245 = vmul.f32 %v1244, 1.442695
    %v1246 = vpow.pop %v1245
    %v1247 = vadd.f32 %v1246, 1.0
    %v1248 = vrcp.pop %v1247
    %v1249 = vmul.f32 1.0, %v1248
    %v1250 = vmul.f32 %v1249, 2.0
    %v1251 = vsub.f32 %v1250, 1.0
    %v1252 = vmul.f32 %v1249, %v1156
    %1254 = vrot.lane.b32.xlu0 %v1251, 64
    %v1255 = vpop.permute.xlu0 %1254
    %v1257 = vmul.f32 %v1249, %v1255
    %1259 = vrot.lane.b32.xlu0 %v1257, 32
    %v1260 = vpop.permute.xlu0 %1259
    %v1262 = vadd.f32 %v1252, %v1260
    %v1263 = vtanh.pop %v1262
    %1265 = vrot.lane.b32.xlu0 %v1263, 64
    %v1266 = vpop.permute.xlu0 %1265
    %v1268 = vmul.f32 %v1249, %v1266
    %1270 = vrot.lane.b32.xlu0 %v1268, 32
    %v1271 = vpop.permute.xlu0 %1270
    %s1273 = scalar_lea.vmem [#allocation2], 64
    %1274 = vst.msk [vmem:[%s1273] sm:$0xff] %vm322, %v1271
    %s1275 = scalar_lea.vmem [#allocation4], 72
    %v1276 = vld [vmem:[%s1275] sm:$0xff]
    %v1277 = vsel %vm322, %v1271, 0
    %1279 = vmatprep.subr.mxu0 0.0
    %1280 = vmatpush1.msra.mxu0 %v317
    %1281 = vmatprep.subr.mxu0 0.0
    %1282 = vmatpush1.msra.mxu0 %v318
    %1283 = vmatprep.subr.mxu0 0.0
    %1284 = vmatpush1.msra.mxu0 %v319
    %1285 = vmatprep.subr.mxu0 0.0
    %1286 = vmatpush1.msra.mxu0 %v320
    %1287 = vmatprep.subr.mxu0 0.0
    %1288 = vmatpush1.msra.mxu0 0.0
    %1289 = vmatprep.subr.mxu0 0.0
    %1290 = vmatpush1.msra.mxu0 0.0
    %1291 = vmatprep.subr.mxu0 0.0
    %1292 = vmatpush1.msra.mxu0 0.0
    %1293 = vmatprep.subr.mxu0 0.0
    %1294 = vmatpush1.msra.mxu0 0.0
    %1295 = vmatprep.subr.mxu0 0.0
    %1296 = vmatpush1.msra.mxu0 0.0
    %1297 = vmatprep.subr.mxu0 0.0
    %1298 = vmatpush1.msra.mxu0 0.0
    %1299 = vmatprep.subr.mxu0 0.0
    %1300 = vmatpush1.msra.mxu0 0.0
    %1301 = vmatprep.subr.mxu0 0.0
    %1302 = vmatpush1.msra.mxu0 0.0
    %1303 = vmatprep.subr.mxu0 0.0
    %1304 = vmatpush1.msra.mxu0 0.0
    %1305 = vmatprep.subr.mxu0 0.0
    %1306 = vmatpush1.msra.mxu0 0.0
    %1307 = vmatprep.subr.mxu0 0.0
    %1308 = vmatpush1.msra.mxu0 0.0
    %1309 = vmatprep.subr.mxu0 0.0
    %1310 = vmatpush1.msra.mxu0 0.0
    %1311 = vmatprep.subr.mxu0 0.0
    %1312 = vmatpush1.msra.mxu0 0.0
    %1313 = vmatprep.subr.mxu0 0.0
    %1314 = vmatpush1.msra.mxu0 0.0
    %1315 = vmatprep.subr.mxu0 0.0
    %1316 = vmatpush1.msra.mxu0 0.0
    %1317 = vmatprep.subr.mxu0 0.0
    %1318 = vmatpush1.msra.mxu0 0.0
    %1319 = vmatprep.subr.mxu0 0.0
    %1320 = vmatpush1.msra.mxu0 0.0
    %1321 = vmatprep.subr.mxu0 0.0
    %1322 = vmatpush1.msra.mxu0 0.0
    %1323 = vmatprep.subr.mxu0 0.0
    %1324 = vmatpush1.msra.mxu0 0.0
    %1325 = vmatprep.subr.mxu0 0.0
    %1326 = vmatpush1.msra.mxu0 0.0
    %1327 = vmatprep.subr.mxu0 0.0
    %1328 = vmatpush1.msra.mxu0 0.0
    %1329 = vmatprep.subr.mxu0 0.0
    %1330 = vmatpush1.msra.mxu0 0.0
    %1331 = vmatprep.subr.mxu0 0.0
    %1332 = vmatpush1.msra.mxu0 0.0
    %1333 = vmatprep.subr.mxu0 0.0
    %1334 = vmatpush1.msra.mxu0 0.0
    %1335 = vmatprep.subr.mxu0 0.0
    %1336 = vmatpush1.msra.mxu0 0.0
    %1337 = vmatprep.subr.mxu0 0.0
    %1338 = vmatpush1.msra.mxu0 0.0
    %1339 = vmatprep.subr.mxu0 0.0
    %1340 = vmatpush1.msra.mxu0 0.0
    %1341 = vmatprep.subr.mxu0 0.0
    %1342 = vmatpush1.msra.mxu0 0.0
    %1343 = vmatprep.mubr.f32.mxu0 0.0
    %1344 = vmatmul.mubr.f32.gmra.mrb[0].mxu0 %v1277
    %v1345 = vpop.f32.mrb[0].mxu0
    %v1346 = vadd.f32 0.0, %v1345
    %v1347 = vpop.f32.mrb[0].mxu0
    %1348 = vdwg.mxu0
    %v1349 = vadd.f32 %v1276, %v1346
    %v1350 = vxor.u32 %v1349, 2147483648
    %v1351 = vmul.f32 %v1350, 1.442695
    %v1352 = vpow.pop %v1351
    %v1353 = vadd.f32 %v1352, 1.0
    %v1354 = vrcp.pop %v1353
    %v1355 = vmul.f32 1.0, %v1354
    %v1356 = vmul.f32 %v1355, 2.0
    %v1357 = vsub.f32 %v1356, 1.0
    %v1358 = vmul.f32 %v1355, %v1262
    %1360 = vrot.lane.b32.xlu0 %v1357, 64
    %v1361 = vpop.permute.xlu0 %1360
    %v1363 = vmul.f32 %v1355, %v1361
    %1365 = vrot.lane.b32.xlu0 %v1363, 32
    %v1366 = vpop.permute.xlu0 %1365
    %v1368 = vadd.f32 %v1358, %v1366
    %v1369 = vtanh.pop %v1368
    %1371 = vrot.lane.b32.xlu0 %v1369, 64
    %v1372 = vpop.permute.xlu0 %1371
    %v1374 = vmul.f32 %v1355, %v1372
    %1376 = vrot.lane.b32.xlu0 %v1374, 32
    %v1377 = vpop.permute.xlu0 %1376
    %s1379 = scalar_lea.vmem [#allocation2], 72
    %1380 = vst.msk [vmem:[%s1379] sm:$0xff] %vm322, %v1377
    %s1381 = scalar_lea.vmem [#allocation4], 80
    %v1382 = vld [vmem:[%s1381] sm:$0xff]
    %v1383 = vsel %vm322, %v1377, 0
    %1385 = vmatprep.subr.mxu0 0.0
    %1386 = vmatpush1.msra.mxu0 %v317
    %1387 = vmatprep.subr.mxu0 0.0
    %1388 = vmatpush1.msra.mxu0 %v318
    %1389 = vmatprep.subr.mxu0 0.0
    %1390 = vmatpush1.msra.mxu0 %v319
    %1391 = vmatprep.subr.mxu0 0.0
    %1392 = vmatpush1.msra.mxu0 %v320
    %1393 = vmatprep.subr.mxu0 0.0
    %1394 = vmatpush1.msra.mxu0 0.0
    %1395 = vmatprep.subr.mxu0 0.0
    %1396 = vmatpush1.msra.mxu0 0.0
    %1397 = vmatprep.subr.mxu0 0.0
    %1398 = vmatpush1.msra.mxu0 0.0
    %1399 = vmatprep.subr.mxu0 0.0
    %1400 = vmatpush1.msra.mxu0 0.0
    %1401 = vmatprep.subr.mxu0 0.0
    %1402 = vmatpush1.msra.mxu0 0.0
    %1403 = vmatprep.subr.mxu0 0.0
    %1404 = vmatpush1.msra.mxu0 0.0
    %1405 = vmatprep.subr.mxu0 0.0
    %1406 = vmatpush1.msra.mxu0 0.0
    %1407 = vmatprep.subr.mxu0 0.0
    %1408 = vmatpush1.msra.mxu0 0.0
    %1409 = vmatprep.subr.mxu0 0.0
    %1410 = vmatpush1.msra.mxu0 0.0
    %1411 = vmatprep.subr.mxu0 0.0
    %1412 = vmatpush1.msra.mxu0 0.0
    %1413 = vmatprep.subr.mxu0 0.0
    %1414 = vmatpush1.msra.mxu0 0.0
    %1415 = vmatprep.subr.mxu0 0.0
    %1416 = vmatpush1.msra.mxu0 0.0
    %1417 = vmatprep.subr.mxu0 0.0
    %1418 = vmatpush1.msra.mxu0 0.0
    %1419 = vmatprep.subr.mxu0 0.0
    %1420 = vmatpush1.msra.mxu0 0.0
    %1421 = vmatprep.subr.mxu0 0.0
    %1422 = vmatpush1.msra.mxu0 0.0
    %1423 = vmatprep.subr.mxu0 0.0
    %1424 = vmatpush1.msra.mxu0 0.0
    %1425 = vmatprep.subr.mxu0 0.0
    %1426 = vmatpush1.msra.mxu0 0.0
    %1427 = vmatprep.subr.mxu0 0.0
    %1428 = vmatpush1.msra.mxu0 0.0
    %1429 = vmatprep.subr.mxu0 0.0
    %1430 = vmatpush1.msra.mxu0 0.0
    %1431 = vmatprep.subr.mxu0 0.0
    %1432 = vmatpush1.msra.mxu0 0.0
    %1433 = vmatprep.subr.mxu0 0.0
    %1434 = vmatpush1.msra.mxu0 0.0
    %1435 = vmatprep.subr.mxu0 0.0
    %1436 = vmatpush1.msra.mxu0 0.0
    %1437 = vmatprep.subr.mxu0 0.0
    %1438 = vmatpush1.msra.mxu0 0.0
    %1439 = vmatprep.subr.mxu0 0.0
    %1440 = vmatpush1.msra.mxu0 0.0
    %1441 = vmatprep.subr.mxu0 0.0
    %1442 = vmatpush1.msra.mxu0 0.0
    %1443 = vmatprep.subr.mxu0 0.0
    %1444 = vmatpush1.msra.mxu0 0.0
    %1445 = vmatprep.subr.mxu0 0.0
    %1446 = vmatpush1.msra.mxu0 0.0
    %1447 = vmatprep.subr.mxu0 0.0
    %1448 = vmatpush1.msra.mxu0 0.0
    %1449 = vmatprep.mubr.f32.mxu0 0.0
    %1450 = vmatmul.mubr.f32.gmra.mrb[0].mxu0 %v1383
    %v1451 = vpop.f32.mrb[0].mxu0
    %v1452 = vadd.f32 0.0, %v1451
    %v1453 = vpop.f32.mrb[0].mxu0
    %1454 = vdwg.mxu0
    %v1455 = vadd.f32 %v1382, %v1452
    %v1456 = vxor.u32 %v1455, 2147483648
    %v1457 = vmul.f32 %v1456, 1.442695
    %v1458 = vpow.pop %v1457
    %v1459 = vadd.f32 %v1458, 1.0
    %v1460 = vrcp.pop %v1459
    %v1461 = vmul.f32 1.0, %v1460
    %v1462 = vmul.f32 %v1461, 2.0
    %v1463 = vsub.f32 %v1462, 1.0
    %v1464 = vmul.f32 %v1461, %v1368
    %1466 = vrot.lane.b32.xlu0 %v1463, 64
    %v1467 = vpop.permute.xlu0 %1466
    %v1469 = vmul.f32 %v1461, %v1467
    %1471 = vrot.lane.b32.xlu0 %v1469, 32
    %v1472 = vpop.permute.xlu0 %1471
    %v1474 = vadd.f32 %v1464, %v1472
    %v1475 = vtanh.pop %v1474
    %1477 = vrot.lane.b32.xlu0 %v1475, 64
    %v1478 = vpop.permute.xlu0 %1477
    %v1480 = vmul.f32 %v1461, %v1478
    %1482 = vrot.lane.b32.xlu0 %v1480, 32
    %v1483 = vpop.permute.xlu0 %1482
    %s1485 = scalar_lea.vmem [#allocation2], 80
    %1486 = vst.msk [vmem:[%s1485] sm:$0xff] %vm322, %v1483
    %s1487 = scalar_lea.vmem [#allocation4], 88
    %v1488 = vld [vmem:[%s1487] sm:$0xff]
    %v1489 = vsel %vm322, %v1483, 0
    %1491 = vmatprep.subr.mxu0 0.0
    %1492 = vmatpush1.msra.mxu0 %v317
    %1493 = vmatprep.subr.mxu0 0.0
    %1494 = vmatpush1.msra.mxu0 %v318
    %1495 = vmatprep.subr.mxu0 0.0
    %1496 = vmatpush1.msra.mxu0 %v319
    %1497 = vmatprep.subr.mxu0 0.0
    %1498 = vmatpush1.msra.mxu0 %v320
    %1499 = vmatprep.subr.mxu0 0.0
    %1500 = vmatpush1.msra.mxu0 0.0
    %1501 = vmatprep.subr.mxu0 0.0
    %1502 = vmatpush1.msra.mxu0 0.0
    %1503 = vmatprep.subr.mxu0 0.0
    %1504 = vmatpush1.msra.mxu0 0.0
    %1505 = vmatprep.subr.mxu0 0.0
    %1506 = vmatpush1.msra.mxu0 0.0
    %1507 = vmatprep.subr.mxu0 0.0
    %1508 = vmatpush1.msra.mxu0 0.0
    %1509 = vmatprep.subr.mxu0 0.0
    %1510 = vmatpush1.msra.mxu0 0.0
    %1511 = vmatprep.subr.mxu0 0.0
    %1512 = vmatpush1.msra.mxu0 0.0
    %1513 = vmatprep.subr.mxu0 0.0
    %1514 = vmatpush1.msra.mxu0 0.0
    %1515 = vmatprep.subr.mxu0 0.0
    %1516 = vmatpush1.msra.mxu0 0.0
    %1517 = vmatprep.subr.mxu0 0.0
    %1518 = vmatpush1.msra.mxu0 0.0
    %1519 = vmatprep.subr.mxu0 0.0
    %1520 = vmatpush1.msra.mxu0 0.0
    %1521 = vmatprep.subr.mxu0 0.0
    %1522 = vmatpush1.msra.mxu0 0.0
    %1523 = vmatprep.subr.mxu0 0.0
    %1524 = vmatpush1.msra.mxu0 0.0
    %1525 = vmatprep.subr.mxu0 0.0
    %1526 = vmatpush1.msra.mxu0 0.0
    %1527 = vmatprep.subr.mxu0 0.0
    %1528 = vmatpush1.msra.mxu0 0.0
    %1529 = vmatprep.subr.mxu0 0.0
    %1530 = vmatpush1.msra.mxu0 0.0
    %1531 = vmatprep.subr.mxu0 0.0
    %1532 = vmatpush1.msra.mxu0 0.0
    %1533 = vmatprep.subr.mxu0 0.0
    %1534 = vmatpush1.msra.mxu0 0.0
    %1535 = vmatprep.subr.mxu0 0.0
    %1536 = vmatpush1.msra.mxu0 0.0
    %1537 = vmatprep.subr.mxu0 0.0
    %1538 = vmatpush1.msra.mxu0 0.0
    %1539 = vmatprep.subr.mxu0 0.0
    %1540 = vmatpush1.msra.mxu0 0.0
    %1541 = vmatprep.subr.mxu0 0.0
    %1542 = vmatpush1.msra.mxu0 0.0
    %1543 = vmatprep.subr.mxu0 0.0
    %1544 = vmatpush1.msra.mxu0 0.0
    %1545 = vmatprep.subr.mxu0 0.0
    %1546 = vmatpush1.msra.mxu0 0.0
    %1547 = vmatprep.subr.mxu0 0.0
    %1548 = vmatpush1.msra.mxu0 0.0
    %1549 = vmatprep.subr.mxu0 0.0
    %1550 = vmatpush1.msra.mxu0 0.0
    %1551 = vmatprep.subr.mxu0 0.0
    %1552 = vmatpush1.msra.mxu0 0.0
    %1553 = vmatprep.subr.mxu0 0.0
    %1554 = vmatpush1.msra.mxu0 0.0
    %1555 = vmatprep.mubr.f32.mxu0 0.0
    %1556 = vmatmul.mubr.f32.gmra.mrb[0].mxu0 %v1489
    %v1557 = vpop.f32.mrb[0].mxu0
    %v1558 = vadd.f32 0.0, %v1557
    %v1559 = vpop.f32.mrb[0].mxu0
    %1560 = vdwg.mxu0
    %v1561 = vadd.f32 %v1488, %v1558
    %v1562 = vxor.u32 %v1561, 2147483648
    %v1563 = vmul.f32 %v1562, 1.442695
    %v1564 = vpow.pop %v1563
    %v1565 = vadd.f32 %v1564, 1.0
    %v1566 = vrcp.pop %v1565
    %v1567 = vmul.f32 1.0, %v1566
    %v1568 = vmul.f32 %v1567, 2.0
    %v1569 = vsub.f32 %v1568, 1.0
    %v1570 = vmul.f32 %v1567, %v1474
    %1572 = vrot.lane.b32.xlu0 %v1569, 64
    %v1573 = vpop.permute.xlu0 %1572
    %v1575 = vmul.f32 %v1567, %v1573
    %1577 = vrot.lane.b32.xlu0 %v1575, 32
    %v1578 = vpop.permute.xlu0 %1577
    %v1580 = vadd.f32 %v1570, %v1578
    %v1581 = vtanh.pop %v1580
    %1583 = vrot.lane.b32.xlu0 %v1581, 64
    %v1584 = vpop.permute.xlu0 %1583
    %v1586 = vmul.f32 %v1567, %v1584
    %1588 = vrot.lane.b32.xlu0 %v1586, 32
    %v1589 = vpop.permute.xlu0 %1588
    %s1591 = scalar_lea.vmem [#allocation2], 88
    %1592 = vst.msk [vmem:[%s1591] sm:$0xff] %vm322, %v1589
    %s1593 = scalar_lea.vmem [#allocation4], 96
    %v1594 = vld [vmem:[%s1593] sm:$0xff]
    %v1595 = vsel %vm322, %v1589, 0
    %1597 = vmatprep.subr.mxu0 0.0
    %1598 = vmatpush1.msra.mxu0 %v317
    %1599 = vmatprep.subr.mxu0 0.0
    %1600 = vmatpush1.msra.mxu0 %v318
    %1601 = vmatprep.subr.mxu0 0.0
    %1602 = vmatpush1.msra.mxu0 %v319
    %1603 = vmatprep.subr.mxu0 0.0
    %1604 = vmatpush1.msra.mxu0 %v320
    %1605 = vmatprep.subr.mxu0 0.0
    %1606 = vmatpush1.msra.mxu0 0.0
    %1607 = vmatprep.subr.mxu0 0.0
    %1608 = vmatpush1.msra.mxu0 0.0
    %1609 = vmatprep.subr.mxu0 0.0
    %1610 = vmatpush1.msra.mxu0 0.0
    %1611 = vmatprep.subr.mxu0 0.0
    %1612 = vmatpush1.msra.mxu0 0.0
    %1613 = vmatprep.subr.mxu0 0.0
    %1614 = vmatpush1.msra.mxu0 0.0
    %1615 = vmatprep.subr.mxu0 0.0
    %1616 = vmatpush1.msra.mxu0 0.0
    %1617 = vmatprep.subr.mxu0 0.0
    %1618 = vmatpush1.msra.mxu0 0.0
    %1619 = vmatprep.subr.mxu0 0.0
    %1620 = vmatpush1.msra.mxu0 0.0
    %1621 = vmatprep.subr.mxu0 0.0
    %1622 = vmatpush1.msra.mxu0 0.0
    %1623 = vmatprep.subr.mxu0 0.0
    %1624 = vmatpush1.msra.mxu0 0.0
    %1625 = vmatprep.subr.mxu0 0.0
    %1626 = vmatpush1.msra.mxu0 0.0
    %1627 = vmatprep.subr.mxu0 0.0
    %1628 = vmatpush1.msra.mxu0 0.0
    %1629 = vmatprep.subr.mxu0 0.0
    %1630 = vmatpush1.msra.mxu0 0.0
    %1631 = vmatprep.subr.mxu0 0.0
    %1632 = vmatpush1.msra.mxu0 0.0
    %1633 = vmatprep.subr.mxu0 0.0
    %1634 = vmatpush1.msra.mxu0 0.0
    %1635 = vmatprep.subr.mxu0 0.0
    %1636 = vmatpush1.msra.mxu0 0.0
    %1637 = vmatprep.subr.mxu0 0.0
    %1638 = vmatpush1.msra.mxu0 0.0
    %1639 = vmatprep.subr.mxu0 0.0
    %1640 = vmatpush1.msra.mxu0 0.0
    %1641 = vmatprep.subr.mxu0 0.0
    %1642 = vmatpush1.msra.mxu0 0.0
    %1643 = vmatprep.subr.mxu0 0.0
    %1644 = vmatpush1.msra.mxu0 0.0
    %1645 = vmatprep.subr.mxu0 0.0
    %1646 = vmatpush1.msra.mxu0 0.0
    %1647 = vmatprep.subr.mxu0 0.0
    %1648 = vmatpush1.msra.mxu0 0.0
    %1649 = vmatprep.subr.mxu0 0.0
    %1650 = vmatpush1.msra.mxu0 0.0
    %1651 = vmatprep.subr.mxu0 0.0
    %1652 = vmatpush1.msra.mxu0 0.0
    %1653 = vmatprep.subr.mxu0 0.0
    %1654 = vmatpush1.msra.mxu0 0.0
    %1655 = vmatprep.subr.mxu0 0.0
    %1656 = vmatpush1.msra.mxu0 0.0
    %1657 = vmatprep.subr.mxu0 0.0
    %1658 = vmatpush1.msra.mxu0 0.0
    %1659 = vmatprep.subr.mxu0 0.0
    %1660 = vmatpush1.msra.mxu0 0.0
    %1661 = vmatprep.mubr.f32.mxu0 0.0
    %1662 = vmatmul.mubr.f32.gmra.mrb[0].mxu0 %v1595
    %v1663 = vpop.f32.mrb[0].mxu0
    %v1664 = vadd.f32 0.0, %v1663
    %v1665 = vpop.f32.mrb[0].mxu0
    %1666 = vdwg.mxu0
    %v1667 = vadd.f32 %v1594, %v1664
    %v1668 = vxor.u32 %v1667, 2147483648
    %v1669 = vmul.f32 %v1668, 1.442695
    %v1670 = vpow.pop %v1669
    %v1671 = vadd.f32 %v1670, 1.0
    %v1672 = vrcp.pop %v1671
    %v1673 = vmul.f32 1.0, %v1672
    %v1674 = vmul.f32 %v1673, 2.0
    %v1675 = vsub.f32 %v1674, 1.0
    %v1676 = vmul.f32 %v1673, %v1580
    %1678 = vrot.lane.b32.xlu0 %v1675, 64
    %v1679 = vpop.permute.xlu0 %1678
    %v1681 = vmul.f32 %v1673, %v1679
    %1683 = vrot.lane.b32.xlu0 %v1681, 32
    %v1684 = vpop.permute.xlu0 %1683
    %v1686 = vadd.f32 %v1676, %v1684
    %v1687 = vtanh.pop %v1686
    %1689 = vrot.lane.b32.xlu0 %v1687, 64
    %v1690 = vpop.permute.xlu0 %1689
    %v1692 = vmul.f32 %v1673, %v1690
    %1694 = vrot.lane.b32.xlu0 %v1692, 32
    %v1695 = vpop.permute.xlu0 %1694
    %s1697 = scalar_lea.vmem [#allocation2], 96
    %1698 = vst.msk [vmem:[%s1697] sm:$0xff] %vm322, %v1695
    %s1699 = scalar_lea.vmem [#allocation4], 104
    %v1700 = vld [vmem:[%s1699] sm:$0xff]
    %v1701 = vsel %vm322, %v1695, 0
    %1703 = vmatprep.subr.mxu0 0.0
    %1704 = vmatpush1.msra.mxu0 %v317
    %1705 = vmatprep.subr.mxu0 0.0
    %1706 = vmatpush1.msra.mxu0 %v318
    %1707 = vmatprep.subr.mxu0 0.0
    %1708 = vmatpush1.msra.mxu0 %v319
    %1709 = vmatprep.subr.mxu0 0.0
    %1710 = vmatpush1.msra.mxu0 %v320
    %1711 = vmatprep.subr.mxu0 0.0
    %1712 = vmatpush1.msra.mxu0 0.0
    %1713 = vmatprep.subr.mxu0 0.0
    %1714 = vmatpush1.msra.mxu0 0.0
    %1715 = vmatprep.subr.mxu0 0.0
    %1716 = vmatpush1.msra.mxu0 0.0
    %1717 = vmatprep.subr.mxu0 0.0
    %1718 = vmatpush1.msra.mxu0 0.0
    %1719 = vmatprep.subr.mxu0 0.0
    %1720 = vmatpush1.msra.mxu0 0.0
    %1721 = vmatprep.subr.mxu0 0.0
    %1722 = vmatpush1.msra.mxu0 0.0
    %1723 = vmatprep.subr.mxu0 0.0
    %1724 = vmatpush1.msra.mxu0 0.0
    %1725 = vmatprep.subr.mxu0 0.0
    %1726 = vmatpush1.msra.mxu0 0.0
    %1727 = vmatprep.subr.mxu0 0.0
    %1728 = vmatpush1.msra.mxu0 0.0
    %1729 = vmatprep.subr.mxu0 0.0
    %1730 = vmatpush1.msra.mxu0 0.0
    %1731 = vmatprep.subr.mxu0 0.0
    %1732 = vmatpush1.msra.mxu0 0.0
    %1733 = vmatprep.subr.mxu0 0.0
    %1734 = vmatpush1.msra.mxu0 0.0
    %1735 = vmatprep.subr.mxu0 0.0
    %1736 = vmatpush1.msra.mxu0 0.0
    %1737 = vmatprep.subr.mxu0 0.0
    %1738 = vmatpush1.msra.mxu0 0.0
    %1739 = vmatprep.subr.mxu0 0.0
    %1740 = vmatpush1.msra.mxu0 0.0
    %1741 = vmatprep.subr.mxu0 0.0
    %1742 = vmatpush1.msra.mxu0 0.0
    %1743 = vmatprep.subr.mxu0 0.0
    %1744 = vmatpush1.msra.mxu0 0.0
    %1745 = vmatprep.subr.mxu0 0.0
    %1746 = vmatpush1.msra.mxu0 0.0
    %1747 = vmatprep.subr.mxu0 0.0
    %1748 = vmatpush1.msra.mxu0 0.0
    %1749 = vmatprep.subr.mxu0 0.0
    %1750 = vmatpush1.msra.mxu0 0.0
    %1751 = vmatprep.subr.mxu0 0.0
    %1752 = vmatpush1.msra.mxu0 0.0
    %1753 = vmatprep.subr.mxu0 0.0
    %1754 = vmatpush1.msra.mxu0 0.0
    %1755 = vmatprep.subr.mxu0 0.0
    %1756 = vmatpush1.msra.mxu0 0.0
    %1757 = vmatprep.subr.mxu0 0.0
    %1758 = vmatpush1.msra.mxu0 0.0
    %1759 = vmatprep.subr.mxu0 0.0
    %1760 = vmatpush1.msra.mxu0 0.0
    %1761 = vmatprep.subr.mxu0 0.0
    %1762 = vmatpush1.msra.mxu0 0.0
    %1763 = vmatprep.subr.mxu0 0.0
    %1764 = vmatpush1.msra.mxu0 0.0
    %1765 = vmatprep.subr.mxu0 0.0
    %1766 = vmatpush1.msra.mxu0 0.0
    %1767 = vmatprep.mubr.f32.mxu0 0.0
    %1768 = vmatmul.mubr.f32.gmra.mrb[0].mxu0 %v1701
    %v1769 = vpop.f32.mrb[0].mxu0
    %v1770 = vadd.f32 0.0, %v1769
    %v1771 = vpop.f32.mrb[0].mxu0
    %1772 = vdwg.mxu0
    %v1773 = vadd.f32 %v1700, %v1770
    %v1774 = vxor.u32 %v1773, 2147483648
    %v1775 = vmul.f32 %v1774, 1.442695
    %v1776 = vpow.pop %v1775
    %v1777 = vadd.f32 %v1776, 1.0
    %v1778 = vrcp.pop %v1777
    %v1779 = vmul.f32 1.0, %v1778
    %v1780 = vmul.f32 %v1779, 2.0
    %v1781 = vsub.f32 %v1780, 1.0
    %v1782 = vmul.f32 %v1779, %v1686
    %1784 = vrot.lane.b32.xlu0 %v1781, 64
    %v1785 = vpop.permute.xlu0 %1784
    %v1787 = vmul.f32 %v1779, %v1785
    %1789 = vrot.lane.b32.xlu0 %v1787, 32
    %v1790 = vpop.permute.xlu0 %1789
    %v1792 = vadd.f32 %v1782, %v1790
    %v1793 = vtanh.pop %v1792
    %1795 = vrot.lane.b32.xlu0 %v1793, 64
    %v1796 = vpop.permute.xlu0 %1795
    %v1798 = vmul.f32 %v1779, %v1796
    %1800 = vrot.lane.b32.xlu0 %v1798, 32
    %v1801 = vpop.permute.xlu0 %1800
    %s1803 = scalar_lea.vmem [#allocation2], 104
    %1804 = vst.msk [vmem:[%s1803] sm:$0xff] %vm322, %v1801
    %s1805 = scalar_lea.vmem [#allocation4], 112
    %v1806 = vld [vmem:[%s1805] sm:$0xff]
    %v1807 = vsel %vm322, %v1801, 0
    %1809 = vmatprep.subr.mxu0 0.0
    %1810 = vmatpush1.msra.mxu0 %v317
    %1811 = vmatprep.subr.mxu0 0.0
    %1812 = vmatpush1.msra.mxu0 %v318
    %1813 = vmatprep.subr.mxu0 0.0
    %1814 = vmatpush1.msra.mxu0 %v319
    %1815 = vmatprep.subr.mxu0 0.0
    %1816 = vmatpush1.msra.mxu0 %v320
    %1817 = vmatprep.subr.mxu0 0.0
    %1818 = vmatpush1.msra.mxu0 0.0
    %1819 = vmatprep.subr.mxu0 0.0
    %1820 = vmatpush1.msra.mxu0 0.0
    %1821 = vmatprep.subr.mxu0 0.0
    %1822 = vmatpush1.msra.mxu0 0.0
    %1823 = vmatprep.subr.mxu0 0.0
    %1824 = vmatpush1.msra.mxu0 0.0
    %1825 = vmatprep.subr.mxu0 0.0
    %1826 = vmatpush1.msra.mxu0 0.0
    %1827 = vmatprep.subr.mxu0 0.0
    %1828 = vmatpush1.msra.mxu0 0.0
    %1829 = vmatprep.subr.mxu0 0.0
    %1830 = vmatpush1.msra.mxu0 0.0
    %1831 = vmatprep.subr.mxu0 0.0
    %1832 = vmatpush1.msra.mxu0 0.0
    %1833 = vmatprep.subr.mxu0 0.0
    %1834 = vmatpush1.msra.mxu0 0.0
    %1835 = vmatprep.subr.mxu0 0.0
    %1836 = vmatpush1.msra.mxu0 0.0
    %1837 = vmatprep.subr.mxu0 0.0
    %1838 = vmatpush1.msra.mxu0 0.0
    %1839 = vmatprep.subr.mxu0 0.0
    %1840 = vmatpush1.msra.mxu0 0.0
    %1841 = vmatprep.subr.mxu0 0.0
    %1842 = vmatpush1.msra.mxu0 0.0
    %1843 = vmatprep.subr.mxu0 0.0
    %1844 = vmatpush1.msra.mxu0 0.0
    %1845 = vmatprep.subr.mxu0 0.0
    %1846 = vmatpush1.msra.mxu0 0.0
    %1847 = vmatprep.subr.mxu0 0.0
    %1848 = vmatpush1.msra.mxu0 0.0
    %1849 = vmatprep.subr.mxu0 0.0
    %1850 = vmatpush1.msra.mxu0 0.0
    %1851 = vmatprep.subr.mxu0 0.0
    %1852 = vmatpush1.msra.mxu0 0.0
    %1853 = vmatprep.subr.mxu0 0.0
    %1854 = vmatpush1.msra.mxu0 0.0
    %1855 = vmatprep.subr.mxu0 0.0
    %1856 = vmatpush1.msra.mxu0 0.0
    %1857 = vmatprep.subr.mxu0 0.0
    %1858 = vmatpush1.msra.mxu0 0.0
    %1859 = vmatprep.subr.mxu0 0.0
    %1860 = vmatpush1.msra.mxu0 0.0
    %1861 = vmatprep.subr.mxu0 0.0
    %1862 = vmatpush1.msra.mxu0 0.0
    %1863 = vmatprep.subr.mxu0 0.0
    %1864 = vmatpush1.msra.mxu0 0.0
    %1865 = vmatprep.subr.mxu0 0.0
    %1866 = vmatpush1.msra.mxu0 0.0
    %1867 = vmatprep.subr.mxu0 0.0
    %1868 = vmatpush1.msra.mxu0 0.0
    %1869 = vmatprep.subr.mxu0 0.0
    %1870 = vmatpush1.msra.mxu0 0.0
    %1871 = vmatprep.subr.mxu0 0.0
    %1872 = vmatpush1.msra.mxu0 0.0
    %1873 = vmatprep.mubr.f32.mxu0 0.0
    %1874 = vmatmul.mubr.f32.gmra.mrb[0].mxu0 %v1807
    %v1875 = vpop.f32.mrb[0].mxu0
    %v1876 = vadd.f32 0.0, %v1875
    %v1877 = vpop.f32.mrb[0].mxu0
    %1878 = vdwg.mxu0
    %v1879 = vadd.f32 %v1806, %v1876
    %v1880 = vxor.u32 %v1879, 2147483648
    %v1881 = vmul.f32 %v1880, 1.442695
    %v1882 = vpow.pop %v1881
    %v1883 = vadd.f32 %v1882, 1.0
    %v1884 = vrcp.pop %v1883
    %v1885 = vmul.f32 1.0, %v1884
    %v1886 = vmul.f32 %v1885, 2.0
    %v1887 = vsub.f32 %v1886, 1.0
    %v1888 = vmul.f32 %v1885, %v1792
    %1890 = vrot.lane.b32.xlu0 %v1887, 64
    %v1891 = vpop.permute.xlu0 %1890
    %v1893 = vmul.f32 %v1885, %v1891
    %1895 = vrot.lane.b32.xlu0 %v1893, 32
    %v1896 = vpop.permute.xlu0 %1895
    %v1898 = vadd.f32 %v1888, %v1896
    %v1899 = vtanh.pop %v1898
    %1901 = vrot.lane.b32.xlu0 %v1899, 64
    %v1902 = vpop.permute.xlu0 %1901
    %v1904 = vmul.f32 %v1885, %v1902
    %1906 = vrot.lane.b32.xlu0 %v1904, 32
    %v1907 = vpop.permute.xlu0 %1906
    %s1909 = scalar_lea.vmem [#allocation2], 112
    %1910 = vst.msk [vmem:[%s1909] sm:$0xff] %vm322, %v1907
    %s1911 = scalar_lea.vmem [#allocation4], 120
    %v1912 = vld [vmem:[%s1911] sm:$0xff]
    %v1913 = vsel %vm322, %v1907, 0
    %1915 = vmatprep.subr.mxu0 0.0
    %1916 = vmatpush1.msra.mxu0 %v317
    %1917 = vmatprep.subr.mxu0 0.0
    %1918 = vmatpush1.msra.mxu0 %v318
    %1919 = vmatprep.subr.mxu0 0.0
    %1920 = vmatpush1.msra.mxu0 %v319
    %1921 = vmatprep.subr.mxu0 0.0
    %1922 = vmatpush1.msra.mxu0 %v320
    %1923 = vmatprep.subr.mxu0 0.0
    %1924 = vmatpush1.msra.mxu0 0.0
    %1925 = vmatprep.subr.mxu0 0.0
    %1926 = vmatpush1.msra.mxu0 0.0
    %1927 = vmatprep.subr.mxu0 0.0
    %1928 = vmatpush1.msra.mxu0 0.0
    %1929 = vmatprep.subr.mxu0 0.0
    %1930 = vmatpush1.msra.mxu0 0.0
    %1931 = vmatprep.subr.mxu0 0.0
    %1932 = vmatpush1.msra.mxu0 0.0
    %1933 = vmatprep.subr.mxu0 0.0
    %1934 = vmatpush1.msra.mxu0 0.0
    %1935 = vmatprep.subr.mxu0 0.0
    %1936 = vmatpush1.msra.mxu0 0.0
    %1937 = vmatprep.subr.mxu0 0.0
    %1938 = vmatpush1.msra.mxu0 0.0
    %1939 = vmatprep.subr.mxu0 0.0
    %1940 = vmatpush1.msra.mxu0 0.0
    %1941 = vmatprep.subr.mxu0 0.0
    %1942 = vmatpush1.msra.mxu0 0.0
    %1943 = vmatprep.subr.mxu0 0.0
    %1944 = vmatpush1.msra.mxu0 0.0
    %1945 = vmatprep.subr.mxu0 0.0
    %1946 = vmatpush1.msra.mxu0 0.0
    %1947 = vmatprep.subr.mxu0 0.0
    %1948 = vmatpush1.msra.mxu0 0.0
    %1949 = vmatprep.subr.mxu0 0.0
    %1950 = vmatpush1.msra.mxu0 0.0
    %1951 = vmatprep.subr.mxu0 0.0
    %1952 = vmatpush1.msra.mxu0 0.0
    %1953 = vmatprep.subr.mxu0 0.0
    %1954 = vmatpush1.msra.mxu0 0.0
    %1955 = vmatprep.subr.mxu0 0.0
    %1956 = vmatpush1.msra.mxu0 0.0
    %1957 = vmatprep.subr.mxu0 0.0
    %1958 = vmatpush1.msra.mxu0 0.0
    %1959 = vmatprep.subr.mxu0 0.0
    %1960 = vmatpush1.msra.mxu0 0.0
    %1961 = vmatprep.subr.mxu0 0.0
    %1962 = vmatpush1.msra.mxu0 0.0
    %1963 = vmatprep.subr.mxu0 0.0
    %1964 = vmatpush1.msra.mxu0 0.0
    %1965 = vmatprep.subr.mxu0 0.0
    %1966 = vmatpush1.msra.mxu0 0.0
    %1967 = vmatprep.subr.mxu0 0.0
    %1968 = vmatpush1.msra.mxu0 0.0
    %1969 = vmatprep.subr.mxu0 0.0
    %1970 = vmatpush1.msra.mxu0 0.0
    %1971 = vmatprep.subr.mxu0 0.0
    %1972 = vmatpush1.msra.mxu0 0.0
    %1973 = vmatprep.subr.mxu0 0.0
    %1974 = vmatpush1.msra.mxu0 0.0
    %1975 = vmatprep.subr.mxu0 0.0
    %1976 = vmatpush1.msra.mxu0 0.0
    %1977 = vmatprep.subr.mxu0 0.0
    %1978 = vmatpush1.msra.mxu0 0.0
    %1979 = vmatprep.mubr.f32.mxu0 0.0
    %1980 = vmatmul.mubr.f32.gmra.mrb[0].mxu0 %v1913
    %v1981 = vpop.f32.mrb[0].mxu0
    %v1982 = vadd.f32 0.0, %v1981
    %v1983 = vpop.f32.mrb[0].mxu0
    %1984 = vdwg.mxu0
    %v1985 = vadd.f32 %v1912, %v1982
    %v1986 = vxor.u32 %v1985, 2147483648
    %v1987 = vmul.f32 %v1986, 1.442695
    %v1988 = vpow.pop %v1987
    %v1989 = vadd.f32 %v1988, 1.0
    %v1990 = vrcp.pop %v1989
    %v1991 = vmul.f32 1.0, %v1990
    %v1992 = vmul.f32 %v1991, 2.0
    %v1993 = vsub.f32 %v1992, 1.0
    %v1994 = vmul.f32 %v1991, %v1898
    %1996 = vrot.lane.b32.xlu0 %v1993, 64
    %v1997 = vpop.permute.xlu0 %1996
    %v1999 = vmul.f32 %v1991, %v1997
    %2001 = vrot.lane.b32.xlu0 %v1999, 32
    %v2002 = vpop.permute.xlu0 %2001
    %v2004 = vadd.f32 %v1994, %v2002
    %v2005 = vtanh.pop %v2004
    %2007 = vrot.lane.b32.xlu0 %v2005, 64
    %v2008 = vpop.permute.xlu0 %2007
    %v2010 = vmul.f32 %v1991, %v2008
    %2012 = vrot.lane.b32.xlu0 %v2010, 32
    %v2013 = vpop.permute.xlu0 %2012
    %s2015 = scalar_lea.vmem [#allocation2], 120
    %2016 = vst.msk [vmem:[%s2015] sm:$0xff] %vm322, %v2013
    %s2017 = scalar_lea.vmem [#allocation4], 128
    %v2018 = vld [vmem:[%s2017] sm:$0xff]
    %v2019 = vsel %vm322, %v2013, 0
    %2021 = vmatprep.subr.mxu0 0.0
    %2022 = vmatpush1.msra.mxu0 %v317
    %2023 = vmatprep.subr.mxu0 0.0
    %2024 = vmatpush1.msra.mxu0 %v318
    %2025 = vmatprep.subr.mxu0 0.0
    %2026 = vmatpush1.msra.mxu0 %v319
    %2027 = vmatprep.subr.mxu0 0.0
    %2028 = vmatpush1.msra.mxu0 %v320
    %2029 = vmatprep.subr.mxu0 0.0
    %2030 = vmatpush1.msra.mxu0 0.0
    %2031 = vmatprep.subr.mxu0 0.0
    %2032 = vmatpush1.msra.mxu0 0.0
    %2033 = vmatprep.subr.mxu0 0.0
    %2034 = vmatpush1.msra.mxu0 0.0
    %2035 = vmatprep.subr.mxu0 0.0
    %2036 = vmatpush1.msra.mxu0 0.0
    %2037 = vmatprep.subr.mxu0 0.0
    %2038 = vmatpush1.msra.mxu0 0.0
    %2039 = vmatprep.subr.mxu0 0.0
    %2040 = vmatpush1.msra.mxu0 0.0
    %2041 = vmatprep.subr.mxu0 0.0
    %2042 = vmatpush1.msra.mxu0 0.0
    %2043 = vmatprep.subr.mxu0 0.0
    %2044 = vmatpush1.msra.mxu0 0.0
    %2045 = vmatprep.subr.mxu0 0.0
    %2046 = vmatpush1.msra.mxu0 0.0
    %2047 = vmatprep.subr.mxu0 0.0
    %2048 = vmatpush1.msra.mxu0 0.0
    %2049 = vmatprep.subr.mxu0 0.0
    %2050 = vmatpush1.msra.mxu0 0.0
    %2051 = vmatprep.subr.mxu0 0.0
    %2052 = vmatpush1.msra.mxu0 0.0
    %2053 = vmatprep.subr.mxu0 0.0
    %2054 = vmatpush1.msra.mxu0 0.0
    %2055 = vmatprep.subr.mxu0 0.0
    %2056 = vmatpush1.msra.mxu0 0.0
    %2057 = vmatprep.subr.mxu0 0.0
    %2058 = vmatpush1.msra.mxu0 0.0
    %2059 = vmatprep.subr.mxu0 0.0
    %2060 = vmatpush1.msra.mxu0 0.0
    %2061 = vmatprep.subr.mxu0 0.0
    %2062 = vmatpush1.msra.mxu0 0.0
    %2063 = vmatprep.subr.mxu0 0.0
    %2064 = vmatpush1.msra.mxu0 0.0
    %2065 = vmatprep.subr.mxu0 0.0
    %2066 = vmatpush1.msra.mxu0 0.0
    %2067 = vmatprep.subr.mxu0 0.0
    %2068 = vmatpush1.msra.mxu0 0.0
    %2069 = vmatprep.subr.mxu0 0.0
    %2070 = vmatpush1.msra.mxu0 0.0
    %2071 = vmatprep.subr.mxu0 0.0
    %2072 = vmatpush1.msra.mxu0 0.0
    %2073 = vmatprep.subr.mxu0 0.0
    %2074 = vmatpush1.msra.mxu0 0.0
    %2075 = vmatprep.subr.mxu0 0.0
    %2076 = vmatpush1.msra.mxu0 0.0
    %2077 = vmatprep.subr.mxu0 0.0
    %2078 = vmatpush1.msra.mxu0 0.0
    %2079 = vmatprep.subr.mxu0 0.0
    %2080 = vmatpush1.msra.mxu0 0.0
    %2081 = vmatprep.subr.mxu0 0.0
    %2082 = vmatpush1.msra.mxu0 0.0
    %2083 = vmatprep.subr.mxu0 0.0
    %2084 = vmatpush1.msra.mxu0 0.0
    %2085 = vmatprep.mubr.f32.mxu0 0.0
    %2086 = vmatmul.mubr.f32.gmra.mrb[0].mxu0 %v2019
    %v2087 = vpop.f32.mrb[0].mxu0
    %v2088 = vadd.f32 0.0, %v2087
    %v2089 = vpop.f32.mrb[0].mxu0
    %2090 = vdwg.mxu0
    %v2091 = vadd.f32 %v2018, %v2088
    %v2092 = vxor.u32 %v2091, 2147483648
    %v2093 = vmul.f32 %v2092, 1.442695
    %v2094 = vpow.pop %v2093
    %v2095 = vadd.f32 %v2094, 1.0
    %v2096 = vrcp.pop %v2095
    %v2097 = vmul.f32 1.0, %v2096
    %v2098 = vmul.f32 %v2097, 2.0
    %v2099 = vsub.f32 %v2098, 1.0
    %v2100 = vmul.f32 %v2097, %v2004
    %2102 = vrot.lane.b32.xlu0 %v2099, 64
    %v2103 = vpop.permute.xlu0 %2102
    %v2105 = vmul.f32 %v2097, %v2103
    %2107 = vrot.lane.b32.xlu0 %v2105, 32
    %v2108 = vpop.permute.xlu0 %2107
    %v2110 = vadd.f32 %v2100, %v2108
    %v2111 = vtanh.pop %v2110
    %2113 = vrot.lane.b32.xlu0 %v2111, 64
    %v2114 = vpop.permute.xlu0 %2113
    %v2116 = vmul.f32 %v2097, %v2114
    %2118 = vrot.lane.b32.xlu0 %v2116, 32
    %v2119 = vpop.permute.xlu0 %2118
    %s2121 = scalar_lea.vmem [#allocation2], 128
    %2122 = vst.msk [vmem:[%s2121] sm:$0xff] %vm322, %v2119
    %s2123 = scalar_lea.vmem [#allocation4], 136
    %v2124 = vld [vmem:[%s2123] sm:$0xff]
    %v2125 = vsel %vm322, %v2119, 0
    %2127 = vmatprep.subr.mxu0 0.0
    %2128 = vmatpush1.msra.mxu0 %v317
    %2129 = vmatprep.subr.mxu0 0.0
    %2130 = vmatpush1.msra.mxu0 %v318
    %2131 = vmatprep.subr.mxu0 0.0
    %2132 = vmatpush1.msra.mxu0 %v319
    %2133 = vmatprep.subr.mxu0 0.0
    %2134 = vmatpush1.msra.mxu0 %v320
    %2135 = vmatprep.subr.mxu0 0.0
    %2136 = vmatpush1.msra.mxu0 0.0
    %2137 = vmatprep.subr.mxu0 0.0
    %2138 = vmatpush1.msra.mxu0 0.0
    %2139 = vmatprep.subr.mxu0 0.0
    %2140 = vmatpush1.msra.mxu0 0.0
    %2141 = vmatprep.subr.mxu0 0.0
    %2142 = vmatpush1.msra.mxu0 0.0
    %2143 = vmatprep.subr.mxu0 0.0
    %2144 = vmatpush1.msra.mxu0 0.0
    %2145 = vmatprep.subr.mxu0 0.0
    %2146 = vmatpush1.msra.mxu0 0.0
    %2147 = vmatprep.subr.mxu0 0.0
    %2148 = vmatpush1.msra.mxu0 0.0
    %2149 = vmatprep.subr.mxu0 0.0
    %2150 = vmatpush1.msra.mxu0 0.0
    %2151 = vmatprep.subr.mxu0 0.0
    %2152 = vmatpush1.msra.mxu0 0.0
    %2153 = vmatprep.subr.mxu0 0.0
    %2154 = vmatpush1.msra.mxu0 0.0
    %2155 = vmatprep.subr.mxu0 0.0
    %2156 = vmatpush1.msra.mxu0 0.0
    %2157 = vmatprep.subr.mxu0 0.0
    %2158 = vmatpush1.msra.mxu0 0.0
    %2159 = vmatprep.subr.mxu0 0.0
    %2160 = vmatpush1.msra.mxu0 0.0
    %2161 = vmatprep.subr.mxu0 0.0
    %2162 = vmatpush1.msra.mxu0 0.0
    %2163 = vmatprep.subr.mxu0 0.0
    %2164 = vmatpush1.msra.mxu0 0.0
    %2165 = vmatprep.subr.mxu0 0.0
    %2166 = vmatpush1.msra.mxu0 0.0
    %2167 = vmatprep.subr.mxu0 0.0
    %2168 = vmatpush1.msra.mxu0 0.0
    %2169 = vmatprep.subr.mxu0 0.0
    %2170 = vmatpush1.msra.mxu0 0.0
    %2171 = vmatprep.subr.mxu0 0.0
    %2172 = vmatpush1.msra.mxu0 0.0
    %2173 = vmatprep.subr.mxu0 0.0
    %2174 = vmatpush1.msra.mxu0 0.0
    %2175 = vmatprep.subr.mxu0 0.0
    %2176 = vmatpush1.msra.mxu0 0.0
    %2177 = vmatprep.subr.mxu0 0.0
    %2178 = vmatpush1.msra.mxu0 0.0
    %2179 = vmatprep.subr.mxu0 0.0
    %2180 = vmatpush1.msra.mxu0 0.0
    %2181 = vmatprep.subr.mxu0 0.0
    %2182 = vmatpush1.msra.mxu0 0.0
    %2183 = vmatprep.subr.mxu0 0.0
    %2184 = vmatpush1.msra.mxu0 0.0
    %2185 = vmatprep.subr.mxu0 0.0
    %2186 = vmatpush1.msra.mxu0 0.0
    %2187 = vmatprep.subr.mxu0 0.0
    %2188 = vmatpush1.msra.mxu0 0.0
    %2189 = vmatprep.subr.mxu0 0.0
    %2190 = vmatpush1.msra.mxu0 0.0
    %2191 = vmatprep.mubr.f32.mxu0 0.0
    %2192 = vmatmul.mubr.f32.gmra.mrb[0].mxu0 %v2125
    %v2193 = vpop.f32.mrb[0].mxu0
    %v2194 = vadd.f32 0.0, %v2193
    %v2195 = vpop.f32.mrb[0].mxu0
    %2196 = vdwg.mxu0
    %v2197 = vadd.f32 %v2124, %v2194
    %v2198 = vxor.u32 %v2197, 2147483648
    %v2199 = vmul.f32 %v2198, 1.442695
    %v2200 = vpow.pop %v2199
    %v2201 = vadd.f32 %v2200, 1.0
    %v2202 = vrcp.pop %v2201
    %v2203 = vmul.f32 1.0, %v2202
    %v2204 = vmul.f32 %v2203, 2.0
    %v2205 = vsub.f32 %v2204, 1.0
    %v2206 = vmul.f32 %v2203, %v2110
    %2208 = vrot.lane.b32.xlu0 %v2205, 64
    %v2209 = vpop.permute.xlu0 %2208
    %v2211 = vmul.f32 %v2203, %v2209
    %2213 = vrot.lane.b32.xlu0 %v2211, 32
    %v2214 = vpop.permute.xlu0 %2213
    %v2216 = vadd.f32 %v2206, %v2214
    %v2217 = vtanh.pop %v2216
    %2219 = vrot.lane.b32.xlu0 %v2217, 64
    %v2220 = vpop.permute.xlu0 %2219
    %v2222 = vmul.f32 %v2203, %v2220
    %2224 = vrot.lane.b32.xlu0 %v2222, 32
    %v2225 = vpop.permute.xlu0 %2224
    %s2227 = scalar_lea.vmem [#allocation2], 136
    %2228 = vst.msk [vmem:[%s2227] sm:$0xff] %vm322, %v2225
    %s2229 = scalar_lea.vmem [#allocation4], 144
    %v2230 = vld [vmem:[%s2229] sm:$0xff]
    %v2231 = vsel %vm322, %v2225, 0
    %2233 = vmatprep.subr.mxu0 0.0
    %2234 = vmatpush1.msra.mxu0 %v317
    %2235 = vmatprep.subr.mxu0 0.0
    %2236 = vmatpush1.msra.mxu0 %v318
    %2237 = vmatprep.subr.mxu0 0.0
    %2238 = vmatpush1.msra.mxu0 %v319
    %2239 = vmatprep.subr.mxu0 0.0
    %2240 = vmatpush1.msra.mxu0 %v320
    %2241 = vmatprep.subr.mxu0 0.0
    %2242 = vmatpush1.msra.mxu0 0.0
    %2243 = vmatprep.subr.mxu0 0.0
    %2244 = vmatpush1.msra.mxu0 0.0
    %2245 = vmatprep.subr.mxu0 0.0
    %2246 = vmatpush1.msra.mxu0 0.0
    %2247 = vmatprep.subr.mxu0 0.0
    %2248 = vmatpush1.msra.mxu0 0.0
    %2249 = vmatprep.subr.mxu0 0.0
    %2250 = vmatpush1.msra.mxu0 0.0
    %2251 = vmatprep.subr.mxu0 0.0
    %2252 = vmatpush1.msra.mxu0 0.0
    %2253 = vmatprep.subr.mxu0 0.0
    %2254 = vmatpush1.msra.mxu0 0.0
    %2255 = vmatprep.subr.mxu0 0.0
    %2256 = vmatpush1.msra.mxu0 0.0
    %2257 = vmatprep.subr.mxu0 0.0
    %2258 = vmatpush1.msra.mxu0 0.0
    %2259 = vmatprep.subr.mxu0 0.0
    %2260 = vmatpush1.msra.mxu0 0.0
    %2261 = vmatprep.subr.mxu0 0.0
    %2262 = vmatpush1.msra.mxu0 0.0
    %2263 = vmatprep.subr.mxu0 0.0
    %2264 = vmatpush1.msra.mxu0 0.0
    %2265 = vmatprep.subr.mxu0 0.0
    %2266 = vmatpush1.msra.mxu0 0.0
    %2267 = vmatprep.subr.mxu0 0.0
    %2268 = vmatpush1.msra.mxu0 0.0
    %2269 = vmatprep.subr.mxu0 0.0
    %2270 = vmatpush1.msra.mxu0 0.0
    %2271 = vmatprep.subr.mxu0 0.0
    %2272 = vmatpush1.msra.mxu0 0.0
    %2273 = vmatprep.subr.mxu0 0.0
    %2274 = vmatpush1.msra.mxu0 0.0
    %2275 = vmatprep.subr.mxu0 0.0
    %2276 = vmatpush1.msra.mxu0 0.0
    %2277 = vmatprep.subr.mxu0 0.0
    %2278 = vmatpush1.msra.mxu0 0.0
    %2279 = vmatprep.subr.mxu0 0.0
    %2280 = vmatpush1.msra.mxu0 0.0
    %2281 = vmatprep.subr.mxu0 0.0
    %2282 = vmatpush1.msra.mxu0 0.0
    %2283 = vmatprep.subr.mxu0 0.0
    %2284 = vmatpush1.msra.mxu0 0.0
    %2285 = vmatprep.subr.mxu0 0.0
    %2286 = vmatpush1.msra.mxu0 0.0
    %2287 = vmatprep.subr.mxu0 0.0
    %2288 = vmatpush1.msra.mxu0 0.0
    %2289 = vmatprep.subr.mxu0 0.0
    %2290 = vmatpush1.msra.mxu0 0.0
    %2291 = vmatprep.subr.mxu0 0.0
    %2292 = vmatpush1.msra.mxu0 0.0
    %2293 = vmatprep.subr.mxu0 0.0
    %2294 = vmatpush1.msra.mxu0 0.0
    %2295 = vmatprep.subr.mxu0 0.0
    %2296 = vmatpush1.msra.mxu0 0.0
    %2297 = vmatprep.mubr.f32.mxu0 0.0
    %2298 = vmatmul.mubr.f32.gmra.mrb[0].mxu0 %v2231
    %v2299 = vpop.f32.mrb[0].mxu0
    %v2300 = vadd.f32 0.0, %v2299
    %v2301 = vpop.f32.mrb[0].mxu0
    %2302 = vdwg.mxu0
    %v2303 = vadd.f32 %v2230, %v2300
    %v2304 = vxor.u32 %v2303, 2147483648
    %v2305 = vmul.f32 %v2304, 1.442695
    %v2306 = vpow.pop %v2305
    %v2307 = vadd.f32 %v2306, 1.0
    %v2308 = vrcp.pop %v2307
    %v2309 = vmul.f32 1.0, %v2308
    %v2310 = vmul.f32 %v2309, 2.0
    %v2311 = vsub.f32 %v2310, 1.0
    %v2312 = vmul.f32 %v2309, %v2216
    %2314 = vrot.lane.b32.xlu0 %v2311, 64
    %v2315 = vpop.permute.xlu0 %2314
    %v2317 = vmul.f32 %v2309, %v2315
    %2319 = vrot.lane.b32.xlu0 %v2317, 32
    %v2320 = vpop.permute.xlu0 %2319
    %v2322 = vadd.f32 %v2312, %v2320
    %v2323 = vtanh.pop %v2322
    %2325 = vrot.lane.b32.xlu0 %v2323, 64
    %v2326 = vpop.permute.xlu0 %2325
    %v2328 = vmul.f32 %v2309, %v2326
    %2330 = vrot.lane.b32.xlu0 %v2328, 32
    %v2331 = vpop.permute.xlu0 %2330
    %s2333 = scalar_lea.vmem [#allocation2], 144
    %2334 = vst.msk [vmem:[%s2333] sm:$0xff] %vm322, %v2331
    %s2335 = scalar_lea.vmem [#allocation4], 152
    %v2336 = vld [vmem:[%s2335] sm:$0xff]
    %v2337 = vsel %vm322, %v2331, 0
    %2339 = vmatprep.subr.mxu0 0.0
    %2340 = vmatpush1.msra.mxu0 %v317
    %2341 = vmatprep.subr.mxu0 0.0
    %2342 = vmatpush1.msra.mxu0 %v318
    %2343 = vmatprep.subr.mxu0 0.0
    %2344 = vmatpush1.msra.mxu0 %v319
    %2345 = vmatprep.subr.mxu0 0.0
    %2346 = vmatpush1.msra.mxu0 %v320
    %2347 = vmatprep.subr.mxu0 0.0
    %2348 = vmatpush1.msra.mxu0 0.0
    %2349 = vmatprep.subr.mxu0 0.0
    %2350 = vmatpush1.msra.mxu0 0.0
    %2351 = vmatprep.subr.mxu0 0.0
    %2352 = vmatpush1.msra.mxu0 0.0
    %2353 = vmatprep.subr.mxu0 0.0
    %2354 = vmatpush1.msra.mxu0 0.0
    %2355 = vmatprep.subr.mxu0 0.0
    %2356 = vmatpush1.msra.mxu0 0.0
    %2357 = vmatprep.subr.mxu0 0.0
    %2358 = vmatpush1.msra.mxu0 0.0
    %2359 = vmatprep.subr.mxu0 0.0
    %2360 = vmatpush1.msra.mxu0 0.0
    %2361 = vmatprep.subr.mxu0 0.0
    %2362 = vmatpush1.msra.mxu0 0.0
    %2363 = vmatprep.subr.mxu0 0.0
    %2364 = vmatpush1.msra.mxu0 0.0
    %2365 = vmatprep.subr.mxu0 0.0
    %2366 = vmatpush1.msra.mxu0 0.0
    %2367 = vmatprep.subr.mxu0 0.0
    %2368 = vmatpush1.msra.mxu0 0.0
    %2369 = vmatprep.subr.mxu0 0.0
    %2370 = vmatpush1.msra.mxu0 0.0
    %2371 = vmatprep.subr.mxu0 0.0
    %2372 = vmatpush1.msra.mxu0 0.0
    %2373 = vmatprep.subr.mxu0 0.0
    %2374 = vmatpush1.msra.mxu0 0.0
    %2375 = vmatprep.subr.mxu0 0.0
    %2376 = vmatpush1.msra.mxu0 0.0
    %2377 = vmatprep.subr.mxu0 0.0
    %2378 = vmatpush1.msra.mxu0 0.0
    %2379 = vmatprep.subr.mxu0 0.0
    %2380 = vmatpush1.msra.mxu0 0.0
    %2381 = vmatprep.subr.mxu0 0.0
    %2382 = vmatpush1.msra.mxu0 0.0
    %2383 = vmatprep.subr.mxu0 0.0
    %2384 = vmatpush1.msra.mxu0 0.0
    %2385 = vmatprep.subr.mxu0 0.0
    %2386 = vmatpush1.msra.mxu0 0.0
    %2387 = vmatprep.subr.mxu0 0.0
    %2388 = vmatpush1.msra.mxu0 0.0
    %2389 = vmatprep.subr.mxu0 0.0
    %2390 = vmatpush1.msra.mxu0 0.0
    %2391 = vmatprep.subr.mxu0 0.0
    %2392 = vmatpush1.msra.mxu0 0.0
    %2393 = vmatprep.subr.mxu0 0.0
    %2394 = vmatpush1.msra.mxu0 0.0
    %2395 = vmatprep.subr.mxu0 0.0
    %2396 = vmatpush1.msra.mxu0 0.0
    %2397 = vmatprep.subr.mxu0 0.0
    %2398 = vmatpush1.msra.mxu0 0.0
    %2399 = vmatprep.subr.mxu0 0.0
    %2400 = vmatpush1.msra.mxu0 0.0
    %2401 = vmatprep.subr.mxu0 0.0
    %2402 = vmatpush1.msra.mxu0 0.0
    %2403 = vmatprep.mubr.f32.mxu0 0.0
    %2404 = vmatmul.mubr.f32.gmra.mrb[0].mxu0 %v2337
    %v2405 = vpop.f32.mrb[0].mxu0
    %v2406 = vadd.f32 0.0, %v2405
    %v2407 = vpop.f32.mrb[0].mxu0
    %2408 = vdwg.mxu0
    %v2409 = vadd.f32 %v2336, %v2406
    %v2410 = vxor.u32 %v2409, 2147483648
    %v2411 = vmul.f32 %v2410, 1.442695
    %v2412 = vpow.pop %v2411
    %v2413 = vadd.f32 %v2412, 1.0
    %v2414 = vrcp.pop %v2413
    %v2415 = vmul.f32 1.0, %v2414
    %v2416 = vmul.f32 %v2415, 2.0
    %v2417 = vsub.f32 %v2416, 1.0
    %v2418 = vmul.f32 %v2415, %v2322
    %2420 = vrot.lane.b32.xlu0 %v2417, 64
    %v2421 = vpop.permute.xlu0 %2420
    %v2423 = vmul.f32 %v2415, %v2421
    %2425 = vrot.lane.b32.xlu0 %v2423, 32
    %v2426 = vpop.permute.xlu0 %2425
    %v2428 = vadd.f32 %v2418, %v2426
    %v2429 = vtanh.pop %v2428
    %2431 = vrot.lane.b32.xlu0 %v2429, 64
    %v2432 = vpop.permute.xlu0 %2431
    %v2434 = vmul.f32 %v2415, %v2432
    %2436 = vrot.lane.b32.xlu0 %v2434, 32
    %v2437 = vpop.permute.xlu0 %2436
    %s2439 = scalar_lea.vmem [#allocation2], 152
    %2440 = vst.msk [vmem:[%s2439] sm:$0xff] %vm322, %v2437
    %s2441 = scalar_lea.vmem [#allocation4], 160
    %v2442 = vld [vmem:[%s2441] sm:$0xff]
    %v2443 = vsel %vm322, %v2437, 0
    %2445 = vmatprep.subr.mxu0 0.0
    %2446 = vmatpush1.msra.mxu0 %v317
    %2447 = vmatprep.subr.mxu0 0.0
    %2448 = vmatpush1.msra.mxu0 %v318
    %2449 = vmatprep.subr.mxu0 0.0
    %2450 = vmatpush1.msra.mxu0 %v319
    %2451 = vmatprep.subr.mxu0 0.0
    %2452 = vmatpush1.msra.mxu0 %v320
    %2453 = vmatprep.subr.mxu0 0.0
    %2454 = vmatpush1.msra.mxu0 0.0
    %2455 = vmatprep.subr.mxu0 0.0
    %2456 = vmatpush1.msra.mxu0 0.0
    %2457 = vmatprep.subr.mxu0 0.0
    %2458 = vmatpush1.msra.mxu0 0.0
    %2459 = vmatprep.subr.mxu0 0.0
    %2460 = vmatpush1.msra.mxu0 0.0
    %2461 = vmatprep.subr.mxu0 0.0
    %2462 = vmatpush1.msra.mxu0 0.0
    %2463 = vmatprep.subr.mxu0 0.0
    %2464 = vmatpush1.msra.mxu0 0.0
    %2465 = vmatprep.subr.mxu0 0.0
    %2466 = vmatpush1.msra.mxu0 0.0
    %2467 = vmatprep.subr.mxu0 0.0
    %2468 = vmatpush1.msra.mxu0 0.0
    %2469 = vmatprep.subr.mxu0 0.0
    %2470 = vmatpush1.msra.mxu0 0.0
    %2471 = vmatprep.subr.mxu0 0.0
    %2472 = vmatpush1.msra.mxu0 0.0
    %2473 = vmatprep.subr.mxu0 0.0
    %2474 = vmatpush1.msra.mxu0 0.0
    %2475 = vmatprep.subr.mxu0 0.0
    %2476 = vmatpush1.msra.mxu0 0.0
    %2477 = vmatprep.subr.mxu0 0.0
    %2478 = vmatpush1.msra.mxu0 0.0
    %2479 = vmatprep.subr.mxu0 0.0
    %2480 = vmatpush1.msra.mxu0 0.0
    %2481 = vmatprep.subr.mxu0 0.0
    %2482 = vmatpush1.msra.mxu0 0.0
    %2483 = vmatprep.subr.mxu0 0.0
    %2484 = vmatpush1.msra.mxu0 0.0
    %2485 = vmatprep.subr.mxu0 0.0
    %2486 = vmatpush1.msra.mxu0 0.0
    %2487 = vmatprep.subr.mxu0 0.0
    %2488 = vmatpush1.msra.mxu0 0.0
    %2489 = vmatprep.subr.mxu0 0.0
    %2490 = vmatpush1.msra.mxu0 0.0
    %2491 = vmatprep.subr.mxu0 0.0
    %2492 = vmatpush1.msra.mxu0 0.0
    %2493 = vmatprep.subr.mxu0 0.0
    %2494 = vmatpush1.msra.mxu0 0.0
    %2495 = vmatprep.subr.mxu0 0.0
    %2496 = vmatpush1.msra.mxu0 0.0
    %2497 = vmatprep.subr.mxu0 0.0
    %2498 = vmatpush1.msra.mxu0 0.0
    %2499 = vmatprep.subr.mxu0 0.0
    %2500 = vmatpush1.msra.mxu0 0.0
    %2501 = vmatprep.subr.mxu0 0.0
    %2502 = vmatpush1.msra.mxu0 0.0
    %2503 = vmatprep.subr.mxu0 0.0
    %2504 = vmatpush1.msra.mxu0 0.0
    %2505 = vmatprep.subr.mxu0 0.0
    %2506 = vmatpush1.msra.mxu0 0.0
    %2507 = vmatprep.subr.mxu0 0.0
    %2508 = vmatpush1.msra.mxu0 0.0
    %2509 = vmatprep.mubr.f32.mxu0 0.0
    %2510 = vmatmul.mubr.f32.gmra.mrb[0].mxu0 %v2443
    %v2511 = vpop.f32.mrb[0].mxu0
    %v2512 = vadd.f32 0.0, %v2511
    %v2513 = vpop.f32.mrb[0].mxu0
    %2514 = vdwg.mxu0
    %v2515 = vadd.f32 %v2442, %v2512
    %v2516 = vxor.u32 %v2515, 2147483648
    %v2517 = vmul.f32 %v2516, 1.442695
    %v2518 = vpow.pop %v2517
    %v2519 = vadd.f32 %v2518, 1.0
    %v2520 = vrcp.pop %v2519
    %v2521 = vmul.f32 1.0, %v2520
    %v2522 = vmul.f32 %v2521, 2.0
    %v2523 = vsub.f32 %v2522, 1.0
    %v2524 = vmul.f32 %v2521, %v2428
    %2526 = vrot.lane.b32.xlu0 %v2523, 64
    %v2527 = vpop.permute.xlu0 %2526
    %v2529 = vmul.f32 %v2521, %v2527
    %2531 = vrot.lane.b32.xlu0 %v2529, 32
    %v2532 = vpop.permute.xlu0 %2531
    %v2534 = vadd.f32 %v2524, %v2532
    %v2535 = vtanh.pop %v2534
    %2537 = vrot.lane.b32.xlu0 %v2535, 64
    %v2538 = vpop.permute.xlu0 %2537
    %v2540 = vmul.f32 %v2521, %v2538
    %2542 = vrot.lane.b32.xlu0 %v2540, 32
    %v2543 = vpop.permute.xlu0 %2542
    %s2545 = scalar_lea.vmem [#allocation2], 160
    %2546 = vst.msk [vmem:[%s2545] sm:$0xff] %vm322, %v2543
    %v2547 = vld [vmem:[#allocation2] sm:$0xff]
    %v2548 = vld [vmem:[#allocation2 + $0x8] sm:$0xff]
    %v2549 = vld [vmem:[#allocation2 + $0x10] sm:$0xff]
    %v2550 = vld [vmem:[#allocation2 + $0x18] sm:$0xff]
    %v2551 = vld [vmem:[#allocation2 + $0x20] sm:$0xff]
    %v2552 = vld [vmem:[#allocation2 + $0x28] sm:$0xff]
    %v2553 = vld [vmem:[#allocation2 + $0x30] sm:$0xff]
    %v2554 = vld [vmem:[#allocation2 + $0x38] sm:$0xff]
    %v2555 = vld [vmem:[#allocation2 + $0x40] sm:$0xff]
    %v2556 = vld [vmem:[#allocation2 + $0x48] sm:$0xff]
    %v2557 = vld [vmem:[#allocation2 + $0x50] sm:$0xff]
    %v2558 = vld [vmem:[#allocation2 + $0x58] sm:$0xff]
    %v2559 = vld [vmem:[#allocation2 + $0x60] sm:$0xff]
    %v2560 = vld [vmem:[#allocation2 + $0x68] sm:$0xff]
    %v2561 = vld [vmem:[#allocation2 + $0x70] sm:$0xff]
    %v2562 = vld [vmem:[#allocation2 + $0x78] sm:$0xff]
    %v2563 = vld [vmem:[#allocation2 + $0x80] sm:$0xff]
    %v2564 = vld [vmem:[#allocation2 + $0x88] sm:$0xff]
    %v2565 = vld [vmem:[#allocation2 + $0x90] sm:$0xff]
    %v2566 = vld [vmem:[#allocation2 + $0x98] sm:$0xff]
    %v2567 = vld [vmem:[#allocation2 + $0xa0] sm:$0xff]
    %v2568 = vld [vmem:[%s4] sm:$0xff]
    %v2569 = vld [vmem:[%s4 + $0x8] sm:$0xff]
    %v2570 = vld [vmem:[%s4 + $0x10] sm:$0xff]
    %v2571 = vld [vmem:[%s4 + $0x18] sm:$0xff]
    %v2572 = vld [vmem:[%s6] sm:$0x1]
    %v2574 = vlaneseq
    %v2575 = vshrl.u32 %v2574, 7
    %v2576 = vsub.s32 0, %v2575
    %v2577 = vrot.slane %v2572, %v2576
    %v2580 = vsel %vm322, %v2547, 0
    %v2583 = vsel %vm322, %v2548, 0
    %v2586 = vsel %vm322, %v2549, 0
    %v2589 = vsel %vm322, %v2550, 0
    %v2592 = vsel %vm322, %v2551, 0
    %v2595 = vsel %vm322, %v2552, 0
    %v2598 = vsel %vm322, %v2553, 0
    %v2601 = vsel %vm322, %v2554, 0
    %v2604 = vsel %vm322, %v2555, 0
    %v2607 = vsel %vm322, %v2556, 0
    %v2610 = vsel %vm322, %v2557, 0
    %v2613 = vsel %vm322, %v2558, 0
    %v2616 = vsel %vm322, %v2559, 0
    %v2619 = vsel %vm322, %v2560, 0
    %v2622 = vsel %vm322, %v2561, 0
    %v2625 = vsel %vm322, %v2562, 0
    %v2628 = vsel %vm322, %v2563, 0
    %v2631 = vsel %vm322, %v2564, 0
    %v2634 = vsel %vm322, %v2565, 0
    %v2637 = vsel %vm322, %v2566, 0
    %v2640 = vsel %vm322, %v2567, 0
    %2642 = vmatprep.subr.mxu0 0.0
    %2643 = vmatpush1.msra.mxu0 %v2568
    %2644 = vmatprep.subr.mxu0 0.0
    %2645 = vmatpush1.msra.mxu0 %v2569
    %2646 = vmatprep.subr.mxu0 0.0
    %2647 = vmatpush1.msra.mxu0 %v2570
    %2648 = vmatprep.subr.mxu0 0.0
    %2649 = vmatpush1.msra.mxu0 %v2571
    %2650 = vmatprep.subr.mxu0 0.0
    %2651 = vmatpush1.msra.mxu0 0.0
    %2652 = vmatprep.subr.mxu0 0.0
    %2653 = vmatpush1.msra.mxu0 0.0
    %2654 = vmatprep.subr.mxu0 0.0
    %2655 = vmatpush1.msra.mxu0 0.0
    %2656 = vmatprep.subr.mxu0 0.0
    %2657 = vmatpush1.msra.mxu0 0.0
    %2658 = vmatprep.subr.mxu0 0.0
    %2659 = vmatpush1.msra.mxu0 0.0
    %2660 = vmatprep.subr.mxu0 0.0
    %2661 = vmatpush1.msra.mxu0 0.0
    %2662 = vmatprep.subr.mxu0 0.0
    %2663 = vmatpush1.msra.mxu0 0.0
    %2664 = vmatprep.subr.mxu0 0.0
    %2665 = vmatpush1.msra.mxu0 0.0
    %2666 = vmatprep.subr.mxu0 0.0
    %2667 = vmatpush1.msra.mxu0 0.0
    %2668 = vmatprep.subr.mxu0 0.0
    %2669 = vmatpush1.msra.mxu0 0.0
    %2670 = vmatprep.subr.mxu0 0.0
    %2671 = vmatpush1.msra.mxu0 0.0
    %2672 = vmatprep.subr.mxu0 0.0
    %2673 = vmatpush1.msra.mxu0 0.0
    %2674 = vmatprep.subr.mxu0 0.0
    %2675 = vmatpush1.msra.mxu0 0.0
    %2676 = vmatprep.subr.mxu0 0.0
    %2677 = vmatpush1.msra.mxu0 0.0
    %2678 = vmatprep.subr.mxu0 0.0
    %2679 = vmatpush1.msra.mxu0 0.0
    %2680 = vmatprep.subr.mxu0 0.0
    %2681 = vmatpush1.msra.mxu0 0.0
    %2682 = vmatprep.subr.mxu0 0.0
    %2683 = vmatpush1.msra.mxu0 0.0
    %2684 = vmatprep.subr.mxu0 0.0
    %2685 = vmatpush1.msra.mxu0 0.0
    %2686 = vmatprep.subr.mxu0 0.0
    %2687 = vmatpush1.msra.mxu0 0.0
    %2688 = vmatprep.subr.mxu0 0.0
    %2689 = vmatpush1.msra.mxu0 0.0
    %2690 = vmatprep.subr.mxu0 0.0
    %2691 = vmatpush1.msra.mxu0 0.0
    %2692 = vmatprep.subr.mxu0 0.0
    %2693 = vmatpush1.msra.mxu0 0.0
    %2694 = vmatprep.subr.mxu0 0.0
    %2695 = vmatpush1.msra.mxu0 0.0
    %2696 = vmatprep.subr.mxu0 0.0
    %2697 = vmatpush1.msra.mxu0 0.0
    %2698 = vmatprep.subr.mxu0 0.0
    %2699 = vmatpush1.msra.mxu0 0.0
    %2700 = vmatprep.subr.mxu0 0.0
    %2701 = vmatpush1.msra.mxu0 0.0
    %2702 = vmatprep.subr.mxu0 0.0
    %2703 = vmatpush1.msra.mxu0 0.0
    %2704 = vmatprep.subr.mxu0 0.0
    %2705 = vmatpush1.msra.mxu0 0.0
    %2706 = vmatprep.mubr.f32.mxu0 0.0
    %2707 = vmatmul.mubr.f32.gmra.mrb[0].mxu0 %v2580
    %v2708 = vpop.f32.mrb[0].mxu0
    %v2709 = vadd.f32 %v2577, %v2708
    %v2710 = vpop.f32.mrb[0].mxu0
    %2711 = vmatprep.mubr.f32.mxu0 0.0
    %2712 = vmatmul.mubr.f32.gmra.mrb[0].mxu0 %v2583
    %v2713 = vpop.f32.mrb[0].mxu0
    %v2714 = vadd.f32 %v2577, %v2713
    %v2715 = vpop.f32.mrb[0].mxu0
    %2716 = vmatprep.mubr.f32.mxu0 0.0
    %2717 = vmatmul.mubr.f32.gmra.mrb[0].mxu0 %v2586
    %v2718 = vpop.f32.mrb[0].mxu0
    %v2719 = vadd.f32 %v2577, %v2718
    %v2720 = vpop.f32.mrb[0].mxu0
    %2721 = vmatprep.mubr.f32.mxu0 0.0
    %2722 = vmatmul.mubr.f32.gmra.mrb[0].mxu0 %v2589
    %v2723 = vpop.f32.mrb[0].mxu0
    %v2724 = vadd.f32 %v2577, %v2723
    %v2725 = vpop.f32.mrb[0].mxu0
    %2726 = vmatprep.mubr.f32.mxu0 0.0
    %2727 = vmatmul.mubr.f32.gmra.mrb[0].mxu0 %v2592
    %v2728 = vpop.f32.mrb[0].mxu0
    %v2729 = vadd.f32 %v2577, %v2728
    %v2730 = vpop.f32.mrb[0].mxu0
    %2731 = vmatprep.mubr.f32.mxu0 0.0
    %2732 = vmatmul.mubr.f32.gmra.mrb[0].mxu0 %v2595
    %v2733 = vpop.f32.mrb[0].mxu0
    %v2734 = vadd.f32 %v2577, %v2733
    %v2735 = vpop.f32.mrb[0].mxu0
    %2736 = vmatprep.mubr.f32.mxu0 0.0
    %2737 = vmatmul.mubr.f32.gmra.mrb[0].mxu0 %v2598
    %v2738 = vpop.f32.mrb[0].mxu0
    %v2739 = vadd.f32 %v2577, %v2738
    %v2740 = vpop.f32.mrb[0].mxu0
    %2741 = vmatprep.mubr.f32.mxu0 0.0
    %2742 = vmatmul.mubr.f32.gmra.mrb[0].mxu0 %v2601
    %v2743 = vpop.f32.mrb[0].mxu0
    %v2744 = vadd.f32 %v2577, %v2743
    %v2745 = vpop.f32.mrb[0].mxu0
    %2746 = vmatprep.mubr.f32.mxu0 0.0
    %2747 = vmatmul.mubr.f32.gmra.mrb[0].mxu0 %v2604
    %v2748 = vpop.f32.mrb[0].mxu0
    %v2749 = vadd.f32 %v2577, %v2748
    %v2750 = vpop.f32.mrb[0].mxu0
    %2751 = vmatprep.mubr.f32.mxu0 0.0
    %2752 = vmatmul.mubr.f32.gmra.mrb[0].mxu0 %v2607
    %v2753 = vpop.f32.mrb[0].mxu0
    %v2754 = vadd.f32 %v2577, %v2753
    %v2755 = vpop.f32.mrb[0].mxu0
    %2756 = vmatprep.mubr.f32.mxu0 0.0
    %2757 = vmatmul.mubr.f32.gmra.mrb[0].mxu0 %v2610
    %v2758 = vpop.f32.mrb[0].mxu0
    %v2759 = vadd.f32 %v2577, %v2758
    %v2760 = vpop.f32.mrb[0].mxu0
    %2761 = vmatprep.mubr.f32.mxu0 0.0
    %2762 = vmatmul.mubr.f32.gmra.mrb[0].mxu0 %v2613
    %v2763 = vpop.f32.mrb[0].mxu0
    %v2764 = vadd.f32 %v2577, %v2763
    %v2765 = vpop.f32.mrb[0].mxu0
    %2766 = vmatprep.mubr.f32.mxu0 0.0
    %2767 = vmatmul.mubr.f32.gmra.mrb[0].mxu0 %v2616
    %v2768 = vpop.f32.mrb[0].mxu0
    %v2769 = vadd.f32 %v2577, %v2768
    %v2770 = vpop.f32.mrb[0].mxu0
    %2771 = vmatprep.mubr.f32.mxu0 0.0
    %2772 = vmatmul.mubr.f32.gmra.mrb[0].mxu0 %v2619
    %v2773 = vpop.f32.mrb[0].mxu0
    %v2774 = vadd.f32 %v2577, %v2773
    %v2775 = vpop.f32.mrb[0].mxu0
    %2776 = vmatprep.mubr.f32.mxu0 0.0
    %2777 = vmatmul.mubr.f32.gmra.mrb[0].mxu0 %v2622
    %v2778 = vpop.f32.mrb[0].mxu0
    %v2779 = vadd.f32 %v2577, %v2778
    %v2780 = vpop.f32.mrb[0].mxu0
    %2781 = vmatprep.mubr.f32.mxu0 0.0
    %2782 = vmatmul.mubr.f32.gmra.mrb[0].mxu0 %v2625
    %v2783 = vpop.f32.mrb[0].mxu0
    %v2784 = vadd.f32 %v2577, %v2783
    %v2785 = vpop.f32.mrb[0].mxu0
    %2786 = vmatprep.mubr.f32.mxu0 0.0
    %2787 = vmatmul.mubr.f32.gmra.mrb[0].mxu0 %v2628
    %v2788 = vpop.f32.mrb[0].mxu0
    %v2789 = vadd.f32 %v2577, %v2788
    %v2790 = vpop.f32.mrb[0].mxu0
    %2791 = vmatprep.mubr.f32.mxu0 0.0
    %2792 = vmatmul.mubr.f32.gmra.mrb[0].mxu0 %v2631
    %v2793 = vpop.f32.mrb[0].mxu0
    %v2794 = vadd.f32 %v2577, %v2793
    %v2795 = vpop.f32.mrb[0].mxu0
    %2796 = vmatprep.mubr.f32.mxu0 0.0
    %2797 = vmatmul.mubr.f32.gmra.mrb[0].mxu0 %v2634
    %v2798 = vpop.f32.mrb[0].mxu0
    %v2799 = vadd.f32 %v2577, %v2798
    %v2800 = vpop.f32.mrb[0].mxu0
    %2801 = vmatprep.mubr.f32.mxu0 0.0
    %2802 = vmatmul.mubr.f32.gmra.mrb[0].mxu0 %v2637
    %v2803 = vpop.f32.mrb[0].mxu0
    %v2804 = vadd.f32 %v2577, %v2803
    %v2805 = vpop.f32.mrb[0].mxu0
    %2806 = vmatprep.mubr.f32.mxu0 0.0
    %2807 = vmatmul.mubr.f32.gmra.mrb[0].mxu0 %v2640
    %v2808 = vpop.f32.mrb[0].mxu0
    %v2809 = vadd.f32 %v2577, %v2808
    %v2810 = vpop.f32.mrb[0].mxu0
    %2811 = vdwg.mxu0
    %2812 = vst [vmem:[#allocation4] sm:$0xff] %v2709
    %2813 = vst [vmem:[#allocation4 + $0x8] sm:$0xff] %v2714
    %2814 = vst [vmem:[#allocation4 + $0x10] sm:$0xff] %v2719
    %2815 = vst [vmem:[#allocation4 + $0x18] sm:$0xff] %v2724
    %2816 = vst [vmem:[#allocation4 + $0x20] sm:$0xff] %v2729
    %2817 = vst [vmem:[#allocation4 + $0x28] sm:$0xff] %v2734
    %2818 = vst [vmem:[#allocation4 + $0x30] sm:$0xff] %v2739
    %2819 = vst [vmem:[#allocation4 + $0x38] sm:$0xff] %v2744
    %2820 = vst [vmem:[#allocation4 + $0x40] sm:$0xff] %v2749
    %2821 = vst [vmem:[#allocation4 + $0x48] sm:$0xff] %v2754
    %2822 = vst [vmem:[#allocation4 + $0x50] sm:$0xff] %v2759
    %2823 = vst [vmem:[#allocation4 + $0x58] sm:$0xff] %v2764
    %2824 = vst [vmem:[#allocation4 + $0x60] sm:$0xff] %v2769
    %2825 = vst [vmem:[#allocation4 + $0x68] sm:$0xff] %v2774
    %2826 = vst [vmem:[#allocation4 + $0x70] sm:$0xff] %v2779
    %2827 = vst [vmem:[#allocation4 + $0x78] sm:$0xff] %v2784
    %2828 = vst [vmem:[#allocation4 + $0x80] sm:$0xff] %v2789
    %2829 = vst [vmem:[#allocation4 + $0x88] sm:$0xff] %v2794
    %2830 = vst [vmem:[#allocation4 + $0x90] sm:$0xff] %v2799
    %2831 = vst [vmem:[#allocation4 + $0x98] sm:$0xff] %v2804
    %2832 = vst [vmem:[#allocation4 + $0xa0] sm:$0xff] %v2809
    %v2833 = vld [vmem:[%s5] sm:$0xff]
    %v2834 = vld [vmem:[%s5 + $0x8] sm:$0xff]
    %v2835 = vld [vmem:[%s5 + $0x10] sm:$0xff]
    %v2836 = vld [vmem:[%s5 + $0x18] sm:$0xff]
    %v2837 = vld [vmem:[#allocation4] sm:$0xff]
    %2838 = vmatprep.subr.mxu0 0.0
    %2839 = vmatpush1.msra.mxu0 %v2833
    %2840 = vmatprep.subr.mxu0 0.0
    %2841 = vmatpush1.msra.mxu0 %v2834
    %2842 = vmatprep.subr.mxu0 0.0
    %2843 = vmatpush1.msra.mxu0 %v2835
    %2844 = vmatprep.subr.mxu0 0.0
    %2845 = vmatpush1.msra.mxu0 %v2836
    %2846 = vmatprep.subr.mxu0 0.0
    %2847 = vmatpush1.msra.mxu0 0.0
    %2848 = vmatprep.subr.mxu0 0.0
    %2849 = vmatpush1.msra.mxu0 0.0
    %2850 = vmatprep.subr.mxu0 0.0
    %2851 = vmatpush1.msra.mxu0 0.0
    %2852 = vmatprep.subr.mxu0 0.0
    %2853 = vmatpush1.msra.mxu0 0.0
    %2854 = vmatprep.subr.mxu0 0.0
    %2855 = vmatpush1.msra.mxu0 0.0
    %2856 = vmatprep.subr.mxu0 0.0
    %2857 = vmatpush1.msra.mxu0 0.0
    %2858 = vmatprep.subr.mxu0 0.0
    %2859 = vmatpush1.msra.mxu0 0.0
    %2860 = vmatprep.subr.mxu0 0.0
    %2861 = vmatpush1.msra.mxu0 0.0
    %2862 = vmatprep.subr.mxu0 0.0
    %2863 = vmatpush1.msra.mxu0 0.0
    %2864 = vmatprep.subr.mxu0 0.0
    %2865 = vmatpush1.msra.mxu0 0.0
    %2866 = vmatprep.subr.mxu0 0.0
    %2867 = vmatpush1.msra.mxu0 0.0
    %2868 = vmatprep.subr.mxu0 0.0
    %2869 = vmatpush1.msra.mxu0 0.0
    %2870 = vmatprep.subr.mxu0 0.0
    %2871 = vmatpush1.msra.mxu0 0.0
    %2872 = vmatprep.subr.mxu0 0.0
    %2873 = vmatpush1.msra.mxu0 0.0
    %2874 = vmatprep.subr.mxu0 0.0
    %2875 = vmatpush1.msra.mxu0 0.0
    %2876 = vmatprep.subr.mxu0 0.0
    %2877 = vmatpush1.msra.mxu0 0.0
    %2878 = vmatprep.subr.mxu0 0.0
    %2879 = vmatpush1.msra.mxu0 0.0
    %2880 = vmatprep.subr.mxu0 0.0
    %2881 = vmatpush1.msra.mxu0 0.0
    %2882 = vmatprep.subr.mxu0 0.0
    %2883 = vmatpush1.msra.mxu0 0.0
    %2884 = vmatprep.subr.mxu0 0.0
    %2885 = vmatpush1.msra.mxu0 0.0
    %2886 = vmatprep.subr.mxu0 0.0
    %2887 = vmatpush1.msra.mxu0 0.0
    %2888 = vmatprep.subr.mxu0 0.0
    %2889 = vmatpush1.msra.mxu0 0.0
    %2890 = vmatprep.subr.mxu0 0.0
    %2891 = vmatpush1.msra.mxu0 0.0
    %2892 = vmatprep.subr.mxu0 0.0
    %2893 = vmatpush1.msra.mxu0 0.0
    %2894 = vmatprep.subr.mxu0 0.0
    %2895 = vmatpush1.msra.mxu0 0.0
    %2896 = vmatprep.subr.mxu0 0.0
    %2897 = vmatpush1.msra.mxu0 0.0
    %2898 = vmatprep.subr.mxu0 0.0
    %2899 = vmatpush1.msra.mxu0 0.0
    %2900 = vmatprep.subr.mxu0 0.0
    %2901 = vmatpush1.msra.mxu0 0.0
    %2902 = vmatprep.mubr.f32.mxu0 0.0
    %2903 = vmatmul.mubr.f32.gmra.mrb[0].mxu0 %v324
    %v2904 = vpop.f32.mrb[0].mxu0
    %v2905 = vadd.f32 0.0, %v2904
    %v2906 = vpop.f32.mrb[0].mxu0
    %2907 = vdwg.mxu0
    %v2908 = vadd.f32 %v2837, %v2905
    %v2909 = vxor.u32 %v2908, 2147483648
    %v2910 = vmul.f32 %v2909, 1.442695
    %v2911 = vpow.pop %v2910
    %v2912 = vadd.f32 %v2911, 1.0
    %v2913 = vrcp.pop %v2912
    %v2914 = vmul.f32 1.0, %v2913
    %v2915 = vmul.f32 %v2914, 2.0
    %v2916 = vsub.f32 %v2915, 1.0
    %v2917 = vmul.f32 %v2914, 0.0
    %2919 = vrot.lane.b32.xlu0 %v2916, 64
    %v2920 = vpop.permute.xlu0 %2919
    %v2922 = vmul.f32 %v2914, %v2920
    %2924 = vrot.lane.b32.xlu0 %v2922, 32
    %v2925 = vpop.permute.xlu0 %2924
    %v2927 = vadd.f32 %v2917, %v2925
    %v2928 = vtanh.pop %v2927
    %2930 = vrot.lane.b32.xlu0 %v2928, 64
    %v2931 = vpop.permute.xlu0 %2930
    %v2933 = vmul.f32 %v2914, %v2931
    %2935 = vrot.lane.b32.xlu0 %v2933, 32
    %v2936 = vpop.permute.xlu0 %2935
    %2938 = vst.msk [vmem:[#allocation3] sm:$0xff] %vm322, %v2936
    %v2939 = vld [vmem:[%s427] sm:$0xff]
    %v2940 = vsel %vm322, %v2936, 0
    %2942 = vmatprep.subr.mxu0 0.0
    %2943 = vmatpush1.msra.mxu0 %v2833
    %2944 = vmatprep.subr.mxu0 0.0
    %2945 = vmatpush1.msra.mxu0 %v2834
    %2946 = vmatprep.subr.mxu0 0.0
    %2947 = vmatpush1.msra.mxu0 %v2835
    %2948 = vmatprep.subr.mxu0 0.0
    %2949 = vmatpush1.msra.mxu0 %v2836
    %2950 = vmatprep.subr.mxu0 0.0
    %2951 = vmatpush1.msra.mxu0 0.0
    %2952 = vmatprep.subr.mxu0 0.0
    %2953 = vmatpush1.msra.mxu0 0.0
    %2954 = vmatprep.subr.mxu0 0.0
    %2955 = vmatpush1.msra.mxu0 0.0
    %2956 = vmatprep.subr.mxu0 0.0
    %2957 = vmatpush1.msra.mxu0 0.0
    %2958 = vmatprep.subr.mxu0 0.0
    %2959 = vmatpush1.msra.mxu0 0.0
    %2960 = vmatprep.subr.mxu0 0.0
    %2961 = vmatpush1.msra.mxu0 0.0
    %2962 = vmatprep.subr.mxu0 0.0
    %2963 = vmatpush1.msra.mxu0 0.0
    %2964 = vmatprep.subr.mxu0 0.0
    %2965 = vmatpush1.msra.mxu0 0.0
    %2966 = vmatprep.subr.mxu0 0.0
    %2967 = vmatpush1.msra.mxu0 0.0
    %2968 = vmatprep.subr.mxu0 0.0
    %2969 = vmatpush1.msra.mxu0 0.0
    %2970 = vmatprep.subr.mxu0 0.0
    %2971 = vmatpush1.msra.mxu0 0.0
    %2972 = vmatprep.subr.mxu0 0.0
    %2973 = vmatpush1.msra.mxu0 0.0
    %2974 = vmatprep.subr.mxu0 0.0
    %2975 = vmatpush1.msra.mxu0 0.0
    %2976 = vmatprep.subr.mxu0 0.0
    %2977 = vmatpush1.msra.mxu0 0.0
    %2978 = vmatprep.subr.mxu0 0.0
    %2979 = vmatpush1.msra.mxu0 0.0
    %2980 = vmatprep.subr.mxu0 0.0
    %2981 = vmatpush1.msra.mxu0 0.0
    %2982 = vmatprep.subr.mxu0 0.0
    %2983 = vmatpush1.msra.mxu0 0.0
    %2984 = vmatprep.subr.mxu0 0.0
    %2985 = vmatpush1.msra.mxu0 0.0
    %2986 = vmatprep.subr.mxu0 0.0
    %2987 = vmatpush1.msra.mxu0 0.0
    %2988 = vmatprep.subr.mxu0 0.0
    %2989 = vmatpush1.msra.mxu0 0.0
    %2990 = vmatprep.subr.mxu0 0.0
    %2991 = vmatpush1.msra.mxu0 0.0
    %2992 = vmatprep.subr.mxu0 0.0
    %2993 = vmatpush1.msra.mxu0 0.0
    %2994 = vmatprep.subr.mxu0 0.0
    %2995 = vmatpush1.msra.mxu0 0.0
    %2996 = vmatprep.subr.mxu0 0.0
    %2997 = vmatpush1.msra.mxu0 0.0
    %2998 = vmatprep.subr.mxu0 0.0
    %2999 = vmatpush1.msra.mxu0 0.0
    %3000 = vmatprep.subr.mxu0 0.0
    %3001 = vmatpush1.msra.mxu0 0.0
    %3002 = vmatprep.subr.mxu0 0.0
    %3003 = vmatpush1.msra.mxu0 0.0
    %3004 = vmatprep.subr.mxu0 0.0
    %3005 = vmatpush1.msra.mxu0 0.0
    %3006 = vmatprep.mubr.f32.mxu0 0.0
    %3007 = vmatmul.mubr.f32.gmra.mrb[0].mxu0 %v2940
    %v3008 = vpop.f32.mrb[0].mxu0
    %v3009 = vadd.f32 0.0, %v3008
    %v3010 = vpop.f32.mrb[0].mxu0
    %3011 = vdwg.mxu0
    %v3012 = vadd.f32 %v2939, %v3009
    %v3013 = vxor.u32 %v3012, 2147483648
    %v3014 = vmul.f32 %v3013, 1.442695
    %v3015 = vpow.pop %v3014
    %v3016 = vadd.f32 %v3015, 1.0
    %v3017 = vrcp.pop %v3016
    %v3018 = vmul.f32 1.0, %v3017
    %v3019 = vmul.f32 %v3018, 2.0
    %v3020 = vsub.f32 %v3019, 1.0
    %v3021 = vmul.f32 %v3018, %v2927
    %3023 = vrot.lane.b32.xlu0 %v3020, 64
    %v3024 = vpop.permute.xlu0 %3023
    %v3026 = vmul.f32 %v3018, %v3024
    %3028 = vrot.lane.b32.xlu0 %v3026, 32
    %v3029 = vpop.permute.xlu0 %3028
    %v3031 = vadd.f32 %v3021, %v3029
    %v3032 = vtanh.pop %v3031
    %3034 = vrot.lane.b32.xlu0 %v3032, 64
    %v3035 = vpop.permute.xlu0 %3034
    %v3037 = vmul.f32 %v3018, %v3035
    %3039 = vrot.lane.b32.xlu0 %v3037, 32
    %v3040 = vpop.permute.xlu0 %3039
    %s3042 = scalar_lea.vmem [#allocation3], 8
    %3043 = vst.msk [vmem:[%s3042] sm:$0xff] %vm322, %v3040
    %v3044 = vld [vmem:[%s533] sm:$0xff]
    %v3045 = vsel %vm322, %v3040, 0
    %3047 = vmatprep.subr.mxu0 0.0
    %3048 = vmatpush1.msra.mxu0 %v2833
    %3049 = vmatprep.subr.mxu0 0.0
    %3050 = vmatpush1.msra.mxu0 %v2834
    %3051 = vmatprep.subr.mxu0 0.0
    %3052 = vmatpush1.msra.mxu0 %v2835
    %3053 = vmatprep.subr.mxu0 0.0
    %3054 = vmatpush1.msra.mxu0 %v2836
    %3055 = vmatprep.subr.mxu0 0.0
    %3056 = vmatpush1.msra.mxu0 0.0
    %3057 = vmatprep.subr.mxu0 0.0
    %3058 = vmatpush1.msra.mxu0 0.0
    %3059 = vmatprep.subr.mxu0 0.0
    %3060 = vmatpush1.msra.mxu0 0.0
    %3061 = vmatprep.subr.mxu0 0.0
    %3062 = vmatpush1.msra.mxu0 0.0
    %3063 = vmatprep.subr.mxu0 0.0
    %3064 = vmatpush1.msra.mxu0 0.0
    %3065 = vmatprep.subr.mxu0 0.0
    %3066 = vmatpush1.msra.mxu0 0.0
    %3067 = vmatprep.subr.mxu0 0.0
    %3068 = vmatpush1.msra.mxu0 0.0
    %3069 = vmatprep.subr.mxu0 0.0
    %3070 = vmatpush1.msra.mxu0 0.0
    %3071 = vmatprep.subr.mxu0 0.0
    %3072 = vmatpush1.msra.mxu0 0.0
    %3073 = vmatprep.subr.mxu0 0.0
    %3074 = vmatpush1.msra.mxu0 0.0
    %3075 = vmatprep.subr.mxu0 0.0
    %3076 = vmatpush1.msra.mxu0 0.0
    %3077 = vmatprep.subr.mxu0 0.0
    %3078 = vmatpush1.msra.mxu0 0.0
    %3079 = vmatprep.subr.mxu0 0.0
    %3080 = vmatpush1.msra.mxu0 0.0
    %3081 = vmatprep.subr.mxu0 0.0
    %3082 = vmatpush1.msra.mxu0 0.0
    %3083 = vmatprep.subr.mxu0 0.0
    %3084 = vmatpush1.msra.mxu0 0.0
    %3085 = vmatprep.subr.mxu0 0.0
    %3086 = vmatpush1.msra.mxu0 0.0
    %3087 = vmatprep.subr.mxu0 0.0
    %3088 = vmatpush1.msra.mxu0 0.0
    %3089 = vmatprep.subr.mxu0 0.0
    %3090 = vmatpush1.msra.mxu0 0.0
    %3091 = vmatprep.subr.mxu0 0.0
    %3092 = vmatpush1.msra.mxu0 0.0
    %3093 = vmatprep.subr.mxu0 0.0
    %3094 = vmatpush1.msra.mxu0 0.0
    %3095 = vmatprep.subr.mxu0 0.0
    %3096 = vmatpush1.msra.mxu0 0.0
    %3097 = vmatprep.subr.mxu0 0.0
    %3098 = vmatpush1.msra.mxu0 0.0
    %3099 = vmatprep.subr.mxu0 0.0
    %3100 = vmatpush1.msra.mxu0 0.0
    %3101 = vmatprep.subr.mxu0 0.0
    %3102 = vmatpush1.msra.mxu0 0.0
    %3103 = vmatprep.subr.mxu0 0.0
    %3104 = vmatpush1.msra.mxu0 0.0
    %3105 = vmatprep.subr.mxu0 0.0
    %3106 = vmatpush1.msra.mxu0 0.0
    %3107 = vmatprep.subr.mxu0 0.0
    %3108 = vmatpush1.msra.mxu0 0.0
    %3109 = vmatprep.subr.mxu0 0.0
    %3110 = vmatpush1.msra.mxu0 0.0
    %3111 = vmatprep.mubr.f32.mxu0 0.0
    %3112 = vmatmul.mubr.f32.gmra.mrb[0].mxu0 %v3045
    %v3113 = vpop.f32.mrb[0].mxu0
    %v3114 = vadd.f32 0.0, %v3113
    %v3115 = vpop.f32.mrb[0].mxu0
    %3116 = vdwg.mxu0
    %v3117 = vadd.f32 %v3044, %v3114
    %v3118 = vxor.u32 %v3117, 2147483648
    %v3119 = vmul.f32 %v3118, 1.442695
    %v3120 = vpow.pop %v3119
    %v3121 = vadd.f32 %v3120, 1.0
    %v3122 = vrcp.pop %v3121
    %v3123 = vmul.f32 1.0, %v3122
    %v3124 = vmul.f32 %v3123, 2.0
    %v3125 = vsub.f32 %v3124, 1.0
    %v3126 = vmul.f32 %v3123, %v3031
    %3128 = vrot.lane.b32.xlu0 %v3125, 64
    %v3129 = vpop.permute.xlu0 %3128
    %v3131 = vmul.f32 %v3123, %v3129
    %3133 = vrot.lane.b32.xlu0 %v3131, 32
    %v3134 = vpop.permute.xlu0 %3133
    %v3136 = vadd.f32 %v3126, %v3134
    %v3137 = vtanh.pop %v3136
    %3139 = vrot.lane.b32.xlu0 %v3137, 64
    %v3140 = vpop.permute.xlu0 %3139
    %v3142 = vmul.f32 %v3123, %v3140
    %3144 = vrot.lane.b32.xlu0 %v3142, 32
    %v3145 = vpop.permute.xlu0 %3144
    %s3147 = scalar_lea.vmem [#allocation3], 16
    %3148 = vst.msk [vmem:[%s3147] sm:$0xff] %vm322, %v3145
    %v3149 = vld [vmem:[%s639] sm:$0xff]
    %v3150 = vsel %vm322, %v3145, 0
    %3152 = vmatprep.subr.mxu0 0.0
    %3153 = vmatpush1.msra.mxu0 %v2833
    %3154 = vmatprep.subr.mxu0 0.0
    %3155 = vmatpush1.msra.mxu0 %v2834
    %3156 = vmatprep.subr.mxu0 0.0
    %3157 = vmatpush1.msra.mxu0 %v2835
    %3158 = vmatprep.subr.mxu0 0.0
    %3159 = vmatpush1.msra.mxu0 %v2836
    %3160 = vmatprep.subr.mxu0 0.0
    %3161 = vmatpush1.msra.mxu0 0.0
    %3162 = vmatprep.subr.mxu0 0.0
    %3163 = vmatpush1.msra.mxu0 0.0
    %3164 = vmatprep.subr.mxu0 0.0
    %3165 = vmatpush1.msra.mxu0 0.0
    %3166 = vmatprep.subr.mxu0 0.0
    %3167 = vmatpush1.msra.mxu0 0.0
    %3168 = vmatprep.subr.mxu0 0.0
    %3169 = vmatpush1.msra.mxu0 0.0
    %3170 = vmatprep.subr.mxu0 0.0
    %3171 = vmatpush1.msra.mxu0 0.0
    %3172 = vmatprep.subr.mxu0 0.0
    %3173 = vmatpush1.msra.mxu0 0.0
    %3174 = vmatprep.subr.mxu0 0.0
    %3175 = vmatpush1.msra.mxu0 0.0
    %3176 = vmatprep.subr.mxu0 0.0
    %3177 = vmatpush1.msra.mxu0 0.0
    %3178 = vmatprep.subr.mxu0 0.0
    %3179 = vmatpush1.msra.mxu0 0.0
    %3180 = vmatprep.subr.mxu0 0.0
    %3181 = vmatpush1.msra.mxu0 0.0
    %3182 = vmatprep.subr.mxu0 0.0
    %3183 = vmatpush1.msra.mxu0 0.0
    %3184 = vmatprep.subr.mxu0 0.0
    %3185 = vmatpush1.msra.mxu0 0.0
    %3186 = vmatprep.subr.mxu0 0.0
    %3187 = vmatpush1.msra.mxu0 0.0
    %3188 = vmatprep.subr.mxu0 0.0
    %3189 = vmatpush1.msra.mxu0 0.0
    %3190 = vmatprep.subr.mxu0 0.0
    %3191 = vmatpush1.msra.mxu0 0.0
    %3192 = vmatprep.subr.mxu0 0.0
    %3193 = vmatpush1.msra.mxu0 0.0
    %3194 = vmatprep.subr.mxu0 0.0
    %3195 = vmatpush1.msra.mxu0 0.0
    %3196 = vmatprep.subr.mxu0 0.0
    %3197 = vmatpush1.msra.mxu0 0.0
    %3198 = vmatprep.subr.mxu0 0.0
    %3199 = vmatpush1.msra.mxu0 0.0
    %3200 = vmatprep.subr.mxu0 0.0
    %3201 = vmatpush1.msra.mxu0 0.0
    %3202 = vmatprep.subr.mxu0 0.0
    %3203 = vmatpush1.msra.mxu0 0.0
    %3204 = vmatprep.subr.mxu0 0.0
    %3205 = vmatpush1.msra.mxu0 0.0
    %3206 = vmatprep.subr.mxu0 0.0
    %3207 = vmatpush1.msra.mxu0 0.0
    %3208 = vmatprep.subr.mxu0 0.0
    %3209 = vmatpush1.msra.mxu0 0.0
    %3210 = vmatprep.subr.mxu0 0.0
    %3211 = vmatpush1.msra.mxu0 0.0
    %3212 = vmatprep.subr.mxu0 0.0
    %3213 = vmatpush1.msra.mxu0 0.0
    %3214 = vmatprep.subr.mxu0 0.0
    %3215 = vmatpush1.msra.mxu0 0.0
    %3216 = vmatprep.mubr.f32.mxu0 0.0
    %3217 = vmatmul.mubr.f32.gmra.mrb[0].mxu0 %v3150
    %v3218 = vpop.f32.mrb[0].mxu0
    %v3219 = vadd.f32 0.0, %v3218
    %v3220 = vpop.f32.mrb[0].mxu0
    %3221 = vdwg.mxu0
    %v3222 = vadd.f32 %v3149, %v3219
    %v3223 = vxor.u32 %v3222, 2147483648
    %v3224 = vmul.f32 %v3223, 1.442695
    %v3225 = vpow.pop %v3224
    %v3226 = vadd.f32 %v3225, 1.0
    %v3227 = vrcp.pop %v3226
    %v3228 = vmul.f32 1.0, %v3227
    %v3229 = vmul.f32 %v3228, 2.0
    %v3230 = vsub.f32 %v3229, 1.0
    %v3231 = vmul.f32 %v3228, %v3136
    %3233 = vrot.lane.b32.xlu0 %v3230, 64
    %v3234 = vpop.permute.xlu0 %3233
    %v3236 = vmul.f32 %v3228, %v3234
    %3238 = vrot.lane.b32.xlu0 %v3236, 32
    %v3239 = vpop.permute.xlu0 %3238
    %v3241 = vadd.f32 %v3231, %v3239
    %v3242 = vtanh.pop %v3241
    %3244 = vrot.lane.b32.xlu0 %v3242, 64
    %v3245 = vpop.permute.xlu0 %3244
    %v3247 = vmul.f32 %v3228, %v3245
    %3249 = vrot.lane.b32.xlu0 %v3247, 32
    %v3250 = vpop.permute.xlu0 %3249
    %s3252 = scalar_lea.vmem [#allocation3], 24
    %3253 = vst.msk [vmem:[%s3252] sm:$0xff] %vm322, %v3250
    %v3254 = vld [vmem:[%s745] sm:$0xff]
    %v3255 = vsel %vm322, %v3250, 0
    %3257 = vmatprep.subr.mxu0 0.0
    %3258 = vmatpush1.msra.mxu0 %v2833
    %3259 = vmatprep.subr.mxu0 0.0
    %3260 = vmatpush1.msra.mxu0 %v2834
    %3261 = vmatprep.subr.mxu0 0.0
    %3262 = vmatpush1.msra.mxu0 %v2835
    %3263 = vmatprep.subr.mxu0 0.0
    %3264 = vmatpush1.msra.mxu0 %v2836
    %3265 = vmatprep.subr.mxu0 0.0
    %3266 = vmatpush1.msra.mxu0 0.0
    %3267 = vmatprep.subr.mxu0 0.0
    %3268 = vmatpush1.msra.mxu0 0.0
    %3269 = vmatprep.subr.mxu0 0.0
    %3270 = vmatpush1.msra.mxu0 0.0
    %3271 = vmatprep.subr.mxu0 0.0
    %3272 = vmatpush1.msra.mxu0 0.0
    %3273 = vmatprep.subr.mxu0 0.0
    %3274 = vmatpush1.msra.mxu0 0.0
    %3275 = vmatprep.subr.mxu0 0.0
    %3276 = vmatpush1.msra.mxu0 0.0
    %3277 = vmatprep.subr.mxu0 0.0
    %3278 = vmatpush1.msra.mxu0 0.0
    %3279 = vmatprep.subr.mxu0 0.0
    %3280 = vmatpush1.msra.mxu0 0.0
    %3281 = vmatprep.subr.mxu0 0.0
    %3282 = vmatpush1.msra.mxu0 0.0
    %3283 = vmatprep.subr.mxu0 0.0
    %3284 = vmatpush1.msra.mxu0 0.0
    %3285 = vmatprep.subr.mxu0 0.0
    %3286 = vmatpush1.msra.mxu0 0.0
    %3287 = vmatprep.subr.mxu0 0.0
    %3288 = vmatpush1.msra.mxu0 0.0
    %3289 = vmatprep.subr.mxu0 0.0
    %3290 = vmatpush1.msra.mxu0 0.0
    %3291 = vmatprep.subr.mxu0 0.0
    %3292 = vmatpush1.msra.mxu0 0.0
    %3293 = vmatprep.subr.mxu0 0.0
    %3294 = vmatpush1.msra.mxu0 0.0
    %3295 = vmatprep.subr.mxu0 0.0
    %3296 = vmatpush1.msra.mxu0 0.0
    %3297 = vmatprep.subr.mxu0 0.0
    %3298 = vmatpush1.msra.mxu0 0.0
    %3299 = vmatprep.subr.mxu0 0.0
    %3300 = vmatpush1.msra.mxu0 0.0
    %3301 = vmatprep.subr.mxu0 0.0
    %3302 = vmatpush1.msra.mxu0 0.0
    %3303 = vmatprep.subr.mxu0 0.0
    %3304 = vmatpush1.msra.mxu0 0.0
    %3305 = vmatprep.subr.mxu0 0.0
    %3306 = vmatpush1.msra.mxu0 0.0
    %3307 = vmatprep.subr.mxu0 0.0
    %3308 = vmatpush1.msra.mxu0 0.0
    %3309 = vmatprep.subr.mxu0 0.0
    %3310 = vmatpush1.msra.mxu0 0.0
    %3311 = vmatprep.subr.mxu0 0.0
    %3312 = vmatpush1.msra.mxu0 0.0
    %3313 = vmatprep.subr.mxu0 0.0
    %3314 = vmatpush1.msra.mxu0 0.0
    %3315 = vmatprep.subr.mxu0 0.0
    %3316 = vmatpush1.msra.mxu0 0.0
    %3317 = vmatprep.subr.mxu0 0.0
    %3318 = vmatpush1.msra.mxu0 0.0
    %3319 = vmatprep.subr.mxu0 0.0
    %3320 = vmatpush1.msra.mxu0 0.0
    %3321 = vmatprep.mubr.f32.mxu0 0.0
    %3322 = vmatmul.mubr.f32.gmra.mrb[0].mxu0 %v3255
    %v3323 = vpop.f32.mrb[0].mxu0
    %v3324 = vadd.f32 0.0, %v3323
    %v3325 = vpop.f32.mrb[0].mxu0
    %3326 = vdwg.mxu0
    %v3327 = vadd.f32 %v3254, %v3324
    %v3328 = vxor.u32 %v3327, 2147483648
    %v3329 = vmul.f32 %v3328, 1.442695
    %v3330 = vpow.pop %v3329
    %v3331 = vadd.f32 %v3330, 1.0
    %v3332 = vrcp.pop %v3331
    %v3333 = vmul.f32 1.0, %v3332
    %v3334 = vmul.f32 %v3333, 2.0
    %v3335 = vsub.f32 %v3334, 1.0
    %v3336 = vmul.f32 %v3333, %v3241
    %3338 = vrot.lane.b32.xlu0 %v3335, 64
    %v3339 = vpop.permute.xlu0 %3338
    %v3341 = vmul.f32 %v3333, %v3339
    %3343 = vrot.lane.b32.xlu0 %v3341, 32
    %v3344 = vpop.permute.xlu0 %3343
    %v3346 = vadd.f32 %v3336, %v3344
    %v3347 = vtanh.pop %v3346
    %3349 = vrot.lane.b32.xlu0 %v3347, 64
    %v3350 = vpop.permute.xlu0 %3349
    %v3352 = vmul.f32 %v3333, %v3350
    %3354 = vrot.lane.b32.xlu0 %v3352, 32
    %v3355 = vpop.permute.xlu0 %3354
    %s3357 = scalar_lea.vmem [#allocation3], 32
    %3358 = vst.msk [vmem:[%s3357] sm:$0xff] %vm322, %v3355
    %v3359 = vld [vmem:[%s851] sm:$0xff]
    %v3360 = vsel %vm322, %v3355, 0
    %3362 = vmatprep.subr.mxu0 0.0
    %3363 = vmatpush1.msra.mxu0 %v2833
    %3364 = vmatprep.subr.mxu0 0.0
    %3365 = vmatpush1.msra.mxu0 %v2834
    %3366 = vmatprep.subr.mxu0 0.0
    %3367 = vmatpush1.msra.mxu0 %v2835
    %3368 = vmatprep.subr.mxu0 0.0
    %3369 = vmatpush1.msra.mxu0 %v2836
    %3370 = vmatprep.subr.mxu0 0.0
    %3371 = vmatpush1.msra.mxu0 0.0
    %3372 = vmatprep.subr.mxu0 0.0
    %3373 = vmatpush1.msra.mxu0 0.0
    %3374 = vmatprep.subr.mxu0 0.0
    %3375 = vmatpush1.msra.mxu0 0.0
    %3376 = vmatprep.subr.mxu0 0.0
    %3377 = vmatpush1.msra.mxu0 0.0
    %3378 = vmatprep.subr.mxu0 0.0
    %3379 = vmatpush1.msra.mxu0 0.0
    %3380 = vmatprep.subr.mxu0 0.0
    %3381 = vmatpush1.msra.mxu0 0.0
    %3382 = vmatprep.subr.mxu0 0.0
    %3383 = vmatpush1.msra.mxu0 0.0
    %3384 = vmatprep.subr.mxu0 0.0
    %3385 = vmatpush1.msra.mxu0 0.0
    %3386 = vmatprep.subr.mxu0 0.0
    %3387 = vmatpush1.msra.mxu0 0.0
    %3388 = vmatprep.subr.mxu0 0.0
    %3389 = vmatpush1.msra.mxu0 0.0
    %3390 = vmatprep.subr.mxu0 0.0
    %3391 = vmatpush1.msra.mxu0 0.0
    %3392 = vmatprep.subr.mxu0 0.0
    %3393 = vmatpush1.msra.mxu0 0.0
    %3394 = vmatprep.subr.mxu0 0.0
    %3395 = vmatpush1.msra.mxu0 0.0
    %3396 = vmatprep.subr.mxu0 0.0
    %3397 = vmatpush1.msra.mxu0 0.0
    %3398 = vmatprep.subr.mxu0 0.0
    %3399 = vmatpush1.msra.mxu0 0.0
    %3400 = vmatprep.subr.mxu0 0.0
    %3401 = vmatpush1.msra.mxu0 0.0
    %3402 = vmatprep.subr.mxu0 0.0
    %3403 = vmatpush1.msra.mxu0 0.0
    %3404 = vmatprep.subr.mxu0 0.0
    %3405 = vmatpush1.msra.mxu0 0.0
    %3406 = vmatprep.subr.mxu0 0.0
    %3407 = vmatpush1.msra.mxu0 0.0
    %3408 = vmatprep.subr.mxu0 0.0
    %3409 = vmatpush1.msra.mxu0 0.0
    %3410 = vmatprep.subr.mxu0 0.0
    %3411 = vmatpush1.msra.mxu0 0.0
    %3412 = vmatprep.subr.mxu0 0.0
    %3413 = vmatpush1.msra.mxu0 0.0
    %3414 = vmatprep.subr.mxu0 0.0
    %3415 = vmatpush1.msra.mxu0 0.0
    %3416 = vmatprep.subr.mxu0 0.0
    %3417 = vmatpush1.msra.mxu0 0.0
    %3418 = vmatprep.subr.mxu0 0.0
    %3419 = vmatpush1.msra.mxu0 0.0
    %3420 = vmatprep.subr.mxu0 0.0
    %3421 = vmatpush1.msra.mxu0 0.0
    %3422 = vmatprep.subr.mxu0 0.0
    %3423 = vmatpush1.msra.mxu0 0.0
    %3424 = vmatprep.subr.mxu0 0.0
    %3425 = vmatpush1.msra.mxu0 0.0
    %3426 = vmatprep.mubr.f32.mxu0 0.0
    %3427 = vmatmul.mubr.f32.gmra.mrb[0].mxu0 %v3360
    %v3428 = vpop.f32.mrb[0].mxu0
    %v3429 = vadd.f32 0.0, %v3428
    %v3430 = vpop.f32.mrb[0].mxu0
    %3431 = vdwg.mxu0
    %v3432 = vadd.f32 %v3359, %v3429
    %v3433 = vxor.u32 %v3432, 2147483648
    %v3434 = vmul.f32 %v3433, 1.442695
    %v3435 = vpow.pop %v3434
    %v3436 = vadd.f32 %v3435, 1.0
    %v3437 = vrcp.pop %v3436
    %v3438 = vmul.f32 1.0, %v3437
    %v3439 = vmul.f32 %v3438, 2.0
    %v3440 = vsub.f32 %v3439, 1.0
    %v3441 = vmul.f32 %v3438, %v3346
    %3443 = vrot.lane.b32.xlu0 %v3440, 64
    %v3444 = vpop.permute.xlu0 %3443
    %v3446 = vmul.f32 %v3438, %v3444
    %3448 = vrot.lane.b32.xlu0 %v3446, 32
    %v3449 = vpop.permute.xlu0 %3448
    %v3451 = vadd.f32 %v3441, %v3449
    %v3452 = vtanh.pop %v3451
    %3454 = vrot.lane.b32.xlu0 %v3452, 64
    %v3455 = vpop.permute.xlu0 %3454
    %v3457 = vmul.f32 %v3438, %v3455
    %3459 = vrot.lane.b32.xlu0 %v3457, 32
    %v3460 = vpop.permute.xlu0 %3459
    %s3462 = scalar_lea.vmem [#allocation3], 40
    %3463 = vst.msk [vmem:[%s3462] sm:$0xff] %vm322, %v3460
    %v3464 = vld [vmem:[%s957] sm:$0xff]
    %v3465 = vsel %vm322, %v3460, 0
    %3467 = vmatprep.subr.mxu0 0.0
    %3468 = vmatpush1.msra.mxu0 %v2833
    %3469 = vmatprep.subr.mxu0 0.0
    %3470 = vmatpush1.msra.mxu0 %v2834
    %3471 = vmatprep.subr.mxu0 0.0
    %3472 = vmatpush1.msra.mxu0 %v2835
    %3473 = vmatprep.subr.mxu0 0.0
    %3474 = vmatpush1.msra.mxu0 %v2836
    %3475 = vmatprep.subr.mxu0 0.0
    %3476 = vmatpush1.msra.mxu0 0.0
    %3477 = vmatprep.subr.mxu0 0.0
    %3478 = vmatpush1.msra.mxu0 0.0
    %3479 = vmatprep.subr.mxu0 0.0
    %3480 = vmatpush1.msra.mxu0 0.0
    %3481 = vmatprep.subr.mxu0 0.0
    %3482 = vmatpush1.msra.mxu0 0.0
    %3483 = vmatprep.subr.mxu0 0.0
    %3484 = vmatpush1.msra.mxu0 0.0
    %3485 = vmatprep.subr.mxu0 0.0
    %3486 = vmatpush1.msra.mxu0 0.0
    %3487 = vmatprep.subr.mxu0 0.0
    %3488 = vmatpush1.msra.mxu0 0.0
    %3489 = vmatprep.subr.mxu0 0.0
    %3490 = vmatpush1.msra.mxu0 0.0
    %3491 = vmatprep.subr.mxu0 0.0
    %3492 = vmatpush1.msra.mxu0 0.0
    %3493 = vmatprep.subr.mxu0 0.0
    %3494 = vmatpush1.msra.mxu0 0.0
    %3495 = vmatprep.subr.mxu0 0.0
    %3496 = vmatpush1.msra.mxu0 0.0
    %3497 = vmatprep.subr.mxu0 0.0
    %3498 = vmatpush1.msra.mxu0 0.0
    %3499 = vmatprep.subr.mxu0 0.0
    %3500 = vmatpush1.msra.mxu0 0.0
    %3501 = vmatprep.subr.mxu0 0.0
    %3502 = vmatpush1.msra.mxu0 0.0
    %3503 = vmatprep.subr.mxu0 0.0
    %3504 = vmatpush1.msra.mxu0 0.0
    %3505 = vmatprep.subr.mxu0 0.0
    %3506 = vmatpush1.msra.mxu0 0.0
    %3507 = vmatprep.subr.mxu0 0.0
    %3508 = vmatpush1.msra.mxu0 0.0
    %3509 = vmatprep.subr.mxu0 0.0
    %3510 = vmatpush1.msra.mxu0 0.0
    %3511 = vmatprep.subr.mxu0 0.0
    %3512 = vmatpush1.msra.mxu0 0.0
    %3513 = vmatprep.subr.mxu0 0.0
    %3514 = vmatpush1.msra.mxu0 0.0
    %3515 = vmatprep.subr.mxu0 0.0
    %3516 = vmatpush1.msra.mxu0 0.0
    %3517 = vmatprep.subr.mxu0 0.0
    %3518 = vmatpush1.msra.mxu0 0.0
    %3519 = vmatprep.subr.mxu0 0.0
    %3520 = vmatpush1.msra.mxu0 0.0
    %3521 = vmatprep.subr.mxu0 0.0
    %3522 = vmatpush1.msra.mxu0 0.0
    %3523 = vmatprep.subr.mxu0 0.0
    %3524 = vmatpush1.msra.mxu0 0.0
    %3525 = vmatprep.subr.mxu0 0.0
    %3526 = vmatpush1.msra.mxu0 0.0
    %3527 = vmatprep.subr.mxu0 0.0
    %3528 = vmatpush1.msra.mxu0 0.0
    %3529 = vmatprep.subr.mxu0 0.0
    %3530 = vmatpush1.msra.mxu0 0.0
    %3531 = vmatprep.mubr.f32.mxu0 0.0
    %3532 = vmatmul.mubr.f32.gmra.mrb[0].mxu0 %v3465
    %v3533 = vpop.f32.mrb[0].mxu0
    %v3534 = vadd.f32 0.0, %v3533
    %v3535 = vpop.f32.mrb[0].mxu0
    %3536 = vdwg.mxu0
    %v3537 = vadd.f32 %v3464, %v3534
    %v3538 = vxor.u32 %v3537, 2147483648
    %v3539 = vmul.f32 %v3538, 1.442695
    %v3540 = vpow.pop %v3539
    %v3541 = vadd.f32 %v3540, 1.0
    %v3542 = vrcp.pop %v3541
    %v3543 = vmul.f32 1.0, %v3542
    %v3544 = vmul.f32 %v3543, 2.0
    %v3545 = vsub.f32 %v3544, 1.0
    %v3546 = vmul.f32 %v3543, %v3451
    %3548 = vrot.lane.b32.xlu0 %v3545, 64
    %v3549 = vpop.permute.xlu0 %3548
    %v3551 = vmul.f32 %v3543, %v3549
    %3553 = vrot.lane.b32.xlu0 %v3551, 32
    %v3554 = vpop.permute.xlu0 %3553
    %v3556 = vadd.f32 %v3546, %v3554
    %v3557 = vtanh.pop %v3556
    %3559 = vrot.lane.b32.xlu0 %v3557, 64
    %v3560 = vpop.permute.xlu0 %3559
    %v3562 = vmul.f32 %v3543, %v3560
    %3564 = vrot.lane.b32.xlu0 %v3562, 32
    %v3565 = vpop.permute.xlu0 %3564
    %s3567 = scalar_lea.vmem [#allocation3], 48
    %3568 = vst.msk [vmem:[%s3567] sm:$0xff] %vm322, %v3565
    %v3569 = vld [vmem:[%s1063] sm:$0xff]
    %v3570 = vsel %vm322, %v3565, 0
    %3572 = vmatprep.subr.mxu0 0.0
    %3573 = vmatpush1.msra.mxu0 %v2833
    %3574 = vmatprep.subr.mxu0 0.0
    %3575 = vmatpush1.msra.mxu0 %v2834
    %3576 = vmatprep.subr.mxu0 0.0
    %3577 = vmatpush1.msra.mxu0 %v2835
    %3578 = vmatprep.subr.mxu0 0.0
    %3579 = vmatpush1.msra.mxu0 %v2836
    %3580 = vmatprep.subr.mxu0 0.0
    %3581 = vmatpush1.msra.mxu0 0.0
    %3582 = vmatprep.subr.mxu0 0.0
    %3583 = vmatpush1.msra.mxu0 0.0
    %3584 = vmatprep.subr.mxu0 0.0
    %3585 = vmatpush1.msra.mxu0 0.0
    %3586 = vmatprep.subr.mxu0 0.0
    %3587 = vmatpush1.msra.mxu0 0.0
    %3588 = vmatprep.subr.mxu0 0.0
    %3589 = vmatpush1.msra.mxu0 0.0
    %3590 = vmatprep.subr.mxu0 0.0
    %3591 = vmatpush1.msra.mxu0 0.0
    %3592 = vmatprep.subr.mxu0 0.0
    %3593 = vmatpush1.msra.mxu0 0.0
    %3594 = vmatprep.subr.mxu0 0.0
    %3595 = vmatpush1.msra.mxu0 0.0
    %3596 = vmatprep.subr.mxu0 0.0
    %3597 = vmatpush1.msra.mxu0 0.0
    %3598 = vmatprep.subr.mxu0 0.0
    %3599 = vmatpush1.msra.mxu0 0.0
    %3600 = vmatprep.subr.mxu0 0.0
    %3601 = vmatpush1.msra.mxu0 0.0
    %3602 = vmatprep.subr.mxu0 0.0
    %3603 = vmatpush1.msra.mxu0 0.0
    %3604 = vmatprep.subr.mxu0 0.0
    %3605 = vmatpush1.msra.mxu0 0.0
    %3606 = vmatprep.subr.mxu0 0.0
    %3607 = vmatpush1.msra.mxu0 0.0
    %3608 = vmatprep.subr.mxu0 0.0
    %3609 = vmatpush1.msra.mxu0 0.0
    %3610 = vmatprep.subr.mxu0 0.0
    %3611 = vmatpush1.msra.mxu0 0.0
    %3612 = vmatprep.subr.mxu0 0.0
    %3613 = vmatpush1.msra.mxu0 0.0
    %3614 = vmatprep.subr.mxu0 0.0
    %3615 = vmatpush1.msra.mxu0 0.0
    %3616 = vmatprep.subr.mxu0 0.0
    %3617 = vmatpush1.msra.mxu0 0.0
    %3618 = vmatprep.subr.mxu0 0.0
    %3619 = vmatpush1.msra.mxu0 0.0
    %3620 = vmatprep.subr.mxu0 0.0
    %3621 = vmatpush1.msra.mxu0 0.0
    %3622 = vmatprep.subr.mxu0 0.0
    %3623 = vmatpush1.msra.mxu0 0.0
    %3624 = vmatprep.subr.mxu0 0.0
    %3625 = vmatpush1.msra.mxu0 0.0
    %3626 = vmatprep.subr.mxu0 0.0
    %3627 = vmatpush1.msra.mxu0 0.0
    %3628 = vmatprep.subr.mxu0 0.0
    %3629 = vmatpush1.msra.mxu0 0.0
    %3630 = vmatprep.subr.mxu0 0.0
    %3631 = vmatpush1.msra.mxu0 0.0
    %3632 = vmatprep.subr.mxu0 0.0
    %3633 = vmatpush1.msra.mxu0 0.0
    %3634 = vmatprep.subr.mxu0 0.0
    %3635 = vmatpush1.msra.mxu0 0.0
    %3636 = vmatprep.mubr.f32.mxu0 0.0
    %3637 = vmatmul.mubr.f32.gmra.mrb[0].mxu0 %v3570
    %v3638 = vpop.f32.mrb[0].mxu0
    %v3639 = vadd.f32 0.0, %v3638
    %v3640 = vpop.f32.mrb[0].mxu0
    %3641 = vdwg.mxu0
    %v3642 = vadd.f32 %v3569, %v3639
    %v3643 = vxor.u32 %v3642, 2147483648
    %v3644 = vmul.f32 %v3643, 1.442695
    %v3645 = vpow.pop %v3644
    %v3646 = vadd.f32 %v3645, 1.0
    %v3647 = vrcp.pop %v3646
    %v3648 = vmul.f32 1.0, %v3647
    %v3649 = vmul.f32 %v3648, 2.0
    %v3650 = vsub.f32 %v3649, 1.0
    %v3651 = vmul.f32 %v3648, %v3556
    %3653 = vrot.lane.b32.xlu0 %v3650, 64
    %v3654 = vpop.permute.xlu0 %3653
    %v3656 = vmul.f32 %v3648, %v3654
    %3658 = vrot.lane.b32.xlu0 %v3656, 32
    %v3659 = vpop.permute.xlu0 %3658
    %v3661 = vadd.f32 %v3651, %v3659
    %v3662 = vtanh.pop %v3661
    %3664 = vrot.lane.b32.xlu0 %v3662, 64
    %v3665 = vpop.permute.xlu0 %3664
    %v3667 = vmul.f32 %v3648, %v3665
    %3669 = vrot.lane.b32.xlu0 %v3667, 32
    %v3670 = vpop.permute.xlu0 %3669
    %s3672 = scalar_lea.vmem [#allocation3], 56
    %3673 = vst.msk [vmem:[%s3672] sm:$0xff] %vm322, %v3670
    %v3674 = vld [vmem:[%s1169] sm:$0xff]
    %v3675 = vsel %vm322, %v3670, 0
    %3677 = vmatprep.subr.mxu0 0.0
    %3678 = vmatpush1.msra.mxu0 %v2833
    %3679 = vmatprep.subr.mxu0 0.0
    %3680 = vmatpush1.msra.mxu0 %v2834
    %3681 = vmatprep.subr.mxu0 0.0
    %3682 = vmatpush1.msra.mxu0 %v2835
    %3683 = vmatprep.subr.mxu0 0.0
    %3684 = vmatpush1.msra.mxu0 %v2836
    %3685 = vmatprep.subr.mxu0 0.0
    %3686 = vmatpush1.msra.mxu0 0.0
    %3687 = vmatprep.subr.mxu0 0.0
    %3688 = vmatpush1.msra.mxu0 0.0
    %3689 = vmatprep.subr.mxu0 0.0
    %3690 = vmatpush1.msra.mxu0 0.0
    %3691 = vmatprep.subr.mxu0 0.0
    %3692 = vmatpush1.msra.mxu0 0.0
    %3693 = vmatprep.subr.mxu0 0.0
    %3694 = vmatpush1.msra.mxu0 0.0
    %3695 = vmatprep.subr.mxu0 0.0
    %3696 = vmatpush1.msra.mxu0 0.0
    %3697 = vmatprep.subr.mxu0 0.0
    %3698 = vmatpush1.msra.mxu0 0.0
    %3699 = vmatprep.subr.mxu0 0.0
    %3700 = vmatpush1.msra.mxu0 0.0
    %3701 = vmatprep.subr.mxu0 0.0
    %3702 = vmatpush1.msra.mxu0 0.0
    %3703 = vmatprep.subr.mxu0 0.0
    %3704 = vmatpush1.msra.mxu0 0.0
    %3705 = vmatprep.subr.mxu0 0.0
    %3706 = vmatpush1.msra.mxu0 0.0
    %3707 = vmatprep.subr.mxu0 0.0
    %3708 = vmatpush1.msra.mxu0 0.0
    %3709 = vmatprep.subr.mxu0 0.0
    %3710 = vmatpush1.msra.mxu0 0.0
    %3711 = vmatprep.subr.mxu0 0.0
    %3712 = vmatpush1.msra.mxu0 0.0
    %3713 = vmatprep.subr.mxu0 0.0
    %3714 = vmatpush1.msra.mxu0 0.0
    %3715 = vmatprep.subr.mxu0 0.0
    %3716 = vmatpush1.msra.mxu0 0.0
    %3717 = vmatprep.subr.mxu0 0.0
    %3718 = vmatpush1.msra.mxu0 0.0
    %3719 = vmatprep.subr.mxu0 0.0
    %3720 = vmatpush1.msra.mxu0 0.0
    %3721 = vmatprep.subr.mxu0 0.0
    %3722 = vmatpush1.msra.mxu0 0.0
    %3723 = vmatprep.subr.mxu0 0.0
    %3724 = vmatpush1.msra.mxu0 0.0
    %3725 = vmatprep.subr.mxu0 0.0
    %3726 = vmatpush1.msra.mxu0 0.0
    %3727 = vmatprep.subr.mxu0 0.0
    %3728 = vmatpush1.msra.mxu0 0.0
    %3729 = vmatprep.subr.mxu0 0.0
    %3730 = vmatpush1.msra.mxu0 0.0
    %3731 = vmatprep.subr.mxu0 0.0
    %3732 = vmatpush1.msra.mxu0 0.0
    %3733 = vmatprep.subr.mxu0 0.0
    %3734 = vmatpush1.msra.mxu0 0.0
    %3735 = vmatprep.subr.mxu0 0.0
    %3736 = vmatpush1.msra.mxu0 0.0
    %3737 = vmatprep.subr.mxu0 0.0
    %3738 = vmatpush1.msra.mxu0 0.0
    %3739 = vmatprep.subr.mxu0 0.0
    %3740 = vmatpush1.msra.mxu0 0.0
    %3741 = vmatprep.mubr.f32.mxu0 0.0
    %3742 = vmatmul.mubr.f32.gmra.mrb[0].mxu0 %v3675
    %v3743 = vpop.f32.mrb[0].mxu0
    %v3744 = vadd.f32 0.0, %v3743
    %v3745 = vpop.f32.mrb[0].mxu0
    %3746 = vdwg.mxu0
    %v3747 = vadd.f32 %v3674, %v3744
    %v3748 = vxor.u32 %v3747, 2147483648
    %v3749 = vmul.f32 %v3748, 1.442695
    %v3750 = vpow.pop %v3749
    %v3751 = vadd.f32 %v3750, 1.0
    %v3752 = vrcp.pop %v3751
    %v3753 = vmul.f32 1.0, %v3752
    %v3754 = vmul.f32 %v3753, 2.0
    %v3755 = vsub.f32 %v3754, 1.0
    %v3756 = vmul.f32 %v3753, %v3661
    %3758 = vrot.lane.b32.xlu0 %v3755, 64
    %v3759 = vpop.permute.xlu0 %3758
    %v3761 = vmul.f32 %v3753, %v3759
    %3763 = vrot.lane.b32.xlu0 %v3761, 32
    %v3764 = vpop.permute.xlu0 %3763
    %v3766 = vadd.f32 %v3756, %v3764
    %v3767 = vtanh.pop %v3766
    %3769 = vrot.lane.b32.xlu0 %v3767, 64
    %v3770 = vpop.permute.xlu0 %3769
    %v3772 = vmul.f32 %v3753, %v3770
    %3774 = vrot.lane.b32.xlu0 %v3772, 32
    %v3775 = vpop.permute.xlu0 %3774
    %s3777 = scalar_lea.vmem [#allocation3], 64
    %3778 = vst.msk [vmem:[%s3777] sm:$0xff] %vm322, %v3775
    %v3779 = vld [vmem:[%s1275] sm:$0xff]
    %v3780 = vsel %vm322, %v3775, 0
    %3782 = vmatprep.subr.mxu0 0.0
    %3783 = vmatpush1.msra.mxu0 %v2833
    %3784 = vmatprep.subr.mxu0 0.0
    %3785 = vmatpush1.msra.mxu0 %v2834
    %3786 = vmatprep.subr.mxu0 0.0
    %3787 = vmatpush1.msra.mxu0 %v2835
    %3788 = vmatprep.subr.mxu0 0.0
    %3789 = vmatpush1.msra.mxu0 %v2836
    %3790 = vmatprep.subr.mxu0 0.0
    %3791 = vmatpush1.msra.mxu0 0.0
    %3792 = vmatprep.subr.mxu0 0.0
    %3793 = vmatpush1.msra.mxu0 0.0
    %3794 = vmatprep.subr.mxu0 0.0
    %3795 = vmatpush1.msra.mxu0 0.0
    %3796 = vmatprep.subr.mxu0 0.0
    %3797 = vmatpush1.msra.mxu0 0.0
    %3798 = vmatprep.subr.mxu0 0.0
    %3799 = vmatpush1.msra.mxu0 0.0
    %3800 = vmatprep.subr.mxu0 0.0
    %3801 = vmatpush1.msra.mxu0 0.0
    %3802 = vmatprep.subr.mxu0 0.0
    %3803 = vmatpush1.msra.mxu0 0.0
    %3804 = vmatprep.subr.mxu0 0.0
    %3805 = vmatpush1.msra.mxu0 0.0
    %3806 = vmatprep.subr.mxu0 0.0
    %3807 = vmatpush1.msra.mxu0 0.0
    %3808 = vmatprep.subr.mxu0 0.0
    %3809 = vmatpush1.msra.mxu0 0.0
    %3810 = vmatprep.subr.mxu0 0.0
    %3811 = vmatpush1.msra.mxu0 0.0
    %3812 = vmatprep.subr.mxu0 0.0
    %3813 = vmatpush1.msra.mxu0 0.0
    %3814 = vmatprep.subr.mxu0 0.0
    %3815 = vmatpush1.msra.mxu0 0.0
    %3816 = vmatprep.subr.mxu0 0.0
    %3817 = vmatpush1.msra.mxu0 0.0
    %3818 = vmatprep.subr.mxu0 0.0
    %3819 = vmatpush1.msra.mxu0 0.0
    %3820 = vmatprep.subr.mxu0 0.0
    %3821 = vmatpush1.msra.mxu0 0.0
    %3822 = vmatprep.subr.mxu0 0.0
    %3823 = vmatpush1.msra.mxu0 0.0
    %3824 = vmatprep.subr.mxu0 0.0
    %3825 = vmatpush1.msra.mxu0 0.0
    %3826 = vmatprep.subr.mxu0 0.0
    %3827 = vmatpush1.msra.mxu0 0.0
    %3828 = vmatprep.subr.mxu0 0.0
    %3829 = vmatpush1.msra.mxu0 0.0
    %3830 = vmatprep.subr.mxu0 0.0
    %3831 = vmatpush1.msra.mxu0 0.0
    %3832 = vmatprep.subr.mxu0 0.0
    %3833 = vmatpush1.msra.mxu0 0.0
    %3834 = vmatprep.subr.mxu0 0.0
    %3835 = vmatpush1.msra.mxu0 0.0
    %3836 = vmatprep.subr.mxu0 0.0
    %3837 = vmatpush1.msra.mxu0 0.0
    %3838 = vmatprep.subr.mxu0 0.0
    %3839 = vmatpush1.msra.mxu0 0.0
    %3840 = vmatprep.subr.mxu0 0.0
    %3841 = vmatpush1.msra.mxu0 0.0
    %3842 = vmatprep.subr.mxu0 0.0
    %3843 = vmatpush1.msra.mxu0 0.0
    %3844 = vmatprep.subr.mxu0 0.0
    %3845 = vmatpush1.msra.mxu0 0.0
    %3846 = vmatprep.mubr.f32.mxu0 0.0
    %3847 = vmatmul.mubr.f32.gmra.mrb[0].mxu0 %v3780
    %v3848 = vpop.f32.mrb[0].mxu0
    %v3849 = vadd.f32 0.0, %v3848
    %v3850 = vpop.f32.mrb[0].mxu0
    %3851 = vdwg.mxu0
    %v3852 = vadd.f32 %v3779, %v3849
    %v3853 = vxor.u32 %v3852, 2147483648
    %v3854 = vmul.f32 %v3853, 1.442695
    %v3855 = vpow.pop %v3854
    %v3856 = vadd.f32 %v3855, 1.0
    %v3857 = vrcp.pop %v3856
    %v3858 = vmul.f32 1.0, %v3857
    %v3859 = vmul.f32 %v3858, 2.0
    %v3860 = vsub.f32 %v3859, 1.0
    %v3861 = vmul.f32 %v3858, %v3766
    %3863 = vrot.lane.b32.xlu0 %v3860, 64
    %v3864 = vpop.permute.xlu0 %3863
    %v3866 = vmul.f32 %v3858, %v3864
    %3868 = vrot.lane.b32.xlu0 %v3866, 32
    %v3869 = vpop.permute.xlu0 %3868
    %v3871 = vadd.f32 %v3861, %v3869
    %v3872 = vtanh.pop %v3871
    %3874 = vrot.lane.b32.xlu0 %v3872, 64
    %v3875 = vpop.permute.xlu0 %3874
    %v3877 = vmul.f32 %v3858, %v3875
    %3879 = vrot.lane.b32.xlu0 %v3877, 32
    %v3880 = vpop.permute.xlu0 %3879
    %s3882 = scalar_lea.vmem [#allocation3], 72
    %3883 = vst.msk [vmem:[%s3882] sm:$0xff] %vm322, %v3880
    %v3884 = vld [vmem:[%s1381] sm:$0xff]
    %v3885 = vsel %vm322, %v3880, 0
    %3887 = vmatprep.subr.mxu0 0.0
    %3888 = vmatpush1.msra.mxu0 %v2833
    %3889 = vmatprep.subr.mxu0 0.0
    %3890 = vmatpush1.msra.mxu0 %v2834
    %3891 = vmatprep.subr.mxu0 0.0
    %3892 = vmatpush1.msra.mxu0 %v2835
    %3893 = vmatprep.subr.mxu0 0.0
    %3894 = vmatpush1.msra.mxu0 %v2836
    %3895 = vmatprep.subr.mxu0 0.0
    %3896 = vmatpush1.msra.mxu0 0.0
    %3897 = vmatprep.subr.mxu0 0.0
    %3898 = vmatpush1.msra.mxu0 0.0
    %3899 = vmatprep.subr.mxu0 0.0
    %3900 = vmatpush1.msra.mxu0 0.0
    %3901 = vmatprep.subr.mxu0 0.0
    %3902 = vmatpush1.msra.mxu0 0.0
    %3903 = vmatprep.subr.mxu0 0.0
    %3904 = vmatpush1.msra.mxu0 0.0
    %3905 = vmatprep.subr.mxu0 0.0
    %3906 = vmatpush1.msra.mxu0 0.0
    %3907 = vmatprep.subr.mxu0 0.0
    %3908 = vmatpush1.msra.mxu0 0.0
    %3909 = vmatprep.subr.mxu0 0.0
    %3910 = vmatpush1.msra.mxu0 0.0
    %3911 = vmatprep.subr.mxu0 0.0
    %3912 = vmatpush1.msra.mxu0 0.0
    %3913 = vmatprep.subr.mxu0 0.0
    %3914 = vmatpush1.msra.mxu0 0.0
    %3915 = vmatprep.subr.mxu0 0.0
    %3916 = vmatpush1.msra.mxu0 0.0
    %3917 = vmatprep.subr.mxu0 0.0
    %3918 = vmatpush1.msra.mxu0 0.0
    %3919 = vmatprep.subr.mxu0 0.0
    %3920 = vmatpush1.msra.mxu0 0.0
    %3921 = vmatprep.subr.mxu0 0.0
    %3922 = vmatpush1.msra.mxu0 0.0
    %3923 = vmatprep.subr.mxu0 0.0
    %3924 = vmatpush1.msra.mxu0 0.0
    %3925 = vmatprep.subr.mxu0 0.0
    %3926 = vmatpush1.msra.mxu0 0.0
    %3927 = vmatprep.subr.mxu0 0.0
    %3928 = vmatpush1.msra.mxu0 0.0
    %3929 = vmatprep.subr.mxu0 0.0
    %3930 = vmatpush1.msra.mxu0 0.0
    %3931 = vmatprep.subr.mxu0 0.0
    %3932 = vmatpush1.msra.mxu0 0.0
    %3933 = vmatprep.subr.mxu0 0.0
    %3934 = vmatpush1.msra.mxu0 0.0
    %3935 = vmatprep.subr.mxu0 0.0
    %3936 = vmatpush1.msra.mxu0 0.0
    %3937 = vmatprep.subr.mxu0 0.0
    %3938 = vmatpush1.msra.mxu0 0.0
    %3939 = vmatprep.subr.mxu0 0.0
    %3940 = vmatpush1.msra.mxu0 0.0
    %3941 = vmatprep.subr.mxu0 0.0
    %3942 = vmatpush1.msra.mxu0 0.0
    %3943 = vmatprep.subr.mxu0 0.0
    %3944 = vmatpush1.msra.mxu0 0.0
    %3945 = vmatprep.subr.mxu0 0.0
    %3946 = vmatpush1.msra.mxu0 0.0
    %3947 = vmatprep.subr.mxu0 0.0
    %3948 = vmatpush1.msra.mxu0 0.0
    %3949 = vmatprep.subr.mxu0 0.0
    %3950 = vmatpush1.msra.mxu0 0.0
    %3951 = vmatprep.mubr.f32.mxu0 0.0
    %3952 = vmatmul.mubr.f32.gmra.mrb[0].mxu0 %v3885
    %v3953 = vpop.f32.mrb[0].mxu0
    %v3954 = vadd.f32 0.0, %v3953
    %v3955 = vpop.f32.mrb[0].mxu0
    %3956 = vdwg.mxu0
    %v3957 = vadd.f32 %v3884, %v3954
    %v3958 = vxor.u32 %v3957, 2147483648
    %v3959 = vmul.f32 %v3958, 1.442695
    %v3960 = vpow.pop %v3959
    %v3961 = vadd.f32 %v3960, 1.0
    %v3962 = vrcp.pop %v3961
    %v3963 = vmul.f32 1.0, %v3962
    %v3964 = vmul.f32 %v3963, 2.0
    %v3965 = vsub.f32 %v3964, 1.0
    %v3966 = vmul.f32 %v3963, %v3871
    %3968 = vrot.lane.b32.xlu0 %v3965, 64
    %v3969 = vpop.permute.xlu0 %3968
    %v3971 = vmul.f32 %v3963, %v3969
    %3973 = vrot.lane.b32.xlu0 %v3971, 32
    %v3974 = vpop.permute.xlu0 %3973
    %v3976 = vadd.f32 %v3966, %v3974
    %v3977 = vtanh.pop %v3976
    %3979 = vrot.lane.b32.xlu0 %v3977, 64
    %v3980 = vpop.permute.xlu0 %3979
    %v3982 = vmul.f32 %v3963, %v3980
    %3984 = vrot.lane.b32.xlu0 %v3982, 32
    %v3985 = vpop.permute.xlu0 %3984
    %s3987 = scalar_lea.vmem [#allocation3], 80
    %3988 = vst.msk [vmem:[%s3987] sm:$0xff] %vm322, %v3985
    %v3989 = vld [vmem:[%s1487] sm:$0xff]
    %v3990 = vsel %vm322, %v3985, 0
    %3992 = vmatprep.subr.mxu0 0.0
    %3993 = vmatpush1.msra.mxu0 %v2833
    %3994 = vmatprep.subr.mxu0 0.0
    %3995 = vmatpush1.msra.mxu0 %v2834
    %3996 = vmatprep.subr.mxu0 0.0
    %3997 = vmatpush1.msra.mxu0 %v2835
    %3998 = vmatprep.subr.mxu0 0.0
    %3999 = vmatpush1.msra.mxu0 %v2836
    %4000 = vmatprep.subr.mxu0 0.0
    %4001 = vmatpush1.msra.mxu0 0.0
    %4002 = vmatprep.subr.mxu0 0.0
    %4003 = vmatpush1.msra.mxu0 0.0
    %4004 = vmatprep.subr.mxu0 0.0
    %4005 = vmatpush1.msra.mxu0 0.0
    %4006 = vmatprep.subr.mxu0 0.0
    %4007 = vmatpush1.msra.mxu0 0.0
    %4008 = vmatprep.subr.mxu0 0.0
    %4009 = vmatpush1.msra.mxu0 0.0
    %4010 = vmatprep.subr.mxu0 0.0
    %4011 = vmatpush1.msra.mxu0 0.0
    %4012 = vmatprep.subr.mxu0 0.0
    %4013 = vmatpush1.msra.mxu0 0.0
    %4014 = vmatprep.subr.mxu0 0.0
    %4015 = vmatpush1.msra.mxu0 0.0
    %4016 = vmatprep.subr.mxu0 0.0
    %4017 = vmatpush1.msra.mxu0 0.0
    %4018 = vmatprep.subr.mxu0 0.0
    %4019 = vmatpush1.msra.mxu0 0.0
    %4020 = vmatprep.subr.mxu0 0.0
    %4021 = vmatpush1.msra.mxu0 0.0
    %4022 = vmatprep.subr.mxu0 0.0
    %4023 = vmatpush1.msra.mxu0 0.0
    %4024 = vmatprep.subr.mxu0 0.0
    %4025 = vmatpush1.msra.mxu0 0.0
    %4026 = vmatprep.subr.mxu0 0.0
    %4027 = vmatpush1.msra.mxu0 0.0
    %4028 = vmatprep.subr.mxu0 0.0
    %4029 = vmatpush1.msra.mxu0 0.0
    %4030 = vmatprep.subr.mxu0 0.0
    %4031 = vmatpush1.msra.mxu0 0.0
    %4032 = vmatprep.subr.mxu0 0.0
    %4033 = vmatpush1.msra.mxu0 0.0
    %4034 = vmatprep.subr.mxu0 0.0
    %4035 = vmatpush1.msra.mxu0 0.0
    %4036 = vmatprep.subr.mxu0 0.0
    %4037 = vmatpush1.msra.mxu0 0.0
    %4038 = vmatprep.subr.mxu0 0.0
    %4039 = vmatpush1.msra.mxu0 0.0
    %4040 = vmatprep.subr.mxu0 0.0
    %4041 = vmatpush1.msra.mxu0 0.0
    %4042 = vmatprep.subr.mxu0 0.0
    %4043 = vmatpush1.msra.mxu0 0.0
    %4044 = vmatprep.subr.mxu0 0.0
    %4045 = vmatpush1.msra.mxu0 0.0
    %4046 = vmatprep.subr.mxu0 0.0
    %4047 = vmatpush1.msra.mxu0 0.0
    %4048 = vmatprep.subr.mxu0 0.0
    %4049 = vmatpush1.msra.mxu0 0.0
    %4050 = vmatprep.subr.mxu0 0.0
    %4051 = vmatpush1.msra.mxu0 0.0
    %4052 = vmatprep.subr.mxu0 0.0
    %4053 = vmatpush1.msra.mxu0 0.0
    %4054 = vmatprep.subr.mxu0 0.0
    %4055 = vmatpush1.msra.mxu0 0.0
    %4056 = vmatprep.mubr.f32.mxu0 0.0
    %4057 = vmatmul.mubr.f32.gmra.mrb[0].mxu0 %v3990
    %v4058 = vpop.f32.mrb[0].mxu0
    %v4059 = vadd.f32 0.0, %v4058
    %v4060 = vpop.f32.mrb[0].mxu0
    %4061 = vdwg.mxu0
    %v4062 = vadd.f32 %v3989, %v4059
    %v4063 = vxor.u32 %v4062, 2147483648
    %v4064 = vmul.f32 %v4063, 1.442695
    %v4065 = vpow.pop %v4064
    %v4066 = vadd.f32 %v4065, 1.0
    %v4067 = vrcp.pop %v4066
    %v4068 = vmul.f32 1.0, %v4067
    %v4069 = vmul.f32 %v4068, 2.0
    %v4070 = vsub.f32 %v4069, 1.0
    %v4071 = vmul.f32 %v4068, %v3976
    %4073 = vrot.lane.b32.xlu0 %v4070, 64
    %v4074 = vpop.permute.xlu0 %4073
    %v4076 = vmul.f32 %v4068, %v4074
    %4078 = vrot.lane.b32.xlu0 %v4076, 32
    %v4079 = vpop.permute.xlu0 %4078
    %v4081 = vadd.f32 %v4071, %v4079
    %v4082 = vtanh.pop %v4081
    %4084 = vrot.lane.b32.xlu0 %v4082, 64
    %v4085 = vpop.permute.xlu0 %4084
    %v4087 = vmul.f32 %v4068, %v4085
    %4089 = vrot.lane.b32.xlu0 %v4087, 32
    %v4090 = vpop.permute.xlu0 %4089
    %s4092 = scalar_lea.vmem [#allocation3], 88
    %4093 = vst.msk [vmem:[%s4092] sm:$0xff] %vm322, %v4090
    %v4094 = vld [vmem:[%s1593] sm:$0xff]
    %v4095 = vsel %vm322, %v4090, 0
    %4097 = vmatprep.subr.mxu0 0.0
    %4098 = vmatpush1.msra.mxu0 %v2833
    %4099 = vmatprep.subr.mxu0 0.0
    %4100 = vmatpush1.msra.mxu0 %v2834
    %4101 = vmatprep.subr.mxu0 0.0
    %4102 = vmatpush1.msra.mxu0 %v2835
    %4103 = vmatprep.subr.mxu0 0.0
    %4104 = vmatpush1.msra.mxu0 %v2836
    %4105 = vmatprep.subr.mxu0 0.0
    %4106 = vmatpush1.msra.mxu0 0.0
    %4107 = vmatprep.subr.mxu0 0.0
    %4108 = vmatpush1.msra.mxu0 0.0
    %4109 = vmatprep.subr.mxu0 0.0
    %4110 = vmatpush1.msra.mxu0 0.0
    %4111 = vmatprep.subr.mxu0 0.0
    %4112 = vmatpush1.msra.mxu0 0.0
    %4113 = vmatprep.subr.mxu0 0.0
    %4114 = vmatpush1.msra.mxu0 0.0
    %4115 = vmatprep.subr.mxu0 0.0
    %4116 = vmatpush1.msra.mxu0 0.0
    %4117 = vmatprep.subr.mxu0 0.0
    %4118 = vmatpush1.msra.mxu0 0.0
    %4119 = vmatprep.subr.mxu0 0.0
    %4120 = vmatpush1.msra.mxu0 0.0
    %4121 = vmatprep.subr.mxu0 0.0
    %4122 = vmatpush1.msra.mxu0 0.0
    %4123 = vmatprep.subr.mxu0 0.0
    %4124 = vmatpush1.msra.mxu0 0.0
    %4125 = vmatprep.subr.mxu0 0.0
    %4126 = vmatpush1.msra.mxu0 0.0
    %4127 = vmatprep.subr.mxu0 0.0
    %4128 = vmatpush1.msra.mxu0 0.0
    %4129 = vmatprep.subr.mxu0 0.0
    %4130 = vmatpush1.msra.mxu0 0.0
    %4131 = vmatprep.subr.mxu0 0.0
    %4132 = vmatpush1.msra.mxu0 0.0
    %4133 = vmatprep.subr.mxu0 0.0
    %4134 = vmatpush1.msra.mxu0 0.0
    %4135 = vmatprep.subr.mxu0 0.0
    %4136 = vmatpush1.msra.mxu0 0.0
    %4137 = vmatprep.subr.mxu0 0.0
    %4138 = vmatpush1.msra.mxu0 0.0
    %4139 = vmatprep.subr.mxu0 0.0
    %4140 = vmatpush1.msra.mxu0 0.0
    %4141 = vmatprep.subr.mxu0 0.0
    %4142 = vmatpush1.msra.mxu0 0.0
    %4143 = vmatprep.subr.mxu0 0.0
    %4144 = vmatpush1.msra.mxu0 0.0
    %4145 = vmatprep.subr.mxu0 0.0
    %4146 = vmatpush1.msra.mxu0 0.0
    %4147 = vmatprep.subr.mxu0 0.0
    %4148 = vmatpush1.msra.mxu0 0.0
    %4149 = vmatprep.subr.mxu0 0.0
    %4150 = vmatpush1.msra.mxu0 0.0
    %4151 = vmatprep.subr.mxu0 0.0
    %4152 = vmatpush1.msra.mxu0 0.0
    %4153 = vmatprep.subr.mxu0 0.0
    %4154 = vmatpush1.msra.mxu0 0.0
    %4155 = vmatprep.subr.mxu0 0.0
    %4156 = vmatpush1.msra.mxu0 0.0
    %4157 = vmatprep.subr.mxu0 0.0
    %4158 = vmatpush1.msra.mxu0 0.0
    %4159 = vmatprep.subr.mxu0 0.0
    %4160 = vmatpush1.msra.mxu0 0.0
    %4161 = vmatprep.mubr.f32.mxu0 0.0
    %4162 = vmatmul.mubr.f32.gmra.mrb[0].mxu0 %v4095
    %v4163 = vpop.f32.mrb[0].mxu0
    %v4164 = vadd.f32 0.0, %v4163
    %v4165 = vpop.f32.mrb[0].mxu0
    %4166 = vdwg.mxu0
    %v4167 = vadd.f32 %v4094, %v4164
    %v4168 = vxor.u32 %v4167, 2147483648
    %v4169 = vmul.f32 %v4168, 1.442695
    %v4170 = vpow.pop %v4169
    %v4171 = vadd.f32 %v4170, 1.0
    %v4172 = vrcp.pop %v4171
    %v4173 = vmul.f32 1.0, %v4172
    %v4174 = vmul.f32 %v4173, 2.0
    %v4175 = vsub.f32 %v4174, 1.0
    %v4176 = vmul.f32 %v4173, %v4081
    %4178 = vrot.lane.b32.xlu0 %v4175, 64
    %v4179 = vpop.permute.xlu0 %4178
    %v4181 = vmul.f32 %v4173, %v4179
    %4183 = vrot.lane.b32.xlu0 %v4181, 32
    %v4184 = vpop.permute.xlu0 %4183
    %v4186 = vadd.f32 %v4176, %v4184
    %v4187 = vtanh.pop %v4186
    %4189 = vrot.lane.b32.xlu0 %v4187, 64
    %v4190 = vpop.permute.xlu0 %4189
    %v4192 = vmul.f32 %v4173, %v4190
    %4194 = vrot.lane.b32.xlu0 %v4192, 32
    %v4195 = vpop.permute.xlu0 %4194
    %s4197 = scalar_lea.vmem [#allocation3], 96
    %4198 = vst.msk [vmem:[%s4197] sm:$0xff] %vm322, %v4195
    %v4199 = vld [vmem:[%s1699] sm:$0xff]
    %v4200 = vsel %vm322, %v4195, 0
    %4202 = vmatprep.subr.mxu0 0.0
    %4203 = vmatpush1.msra.mxu0 %v2833
    %4204 = vmatprep.subr.mxu0 0.0
    %4205 = vmatpush1.msra.mxu0 %v2834
    %4206 = vmatprep.subr.mxu0 0.0
    %4207 = vmatpush1.msra.mxu0 %v2835
    %4208 = vmatprep.subr.mxu0 0.0
    %4209 = vmatpush1.msra.mxu0 %v2836
    %4210 = vmatprep.subr.mxu0 0.0
    %4211 = vmatpush1.msra.mxu0 0.0
    %4212 = vmatprep.subr.mxu0 0.0
    %4213 = vmatpush1.msra.mxu0 0.0
    %4214 = vmatprep.subr.mxu0 0.0
    %4215 = vmatpush1.msra.mxu0 0.0
    %4216 = vmatprep.subr.mxu0 0.0
    %4217 = vmatpush1.msra.mxu0 0.0
    %4218 = vmatprep.subr.mxu0 0.0
    %4219 = vmatpush1.msra.mxu0 0.0
    %4220 = vmatprep.subr.mxu0 0.0
    %4221 = vmatpush1.msra.mxu0 0.0
    %4222 = vmatprep.subr.mxu0 0.0
    %4223 = vmatpush1.msra.mxu0 0.0
    %4224 = vmatprep.subr.mxu0 0.0
    %4225 = vmatpush1.msra.mxu0 0.0
    %4226 = vmatprep.subr.mxu0 0.0
    %4227 = vmatpush1.msra.mxu0 0.0
    %4228 = vmatprep.subr.mxu0 0.0
    %4229 = vmatpush1.msra.mxu0 0.0
    %4230 = vmatprep.subr.mxu0 0.0
    %4231 = vmatpush1.msra.mxu0 0.0
    %4232 = vmatprep.subr.mxu0 0.0
    %4233 = vmatpush1.msra.mxu0 0.0
    %4234 = vmatprep.subr.mxu0 0.0
    %4235 = vmatpush1.msra.mxu0 0.0
    %4236 = vmatprep.subr.mxu0 0.0
    %4237 = vmatpush1.msra.mxu0 0.0
    %4238 = vmatprep.subr.mxu0 0.0
    %4239 = vmatpush1.msra.mxu0 0.0
    %4240 = vmatprep.subr.mxu0 0.0
    %4241 = vmatpush1.msra.mxu0 0.0
    %4242 = vmatprep.subr.mxu0 0.0
    %4243 = vmatpush1.msra.mxu0 0.0
    %4244 = vmatprep.subr.mxu0 0.0
    %4245 = vmatpush1.msra.mxu0 0.0
    %4246 = vmatprep.subr.mxu0 0.0
    %4247 = vmatpush1.msra.mxu0 0.0
    %4248 = vmatprep.subr.mxu0 0.0
    %4249 = vmatpush1.msra.mxu0 0.0
    %4250 = vmatprep.subr.mxu0 0.0
    %4251 = vmatpush1.msra.mxu0 0.0
    %4252 = vmatprep.subr.mxu0 0.0
    %4253 = vmatpush1.msra.mxu0 0.0
    %4254 = vmatprep.subr.mxu0 0.0
    %4255 = vmatpush1.msra.mxu0 0.0
    %4256 = vmatprep.subr.mxu0 0.0
    %4257 = vmatpush1.msra.mxu0 0.0
    %4258 = vmatprep.subr.mxu0 0.0
    %4259 = vmatpush1.msra.mxu0 0.0
    %4260 = vmatprep.subr.mxu0 0.0
    %4261 = vmatpush1.msra.mxu0 0.0
    %4262 = vmatprep.subr.mxu0 0.0
    %4263 = vmatpush1.msra.mxu0 0.0
    %4264 = vmatprep.subr.mxu0 0.0
    %4265 = vmatpush1.msra.mxu0 0.0
    %4266 = vmatprep.mubr.f32.mxu0 0.0
    %4267 = vmatmul.mubr.f32.gmra.mrb[0].mxu0 %v4200
    %v4268 = vpop.f32.mrb[0].mxu0
    %v4269 = vadd.f32 0.0, %v4268
    %v4270 = vpop.f32.mrb[0].mxu0
    %4271 = vdwg.mxu0
    %v4272 = vadd.f32 %v4199, %v4269
    %v4273 = vxor.u32 %v4272, 2147483648
    %v4274 = vmul.f32 %v4273, 1.442695
    %v4275 = vpow.pop %v4274
    %v4276 = vadd.f32 %v4275, 1.0
    %v4277 = vrcp.pop %v4276
    %v4278 = vmul.f32 1.0, %v4277
    %v4279 = vmul.f32 %v4278, 2.0
    %v4280 = vsub.f32 %v4279, 1.0
    %v4281 = vmul.f32 %v4278, %v4186
    %4283 = vrot.lane.b32.xlu0 %v4280, 64
    %v4284 = vpop.permute.xlu0 %4283
    %v4286 = vmul.f32 %v4278, %v4284
    %4288 = vrot.lane.b32.xlu0 %v4286, 32
    %v4289 = vpop.permute.xlu0 %4288
    %v4291 = vadd.f32 %v4281, %v4289
    %v4292 = vtanh.pop %v4291
    %4294 = vrot.lane.b32.xlu0 %v4292, 64
    %v4295 = vpop.permute.xlu0 %4294
    %v4297 = vmul.f32 %v4278, %v4295
    %4299 = vrot.lane.b32.xlu0 %v4297, 32
    %v4300 = vpop.permute.xlu0 %4299
    %s4302 = scalar_lea.vmem [#allocation3], 104
    %4303 = vst.msk [vmem:[%s4302] sm:$0xff] %vm322, %v4300
    %v4304 = vld [vmem:[%s1805] sm:$0xff]
    %v4305 = vsel %vm322, %v4300, 0
    %4307 = vmatprep.subr.mxu0 0.0
    %4308 = vmatpush1.msra.mxu0 %v2833
    %4309 = vmatprep.subr.mxu0 0.0
    %4310 = vmatpush1.msra.mxu0 %v2834
    %4311 = vmatprep.subr.mxu0 0.0
    %4312 = vmatpush1.msra.mxu0 %v2835
    %4313 = vmatprep.subr.mxu0 0.0
    %4314 = vmatpush1.msra.mxu0 %v2836
    %4315 = vmatprep.subr.mxu0 0.0
    %4316 = vmatpush1.msra.mxu0 0.0
    %4317 = vmatprep.subr.mxu0 0.0
    %4318 = vmatpush1.msra.mxu0 0.0
    %4319 = vmatprep.subr.mxu0 0.0
    %4320 = vmatpush1.msra.mxu0 0.0
    %4321 = vmatprep.subr.mxu0 0.0
    %4322 = vmatpush1.msra.mxu0 0.0
    %4323 = vmatprep.subr.mxu0 0.0
    %4324 = vmatpush1.msra.mxu0 0.0
    %4325 = vmatprep.subr.mxu0 0.0
    %4326 = vmatpush1.msra.mxu0 0.0
    %4327 = vmatprep.subr.mxu0 0.0
    %4328 = vmatpush1.msra.mxu0 0.0
    %4329 = vmatprep.subr.mxu0 0.0
    %4330 = vmatpush1.msra.mxu0 0.0
    %4331 = vmatprep.subr.mxu0 0.0
    %4332 = vmatpush1.msra.mxu0 0.0
    %4333 = vmatprep.subr.mxu0 0.0
    %4334 = vmatpush1.msra.mxu0 0.0
    %4335 = vmatprep.subr.mxu0 0.0
    %4336 = vmatpush1.msra.mxu0 0.0
    %4337 = vmatprep.subr.mxu0 0.0
    %4338 = vmatpush1.msra.mxu0 0.0
    %4339 = vmatprep.subr.mxu0 0.0
    %4340 = vmatpush1.msra.mxu0 0.0
    %4341 = vmatprep.subr.mxu0 0.0
    %4342 = vmatpush1.msra.mxu0 0.0
    %4343 = vmatprep.subr.mxu0 0.0
    %4344 = vmatpush1.msra.mxu0 0.0
    %4345 = vmatprep.subr.mxu0 0.0
    %4346 = vmatpush1.msra.mxu0 0.0
    %4347 = vmatprep.subr.mxu0 0.0
    %4348 = vmatpush1.msra.mxu0 0.0
    %4349 = vmatprep.subr.mxu0 0.0
    %4350 = vmatpush1.msra.mxu0 0.0
    %4351 = vmatprep.subr.mxu0 0.0
    %4352 = vmatpush1.msra.mxu0 0.0
    %4353 = vmatprep.subr.mxu0 0.0
    %4354 = vmatpush1.msra.mxu0 0.0
    %4355 = vmatprep.subr.mxu0 0.0
    %4356 = vmatpush1.msra.mxu0 0.0
    %4357 = vmatprep.subr.mxu0 0.0
    %4358 = vmatpush1.msra.mxu0 0.0
    %4359 = vmatprep.subr.mxu0 0.0
    %4360 = vmatpush1.msra.mxu0 0.0
    %4361 = vmatprep.subr.mxu0 0.0
    %4362 = vmatpush1.msra.mxu0 0.0
    %4363 = vmatprep.subr.mxu0 0.0
    %4364 = vmatpush1.msra.mxu0 0.0
    %4365 = vmatprep.subr.mxu0 0.0
    %4366 = vmatpush1.msra.mxu0 0.0
    %4367 = vmatprep.subr.mxu0 0.0
    %4368 = vmatpush1.msra.mxu0 0.0
    %4369 = vmatprep.subr.mxu0 0.0
    %4370 = vmatpush1.msra.mxu0 0.0
    %4371 = vmatprep.mubr.f32.mxu0 0.0
    %4372 = vmatmul.mubr.f32.gmra.mrb[0].mxu0 %v4305
    %v4373 = vpop.f32.mrb[0].mxu0
    %v4374 = vadd.f32 0.0, %v4373
    %v4375 = vpop.f32.mrb[0].mxu0
    %4376 = vdwg.mxu0
    %v4377 = vadd.f32 %v4304, %v4374
    %v4378 = vxor.u32 %v4377, 2147483648
    %v4379 = vmul.f32 %v4378, 1.442695
    %v4380 = vpow.pop %v4379
    %v4381 = vadd.f32 %v4380, 1.0
    %v4382 = vrcp.pop %v4381
    %v4383 = vmul.f32 1.0, %v4382
    %v4384 = vmul.f32 %v4383, 2.0
    %v4385 = vsub.f32 %v4384, 1.0
    %v4386 = vmul.f32 %v4383, %v4291
    %4388 = vrot.lane.b32.xlu0 %v4385, 64
    %v4389 = vpop.permute.xlu0 %4388
    %v4391 = vmul.f32 %v4383, %v4389
    %4393 = vrot.lane.b32.xlu0 %v4391, 32
    %v4394 = vpop.permute.xlu0 %4393
    %v4396 = vadd.f32 %v4386, %v4394
    %v4397 = vtanh.pop %v4396
    %4399 = vrot.lane.b32.xlu0 %v4397, 64
    %v4400 = vpop.permute.xlu0 %4399
    %v4402 = vmul.f32 %v4383, %v4400
    %4404 = vrot.lane.b32.xlu0 %v4402, 32
    %v4405 = vpop.permute.xlu0 %4404
    %s4407 = scalar_lea.vmem [#allocation3], 112
    %4408 = vst.msk [vmem:[%s4407] sm:$0xff] %vm322, %v4405
    %v4409 = vld [vmem:[%s1911] sm:$0xff]
    %v4410 = vsel %vm322, %v4405, 0
    %4412 = vmatprep.subr.mxu0 0.0
    %4413 = vmatpush1.msra.mxu0 %v2833
    %4414 = vmatprep.subr.mxu0 0.0
    %4415 = vmatpush1.msra.mxu0 %v2834
    %4416 = vmatprep.subr.mxu0 0.0
    %4417 = vmatpush1.msra.mxu0 %v2835
    %4418 = vmatprep.subr.mxu0 0.0
    %4419 = vmatpush1.msra.mxu0 %v2836
    %4420 = vmatprep.subr.mxu0 0.0
    %4421 = vmatpush1.msra.mxu0 0.0
    %4422 = vmatprep.subr.mxu0 0.0
    %4423 = vmatpush1.msra.mxu0 0.0
    %4424 = vmatprep.subr.mxu0 0.0
    %4425 = vmatpush1.msra.mxu0 0.0
    %4426 = vmatprep.subr.mxu0 0.0
    %4427 = vmatpush1.msra.mxu0 0.0
    %4428 = vmatprep.subr.mxu0 0.0
    %4429 = vmatpush1.msra.mxu0 0.0
    %4430 = vmatprep.subr.mxu0 0.0
    %4431 = vmatpush1.msra.mxu0 0.0
    %4432 = vmatprep.subr.mxu0 0.0
    %4433 = vmatpush1.msra.mxu0 0.0
    %4434 = vmatprep.subr.mxu0 0.0
    %4435 = vmatpush1.msra.mxu0 0.0
    %4436 = vmatprep.subr.mxu0 0.0
    %4437 = vmatpush1.msra.mxu0 0.0
    %4438 = vmatprep.subr.mxu0 0.0
    %4439 = vmatpush1.msra.mxu0 0.0
    %4440 = vmatprep.subr.mxu0 0.0
    %4441 = vmatpush1.msra.mxu0 0.0
    %4442 = vmatprep.subr.mxu0 0.0
    %4443 = vmatpush1.msra.mxu0 0.0
    %4444 = vmatprep.subr.mxu0 0.0
    %4445 = vmatpush1.msra.mxu0 0.0
    %4446 = vmatprep.subr.mxu0 0.0
    %4447 = vmatpush1.msra.mxu0 0.0
    %4448 = vmatprep.subr.mxu0 0.0
    %4449 = vmatpush1.msra.mxu0 0.0
    %4450 = vmatprep.subr.mxu0 0.0
    %4451 = vmatpush1.msra.mxu0 0.0
    %4452 = vmatprep.subr.mxu0 0.0
    %4453 = vmatpush1.msra.mxu0 0.0
    %4454 = vmatprep.subr.mxu0 0.0
    %4455 = vmatpush1.msra.mxu0 0.0
    %4456 = vmatprep.subr.mxu0 0.0
    %4457 = vmatpush1.msra.mxu0 0.0
    %4458 = vmatprep.subr.mxu0 0.0
    %4459 = vmatpush1.msra.mxu0 0.0
    %4460 = vmatprep.subr.mxu0 0.0
    %4461 = vmatpush1.msra.mxu0 0.0
    %4462 = vmatprep.subr.mxu0 0.0
    %4463 = vmatpush1.msra.mxu0 0.0
    %4464 = vmatprep.subr.mxu0 0.0
    %4465 = vmatpush1.msra.mxu0 0.0
    %4466 = vmatprep.subr.mxu0 0.0
    %4467 = vmatpush1.msra.mxu0 0.0
    %4468 = vmatprep.subr.mxu0 0.0
    %4469 = vmatpush1.msra.mxu0 0.0
    %4470 = vmatprep.subr.mxu0 0.0
    %4471 = vmatpush1.msra.mxu0 0.0
    %4472 = vmatprep.subr.mxu0 0.0
    %4473 = vmatpush1.msra.mxu0 0.0
    %4474 = vmatprep.subr.mxu0 0.0
    %4475 = vmatpush1.msra.mxu0 0.0
    %4476 = vmatprep.mubr.f32.mxu0 0.0
    %4477 = vmatmul.mubr.f32.gmra.mrb[0].mxu0 %v4410
    %v4478 = vpop.f32.mrb[0].mxu0
    %v4479 = vadd.f32 0.0, %v4478
    %v4480 = vpop.f32.mrb[0].mxu0
    %4481 = vdwg.mxu0
    %v4482 = vadd.f32 %v4409, %v4479
    %v4483 = vxor.u32 %v4482, 2147483648
    %v4484 = vmul.f32 %v4483, 1.442695
    %v4485 = vpow.pop %v4484
    %v4486 = vadd.f32 %v4485, 1.0
    %v4487 = vrcp.pop %v4486
    %v4488 = vmul.f32 1.0, %v4487
    %v4489 = vmul.f32 %v4488, 2.0
    %v4490 = vsub.f32 %v4489, 1.0
    %v4491 = vmul.f32 %v4488, %v4396
    %4493 = vrot.lane.b32.xlu0 %v4490, 64
    %v4494 = vpop.permute.xlu0 %4493
    %v4496 = vmul.f32 %v4488, %v4494
    %4498 = vrot.lane.b32.xlu0 %v4496, 32
    %v4499 = vpop.permute.xlu0 %4498
    %v4501 = vadd.f32 %v4491, %v4499
    %v4502 = vtanh.pop %v4501
    %4504 = vrot.lane.b32.xlu0 %v4502, 64
    %v4505 = vpop.permute.xlu0 %4504
    %v4507 = vmul.f32 %v4488, %v4505
    %4509 = vrot.lane.b32.xlu0 %v4507, 32
    %v4510 = vpop.permute.xlu0 %4509
    %s4512 = scalar_lea.vmem [#allocation3], 120
    %4513 = vst.msk [vmem:[%s4512] sm:$0xff] %vm322, %v4510
    %v4514 = vld [vmem:[%s2017] sm:$0xff]
    %v4515 = vsel %vm322, %v4510, 0
    %4517 = vmatprep.subr.mxu0 0.0
    %4518 = vmatpush1.msra.mxu0 %v2833
    %4519 = vmatprep.subr.mxu0 0.0
    %4520 = vmatpush1.msra.mxu0 %v2834
    %4521 = vmatprep.subr.mxu0 0.0
    %4522 = vmatpush1.msra.mxu0 %v2835
    %4523 = vmatprep.subr.mxu0 0.0
    %4524 = vmatpush1.msra.mxu0 %v2836
    %4525 = vmatprep.subr.mxu0 0.0
    %4526 = vmatpush1.msra.mxu0 0.0
    %4527 = vmatprep.subr.mxu0 0.0
    %4528 = vmatpush1.msra.mxu0 0.0
    %4529 = vmatprep.subr.mxu0 0.0
    %4530 = vmatpush1.msra.mxu0 0.0
    %4531 = vmatprep.subr.mxu0 0.0
    %4532 = vmatpush1.msra.mxu0 0.0
    %4533 = vmatprep.subr.mxu0 0.0
    %4534 = vmatpush1.msra.mxu0 0.0
    %4535 = vmatprep.subr.mxu0 0.0
    %4536 = vmatpush1.msra.mxu0 0.0
    %4537 = vmatprep.subr.mxu0 0.0
    %4538 = vmatpush1.msra.mxu0 0.0
    %4539 = vmatprep.subr.mxu0 0.0
    %4540 = vmatpush1.msra.mxu0 0.0
    %4541 = vmatprep.subr.mxu0 0.0
    %4542 = vmatpush1.msra.mxu0 0.0
    %4543 = vmatprep.subr.mxu0 0.0
    %4544 = vmatpush1.msra.mxu0 0.0
    %4545 = vmatprep.subr.mxu0 0.0
    %4546 = vmatpush1.msra.mxu0 0.0
    %4547 = vmatprep.subr.mxu0 0.0
    %4548 = vmatpush1.msra.mxu0 0.0
    %4549 = vmatprep.subr.mxu0 0.0
    %4550 = vmatpush1.msra.mxu0 0.0
    %4551 = vmatprep.subr.mxu0 0.0
    %4552 = vmatpush1.msra.mxu0 0.0
    %4553 = vmatprep.subr.mxu0 0.0
    %4554 = vmatpush1.msra.mxu0 0.0
    %4555 = vmatprep.subr.mxu0 0.0
    %4556 = vmatpush1.msra.mxu0 0.0
    %4557 = vmatprep.subr.mxu0 0.0
    %4558 = vmatpush1.msra.mxu0 0.0
    %4559 = vmatprep.subr.mxu0 0.0
    %4560 = vmatpush1.msra.mxu0 0.0
    %4561 = vmatprep.subr.mxu0 0.0
    %4562 = vmatpush1.msra.mxu0 0.0
    %4563 = vmatprep.subr.mxu0 0.0
    %4564 = vmatpush1.msra.mxu0 0.0
    %4565 = vmatprep.subr.mxu0 0.0
    %4566 = vmatpush1.msra.mxu0 0.0
    %4567 = vmatprep.subr.mxu0 0.0
    %4568 = vmatpush1.msra.mxu0 0.0
    %4569 = vmatprep.subr.mxu0 0.0
    %4570 = vmatpush1.msra.mxu0 0.0
    %4571 = vmatprep.subr.mxu0 0.0
    %4572 = vmatpush1.msra.mxu0 0.0
    %4573 = vmatprep.subr.mxu0 0.0
    %4574 = vmatpush1.msra.mxu0 0.0
    %4575 = vmatprep.subr.mxu0 0.0
    %4576 = vmatpush1.msra.mxu0 0.0
    %4577 = vmatprep.subr.mxu0 0.0
    %4578 = vmatpush1.msra.mxu0 0.0
    %4579 = vmatprep.subr.mxu0 0.0
    %4580 = vmatpush1.msra.mxu0 0.0
    %4581 = vmatprep.mubr.f32.mxu0 0.0
    %4582 = vmatmul.mubr.f32.gmra.mrb[0].mxu0 %v4515
    %v4583 = vpop.f32.mrb[0].mxu0
    %v4584 = vadd.f32 0.0, %v4583
    %v4585 = vpop.f32.mrb[0].mxu0
    %4586 = vdwg.mxu0
    %v4587 = vadd.f32 %v4514, %v4584
    %v4588 = vxor.u32 %v4587, 2147483648
    %v4589 = vmul.f32 %v4588, 1.442695
    %v4590 = vpow.pop %v4589
    %v4591 = vadd.f32 %v4590, 1.0
    %v4592 = vrcp.pop %v4591
    %v4593 = vmul.f32 1.0, %v4592
    %v4594 = vmul.f32 %v4593, 2.0
    %v4595 = vsub.f32 %v4594, 1.0
    %v4596 = vmul.f32 %v4593, %v4501
    %4598 = vrot.lane.b32.xlu0 %v4595, 64
    %v4599 = vpop.permute.xlu0 %4598
    %v4601 = vmul.f32 %v4593, %v4599
    %4603 = vrot.lane.b32.xlu0 %v4601, 32
    %v4604 = vpop.permute.xlu0 %4603
    %v4606 = vadd.f32 %v4596, %v4604
    %v4607 = vtanh.pop %v4606
    %4609 = vrot.lane.b32.xlu0 %v4607, 64
    %v4610 = vpop.permute.xlu0 %4609
    %v4612 = vmul.f32 %v4593, %v4610
    %4614 = vrot.lane.b32.xlu0 %v4612, 32
    %v4615 = vpop.permute.xlu0 %4614
    %s4617 = scalar_lea.vmem [#allocation3], 128
    %4618 = vst.msk [vmem:[%s4617] sm:$0xff] %vm322, %v4615
    %v4619 = vld [vmem:[%s2123] sm:$0xff]
    %v4620 = vsel %vm322, %v4615, 0
    %4622 = vmatprep.subr.mxu0 0.0
    %4623 = vmatpush1.msra.mxu0 %v2833
    %4624 = vmatprep.subr.mxu0 0.0
    %4625 = vmatpush1.msra.mxu0 %v2834
    %4626 = vmatprep.subr.mxu0 0.0
    %4627 = vmatpush1.msra.mxu0 %v2835
    %4628 = vmatprep.subr.mxu0 0.0
    %4629 = vmatpush1.msra.mxu0 %v2836
    %4630 = vmatprep.subr.mxu0 0.0
    %4631 = vmatpush1.msra.mxu0 0.0
    %4632 = vmatprep.subr.mxu0 0.0
    %4633 = vmatpush1.msra.mxu0 0.0
    %4634 = vmatprep.subr.mxu0 0.0
    %4635 = vmatpush1.msra.mxu0 0.0
    %4636 = vmatprep.subr.mxu0 0.0
    %4637 = vmatpush1.msra.mxu0 0.0
    %4638 = vmatprep.subr.mxu0 0.0
    %4639 = vmatpush1.msra.mxu0 0.0
    %4640 = vmatprep.subr.mxu0 0.0
    %4641 = vmatpush1.msra.mxu0 0.0
    %4642 = vmatprep.subr.mxu0 0.0
    %4643 = vmatpush1.msra.mxu0 0.0
    %4644 = vmatprep.subr.mxu0 0.0
    %4645 = vmatpush1.msra.mxu0 0.0
    %4646 = vmatprep.subr.mxu0 0.0
    %4647 = vmatpush1.msra.mxu0 0.0
    %4648 = vmatprep.subr.mxu0 0.0
    %4649 = vmatpush1.msra.mxu0 0.0
    %4650 = vmatprep.subr.mxu0 0.0
    %4651 = vmatpush1.msra.mxu0 0.0
    %4652 = vmatprep.subr.mxu0 0.0
    %4653 = vmatpush1.msra.mxu0 0.0
    %4654 = vmatprep.subr.mxu0 0.0
    %4655 = vmatpush1.msra.mxu0 0.0
    %4656 = vmatprep.subr.mxu0 0.0
    %4657 = vmatpush1.msra.mxu0 0.0
    %4658 = vmatprep.subr.mxu0 0.0
    %4659 = vmatpush1.msra.mxu0 0.0
    %4660 = vmatprep.subr.mxu0 0.0
    %4661 = vmatpush1.msra.mxu0 0.0
    %4662 = vmatprep.subr.mxu0 0.0
    %4663 = vmatpush1.msra.mxu0 0.0
    %4664 = vmatprep.subr.mxu0 0.0
    %4665 = vmatpush1.msra.mxu0 0.0
    %4666 = vmatprep.subr.mxu0 0.0
    %4667 = vmatpush1.msra.mxu0 0.0
    %4668 = vmatprep.subr.mxu0 0.0
    %4669 = vmatpush1.msra.mxu0 0.0
    %4670 = vmatprep.subr.mxu0 0.0
    %4671 = vmatpush1.msra.mxu0 0.0
    %4672 = vmatprep.subr.mxu0 0.0
    %4673 = vmatpush1.msra.mxu0 0.0
    %4674 = vmatprep.subr.mxu0 0.0
    %4675 = vmatpush1.msra.mxu0 0.0
    %4676 = vmatprep.subr.mxu0 0.0
    %4677 = vmatpush1.msra.mxu0 0.0
    %4678 = vmatprep.subr.mxu0 0.0
    %4679 = vmatpush1.msra.mxu0 0.0
    %4680 = vmatprep.subr.mxu0 0.0
    %4681 = vmatpush1.msra.mxu0 0.0
    %4682 = vmatprep.subr.mxu0 0.0
    %4683 = vmatpush1.msra.mxu0 0.0
    %4684 = vmatprep.subr.mxu0 0.0
    %4685 = vmatpush1.msra.mxu0 0.0
    %4686 = vmatprep.mubr.f32.mxu0 0.0
    %4687 = vmatmul.mubr.f32.gmra.mrb[0].mxu0 %v4620
    %v4688 = vpop.f32.mrb[0].mxu0
    %v4689 = vadd.f32 0.0, %v4688
    %v4690 = vpop.f32.mrb[0].mxu0
    %4691 = vdwg.mxu0
    %v4692 = vadd.f32 %v4619, %v4689
    %v4693 = vxor.u32 %v4692, 2147483648
    %v4694 = vmul.f32 %v4693, 1.442695
    %v4695 = vpow.pop %v4694
    %v4696 = vadd.f32 %v4695, 1.0
    %v4697 = vrcp.pop %v4696
    %v4698 = vmul.f32 1.0, %v4697
    %v4699 = vmul.f32 %v4698, 2.0
    %v4700 = vsub.f32 %v4699, 1.0
    %v4701 = vmul.f32 %v4698, %v4606
    %4703 = vrot.lane.b32.xlu0 %v4700, 64
    %v4704 = vpop.permute.xlu0 %4703
    %v4706 = vmul.f32 %v4698, %v4704
    %4708 = vrot.lane.b32.xlu0 %v4706, 32
    %v4709 = vpop.permute.xlu0 %4708
    %v4711 = vadd.f32 %v4701, %v4709
    %v4712 = vtanh.pop %v4711
    %4714 = vrot.lane.b32.xlu0 %v4712, 64
    %v4715 = vpop.permute.xlu0 %4714
    %v4717 = vmul.f32 %v4698, %v4715
    %4719 = vrot.lane.b32.xlu0 %v4717, 32
    %v4720 = vpop.permute.xlu0 %4719
    %s4722 = scalar_lea.vmem [#allocation3], 136
    %4723 = vst.msk [vmem:[%s4722] sm:$0xff] %vm322, %v4720
    %v4724 = vld [vmem:[%s2229] sm:$0xff]
    %v4725 = vsel %vm322, %v4720, 0
    %4727 = vmatprep.subr.mxu0 0.0
    %4728 = vmatpush1.msra.mxu0 %v2833
    %4729 = vmatprep.subr.mxu0 0.0
    %4730 = vmatpush1.msra.mxu0 %v2834
    %4731 = vmatprep.subr.mxu0 0.0
    %4732 = vmatpush1.msra.mxu0 %v2835
    %4733 = vmatprep.subr.mxu0 0.0
    %4734 = vmatpush1.msra.mxu0 %v2836
    %4735 = vmatprep.subr.mxu0 0.0
    %4736 = vmatpush1.msra.mxu0 0.0
    %4737 = vmatprep.subr.mxu0 0.0
    %4738 = vmatpush1.msra.mxu0 0.0
    %4739 = vmatprep.subr.mxu0 0.0
    %4740 = vmatpush1.msra.mxu0 0.0
    %4741 = vmatprep.subr.mxu0 0.0
    %4742 = vmatpush1.msra.mxu0 0.0
    %4743 = vmatprep.subr.mxu0 0.0
    %4744 = vmatpush1.msra.mxu0 0.0
    %4745 = vmatprep.subr.mxu0 0.0
    %4746 = vmatpush1.msra.mxu0 0.0
    %4747 = vmatprep.subr.mxu0 0.0
    %4748 = vmatpush1.msra.mxu0 0.0
    %4749 = vmatprep.subr.mxu0 0.0
    %4750 = vmatpush1.msra.mxu0 0.0
    %4751 = vmatprep.subr.mxu0 0.0
    %4752 = vmatpush1.msra.mxu0 0.0
    %4753 = vmatprep.subr.mxu0 0.0
    %4754 = vmatpush1.msra.mxu0 0.0
    %4755 = vmatprep.subr.mxu0 0.0
    %4756 = vmatpush1.msra.mxu0 0.0
    %4757 = vmatprep.subr.mxu0 0.0
    %4758 = vmatpush1.msra.mxu0 0.0
    %4759 = vmatprep.subr.mxu0 0.0
    %4760 = vmatpush1.msra.mxu0 0.0
    %4761 = vmatprep.subr.mxu0 0.0
    %4762 = vmatpush1.msra.mxu0 0.0
    %4763 = vmatprep.subr.mxu0 0.0
    %4764 = vmatpush1.msra.mxu0 0.0
    %4765 = vmatprep.subr.mxu0 0.0
    %4766 = vmatpush1.msra.mxu0 0.0
    %4767 = vmatprep.subr.mxu0 0.0
    %4768 = vmatpush1.msra.mxu0 0.0
    %4769 = vmatprep.subr.mxu0 0.0
    %4770 = vmatpush1.msra.mxu0 0.0
    %4771 = vmatprep.subr.mxu0 0.0
    %4772 = vmatpush1.msra.mxu0 0.0
    %4773 = vmatprep.subr.mxu0 0.0
    %4774 = vmatpush1.msra.mxu0 0.0
    %4775 = vmatprep.subr.mxu0 0.0
    %4776 = vmatpush1.msra.mxu0 0.0
    %4777 = vmatprep.subr.mxu0 0.0
    %4778 = vmatpush1.msra.mxu0 0.0
    %4779 = vmatprep.subr.mxu0 0.0
    %4780 = vmatpush1.msra.mxu0 0.0
    %4781 = vmatprep.subr.mxu0 0.0
    %4782 = vmatpush1.msra.mxu0 0.0
    %4783 = vmatprep.subr.mxu0 0.0
    %4784 = vmatpush1.msra.mxu0 0.0
    %4785 = vmatprep.subr.mxu0 0.0
    %4786 = vmatpush1.msra.mxu0 0.0
    %4787 = vmatprep.subr.mxu0 0.0
    %4788 = vmatpush1.msra.mxu0 0.0
    %4789 = vmatprep.subr.mxu0 0.0
    %4790 = vmatpush1.msra.mxu0 0.0
    %4791 = vmatprep.mubr.f32.mxu0 0.0
    %4792 = vmatmul.mubr.f32.gmra.mrb[0].mxu0 %v4725
    %v4793 = vpop.f32.mrb[0].mxu0
    %v4794 = vadd.f32 0.0, %v4793
    %v4795 = vpop.f32.mrb[0].mxu0
    %4796 = vdwg.mxu0
    %v4797 = vadd.f32 %v4724, %v4794
    %v4798 = vxor.u32 %v4797, 2147483648
    %v4799 = vmul.f32 %v4798, 1.442695
    %v4800 = vpow.pop %v4799
    %v4801 = vadd.f32 %v4800, 1.0
    %v4802 = vrcp.pop %v4801
    %v4803 = vmul.f32 1.0, %v4802
    %v4804 = vmul.f32 %v4803, 2.0
    %v4805 = vsub.f32 %v4804, 1.0
    %v4806 = vmul.f32 %v4803, %v4711
    %4808 = vrot.lane.b32.xlu0 %v4805, 64
    %v4809 = vpop.permute.xlu0 %4808
    %v4811 = vmul.f32 %v4803, %v4809
    %4813 = vrot.lane.b32.xlu0 %v4811, 32
    %v4814 = vpop.permute.xlu0 %4813
    %v4816 = vadd.f32 %v4806, %v4814
    %v4817 = vtanh.pop %v4816
    %4819 = vrot.lane.b32.xlu0 %v4817, 64
    %v4820 = vpop.permute.xlu0 %4819
    %v4822 = vmul.f32 %v4803, %v4820
    %4824 = vrot.lane.b32.xlu0 %v4822, 32
    %v4825 = vpop.permute.xlu0 %4824
    %s4827 = scalar_lea.vmem [#allocation3], 144
    %4828 = vst.msk [vmem:[%s4827] sm:$0xff] %vm322, %v4825
    %v4829 = vld [vmem:[%s2335] sm:$0xff]
    %v4830 = vsel %vm322, %v4825, 0
    %4832 = vmatprep.subr.mxu0 0.0
    %4833 = vmatpush1.msra.mxu0 %v2833
    %4834 = vmatprep.subr.mxu0 0.0
    %4835 = vmatpush1.msra.mxu0 %v2834
    %4836 = vmatprep.subr.mxu0 0.0
    %4837 = vmatpush1.msra.mxu0 %v2835
    %4838 = vmatprep.subr.mxu0 0.0
    %4839 = vmatpush1.msra.mxu0 %v2836
    %4840 = vmatprep.subr.mxu0 0.0
    %4841 = vmatpush1.msra.mxu0 0.0
    %4842 = vmatprep.subr.mxu0 0.0
    %4843 = vmatpush1.msra.mxu0 0.0
    %4844 = vmatprep.subr.mxu0 0.0
    %4845 = vmatpush1.msra.mxu0 0.0
    %4846 = vmatprep.subr.mxu0 0.0
    %4847 = vmatpush1.msra.mxu0 0.0
    %4848 = vmatprep.subr.mxu0 0.0
    %4849 = vmatpush1.msra.mxu0 0.0
    %4850 = vmatprep.subr.mxu0 0.0
    %4851 = vmatpush1.msra.mxu0 0.0
    %4852 = vmatprep.subr.mxu0 0.0
    %4853 = vmatpush1.msra.mxu0 0.0
    %4854 = vmatprep.subr.mxu0 0.0
    %4855 = vmatpush1.msra.mxu0 0.0
    %4856 = vmatprep.subr.mxu0 0.0
    %4857 = vmatpush1.msra.mxu0 0.0
    %4858 = vmatprep.subr.mxu0 0.0
    %4859 = vmatpush1.msra.mxu0 0.0
    %4860 = vmatprep.subr.mxu0 0.0
    %4861 = vmatpush1.msra.mxu0 0.0
    %4862 = vmatprep.subr.mxu0 0.0
    %4863 = vmatpush1.msra.mxu0 0.0
    %4864 = vmatprep.subr.mxu0 0.0
    %4865 = vmatpush1.msra.mxu0 0.0
    %4866 = vmatprep.subr.mxu0 0.0
    %4867 = vmatpush1.msra.mxu0 0.0
    %4868 = vmatprep.subr.mxu0 0.0
    %4869 = vmatpush1.msra.mxu0 0.0
    %4870 = vmatprep.subr.mxu0 0.0
    %4871 = vmatpush1.msra.mxu0 0.0
    %4872 = vmatprep.subr.mxu0 0.0
    %4873 = vmatpush1.msra.mxu0 0.0
    %4874 = vmatprep.subr.mxu0 0.0
    %4875 = vmatpush1.msra.mxu0 0.0
    %4876 = vmatprep.subr.mxu0 0.0
    %4877 = vmatpush1.msra.mxu0 0.0
    %4878 = vmatprep.subr.mxu0 0.0
    %4879 = vmatpush1.msra.mxu0 0.0
    %4880 = vmatprep.subr.mxu0 0.0
    %4881 = vmatpush1.msra.mxu0 0.0
    %4882 = vmatprep.subr.mxu0 0.0
    %4883 = vmatpush1.msra.mxu0 0.0
    %4884 = vmatprep.subr.mxu0 0.0
    %4885 = vmatpush1.msra.mxu0 0.0
    %4886 = vmatprep.subr.mxu0 0.0
    %4887 = vmatpush1.msra.mxu0 0.0
    %4888 = vmatprep.subr.mxu0 0.0
    %4889 = vmatpush1.msra.mxu0 0.0
    %4890 = vmatprep.subr.mxu0 0.0
    %4891 = vmatpush1.msra.mxu0 0.0
    %4892 = vmatprep.subr.mxu0 0.0
    %4893 = vmatpush1.msra.mxu0 0.0
    %4894 = vmatprep.subr.mxu0 0.0
    %4895 = vmatpush1.msra.mxu0 0.0
    %4896 = vmatprep.mubr.f32.mxu0 0.0
    %4897 = vmatmul.mubr.f32.gmra.mrb[0].mxu0 %v4830
    %v4898 = vpop.f32.mrb[0].mxu0
    %v4899 = vadd.f32 0.0, %v4898
    %v4900 = vpop.f32.mrb[0].mxu0
    %4901 = vdwg.mxu0
    %v4902 = vadd.f32 %v4829, %v4899
    %v4903 = vxor.u32 %v4902, 2147483648
    %v4904 = vmul.f32 %v4903, 1.442695
    %v4905 = vpow.pop %v4904
    %v4906 = vadd.f32 %v4905, 1.0
    %v4907 = vrcp.pop %v4906
    %v4908 = vmul.f32 1.0, %v4907
    %v4909 = vmul.f32 %v4908, 2.0
    %v4910 = vsub.f32 %v4909, 1.0
    %v4911 = vmul.f32 %v4908, %v4816
    %4913 = vrot.lane.b32.xlu0 %v4910, 64
    %v4914 = vpop.permute.xlu0 %4913
    %v4916 = vmul.f32 %v4908, %v4914
    %4918 = vrot.lane.b32.xlu0 %v4916, 32
    %v4919 = vpop.permute.xlu0 %4918
    %v4921 = vadd.f32 %v4911, %v4919
    %v4922 = vtanh.pop %v4921
    %4924 = vrot.lane.b32.xlu0 %v4922, 64
    %v4925 = vpop.permute.xlu0 %4924
    %v4927 = vmul.f32 %v4908, %v4925
    %4929 = vrot.lane.b32.xlu0 %v4927, 32
    %v4930 = vpop.permute.xlu0 %4929
    %s4932 = scalar_lea.vmem [#allocation3], 152
    %4933 = vst.msk [vmem:[%s4932] sm:$0xff] %vm322, %v4930
    %v4934 = vld [vmem:[%s2441] sm:$0xff]
    %v4935 = vsel %vm322, %v4930, 0
    %4937 = vmatprep.subr.mxu0 0.0
    %4938 = vmatpush1.msra.mxu0 %v2833
    %4939 = vmatprep.subr.mxu0 0.0
    %4940 = vmatpush1.msra.mxu0 %v2834
    %4941 = vmatprep.subr.mxu0 0.0
    %4942 = vmatpush1.msra.mxu0 %v2835
    %4943 = vmatprep.subr.mxu0 0.0
    %4944 = vmatpush1.msra.mxu0 %v2836
    %4945 = vmatprep.subr.mxu0 0.0
    %4946 = vmatpush1.msra.mxu0 0.0
    %4947 = vmatprep.subr.mxu0 0.0
    %4948 = vmatpush1.msra.mxu0 0.0
    %4949 = vmatprep.subr.mxu0 0.0
    %4950 = vmatpush1.msra.mxu0 0.0
    %4951 = vmatprep.subr.mxu0 0.0
    %4952 = vmatpush1.msra.mxu0 0.0
    %4953 = vmatprep.subr.mxu0 0.0
    %4954 = vmatpush1.msra.mxu0 0.0
    %4955 = vmatprep.subr.mxu0 0.0
    %4956 = vmatpush1.msra.mxu0 0.0
    %4957 = vmatprep.subr.mxu0 0.0
    %4958 = vmatpush1.msra.mxu0 0.0
    %4959 = vmatprep.subr.mxu0 0.0
    %4960 = vmatpush1.msra.mxu0 0.0
    %4961 = vmatprep.subr.mxu0 0.0
    %4962 = vmatpush1.msra.mxu0 0.0
    %4963 = vmatprep.subr.mxu0 0.0
    %4964 = vmatpush1.msra.mxu0 0.0
    %4965 = vmatprep.subr.mxu0 0.0
    %4966 = vmatpush1.msra.mxu0 0.0
    %4967 = vmatprep.subr.mxu0 0.0
    %4968 = vmatpush1.msra.mxu0 0.0
    %4969 = vmatprep.subr.mxu0 0.0
    %4970 = vmatpush1.msra.mxu0 0.0
    %4971 = vmatprep.subr.mxu0 0.0
    %4972 = vmatpush1.msra.mxu0 0.0
    %4973 = vmatprep.subr.mxu0 0.0
    %4974 = vmatpush1.msra.mxu0 0.0
    %4975 = vmatprep.subr.mxu0 0.0
    %4976 = vmatpush1.msra.mxu0 0.0
    %4977 = vmatprep.subr.mxu0 0.0
    %4978 = vmatpush1.msra.mxu0 0.0
    %4979 = vmatprep.subr.mxu0 0.0
    %4980 = vmatpush1.msra.mxu0 0.0
    %4981 = vmatprep.subr.mxu0 0.0
    %4982 = vmatpush1.msra.mxu0 0.0
    %4983 = vmatprep.subr.mxu0 0.0
    %4984 = vmatpush1.msra.mxu0 0.0
    %4985 = vmatprep.subr.mxu0 0.0
    %4986 = vmatpush1.msra.mxu0 0.0
    %4987 = vmatprep.subr.mxu0 0.0
    %4988 = vmatpush1.msra.mxu0 0.0
    %4989 = vmatprep.subr.mxu0 0.0
    %4990 = vmatpush1.msra.mxu0 0.0
    %4991 = vmatprep.subr.mxu0 0.0
    %4992 = vmatpush1.msra.mxu0 0.0
    %4993 = vmatprep.subr.mxu0 0.0
    %4994 = vmatpush1.msra.mxu0 0.0
    %4995 = vmatprep.subr.mxu0 0.0
    %4996 = vmatpush1.msra.mxu0 0.0
    %4997 = vmatprep.subr.mxu0 0.0
    %4998 = vmatpush1.msra.mxu0 0.0
    %4999 = vmatprep.subr.mxu0 0.0
    %5000 = vmatpush1.msra.mxu0 0.0
    %5001 = vmatprep.mubr.f32.mxu0 0.0
    %5002 = vmatmul.mubr.f32.gmra.mrb[0].mxu0 %v4935
    %v5003 = vpop.f32.mrb[0].mxu0
    %v5004 = vadd.f32 0.0, %v5003
    %v5005 = vpop.f32.mrb[0].mxu0
    %5006 = vdwg.mxu0
    %v5007 = vadd.f32 %v4934, %v5004
    %v5008 = vxor.u32 %v5007, 2147483648
    %v5009 = vmul.f32 %v5008, 1.442695
    %v5010 = vpow.pop %v5009
    %v5011 = vadd.f32 %v5010, 1.0
    %v5012 = vrcp.pop %v5011
    %v5013 = vmul.f32 1.0, %v5012
    %v5014 = vmul.f32 %v5013, 2.0
    %v5015 = vsub.f32 %v5014, 1.0
    %v5016 = vmul.f32 %v5013, %v4921
    %5018 = vrot.lane.b32.xlu0 %v5015, 64
    %v5019 = vpop.permute.xlu0 %5018
    %v5021 = vmul.f32 %v5013, %v5019
    %5023 = vrot.lane.b32.xlu0 %v5021, 32
    %v5024 = vpop.permute.xlu0 %5023
    %v5026 = vadd.f32 %v5016, %v5024
    %v5027 = vtanh.pop %v5026
    %5029 = vrot.lane.b32.xlu0 %v5027, 64
    %v5030 = vpop.permute.xlu0 %5029
    %v5032 = vmul.f32 %v5013, %v5030
    %5034 = vrot.lane.b32.xlu0 %v5032, 32
    %v5035 = vpop.permute.xlu0 %5034
    %s5037 = scalar_lea.vmem [#allocation3], 160
    %5038 = vst.msk [vmem:[%s5037] sm:$0xff] %vm322, %v5035
    %v5039 = vld [vmem:[%s7] sm:$0xff]
    %v5040 = vld [vmem:[%s7 + $0x8] sm:$0xff]
    %v5041 = vld [vmem:[%s7 + $0x10] sm:$0xff]
    %v5042 = vld [vmem:[%s7 + $0x18] sm:$0xff]
    %v5043 = vld [vmem:[%s8] sm:$0x1]
    %v5045 = vlaneseq
    %v5046 = vshrl.u32 %v5045, 7
    %v5047 = vsub.s32 0, %v5046
    %v5048 = vrot.slane %v5043, %v5047
    %v5050 = vsel %vm322, %v2543, 0
    %v5052 = vsel %vm322, %v5035, 0
    %5054 = vmatprep.subr.mxu0 0.0
    %5055 = vmatpush1.msra.mxu0 %v5039
    %5056 = vmatprep.subr.mxu0 0.0
    %5057 = vmatpush1.msra.mxu0 %v5040
    %5058 = vmatprep.subr.mxu0 0.0
    %5059 = vmatpush1.msra.mxu0 %v5041
    %5060 = vmatprep.subr.mxu0 0.0
    %5061 = vmatpush1.msra.mxu0 %v5042
    %5062 = vmatprep.subr.mxu0 0.0
    %5063 = vmatpush1.msra.mxu0 0.0
    %5064 = vmatprep.subr.mxu0 0.0
    %5065 = vmatpush1.msra.mxu0 0.0
    %5066 = vmatprep.subr.mxu0 0.0
    %5067 = vmatpush1.msra.mxu0 0.0
    %5068 = vmatprep.subr.mxu0 0.0
    %5069 = vmatpush1.msra.mxu0 0.0
    %5070 = vmatprep.subr.mxu0 0.0
    %5071 = vmatpush1.msra.mxu0 0.0
    %5072 = vmatprep.subr.mxu0 0.0
    %5073 = vmatpush1.msra.mxu0 0.0
    %5074 = vmatprep.subr.mxu0 0.0
    %5075 = vmatpush1.msra.mxu0 0.0
    %5076 = vmatprep.subr.mxu0 0.0
    %5077 = vmatpush1.msra.mxu0 0.0
    %5078 = vmatprep.subr.mxu0 0.0
    %5079 = vmatpush1.msra.mxu0 0.0
    %5080 = vmatprep.subr.mxu0 0.0
    %5081 = vmatpush1.msra.mxu0 0.0
    %5082 = vmatprep.subr.mxu0 0.0
    %5083 = vmatpush1.msra.mxu0 0.0
    %5084 = vmatprep.subr.mxu0 0.0
    %5085 = vmatpush1.msra.mxu0 0.0
    %5086 = vmatprep.subr.mxu0 0.0
    %5087 = vmatpush1.msra.mxu0 0.0
    %5088 = vmatprep.subr.mxu0 0.0
    %5089 = vmatpush1.msra.mxu0 0.0
    %5090 = vmatprep.subr.mxu0 0.0
    %5091 = vmatpush1.msra.mxu0 0.0
    %5092 = vmatprep.subr.mxu0 0.0
    %5093 = vmatpush1.msra.mxu0 0.0
    %5094 = vmatprep.subr.mxu0 0.0
    %5095 = vmatpush1.msra.mxu0 0.0
    %5096 = vmatprep.subr.mxu0 0.0
    %5097 = vmatpush1.msra.mxu0 0.0
    %5098 = vmatprep.subr.mxu0 0.0
    %5099 = vmatpush1.msra.mxu0 0.0
    %5100 = vmatprep.subr.mxu0 0.0
    %5101 = vmatpush1.msra.mxu0 0.0
    %5102 = vmatprep.subr.mxu0 0.0
    %5103 = vmatpush1.msra.mxu0 0.0
    %5104 = vmatprep.subr.mxu0 0.0
    %5105 = vmatpush1.msra.mxu0 0.0
    %5106 = vmatprep.subr.mxu0 0.0
    %5107 = vmatpush1.msra.mxu0 0.0
    %5108 = vmatprep.subr.mxu0 0.0
    %5109 = vmatpush1.msra.mxu0 0.0
    %5110 = vmatprep.subr.mxu0 0.0
    %5111 = vmatpush1.msra.mxu0 0.0
    %5112 = vmatprep.subr.mxu0 0.0
    %5113 = vmatpush1.msra.mxu0 0.0
    %5114 = vmatprep.subr.mxu0 0.0
    %5115 = vmatpush1.msra.mxu0 0.0
    %5116 = vmatprep.subr.mxu0 0.0
    %5117 = vmatpush1.msra.mxu0 0.0
    %5118 = vmatprep.mubr.f32.mxu0 0.0
    %5119 = vmatmul.mubr.f32.gmra.mrb[0].mxu0 %v5050
    %v5120 = vpop.f32.mrb[0].mxu0
    %v5121 = vadd.f32 %v5048, %v5120
    %v5122 = vpop.f32.mrb[0].mxu0
    %5123 = vmatprep.mubr.f32.mxu0 0.0
    %5124 = vmatmul.mubr.f32.gmra.mrb[0].mxu0 %v5052
    %v5125 = vpop.f32.mrb[0].mxu0
    %v5126 = vadd.f32 %v5048, %v5125
    %v5127 = vpop.f32.mrb[0].mxu0
    %5128 = vdwg.mxu0
    %5129 = vst [vmem:[#allocation5] sm:$0xff] %v5121
    %5130 = vst [vmem:[#allocation5 + $0x8] sm:$0xff] %v5126
    // Predicated region
    $region38: #{tpu_custom_call.1} parent=1 // pred_check
      _
    $region39: #{tpu_custom_call.1} parent=1 // pred_check_branch
      %5132 = sbr.rel (0) target = $region41
    $region40: #{tpu_custom_call.1} parent=1 // pred_region
      %s5134 = ssub.s32 256, 256
      %5135 = vsyncadd [#allocation6], %s5134
      %s5136 = sshll.u32 [#allocation5], 4
      %s5137 = int_to_ptr.vmem [resolvable:$true] %s5136
      %5142 = dma.vmem_to_hbm [thread:$0]  %s5137, 256, %s9, [#allocation6], 128, 128, 8
    $region41: #{tpu_custom_call.1} parent=1 // pred_fallthru
      _
    // Predicated region
    $region42: #{tpu_custom_call.1} parent=1 // pred_check
      _
    $region43: #{tpu_custom_call.1} parent=1 // pred_check_branch
      %5144 = sbr.rel (0) target = $region45
    $region44: #{tpu_custom_call.1} parent=1 // pred_region
      %5145 = dma.done [#allocation6], 256
    $region45: #{tpu_custom_call.1} parent=1 // pred_fallthru
      _
    %5146 = vsyncpa [#allocation6], 1

</llo_original>
